<compile_context>
chip_gen: v6e
topology: v6e:2x2x1
jax: 0.10.0
libtpu: 0.0.40
codegen_flags: <defaults>
</compile_context>

<pallas_src>
import jax
import jax.numpy as jnp
import numpy as np
from jax import lax
from jax.experimental import pallas as pl
from jax.experimental.pallas import tpu as pltpu

EPS = 1e-5
NUM_GROUPS = 16
SKIP_SCALE = 0.5 ** 0.5


def _group_one_hot(C, num_groups):
    """(C, G) one-hot group membership matrix, built on the host."""
    gs = C // num_groups
    cidx = np.arange(C)[:, None]
    gidx = np.arange(num_groups)[None, :]
    return (cidx // gs == gidx).astype(np.float32)


def _silu(x):
    return x * jax.nn.sigmoid(x)


def _group_norm(x, gamma, beta, m_mean, mt):
    """GroupNorm on (tb, C) f32, matching torch.nn.GroupNorm (biased variance).

    m_mean is the one-hot membership matrix pre-scaled by 1/group_size (C, G);
    mt is its (unscaled) transpose (G, C).  Stats use two independent dots
    (no sublane concat/slice — those materialize VMEM copies), and the f32
    dots are pinned to full precision."""
    mean_g = jnp.dot(x, m_mean, preferred_element_type=jnp.float32,
                     precision=lax.Precision.HIGHEST)                 # (tb, G)
    mean2_g = jnp.dot(x * x, m_mean, preferred_element_type=jnp.float32,
                      precision=lax.Precision.HIGHEST)                # (tb, G)
    # NOTE: single-pass E[x^2]-E[x]^2; clamped >= 0. Fine for normalized-scale
    # activations; switch to two-pass if |mean| >> std inputs are expected.
    var_g = jnp.maximum(mean2_g - mean_g * mean_g, 0.0)
    mean_c = jnp.dot(mean_g, mt, preferred_element_type=jnp.float32,
                     precision=lax.Precision.HIGHEST)                 # (tb, C)
    var_c = jnp.dot(var_g, mt, preferred_element_type=jnp.float32,
                    precision=lax.Precision.HIGHEST)                  # (tb, C)
    xn = (x - mean_c) * lax.rsqrt(var_c + EPS)
    return xn * gamma + beta


def _make_kernel(has_skip):
    def kernel(x_ref, emb_ref,
               gn0w_ref, gn0b_ref, m0_ref, mt0_ref,
               w0_ref, b0_ref, waff_ref, baff_ref,
               gn1w_ref, gn1b_ref, m1_ref, mt1_ref,
               w1_ref, b1_ref, *rest):
        if has_skip:
            wskip_ref, bskip_ref, out_ref = rest
        else:
            (out_ref,) = rest

        x = x_ref[...].astype(jnp.float32)
        emb = emb_ref[...].astype(jnp.float32)

        # affine(emb): independent of GroupNorm0 — issue early so its MXU
        # pushes overlap the gn0 + silu EUP/VPU chain.
        aff = jnp.dot(emb.astype(jnp.bfloat16), waff_ref[...],
                      preferred_element_type=jnp.float32) + baff_ref[...]

        # h = conv0(silu(norm0(x))) + affine(emb)
        h = _silu(_group_norm(x, gn0w_ref[...], gn0b_ref[...],
                              m0_ref[...], mt0_ref[...]))
        h = jnp.dot(h.astype(jnp.bfloat16), w0_ref[...],
                    preferred_element_type=jnp.float32) + b0_ref[...]
        h = h + aff

        # h = silu(norm1(h))
        h = _silu(_group_norm(h, gn1w_ref[...], gn1b_ref[...],
                              m1_ref[...], mt1_ref[...]))

        # skip path: independent of norm1 chain.
        if has_skip:
            skip = jnp.dot(x.astype(jnp.bfloat16), wskip_ref[...],
                           preferred_element_type=jnp.float32) + bskip_ref[...]
        else:
            skip = x  # identity skip (Cin == Cout)

        # out = (conv1(dropout(h)) + skip(x)) * skip_scale ; dropout = identity.
        h = jnp.dot(h.astype(jnp.bfloat16), w1_ref[...],
                    preferred_element_type=jnp.float32) + b1_ref[...]
        out_ref[...] = ((h + skip) * SKIP_SCALE).astype(out_ref.dtype)

    return kernel


def _pick_tb(B, max_tb=512):
    """Largest sublane-aligned divisor of B (<= max_tb), preferring an even
    grid (>= 2 steps) so the 'parallel' batch axis shards across both v7x
    TensorCores; on single-TC chips the extra step costs ~0.35 us."""
    cands = [t for t in range(8, min(B, max_tb) + 1, 8) if B % t == 0]
    if not cands:
        return B  # tiny/unaligned batch: single full-extent block
    even = [t for t in cands if (B // t) % 2 == 0]
    pool = even if even else cands
    return max(pool)


def fblock_forward(x, emb, params, *, tb=None, out_dtype=None):
    B, Cin = x.shape
    Cemb = emb.shape[-1]
    Cout = params["w0"].shape[-1]
    has_skip = ("w_skip" in params) and (params["w_skip"] is not None)
    if not has_skip:
        assert Cin == Cout, "identity skip requires in_channels == out_channels"
    assert Cin % NUM_GROUPS == 0 and Cout % NUM_GROUPS == 0

    out_dtype = x.dtype if out_dtype is None else out_dtype  # bf16 halves writeback
    if tb is None:
        tb = _pick_tb(B)
    tb = min(tb, B)
    assert B % tb == 0 and (tb % 8 == 0 or tb == B), \
        "batch must tile into sublane-aligned blocks"

    # --- host-side packing (done once) ---------------------------------------
    w0 = params["w0"].astype(jnp.bfloat16)
    waff = params["w_aff"].astype(jnp.bfloat16)
    w1 = params["w1"].astype(jnp.bfloat16)
    b0 = params["b0"].astype(jnp.float32)
    baff = params["b_aff"].astype(jnp.float32)
    b1 = params["b1"].astype(jnp.float32)
    gn0w = params["gn0_w"].astype(jnp.float32)
    gn0b = params["gn0_b"].astype(jnp.float32)
    gn1w = params["gn1_w"].astype(jnp.float32)
    gn1b = params["gn1_b"].astype(jnp.float32)

    gs0 = Cin // NUM_GROUPS
    gs1 = Cout // NUM_GROUPS
    m0_np = _group_one_hot(Cin, NUM_GROUPS)
    m1_np = _group_one_hot(Cout, NUM_GROUPS)
    m0 = jnp.asarray(m0_np / gs0)      # pre-scaled so matmul gives E[.] directly
    mt0 = jnp.asarray(m0_np.T)
    m1 = jnp.asarray(m1_np / gs1)
    mt1 = jnp.asarray(m1_np.T)

    # --- specs ----------------------------------------------------------------
    def row_spec(c):
        return pl.BlockSpec((tb, c), lambda i: (i, 0))

    def full_spec(shape):
        return pl.BlockSpec(shape, lambda i, _n=len(shape): (0,) * _n)

    in_specs = [
        row_spec(Cin),                        # x
        row_spec(Cemb),                       # emb
        full_spec((1, Cin)),                  # gn0 weight
        full_spec((1, Cin)),                  # gn0 bias
        full_spec((Cin, NUM_GROUPS)),         # M0 / gs0
        full_spec((NUM_GROUPS, Cin)),         # M0^T
        full_spec((Cin, Cout)),               # conv0 W (bf16)
        full_spec((1, Cout)),                 # conv0 b
        full_spec((Cemb, Cout)),              # affine W (bf16)
        full_spec((1, Cout)),                 # affine b
        full_spec((1, Cout)),                 # gn1 weight
        full_spec((1, Cout)),                 # gn1 bias
        full_spec((Cout, NUM_GROUPS)),        # M1 / gs1
        full_spec((NUM_GROUPS, Cout)),        # M1^T
        full_spec((Cout, Cout)),              # conv1 W (bf16)
        full_spec((1, Cout)),                 # conv1 b
    ]
    args = [x, emb, gn0w, gn0b, m0, mt0, w0, b0, waff, baff,
            gn1w, gn1b, m1, mt1, w1, b1]
    if has_skip:
        wskip = params["w_skip"].astype(jnp.bfloat16)
        bskip = params["b_skip"].astype(jnp.float32)
        in_specs += [full_spec((Cin, Cout)), full_spec((1, Cout))]
        args += [wskip, bskip]

    out_specs = pl.BlockSpec((tb, Cout), lambda i: (i, 0))

    return pl.pallas_call(
        _make_kernel(has_skip),
        out_shape=jax.ShapeDtypeStruct((B, Cout), out_dtype),
        grid=(B // tb,),
        in_specs=in_specs,
        out_specs=out_specs,
        compiler_params=pltpu.CompilerParams(
            dimension_semantics=("parallel",),
            vmem_limit_bytes=32 * 1024 * 1024),
    )(*args)


def fblock_reference(x, emb, p):
    """Pure-JAX f32 reference mirroring the PyTorch forward."""
    def gn(h, w, b):
        B, C = h.shape
        hg = h.reshape(B, NUM_GROUPS, C // NUM_GROUPS)
        m = hg.mean(-1, keepdims=True)
        v = hg.var(-1, keepdims=True)          # biased, like torch
        hn = ((hg - m) / jnp.sqrt(v + EPS)).reshape(B, C)
        return hn * w + b

    silu = lambda z: z * jax.nn.sigmoid(z)
    h = jnp.dot(silu(gn(x, p["gn0_w"], p["gn0_b"])), p["w0"]) + p["b0"]
    h = h + (jnp.dot(emb, p["w_aff"]) + p["b_aff"])
    h = silu(gn(h, p["gn1_w"], p["gn1_b"]))
    h = jnp.dot(h, p["w1"]) + p["b1"]
    if p.get("w_skip") is not None:
        h = h + (jnp.dot(x, p["w_skip"]) + p["b_skip"])
    else:
        h = h + x
    return h * SKIP_SCALE


if __name__ == "__main__":
    # Cin/Cout divisible by 16 groups; B picked so the auto tile policy gives
    # an even grid (tb=64 -> grid=2 -> both v7x TensorCores busy).
    B, Cin, Cout, Cemb = 128, 64, 128, 32

    key = jax.random.PRNGKey(0)
    ks = jax.random.split(key, 14)

    def init(k, shape, scale=0.05):
        return scale * jax.random.normal(k, shape, dtype=jnp.float32)

    params = {
        "gn0_w": init(ks[0], (1, Cin)) + 1.0,
        "gn0_b": init(ks[1], (1, Cin)),
        "w0":    init(ks[2], (Cin, Cout)),
        "b0":    init(ks[3], (1, Cout)),
        "w_aff": init(ks[4], (Cemb, Cout)),
        "b_aff": init(ks[5], (1, Cout)),
        "gn1_w": init(ks[6], (1, Cout)) + 1.0,
        "gn1_b": init(ks[7], (1, Cout)),
        "w1":    init(ks[8], (Cout, Cout)),
        "b1":    init(ks[9], (1, Cout)),
        "w_skip": init(ks[10], (Cin, Cout)),   # Cin != Cout -> skip Linear exists
        "b_skip": init(ks[11], (1, Cout)),
    }

    x = jax.random.normal(ks[12], (B, Cin), dtype=jnp.float32)
    emb = jax.random.normal(ks[13], (B, Cemb), dtype=jnp.float32)

    out = fblock_forward(x, emb, params)
    out = jax.block_until_ready(out)

    ref = jax.block_until_ready(fblock_reference(x, emb, params))
    # bf16 matmul operands (f32 accumulate) -> relaxed tolerance vs f32 reference.
    np.testing.assert_allclose(np.asarray(out), np.asarray(ref), rtol=2e-2, atol=2e-2)

    print("KERNEL_OK")
</pallas_src>

<mosaic_0001>
module attributes {stable_mosaic.version = 11 : i64} {
  func.func @kernel(%arg0: i32, %arg1: memref<64x64xf32, #tpu.memory_space<vmem>>, %arg2: memref<64x32xf32, #tpu.memory_space<vmem>>, %arg3: memref<1x64xf32, #tpu.memory_space<vmem>>, %arg4: memref<1x64xf32, #tpu.memory_space<vmem>>, %arg5: memref<64x16xf32, #tpu.memory_space<vmem>>, %arg6: memref<16x64xf32, #tpu.memory_space<vmem>>, %arg7: memref<64x128xbf16, #tpu.memory_space<vmem>>, %arg8: memref<1x128xf32, #tpu.memory_space<vmem>>, %arg9: memref<32x128xbf16, #tpu.memory_space<vmem>>, %arg10: memref<1x128xf32, #tpu.memory_space<vmem>>, %arg11: memref<1x128xf32, #tpu.memory_space<vmem>>, %arg12: memref<1x128xf32, #tpu.memory_space<vmem>>, %arg13: memref<128x16xf32, #tpu.memory_space<vmem>>, %arg14: memref<16x128xf32, #tpu.memory_space<vmem>>, %arg15: memref<128x128xbf16, #tpu.memory_space<vmem>>, %arg16: memref<1x128xf32, #tpu.memory_space<vmem>>, %arg17: memref<64x128xbf16, #tpu.memory_space<vmem>>, %arg18: memref<1x128xf32, #tpu.memory_space<vmem>>, %arg19: memref<64x128xf32, #tpu.memory_space<vmem>>) attributes {dimension_semantics = [#tpu.dimension_semantics<parallel>], iteration_bounds = array<i64: 2>, scalar_prefetch = 0 : i64, scratch_operands = 0 : i64, tpu.core_type = #tpu.core_type<tc>, window_params = [{transform_indices = @transform_0, window_bounds = array<i64: 64, 64>}, {transform_indices = @transform_1, window_bounds = array<i64: 64, 32>}, {pipeline_mode = #tpu.pipeline_mode<synchronous>, transform_indices = @transform_2, window_bounds = array<i64: 1, 64>}, {pipeline_mode = #tpu.pipeline_mode<synchronous>, transform_indices = @transform_3, window_bounds = array<i64: 1, 64>}, {pipeline_mode = #tpu.pipeline_mode<synchronous>, transform_indices = @transform_4, window_bounds = array<i64: 64, 16>}, {pipeline_mode = #tpu.pipeline_mode<synchronous>, transform_indices = @transform_5, window_bounds = array<i64: 16, 64>}, {pipeline_mode = #tpu.pipeline_mode<synchronous>, transform_indices = @transform_6, window_bounds = array<i64: 64, 128>}, {pipeline_mode = #tpu.pipeline_mode<synchronous>, transform_indices = @transform_7, window_bounds = array<i64: 1, 128>}, {pipeline_mode = #tpu.pipeline_mode<synchronous>, transform_indices = @transform_8, window_bounds = array<i64: 32, 128>}, {pipeline_mode = #tpu.pipeline_mode<synchronous>, transform_indices = @transform_9, window_bounds = array<i64: 1, 128>}, {pipeline_mode = #tpu.pipeline_mode<synchronous>, transform_indices = @transform_10, window_bounds = array<i64: 1, 128>}, {pipeline_mode = #tpu.pipeline_mode<synchronous>, transform_indices = @transform_11, window_bounds = array<i64: 1, 128>}, {pipeline_mode = #tpu.pipeline_mode<synchronous>, transform_indices = @transform_12, window_bounds = array<i64: 128, 16>}, {pipeline_mode = #tpu.pipeline_mode<synchronous>, transform_indices = @transform_13, window_bounds = array<i64: 16, 128>}, {pipeline_mode = #tpu.pipeline_mode<synchronous>, transform_indices = @transform_14, window_bounds = array<i64: 128, 128>}, {pipeline_mode = #tpu.pipeline_mode<synchronous>, transform_indices = @transform_15, window_bounds = array<i64: 1, 128>}, {pipeline_mode = #tpu.pipeline_mode<synchronous>, transform_indices = @transform_16, window_bounds = array<i64: 64, 128>}, {pipeline_mode = #tpu.pipeline_mode<synchronous>, transform_indices = @transform_17, window_bounds = array<i64: 1, 128>}, {transform_indices = @transform_18, window_bounds = array<i64: 64, 128>}]} {
    %c0 = arith.constant 0 : index
    %c0_0 = arith.constant 0 : index
    %0 = vector.load %arg1[%c0, %c0_0] : memref<64x64xf32, #tpu.memory_space<vmem>>, vector<64x64xf32>
    %c0_1 = arith.constant 0 : index
    %c0_2 = arith.constant 0 : index
    %1 = vector.load %arg2[%c0_1, %c0_2] : memref<64x32xf32, #tpu.memory_space<vmem>>, vector<64x32xf32>
    %2 = arith.truncf %1 : vector<64x32xf32> to vector<64x32xbf16>
    %c0_3 = arith.constant 0 : index
    %c0_4 = arith.constant 0 : index
    %3 = vector.load %arg9[%c0_3, %c0_4] : memref<32x128xbf16, #tpu.memory_space<vmem>>, vector<32x128xbf16>
    %cst = arith.constant dense<0.000000e+00> : vector<64x128xf32>
    %4 = tpu.matmul %2, %3, %cst {dimension_numbers = #tpu.dot_dimension_numbers<[1], [0], [0], [1], [0, 0, 1, 1], [], []>} : vector<64x32xbf16>, vector<32x128xbf16>, vector<64x128xf32> -> vector<64x128xf32>
    %c0_5 = arith.constant 0 : index
    %c0_6 = arith.constant 0 : index
    %5 = vector.load %arg10[%c0_5, %c0_6] : memref<1x128xf32, #tpu.memory_space<vmem>>, vector<1x128xf32>
    %6 = vector.broadcast %5 : vector<1x128xf32> to vector<64x128xf32>
    %7 = arith.addf %4, %6 : vector<64x128xf32>
    %c0_7 = arith.constant 0 : index
    %c0_8 = arith.constant 0 : index
    %8 = vector.load %arg3[%c0_7, %c0_8] : memref<1x64xf32, #tpu.memory_space<vmem>>, vector<1x64xf32>
    %c0_9 = arith.constant 0 : index
    %c0_10 = arith.constant 0 : index
    %9 = vector.load %arg4[%c0_9, %c0_10] : memref<1x64xf32, #tpu.memory_space<vmem>>, vector<1x64xf32>
    %c0_11 = arith.constant 0 : index
    %c0_12 = arith.constant 0 : index
    %10 = vector.load %arg5[%c0_11, %c0_12] : memref<64x16xf32, #tpu.memory_space<vmem>>, vector<64x16xf32>
    %c0_13 = arith.constant 0 : index
    %c0_14 = arith.constant 0 : index
    %11 = vector.load %arg6[%c0_13, %c0_14] : memref<16x64xf32, #tpu.memory_space<vmem>>, vector<16x64xf32>
    %cst_15 = arith.constant dense<0.000000e+00> : vector<64x16xf32>
    %12 = tpu.matmul %0, %10, %cst_15 {dimension_numbers = #tpu.dot_dimension_numbers<[1], [0], [0], [1], [0, 0, 1, 1], [], []>, precision = #tpu.contract_precision<fp32>} : vector<64x64xf32>, vector<64x16xf32>, vector<64x16xf32> -> vector<64x16xf32>
    %13 = arith.mulf %0, %0 : vector<64x64xf32>
    %cst_16 = arith.constant dense<0.000000e+00> : vector<64x16xf32>
    %14 = tpu.matmul %13, %10, %cst_16 {dimension_numbers = #tpu.dot_dimension_numbers<[1], [0], [0], [1], [0, 0, 1, 1], [], []>, precision = #tpu.contract_precision<fp32>} : vector<64x64xf32>, vector<64x16xf32>, vector<64x16xf32> -> vector<64x16xf32>
    %15 = arith.mulf %12, %12 : vector<64x16xf32>
    %16 = arith.subf %14, %15 : vector<64x16xf32>
    %cst_17 = arith.constant 0.000000e+00 : f32
    %17 = vector.broadcast %cst_17 : f32 to vector<64x16xf32>
    %18 = arith.maximumf %16, %17 : vector<64x16xf32>
    %cst_18 = arith.constant dense<0.000000e+00> : vector<64x64xf32>
    %19 = tpu.matmul %12, %11, %cst_18 {dimension_numbers = #tpu.dot_dimension_numbers<[1], [0], [0], [1], [0, 0, 1, 1], [], []>, precision = #tpu.contract_precision<fp32>} : vector<64x16xf32>, vector<16x64xf32>, vector<64x64xf32> -> vector<64x64xf32>
    %cst_19 = arith.constant dense<0.000000e+00> : vector<64x64xf32>
    %20 = tpu.matmul %18, %11, %cst_19 {dimension_numbers = #tpu.dot_dimension_numbers<[1], [0], [0], [1], [0, 0, 1, 1], [], []>, precision = #tpu.contract_precision<fp32>} : vector<64x16xf32>, vector<16x64xf32>, vector<64x64xf32> -> vector<64x64xf32>
    %21 = arith.subf %0, %19 : vector<64x64xf32>
    %cst_20 = arith.constant 9.99999974E-6 : f32
    %22 = vector.broadcast %cst_20 : f32 to vector<64x64xf32>
    %23 = arith.addf %20, %22 : vector<64x64xf32>
    %24 = math.rsqrt %23 : vector<64x64xf32>
    %25 = arith.mulf %21, %24 : vector<64x64xf32>
    %26 = vector.broadcast %8 : vector<1x64xf32> to vector<64x64xf32>
    %27 = arith.mulf %25, %26 : vector<64x64xf32>
    %28 = vector.broadcast %9 : vector<1x64xf32> to vector<64x64xf32>
    %29 = arith.addf %27, %28 : vector<64x64xf32>
    %30 = arith.negf %29 : vector<64x64xf32>
    %31 = math.exp %30 : vector<64x64xf32>
    %cst_21 = arith.constant 1.000000e+00 : f32
    %32 = vector.broadcast %cst_21 : f32 to vector<64x64xf32>
    %33 = arith.addf %32, %31 : vector<64x64xf32>
    %34 = arith.divf %32, %33 : vector<64x64xf32>
    %35 = arith.mulf %29, %34 : vector<64x64xf32>
    %36 = arith.truncf %35 : vector<64x64xf32> to vector<64x64xbf16>
    %c0_22 = arith.constant 0 : index
    %c0_23 = arith.constant 0 : index
    %37 = vector.load %arg7[%c0_22, %c0_23] : memref<64x128xbf16, #tpu.memory_space<vmem>>, vector<64x128xbf16>
    %cst_24 = arith.constant dense<0.000000e+00> : vector<64x128xf32>
    %38 = tpu.matmul %36, %37, %cst_24 {dimension_numbers = #tpu.dot_dimension_numbers<[1], [0], [0], [1], [0, 0, 1, 1], [], []>} : vector<64x64xbf16>, vector<64x128xbf16>, vector<64x128xf32> -> vector<64x128xf32>
    %c0_25 = arith.constant 0 : index
    %c0_26 = arith.constant 0 : index
    %39 = vector.load %arg8[%c0_25, %c0_26] : memref<1x128xf32, #tpu.memory_space<vmem>>, vector<1x128xf32>
    %40 = vector.broadcast %39 : vector<1x128xf32> to vector<64x128xf32>
    %41 = arith.addf %38, %40 : vector<64x128xf32>
    %42 = arith.addf %41, %7 : vector<64x128xf32>
    %c0_27 = arith.constant 0 : index
    %c0_28 = arith.constant 0 : index
    %43 = vector.load %arg11[%c0_27, %c0_28] : memref<1x128xf32, #tpu.memory_space<vmem>>, vector<1x128xf32>
    %c0_29 = arith.constant 0 : index
    %c0_30 = arith.constant 0 : index
    %44 = vector.load %arg12[%c0_29, %c0_30] : memref<1x128xf32, #tpu.memory_space<vmem>>, vector<1x128xf32>
    %c0_31 = arith.constant 0 : index
    %c0_32 = arith.constant 0 : index
    %45 = vector.load %arg13[%c0_31, %c0_32] : memref<128x16xf32, #tpu.memory_space<vmem>>, vector<128x16xf32>
    %c0_33 = arith.constant 0 : index
    %c0_34 = arith.constant 0 : index
    %46 = vector.load %arg14[%c0_33, %c0_34] : memref<16x128xf32, #tpu.memory_space<vmem>>, vector<16x128xf32>
    %cst_35 = arith.constant dense<0.000000e+00> : vector<64x16xf32>
    %47 = tpu.matmul %42, %45, %cst_35 {dimension_numbers = #tpu.dot_dimension_numbers<[1], [0], [0], [1], [0, 0, 1, 1], [], []>, precision = #tpu.contract_precision<fp32>} : vector<64x128xf32>, vector<128x16xf32>, vector<64x16xf32> -> vector<64x16xf32>
    %48 = arith.mulf %42, %42 : vector<64x128xf32>
    %cst_36 = arith.constant dense<0.000000e+00> : vector<64x16xf32>
    %49 = tpu.matmul %48, %45, %cst_36 {dimension_numbers = #tpu.dot_dimension_numbers<[1], [0], [0], [1], [0, 0, 1, 1], [], []>, precision = #tpu.contract_precision<fp32>} : vector<64x128xf32>, vector<128x16xf32>, vector<64x16xf32> -> vector<64x16xf32>
    %50 = arith.mulf %47, %47 : vector<64x16xf32>
    %51 = arith.subf %49, %50 : vector<64x16xf32>
    %cst_37 = arith.constant 0.000000e+00 : f32
    %52 = vector.broadcast %cst_37 : f32 to vector<64x16xf32>
    %53 = arith.maximumf %51, %52 : vector<64x16xf32>
    %cst_38 = arith.constant dense<0.000000e+00> : vector<64x128xf32>
    %54 = tpu.matmul %47, %46, %cst_38 {dimension_numbers = #tpu.dot_dimension_numbers<[1], [0], [0], [1], [0, 0, 1, 1], [], []>, precision = #tpu.contract_precision<fp32>} : vector<64x16xf32>, vector<16x128xf32>, vector<64x128xf32> -> vector<64x128xf32>
    %cst_39 = arith.constant dense<0.000000e+00> : vector<64x128xf32>
    %55 = tpu.matmul %53, %46, %cst_39 {dimension_numbers = #tpu.dot_dimension_numbers<[1], [0], [0], [1], [0, 0, 1, 1], [], []>, precision = #tpu.contract_precision<fp32>} : vector<64x16xf32>, vector<16x128xf32>, vector<64x128xf32> -> vector<64x128xf32>
    %56 = arith.subf %42, %54 : vector<64x128xf32>
    %cst_40 = arith.constant 9.99999974E-6 : f32
    %57 = vector.broadcast %cst_40 : f32 to vector<64x128xf32>
    %58 = arith.addf %55, %57 : vector<64x128xf32>
    %59 = math.rsqrt %58 : vector<64x128xf32>
    %60 = arith.mulf %56, %59 : vector<64x128xf32>
    %61 = vector.broadcast %43 : vector<1x128xf32> to vector<64x128xf32>
    %62 = arith.mulf %60, %61 : vector<64x128xf32>
    %63 = vector.broadcast %44 : vector<1x128xf32> to vector<64x128xf32>
    %64 = arith.addf %62, %63 : vector<64x128xf32>
    %65 = arith.negf %64 : vector<64x128xf32>
    %66 = math.exp %65 : vector<64x128xf32>
    %cst_41 = arith.constant 1.000000e+00 : f32
    %67 = vector.broadcast %cst_41 : f32 to vector<64x128xf32>
    %68 = arith.addf %67, %66 : vector<64x128xf32>
    %69 = arith.divf %67, %68 : vector<64x128xf32>
    %70 = arith.mulf %64, %69 : vector<64x128xf32>
    %71 = arith.truncf %0 : vector<64x64xf32> to vector<64x64xbf16>
    %c0_42 = arith.constant 0 : index
    %c0_43 = arith.constant 0 : index
    %72 = vector.load %arg17[%c0_42, %c0_43] : memref<64x128xbf16, #tpu.memory_space<vmem>>, vector<64x128xbf16>
    %cst_44 = arith.constant dense<0.000000e+00> : vector<64x128xf32>
    %73 = tpu.matmul %71, %72, %cst_44 {dimension_numbers = #tpu.dot_dimension_numbers<[1], [0], [0], [1], [0, 0, 1, 1], [], []>} : vector<64x64xbf16>, vector<64x128xbf16>, vector<64x128xf32> -> vector<64x128xf32>
    %c0_45 = arith.constant 0 : index
    %c0_46 = arith.constant 0 : index
    %74 = vector.load %arg18[%c0_45, %c0_46] : memref<1x128xf32, #tpu.memory_space<vmem>>, vector<1x128xf32>
    %75 = vector.broadcast %74 : vector<1x128xf32> to vector<64x128xf32>
    %76 = arith.addf %73, %75 : vector<64x128xf32>
    %77 = arith.truncf %70 : vector<64x128xf32> to vector<64x128xbf16>
    %c0_47 = arith.constant 0 : index
    %c0_48 = arith.constant 0 : index
    %78 = vector.load %arg15[%c0_47, %c0_48] : memref<128x128xbf16, #tpu.memory_space<vmem>>, vector<128x128xbf16>
    %cst_49 = arith.constant dense<0.000000e+00> : vector<64x128xf32>
    %79 = tpu.matmul %77, %78, %cst_49 {dimension_numbers = #tpu.dot_dimension_numbers<[1], [0], [0], [1], [0, 0, 1, 1], [], []>} : vector<64x128xbf16>, vector<128x128xbf16>, vector<64x128xf32> -> vector<64x128xf32>
    %c0_50 = arith.constant 0 : index
    %c0_51 = arith.constant 0 : index
    %80 = vector.load %arg16[%c0_50, %c0_51] : memref<1x128xf32, #tpu.memory_space<vmem>>, vector<1x128xf32>
    %81 = vector.broadcast %80 : vector<1x128xf32> to vector<64x128xf32>
    %82 = arith.addf %79, %81 : vector<64x128xf32>
    %83 = arith.addf %82, %76 : vector<64x128xf32>
    %cst_52 = arith.constant 0.707106769 : f32
    %84 = vector.broadcast %cst_52 : f32 to vector<64x128xf32>
    %85 = arith.mulf %83, %84 : vector<64x128xf32>
    %c0_53 = arith.constant 0 : index
    %c0_54 = arith.constant 0 : index
    %86 = vector.load %arg19[%c0_53, %c0_54] : memref<64x128xf32, #tpu.memory_space<vmem>>, vector<64x128xf32>
    tpu.vector_store %arg19[%c0_53, %c0_54], %85 {strides = array<i32>} : memref<64x128xf32, #tpu.memory_space<vmem>>, vector<64x128xf32>,
    return
  }
  func.func @transform_0(%arg0: i32) -> (i32, i32) {
    %c0_i32 = arith.constant 0 : i32
    %c0_i32_0 = arith.constant 0 : i32
    return %arg0, %c0_i32 : i32, i32
  }
  func.func @transform_1(%arg0: i32) -> (i32, i32) {
    %c0_i32 = arith.constant 0 : i32
    %c0_i32_0 = arith.constant 0 : i32
    return %arg0, %c0_i32 : i32, i32
  }
  func.func @transform_2(%arg0: i32) -> (i32, i32) {
    %c0_i32 = arith.constant 0 : i32
    %c0_i32_0 = arith.constant 0 : i32
    %c0_i32_1 = arith.constant 0 : i32
    return %c0_i32, %c0_i32_0 : i32, i32
  }
  func.func @transform_3(%arg0: i32) -> (i32, i32) {
    %c0_i32 = arith.constant 0 : i32
    %c0_i32_0 = arith.constant 0 : i32
    %c0_i32_1 = arith.constant 0 : i32
    return %c0_i32, %c0_i32_0 : i32, i32
  }
  func.func @transform_4(%arg0: i32) -> (i32, i32) {
    %c0_i32 = arith.constant 0 : i32
    %c0_i32_0 = arith.constant 0 : i32
    %c0_i32_1 = arith.constant 0 : i32
    return %c0_i32, %c0_i32_0 : i32, i32
  }
  func.func @transform_5(%arg0: i32) -> (i32, i32) {
    %c0_i32 = arith.constant 0 : i32
    %c0_i32_0 = arith.constant 0 : i32
    %c0_i32_1 = arith.constant 0 : i32
    return %c0_i32, %c0_i32_0 : i32, i32
  }
  func.func @transform_6(%arg0: i32) -> (i32, i32) {
    %c0_i32 = arith.constant 0 : i32
    %c0_i32_0 = arith.constant 0 : i32
    %c0_i32_1 = arith.constant 0 : i32
    return %c0_i32, %c0_i32_0 : i32, i32
  }
  func.func @transform_7(%arg0: i32) -> (i32, i32) {
    %c0_i32 = arith.constant 0 : i32
    %c0_i32_0 = arith.constant 0 : i32
    %c0_i32_1 = arith.constant 0 : i32
    return %c0_i32, %c0_i32_0 : i32, i32
  }
  func.func @transform_8(%arg0: i32) -> (i32, i32) {
    %c0_i32 = arith.constant 0 : i32
    %c0_i32_0 = arith.constant 0 : i32
    %c0_i32_1 = arith.constant 0 : i32
    return %c0_i32, %c0_i32_0 : i32, i32
  }
  func.func @transform_9(%arg0: i32) -> (i32, i32) {
    %c0_i32 = arith.constant 0 : i32
    %c0_i32_0 = arith.constant 0 : i32
    %c0_i32_1 = arith.constant 0 : i32
    return %c0_i32, %c0_i32_0 : i32, i32
  }
  func.func @transform_10(%arg0: i32) -> (i32, i32) {
    %c0_i32 = arith.constant 0 : i32
    %c0_i32_0 = arith.constant 0 : i32
    %c0_i32_1 = arith.constant 0 : i32
    return %c0_i32, %c0_i32_0 : i32, i32
  }
  func.func @transform_11(%arg0: i32) -> (i32, i32) {
    %c0_i32 = arith.constant 0 : i32
    %c0_i32_0 = arith.constant 0 : i32
    %c0_i32_1 = arith.constant 0 : i32
    return %c0_i32, %c0_i32_0 : i32, i32
  }
  func.func @transform_12(%arg0: i32) -> (i32, i32) {
    %c0_i32 = arith.constant 0 : i32
    %c0_i32_0 = arith.constant 0 : i32
    %c0_i32_1 = arith.constant 0 : i32
    return %c0_i32, %c0_i32_0 : i32, i32
  }
  func.func @transform_13(%arg0: i32) -> (i32, i32) {
    %c0_i32 = arith.constant 0 : i32
    %c0_i32_0 = arith.constant 0 : i32
    %c0_i32_1 = arith.constant 0 : i32
    return %c0_i32, %c0_i32_0 : i32, i32
  }
  func.func @transform_14(%arg0: i32) -> (i32, i32) {
    %c0_i32 = arith.constant 0 : i32
    %c0_i32_0 = arith.constant 0 : i32
    %c0_i32_1 = arith.constant 0 : i32
    return %c0_i32, %c0_i32_0 : i32, i32
  }
  func.func @transform_15(%arg0: i32) -> (i32, i32) {
    %c0_i32 = arith.constant 0 : i32
    %c0_i32_0 = arith.constant 0 : i32
    %c0_i32_1 = arith.constant 0 : i32
    return %c0_i32, %c0_i32_0 : i32, i32
  }
  func.func @transform_16(%arg0: i32) -> (i32, i32) {
    %c0_i32 = arith.constant 0 : i32
    %c0_i32_0 = arith.constant 0 : i32
    %c0_i32_1 = arith.constant 0 : i32
    return %c0_i32, %c0_i32_0 : i32, i32
  }
  func.func @transform_17(%arg0: i32) -> (i32, i32) {
    %c0_i32 = arith.constant 0 : i32
    %c0_i32_0 = arith.constant 0 : i32
    %c0_i32_1 = arith.constant 0 : i32
    return %c0_i32, %c0_i32_0 : i32, i32
  }
  func.func @transform_18(%arg0: i32) -> (i32, i32) {
    %c0_i32 = arith.constant 0 : i32
    %c0_i32_0 = arith.constant 0 : i32
    return %arg0, %c0_i32 : i32, i32
  }
}

</mosaic_0001>

<llo_original>
// kernel: tpu_custom_call.1
$region0: #{tpu_custom_call.1}
  #allocation0 [shape = 'u32[]', space=smem, size = 0x4, offset = 0x4, fixed_abs, tag = 'smem constant byte address 0x4 - core index']
  #allocation1 [shape = 'u32[144,128]{1,0:T(1,128)}', space=vmem, size = 0x12000, scoped, tag = 'internal scratch']
  %s0 = inlined_call_operand.vmem [shape: f32[128,64], index: 0, kind: input, shape index: {}]
  %s1 = inlined_call_operand.vmem [shape: f32[128,32], index: 1, kind: input, shape index: {}]
  %s2 = inlined_call_operand.vmem [shape: f32[1,64], index: 2, kind: input, shape index: {}]
  %s3 = inlined_call_operand.vmem [shape: f32[1,64], index: 3, kind: input, shape index: {}]
  %s4 = inlined_call_operand.vmem [shape: f32[64,16], index: 4, kind: input, shape index: {}]
  %s5 = inlined_call_operand.vmem [shape: f32[16,64], index: 5, kind: input, shape index: {}]
  %s6 = inlined_call_operand.vmem [shape: bf16[64,128], index: 6, kind: input, shape index: {}]
  %s7 = inlined_call_operand.vmem [shape: f32[1,128], index: 7, kind: input, shape index: {}]
  %s8 = inlined_call_operand.vmem [shape: bf16[32,128], index: 8, kind: input, shape index: {}]
  %s9 = inlined_call_operand.vmem [shape: f32[1,128], index: 9, kind: input, shape index: {}]
  %s10 = inlined_call_operand.vmem [shape: f32[1,128], index: 10, kind: input, shape index: {}]
  %s11 = inlined_call_operand.vmem [shape: f32[1,128], index: 11, kind: input, shape index: {}]
  %s12 = inlined_call_operand.vmem [shape: f32[128,16], index: 12, kind: input, shape index: {}]
  %s13 = inlined_call_operand.vmem [shape: f32[16,128], index: 13, kind: input, shape index: {}]
  %s14 = inlined_call_operand.vmem [shape: bf16[128,128], index: 14, kind: input, shape index: {}]
  %s15 = inlined_call_operand.vmem [shape: f32[1,128], index: 15, kind: input, shape index: {}]
  %s16 = inlined_call_operand.vmem [shape: bf16[64,128], index: 16, kind: input, shape index: {}]
  %s17 = inlined_call_operand.vmem [shape: f32[1,128], index: 17, kind: input, shape index: {}]
  %s18 = inlined_call_operand.hbm [shape: f32[128,128], index: 18, kind: output, shape index: {}]
  %s19 = sld [smem:[#allocation0]]
  $region105: #{tpu_custom_call.1} parent=0
    _
  %s21 = ssub.s32 1, %s19
  %s22 = scalar_select 0, %s21, %s19
  $region1: #{tpu_custom_call.1} parent=0
    #allocation2 [shape = 'u8[65536]{0}', space=vmem, size = 0x10000, scoped, tag = 'output window, operand 0']
    #allocation3 [shape = 's32[2]{0}', space=sflag, size = 0x8, scoped, tag = 'scoped memory for tpu_custom_call.1']
    %23 = vsyncpa [#allocation3], 0
    %s24 = scalar_lea.sflag [#allocation3], 1
    %25 = vsyncpa %s24, 0
    loop: start=0, step=1, limit=4
    $region2: #{tpu_custom_call.1} parent=1 // loop_pre_header
      _
    $region3: #{tpu_custom_call.1} parent=1 // loop_header
      %s27 = sphi 0, %s31
      %p28 = scmp.ge.s32.totalorder %s27, 4
      %s37 = sphi 0, %s39
      %s40 = sphi 0, %s37
      %s41 = sphi 0, %s40
      %s57 = sphi 0, %s41
      %s63 = sphi 0, %s65
      %s66 = sphi 0, %s63
      %s67 = sphi 0, %s66
      %s83 = sphi 0, %s67
      %s87 = sphi 0, %s87
      %s89 = sphi 0, %s87
      %s90 = sphi 0, %s89
      %s104 = sphi 0, %s90
      %s108 = sphi 0, %s108
      %s110 = sphi 0, %s108
      %s111 = sphi 0, %s110
      %s125 = sphi 0, %s111
      %s129 = sphi 0, %s129
      %s131 = sphi 0, %s129
      %s132 = sphi 0, %s131
      %s146 = sphi 0, %s132
      %s150 = sphi 0, %s150
      %s152 = sphi 0, %s150
      %s153 = sphi 0, %s152
      %s167 = sphi 0, %s153
      %s171 = sphi 0, %s171
      %s173 = sphi 0, %s171
      %s174 = sphi 0, %s173
      %s188 = sphi 0, %s174
      %s192 = sphi 0, %s192
      %s194 = sphi 0, %s192
      %s195 = sphi 0, %s194
      %s209 = sphi 0, %s195
      %s213 = sphi 0, %s213
      %s215 = sphi 0, %s213
      %s216 = sphi 0, %s215
      %s230 = sphi 0, %s216
      %s234 = sphi 0, %s234
      %s236 = sphi 0, %s234
      %s237 = sphi 0, %s236
      %s251 = sphi 0, %s237
      %s255 = sphi 0, %s255
      %s257 = sphi 0, %s255
      %s258 = sphi 0, %s257
      %s272 = sphi 0, %s258
      %s276 = sphi 0, %s276
      %s278 = sphi 0, %s276
      %s279 = sphi 0, %s278
      %s293 = sphi 0, %s279
      %s297 = sphi 0, %s297
      %s299 = sphi 0, %s297
      %s300 = sphi 0, %s299
      %s314 = sphi 0, %s300
      %s318 = sphi 0, %s318
      %s320 = sphi 0, %s318
      %s321 = sphi 0, %s320
      %s335 = sphi 0, %s321
      %s339 = sphi 0, %s339
      %s341 = sphi 0, %s339
      %s342 = sphi 0, %s341
      %s356 = sphi 0, %s342
      %s360 = sphi 0, %s360
      %s362 = sphi 0, %s360
      %s363 = sphi 0, %s362
      %s377 = sphi 0, %s363
      %s381 = sphi 0, %s381
      %s383 = sphi 0, %s381
      %s384 = sphi 0, %s383
      %s398 = sphi 0, %s384
      %s402 = sphi 0, %s402
      %s404 = sphi 0, %s402
      %s405 = sphi 0, %s404
      %s419 = sphi 0, %s405
      %s425 = sphi 0, %s427
      %s428 = sphi 0, %s425
      %s429 = sphi 0, %s428
      %s445 = sphi 0, %s429
    $region4: #{tpu_custom_call.1} parent=1 // loop_header_branch
      %30 = sbr.rel (%p28) target = $region8
    $region5: #{tpu_custom_call.1} parent=1 // loop_body
      %s32 = ssub.s32 %s27, 1
      %s33 = ssub.s32 %s27, 2
      %s34 = sadd.s32 %s27, 1
      %s35 = ssub.s32 %s27, %s34
      %p36 = scmp.eq.s32.totalorder %s35, 0
      %s38 = sadd.s32 %s37, 1
      %s39 = scalar_select %p36, %s37, %s38
      %p42 = pneg %p36
      %p43 = scmp.eq.s32.totalorder %s27, 1
      %p44 = por %p42, %p43
      %p45 = scmp.ne.s32.totalorder %s37, %s40
      %p46 = scmp.eq.s32.totalorder %s27, 0
      %p47 = por %p45, %p46
      %p48 = scmp.ne.s32.totalorder %s37, %s40
      %p49 = scmp.eq.s32.totalorder %s32, 1
      %p50 = por %p48, %p49
      %p51 = scmp.ne.s32.totalorder %s40, %s41
      %p52 = scmp.eq.s32.totalorder %s32, 0
      %p53 = por %p51, %p52
      %p54 = scmp.ne.s32.totalorder %s40, %s41
      %p55 = scmp.eq.s32.totalorder %s33, 1
      %p56 = por %p54, %p55
      %p58 = scmp.ne.s32.totalorder %s41, %s57
      %p59 = scmp.eq.s32.totalorder %s33, 0
      %p60 = por %p58, %p59
      %s61 = ssub.s32 %s27, %s34
      %p62 = scmp.eq.s32.totalorder %s61, 0
      %s64 = sadd.s32 %s63, 1
      %s65 = scalar_select %p62, %s63, %s64
      %p68 = pneg %p62
      %p69 = scmp.eq.s32.totalorder %s27, 1
      %p70 = por %p68, %p69
      %p71 = scmp.ne.s32.totalorder %s63, %s66
      %p72 = scmp.eq.s32.totalorder %s27, 0
      %p73 = por %p71, %p72
      %p74 = scmp.ne.s32.totalorder %s63, %s66
      %p75 = scmp.eq.s32.totalorder %s32, 1
      %p76 = por %p74, %p75
      %p77 = scmp.ne.s32.totalorder %s66, %s67
      %p78 = scmp.eq.s32.totalorder %s32, 0
      %p79 = por %p77, %p78
      %p80 = scmp.ne.s32.totalorder %s66, %s67
      %p81 = scmp.eq.s32.totalorder %s33, 1
      %p82 = por %p80, %p81
      %p84 = scmp.ne.s32.totalorder %s67, %s83
      %p85 = scmp.eq.s32.totalorder %s33, 0
      %p86 = por %p84, %p85
      %s88 = sadd.s32 %s87, 1
      %p91 = scmp.eq.s32.totalorder %s27, 1
      %p92 = scmp.ne.s32.totalorder %s87, %s89
      %p93 = scmp.eq.s32.totalorder %s27, 0
      %p94 = por %p92, %p93
      %p95 = scmp.ne.s32.totalorder %s87, %s89
      %p96 = scmp.eq.s32.totalorder %s32, 1
      %p97 = por %p95, %p96
      %p98 = scmp.ne.s32.totalorder %s89, %s90
      %p99 = scmp.eq.s32.totalorder %s32, 0
      %p100 = por %p98, %p99
      %p101 = scmp.ne.s32.totalorder %s89, %s90
      %p102 = scmp.eq.s32.totalorder %s33, 1
      %p103 = por %p101, %p102
      %p105 = scmp.ne.s32.totalorder %s90, %s104
      %p106 = scmp.eq.s32.totalorder %s33, 0
      %p107 = por %p105, %p106
      %s109 = sadd.s32 %s108, 1
      %p112 = scmp.eq.s32.totalorder %s27, 1
      %p113 = scmp.ne.s32.totalorder %s108, %s110
      %p114 = scmp.eq.s32.totalorder %s27, 0
      %p115 = por %p113, %p114
      %p116 = scmp.ne.s32.totalorder %s108, %s110
      %p117 = scmp.eq.s32.totalorder %s32, 1
      %p118 = por %p116, %p117
      %p119 = scmp.ne.s32.totalorder %s110, %s111
      %p120 = scmp.eq.s32.totalorder %s32, 0
      %p121 = por %p119, %p120
      %p122 = scmp.ne.s32.totalorder %s110, %s111
      %p123 = scmp.eq.s32.totalorder %s33, 1
      %p124 = por %p122, %p123
      %p126 = scmp.ne.s32.totalorder %s111, %s125
      %p127 = scmp.eq.s32.totalorder %s33, 0
      %p128 = por %p126, %p127
      %s130 = sadd.s32 %s129, 1
      %p133 = scmp.eq.s32.totalorder %s27, 1
      %p134 = scmp.ne.s32.totalorder %s129, %s131
      %p135 = scmp.eq.s32.totalorder %s27, 0
      %p136 = por %p134, %p135
      %p137 = scmp.ne.s32.totalorder %s129, %s131
      %p138 = scmp.eq.s32.totalorder %s32, 1
      %p139 = por %p137, %p138
      %p140 = scmp.ne.s32.totalorder %s131, %s132
      %p141 = scmp.eq.s32.totalorder %s32, 0
      %p142 = por %p140, %p141
      %p143 = scmp.ne.s32.totalorder %s131, %s132
      %p144 = scmp.eq.s32.totalorder %s33, 1
      %p145 = por %p143, %p144
      %p147 = scmp.ne.s32.totalorder %s132, %s146
      %p148 = scmp.eq.s32.totalorder %s33, 0
      %p149 = por %p147, %p148
      %s151 = sadd.s32 %s150, 1
      %p154 = scmp.eq.s32.totalorder %s27, 1
      %p155 = scmp.ne.s32.totalorder %s150, %s152
      %p156 = scmp.eq.s32.totalorder %s27, 0
      %p157 = por %p155, %p156
      %p158 = scmp.ne.s32.totalorder %s150, %s152
      %p159 = scmp.eq.s32.totalorder %s32, 1
      %p160 = por %p158, %p159
      %p161 = scmp.ne.s32.totalorder %s152, %s153
      %p162 = scmp.eq.s32.totalorder %s32, 0
      %p163 = por %p161, %p162
      %p164 = scmp.ne.s32.totalorder %s152, %s153
      %p165 = scmp.eq.s32.totalorder %s33, 1
      %p166 = por %p164, %p165
      %p168 = scmp.ne.s32.totalorder %s153, %s167
      %p169 = scmp.eq.s32.totalorder %s33, 0
      %p170 = por %p168, %p169
      %s172 = sadd.s32 %s171, 1
      %p175 = scmp.eq.s32.totalorder %s27, 1
      %p176 = scmp.ne.s32.totalorder %s171, %s173
      %p177 = scmp.eq.s32.totalorder %s27, 0
      %p178 = por %p176, %p177
      %p179 = scmp.ne.s32.totalorder %s171, %s173
      %p180 = scmp.eq.s32.totalorder %s32, 1
      %p181 = por %p179, %p180
      %p182 = scmp.ne.s32.totalorder %s173, %s174
      %p183 = scmp.eq.s32.totalorder %s32, 0
      %p184 = por %p182, %p183
      %p185 = scmp.ne.s32.totalorder %s173, %s174
      %p186 = scmp.eq.s32.totalorder %s33, 1
      %p187 = por %p185, %p186
      %p189 = scmp.ne.s32.totalorder %s174, %s188
      %p190 = scmp.eq.s32.totalorder %s33, 0
      %p191 = por %p189, %p190
      %s193 = sadd.s32 %s192, 1
      %p196 = scmp.eq.s32.totalorder %s27, 1
      %p197 = scmp.ne.s32.totalorder %s192, %s194
      %p198 = scmp.eq.s32.totalorder %s27, 0
      %p199 = por %p197, %p198
      %p200 = scmp.ne.s32.totalorder %s192, %s194
      %p201 = scmp.eq.s32.totalorder %s32, 1
      %p202 = por %p200, %p201
      %p203 = scmp.ne.s32.totalorder %s194, %s195
      %p204 = scmp.eq.s32.totalorder %s32, 0
      %p205 = por %p203, %p204
      %p206 = scmp.ne.s32.totalorder %s194, %s195
      %p207 = scmp.eq.s32.totalorder %s33, 1
      %p208 = por %p206, %p207
      %p210 = scmp.ne.s32.totalorder %s195, %s209
      %p211 = scmp.eq.s32.totalorder %s33, 0
      %p212 = por %p210, %p211
      %s214 = sadd.s32 %s213, 1
      %p217 = scmp.eq.s32.totalorder %s27, 1
      %p218 = scmp.ne.s32.totalorder %s213, %s215
      %p219 = scmp.eq.s32.totalorder %s27, 0
      %p220 = por %p218, %p219
      %p221 = scmp.ne.s32.totalorder %s213, %s215
      %p222 = scmp.eq.s32.totalorder %s32, 1
      %p223 = por %p221, %p222
      %p224 = scmp.ne.s32.totalorder %s215, %s216
      %p225 = scmp.eq.s32.totalorder %s32, 0
      %p226 = por %p224, %p225
      %p227 = scmp.ne.s32.totalorder %s215, %s216
      %p228 = scmp.eq.s32.totalorder %s33, 1
      %p229 = por %p227, %p228
      %p231 = scmp.ne.s32.totalorder %s216, %s230
      %p232 = scmp.eq.s32.totalorder %s33, 0
      %p233 = por %p231, %p232
      %s235 = sadd.s32 %s234, 1
      %p238 = scmp.eq.s32.totalorder %s27, 1
      %p239 = scmp.ne.s32.totalorder %s234, %s236
      %p240 = scmp.eq.s32.totalorder %s27, 0
      %p241 = por %p239, %p240
      %p242 = scmp.ne.s32.totalorder %s234, %s236
      %p243 = scmp.eq.s32.totalorder %s32, 1
      %p244 = por %p242, %p243
      %p245 = scmp.ne.s32.totalorder %s236, %s237
      %p246 = scmp.eq.s32.totalorder %s32, 0
      %p247 = por %p245, %p246
      %p248 = scmp.ne.s32.totalorder %s236, %s237
      %p249 = scmp.eq.s32.totalorder %s33, 1
      %p250 = por %p248, %p249
      %p252 = scmp.ne.s32.totalorder %s237, %s251
      %p253 = scmp.eq.s32.totalorder %s33, 0
      %p254 = por %p252, %p253
      %s256 = sadd.s32 %s255, 1
      %p259 = scmp.eq.s32.totalorder %s27, 1
      %p260 = scmp.ne.s32.totalorder %s255, %s257
      %p261 = scmp.eq.s32.totalorder %s27, 0
      %p262 = por %p260, %p261
      %p263 = scmp.ne.s32.totalorder %s255, %s257
      %p264 = scmp.eq.s32.totalorder %s32, 1
      %p265 = por %p263, %p264
      %p266 = scmp.ne.s32.totalorder %s257, %s258
      %p267 = scmp.eq.s32.totalorder %s32, 0
      %p268 = por %p266, %p267
      %p269 = scmp.ne.s32.totalorder %s257, %s258
      %p270 = scmp.eq.s32.totalorder %s33, 1
      %p271 = por %p269, %p270
      %p273 = scmp.ne.s32.totalorder %s258, %s272
      %p274 = scmp.eq.s32.totalorder %s33, 0
      %p275 = por %p273, %p274
      %s277 = sadd.s32 %s276, 1
      %p280 = scmp.eq.s32.totalorder %s27, 1
      %p281 = scmp.ne.s32.totalorder %s276, %s278
      %p282 = scmp.eq.s32.totalorder %s27, 0
      %p283 = por %p281, %p282
      %p284 = scmp.ne.s32.totalorder %s276, %s278
      %p285 = scmp.eq.s32.totalorder %s32, 1
      %p286 = por %p284, %p285
      %p287 = scmp.ne.s32.totalorder %s278, %s279
      %p288 = scmp.eq.s32.totalorder %s32, 0
      %p289 = por %p287, %p288
      %p290 = scmp.ne.s32.totalorder %s278, %s279
      %p291 = scmp.eq.s32.totalorder %s33, 1
      %p292 = por %p290, %p291
      %p294 = scmp.ne.s32.totalorder %s279, %s293
      %p295 = scmp.eq.s32.totalorder %s33, 0
      %p296 = por %p294, %p295
      %s298 = sadd.s32 %s297, 1
      %p301 = scmp.eq.s32.totalorder %s27, 1
      %p302 = scmp.ne.s32.totalorder %s297, %s299
      %p303 = scmp.eq.s32.totalorder %s27, 0
      %p304 = por %p302, %p303
      %p305 = scmp.ne.s32.totalorder %s297, %s299
      %p306 = scmp.eq.s32.totalorder %s32, 1
      %p307 = por %p305, %p306
      %p308 = scmp.ne.s32.totalorder %s299, %s300
      %p309 = scmp.eq.s32.totalorder %s32, 0
      %p310 = por %p308, %p309
      %p311 = scmp.ne.s32.totalorder %s299, %s300
      %p312 = scmp.eq.s32.totalorder %s33, 1
      %p313 = por %p311, %p312
      %p315 = scmp.ne.s32.totalorder %s300, %s314
      %p316 = scmp.eq.s32.totalorder %s33, 0
      %p317 = por %p315, %p316
      %s319 = sadd.s32 %s318, 1
      %p322 = scmp.eq.s32.totalorder %s27, 1
      %p323 = scmp.ne.s32.totalorder %s318, %s320
      %p324 = scmp.eq.s32.totalorder %s27, 0
      %p325 = por %p323, %p324
      %p326 = scmp.ne.s32.totalorder %s318, %s320
      %p327 = scmp.eq.s32.totalorder %s32, 1
      %p328 = por %p326, %p327
      %p329 = scmp.ne.s32.totalorder %s320, %s321
      %p330 = scmp.eq.s32.totalorder %s32, 0
      %p331 = por %p329, %p330
      %p332 = scmp.ne.s32.totalorder %s320, %s321
      %p333 = scmp.eq.s32.totalorder %s33, 1
      %p334 = por %p332, %p333
      %p336 = scmp.ne.s32.totalorder %s321, %s335
      %p337 = scmp.eq.s32.totalorder %s33, 0
      %p338 = por %p336, %p337
      %s340 = sadd.s32 %s339, 1
      %p343 = scmp.eq.s32.totalorder %s27, 1
      %p344 = scmp.ne.s32.totalorder %s339, %s341
      %p345 = scmp.eq.s32.totalorder %s27, 0
      %p346 = por %p344, %p345
      %p347 = scmp.ne.s32.totalorder %s339, %s341
      %p348 = scmp.eq.s32.totalorder %s32, 1
      %p349 = por %p347, %p348
      %p350 = scmp.ne.s32.totalorder %s341, %s342
      %p351 = scmp.eq.s32.totalorder %s32, 0
      %p352 = por %p350, %p351
      %p353 = scmp.ne.s32.totalorder %s341, %s342
      %p354 = scmp.eq.s32.totalorder %s33, 1
      %p355 = por %p353, %p354
      %p357 = scmp.ne.s32.totalorder %s342, %s356
      %p358 = scmp.eq.s32.totalorder %s33, 0
      %p359 = por %p357, %p358
      %s361 = sadd.s32 %s360, 1
      %p364 = scmp.eq.s32.totalorder %s27, 1
      %p365 = scmp.ne.s32.totalorder %s360, %s362
      %p366 = scmp.eq.s32.totalorder %s27, 0
      %p367 = por %p365, %p366
      %p368 = scmp.ne.s32.totalorder %s360, %s362
      %p369 = scmp.eq.s32.totalorder %s32, 1
      %p370 = por %p368, %p369
      %p371 = scmp.ne.s32.totalorder %s362, %s363
      %p372 = scmp.eq.s32.totalorder %s32, 0
      %p373 = por %p371, %p372
      %p374 = scmp.ne.s32.totalorder %s362, %s363
      %p375 = scmp.eq.s32.totalorder %s33, 1
      %p376 = por %p374, %p375
      %p378 = scmp.ne.s32.totalorder %s363, %s377
      %p379 = scmp.eq.s32.totalorder %s33, 0
      %p380 = por %p378, %p379
      %s382 = sadd.s32 %s381, 1
      %p385 = scmp.eq.s32.totalorder %s27, 1
      %p386 = scmp.ne.s32.totalorder %s381, %s383
      %p387 = scmp.eq.s32.totalorder %s27, 0
      %p388 = por %p386, %p387
      %p389 = scmp.ne.s32.totalorder %s381, %s383
      %p390 = scmp.eq.s32.totalorder %s32, 1
      %p391 = por %p389, %p390
      %p392 = scmp.ne.s32.totalorder %s383, %s384
      %p393 = scmp.eq.s32.totalorder %s32, 0
      %p394 = por %p392, %p393
      %p395 = scmp.ne.s32.totalorder %s383, %s384
      %p396 = scmp.eq.s32.totalorder %s33, 1
      %p397 = por %p395, %p396
      %p399 = scmp.ne.s32.totalorder %s384, %s398
      %p400 = scmp.eq.s32.totalorder %s33, 0
      %p401 = por %p399, %p400
      %s403 = sadd.s32 %s402, 1
      %p406 = scmp.eq.s32.totalorder %s27, 1
      %p407 = scmp.ne.s32.totalorder %s402, %s404
      %p408 = scmp.eq.s32.totalorder %s27, 0
      %p409 = por %p407, %p408
      %p410 = scmp.ne.s32.totalorder %s402, %s404
      %p411 = scmp.eq.s32.totalorder %s32, 1
      %p412 = por %p410, %p411
      %p413 = scmp.ne.s32.totalorder %s404, %s405
      %p414 = scmp.eq.s32.totalorder %s32, 0
      %p415 = por %p413, %p414
      %p416 = scmp.ne.s32.totalorder %s404, %s405
      %p417 = scmp.eq.s32.totalorder %s33, 1
      %p418 = por %p416, %p417
      %p420 = scmp.ne.s32.totalorder %s405, %s419
      %p421 = scmp.eq.s32.totalorder %s33, 0
      %p422 = por %p420, %p421
      %s423 = ssub.s32 %s27, %s34
      %p424 = scmp.eq.s32.totalorder %s423, 0
      %s426 = sadd.s32 %s425, 1
      %s427 = scalar_select %p424, %s425, %s426
      %p430 = pneg %p424
      %p431 = scmp.eq.s32.totalorder %s27, 1
      %p432 = por %p430, %p431
      %p433 = scmp.ne.s32.totalorder %s425, %s428
      %p434 = scmp.eq.s32.totalorder %s27, 0
      %p435 = por %p433, %p434
      %p436 = scmp.ne.s32.totalorder %s425, %s428
      %p437 = scmp.eq.s32.totalorder %s32, 1
      %p438 = por %p436, %p437
      %p439 = scmp.ne.s32.totalorder %s428, %s429
      %p440 = scmp.eq.s32.totalorder %s32, 0
      %p441 = por %p439, %p440
      %p442 = scmp.ne.s32.totalorder %s428, %s429
      %p443 = scmp.eq.s32.totalorder %s33, 1
      %p444 = por %p442, %p443
      %p446 = scmp.ne.s32.totalorder %s429, %s445
      %p447 = scmp.eq.s32.totalorder %s33, 0
      %p448 = por %p446, %p447
      %p449 = scmp.le.s32.totalorder 1, %s27
      %p450 = scmp.lt.s32.totalorder %s27, 3
      %p451 = pnand %p449, %p450
      %p452 = pneg %p451
      // Predicated region
      $region9: #{tpu_custom_call.1} parent=5 // pred_check
        _
      $region10: #{tpu_custom_call.1} parent=5 // pred_check_branch
        %454 = sbr.rel (%p451) target = $region12
      $region11: #{tpu_custom_call.1} parent=5 // pred_region
        %s455 = ssub.s32 %s27, 1
        // Predicated region
        $region13: #{tpu_custom_call.1} parent=11 // pred_check
          %p456 = pneg %p100
        $region14: #{tpu_custom_call.1} parent=11 // pred_check_branch
          %458 = sbr.rel (%p456) target = $region16
        $region15: #{tpu_custom_call.1} parent=11 // pred_region
          _
        $region16: #{tpu_custom_call.1} parent=11 // pred_fallthru
          _
        // Predicated region
        $region17: #{tpu_custom_call.1} parent=11 // pred_check
          %p459 = pneg %p121
        $region18: #{tpu_custom_call.1} parent=11 // pred_check_branch
          %461 = sbr.rel (%p459) target = $region20
        $region19: #{tpu_custom_call.1} parent=11 // pred_region
          _
        $region20: #{tpu_custom_call.1} parent=11 // pred_fallthru
          _
        // Predicated region
        $region21: #{tpu_custom_call.1} parent=11 // pred_check
          %p462 = pneg %p142
        $region22: #{tpu_custom_call.1} parent=11 // pred_check_branch
          %464 = sbr.rel (%p462) target = $region24
        $region23: #{tpu_custom_call.1} parent=11 // pred_region
          _
        $region24: #{tpu_custom_call.1} parent=11 // pred_fallthru
          _
        // Predicated region
        $region25: #{tpu_custom_call.1} parent=11 // pred_check
          %p465 = pneg %p163
        $region26: #{tpu_custom_call.1} parent=11 // pred_check_branch
          %467 = sbr.rel (%p465) target = $region28
        $region27: #{tpu_custom_call.1} parent=11 // pred_region
          _
        $region28: #{tpu_custom_call.1} parent=11 // pred_fallthru
          _
        // Predicated region
        $region29: #{tpu_custom_call.1} parent=11 // pred_check
          %p468 = pneg %p184
        $region30: #{tpu_custom_call.1} parent=11 // pred_check_branch
          %470 = sbr.rel (%p468) target = $region32
        $region31: #{tpu_custom_call.1} parent=11 // pred_region
          _
        $region32: #{tpu_custom_call.1} parent=11 // pred_fallthru
          _
        // Predicated region
        $region33: #{tpu_custom_call.1} parent=11 // pred_check
          %p471 = pneg %p205
        $region34: #{tpu_custom_call.1} parent=11 // pred_check_branch
          %473 = sbr.rel (%p471) target = $region36
        $region35: #{tpu_custom_call.1} parent=11 // pred_region
          _
        $region36: #{tpu_custom_call.1} parent=11 // pred_fallthru
          _
        // Predicated region
        $region37: #{tpu_custom_call.1} parent=11 // pred_check
          %p474 = pneg %p226
        $region38: #{tpu_custom_call.1} parent=11 // pred_check_branch
          %476 = sbr.rel (%p474) target = $region40
        $region39: #{tpu_custom_call.1} parent=11 // pred_region
          _
        $region40: #{tpu_custom_call.1} parent=11 // pred_fallthru
          _
        // Predicated region
        $region41: #{tpu_custom_call.1} parent=11 // pred_check
          %p477 = pneg %p247
        $region42: #{tpu_custom_call.1} parent=11 // pred_check_branch
          %479 = sbr.rel (%p477) target = $region44
        $region43: #{tpu_custom_call.1} parent=11 // pred_region
          _
        $region44: #{tpu_custom_call.1} parent=11 // pred_fallthru
          _
        // Predicated region
        $region45: #{tpu_custom_call.1} parent=11 // pred_check
          %p480 = pneg %p268
        $region46: #{tpu_custom_call.1} parent=11 // pred_check_branch
          %482 = sbr.rel (%p480) target = $region48
        $region47: #{tpu_custom_call.1} parent=11 // pred_region
          _
        $region48: #{tpu_custom_call.1} parent=11 // pred_fallthru
          _
        // Predicated region
        $region49: #{tpu_custom_call.1} parent=11 // pred_check
          %p483 = pneg %p289
        $region50: #{tpu_custom_call.1} parent=11 // pred_check_branch
          %485 = sbr.rel (%p483) target = $region52
        $region51: #{tpu_custom_call.1} parent=11 // pred_region
          _
        $region52: #{tpu_custom_call.1} parent=11 // pred_fallthru
          _
        // Predicated region
        $region53: #{tpu_custom_call.1} parent=11 // pred_check
          %p486 = pneg %p310
        $region54: #{tpu_custom_call.1} parent=11 // pred_check_branch
          %488 = sbr.rel (%p486) target = $region56
        $region55: #{tpu_custom_call.1} parent=11 // pred_region
          _
        $region56: #{tpu_custom_call.1} parent=11 // pred_fallthru
          _
        // Predicated region
        $region57: #{tpu_custom_call.1} parent=11 // pred_check
          %p489 = pneg %p331
        $region58: #{tpu_custom_call.1} parent=11 // pred_check_branch
          %491 = sbr.rel (%p489) target = $region60
        $region59: #{tpu_custom_call.1} parent=11 // pred_region
          _
        $region60: #{tpu_custom_call.1} parent=11 // pred_fallthru
          _
        // Predicated region
        $region61: #{tpu_custom_call.1} parent=11 // pred_check
          %p492 = pneg %p352
        $region62: #{tpu_custom_call.1} parent=11 // pred_check_branch
          %494 = sbr.rel (%p492) target = $region64
        $region63: #{tpu_custom_call.1} parent=11 // pred_region
          _
        $region64: #{tpu_custom_call.1} parent=11 // pred_fallthru
          _
        // Predicated region
        $region65: #{tpu_custom_call.1} parent=11 // pred_check
          %p495 = pneg %p373
        $region66: #{tpu_custom_call.1} parent=11 // pred_check_branch
          %497 = sbr.rel (%p495) target = $region68
        $region67: #{tpu_custom_call.1} parent=11 // pred_region
          _
        $region68: #{tpu_custom_call.1} parent=11 // pred_fallthru
          _
        // Predicated region
        $region69: #{tpu_custom_call.1} parent=11 // pred_check
          %p498 = pneg %p394
        $region70: #{tpu_custom_call.1} parent=11 // pred_check_branch
          %500 = sbr.rel (%p498) target = $region72
        $region71: #{tpu_custom_call.1} parent=11 // pred_region
          _
        $region72: #{tpu_custom_call.1} parent=11 // pred_fallthru
          _
        // Predicated region
        $region73: #{tpu_custom_call.1} parent=11 // pred_check
          %p501 = pneg %p415
        $region74: #{tpu_custom_call.1} parent=11 // pred_check_branch
          %503 = sbr.rel (%p501) target = $region76
        $region75: #{tpu_custom_call.1} parent=11 // pred_region
          _
        $region76: #{tpu_custom_call.1} parent=11 // pred_fallthru
          _
      $region12: #{tpu_custom_call.1} parent=5 // pred_fallthru
        _
      %p504 = scmp.lt.s32.totalorder %s27, 2
      // Predicated region
      $region77: #{tpu_custom_call.1} parent=5 // pred_check
        %p505 = pneg %p504
      $region78: #{tpu_custom_call.1} parent=5 // pred_check_branch
        %507 = sbr.rel (%p505) target = $region80
      $region79: #{tpu_custom_call.1} parent=5 // pred_region
        // Predicated region
        $region81: #{tpu_custom_call.1} parent=79 // pred_check
          %p508 = pneg %p47
        $region82: #{tpu_custom_call.1} parent=79 // pred_check_branch
          %510 = sbr.rel (%p508) target = $region84
        $region83: #{tpu_custom_call.1} parent=79 // pred_region
          %s511 = smul.u32 8, %s27
          %p512 = scmp.lt.s32.totalorder %s511, 15
          %s513 = scalar_select %p512, %s511, 15
          %s514 = smul.addr %s513, 8
          %s515 = scalar_lea.vmem %s0, %s514
          %s516 = smul.u32 8, %s27
        $region84: #{tpu_custom_call.1} parent=79 // pred_fallthru
          _
        // Predicated region
        $region85: #{tpu_custom_call.1} parent=79 // pred_check
          %p517 = pneg %p73
        $region86: #{tpu_custom_call.1} parent=79 // pred_check_branch
          %519 = sbr.rel (%p517) target = $region88
        $region87: #{tpu_custom_call.1} parent=79 // pred_region
          %s520 = smul.u32 8, %s27
          %p521 = scmp.lt.s32.totalorder %s520, 15
          %s522 = scalar_select %p521, %s520, 15
          %s523 = smul.addr %s522, 8
          %s524 = scalar_lea.vmem %s1, %s523
          %s525 = smul.u32 8, %s27
        $region88: #{tpu_custom_call.1} parent=79 // pred_fallthru
          _
      $region80: #{tpu_custom_call.1} parent=5 // pred_fallthru
        _
      %p526 = scmp.le.s32.totalorder 1, %s27
      %p527 = scmp.lt.s32.totalorder %s27, 3
      %p528 = pnand %p526, %p527
      %p529 = pneg %p528
      // Predicated region
      $region89: #{tpu_custom_call.1} parent=5 // pred_check
        _
      $region90: #{tpu_custom_call.1} parent=5 // pred_check_branch
        %531 = sbr.rel (%p528) target = $region92
      $region91: #{tpu_custom_call.1} parent=5 // pred_region
        %s532 = ssub.s32 %s27, 1
        %s533 = smul.u32 8, %s32
        %p534 = scmp.lt.s32.totalorder %s533, 15
        %s535 = scalar_select %p534, %s533, 15
        %s536 = smul.addr %s535, 8
        %s537 = scalar_lea.vmem %s0, %s536
        %p538 = pneg %p53
        %p539 = pneg %p50
        %s540 = smul.u32 8, %s32
        %p541 = scmp.lt.s32.totalorder %s540, 15
        %s542 = scalar_select %p541, %s540, 15
        %s543 = smul.addr %s542, 8
        %s544 = scalar_lea.vmem %s1, %s543
        %p545 = pneg %p79
        %p546 = pneg %p76
        %p547 = pneg %p100
        %p548 = pneg %p97
        %p549 = pneg %p121
        %p550 = pneg %p118
        %p551 = pneg %p142
        %p552 = pneg %p139
        %p553 = pneg %p163
        %p554 = pneg %p160
        %p555 = pneg %p184
        %p556 = pneg %p181
        %p557 = pneg %p205
        %p558 = pneg %p202
        %p559 = pneg %p226
        %p560 = pneg %p223
        %p561 = pneg %p247
        %p562 = pneg %p244
        %p563 = pneg %p268
        %p564 = pneg %p265
        %p565 = pneg %p289
        %p566 = pneg %p286
        %p567 = pneg %p310
        %p568 = pneg %p307
        %p569 = pneg %p331
        %p570 = pneg %p328
        %p571 = pneg %p352
        %p572 = pneg %p349
        %p573 = pneg %p373
        %p574 = pneg %p370
        %p575 = pneg %p394
        %p576 = pneg %p391
        %p577 = pneg %p415
        %p578 = pneg %p412
        %p579 = pneg %p441
        %p580 = pneg %p438
        %s581 = sand.u32 %s428, 1
        %s582 = scalar_lea.sflag [#allocation3], %s581
        %s583 = sand.u32 %s428, 1
        %s584 = smul.addr %s583, 64
        %s585 = scalar_lea.vmem [#allocation2], %s584
        %s586 = smul.u32 8, %s32
        %p587 = scmp.lt.s32.totalorder %s586, 15
        %s588 = scalar_select %p587, %s586, 15
        %s589 = smul.addr %s588, 8
        %s590 = scalar_lea.vmem %s0, %s589
        %s591 = smul.u32 8, %s32
        %s592 = smul.u32 8, %s32
        %p593 = scmp.lt.s32.totalorder %s592, 15
        %s594 = scalar_select %p593, %s592, 15
        %s595 = smul.addr %s594, 8
        %s596 = scalar_lea.vmem %s1, %s595
        %s597 = smul.u32 8, %s32
        %s598 = smul.u32 8, %s32
        %v600 = vld [vmem:[%s590] sm:$0xff]
        %v601 = vld [vmem:[%s590 + $0x8] sm:$0xff]
        %v602 = vld [vmem:[%s590 + $0x10] sm:$0xff]
        %v603 = vld [vmem:[%s590 + $0x18] sm:$0xff]
        %v604 = vld [vmem:[%s590 + $0x20] sm:$0xff]
        %v605 = vld [vmem:[%s590 + $0x28] sm:$0xff]
        %v606 = vld [vmem:[%s590 + $0x30] sm:$0xff]
        %v607 = vld [vmem:[%s590 + $0x38] sm:$0xff]
        %v608 = vld [vmem:[%s596] sm:$0xff]
        %v609 = vld [vmem:[%s596 + $0x8] sm:$0xff]
        %v610 = vld [vmem:[%s596 + $0x10] sm:$0xff]
        %v611 = vld [vmem:[%s596 + $0x18] sm:$0xff]
        %v612 = vld [vmem:[%s596 + $0x20] sm:$0xff]
        %v613 = vld [vmem:[%s596 + $0x28] sm:$0xff]
        %v614 = vld [vmem:[%s596 + $0x30] sm:$0xff]
        %v615 = vld [vmem:[%s596 + $0x38] sm:$0xff]
        %v616 = vpack.c.bf16 %v609, %v608
        %v617 = vpack.c.bf16 %v611, %v610
        %v618 = vpack.c.bf16 %v613, %v612
        %v619 = vpack.c.bf16 %v615, %v614
        %v620 = vld [vmem:[%s8] sm:$0xf]
        %v621 = vld [vmem:[%s8 + $0x4] sm:$0xf]
        %v622 = vld [vmem:[%s8 + $0x8] sm:$0xf]
        %v623 = vld [vmem:[%s8 + $0xc] sm:$0xf]
        %v624 = vld [vmem:[%s9] sm:$0x1]
        %v626 = vlaneseq
        %v627 = vshrl.u32 %v626, 7
        %v628 = vsub.s32 0, %v627
        %v629 = vrot.slane %v624, %v628
        %v635 = vunpack.c.l.b16 %v620
        %v636 = vunpack.c.l.b16 %v621
        %v637 = vunpack.c.l.b16 %v622
        %v638 = vunpack.c.l.b16 %v623
        %v639 = vpack.c.b16 %v636, %v635
        %v640 = vpack.c.b16 %v638, %v637
        %vm643 = vcmask 261120
        %v645 = vsel %vm643, %v616, 0
        %v648 = vsel %vm643, %v617, 0
        %v651 = vsel %vm643, %v618, 0
        %v654 = vsel %vm643, %v619, 0
        %656 = vmatprep.subr.bf16.mxu0 0
        %657 = vmatpush1.bf16.msra.mxu0 0
        %658 = vmatprep.subr.bf16.mxu0 0
        %659 = vmatpush1.bf16.msra.mxu0 0
        %660 = vmatprep.subr.bf16.mxu0 0
        %661 = vmatpush1.bf16.msra.mxu0 0
        %662 = vmatprep.subr.bf16.mxu0 0
        %663 = vmatpush1.bf16.msra.mxu0 0
        %664 = vmatprep.subr.bf16.mxu0 0
        %665 = vmatpush1.bf16.msra.mxu0 0
        %666 = vmatprep.subr.bf16.mxu0 0
        %667 = vmatpush1.bf16.msra.mxu0 0
        %668 = vmatprep.subr.bf16.mxu0 0
        %669 = vmatpush1.bf16.msra.mxu0 %v640
        %670 = vmatprep.subr.bf16.mxu0 0
        %671 = vmatpush1.bf16.msra.mxu0 %v639
        %672 = vmatprep.subr.bf16.mxu0 0
        %673 = vmatpush2.bf16.msra.mxu0 0
        %674 = vmatprep.subr.bf16.mxu0 0
        %675 = vmatpush2.bf16.msra.mxu0 0
        %676 = vmatprep.subr.bf16.mxu0 0
        %677 = vmatpush2.bf16.msra.mxu0 0
        %678 = vmatprep.subr.bf16.mxu0 0
        %679 = vmatpush2.bf16.msra.mxu0 0
        %680 = vmatprep.subr.bf16.mxu0 0
        %681 = vmatpush2.bf16.msra.mxu0 0
        %682 = vmatprep.subr.bf16.mxu0 0
        %683 = vmatpush2.bf16.msra.mxu0 0
        %684 = vmatprep.subr.bf16.mxu0 0
        %685 = vmatpush2.bf16.msra.mxu0 0
        %686 = vmatprep.subr.bf16.mxu0 0
        %687 = vmatpush2.bf16.msra.mxu0 0
        %688 = vmatprep.mubr.bf16.mxu0 0
        %689 = vmatmul.mubr.bf16.gmra.mxu0 %v645
        %v690 = vpop.f32.mrf.mxu0
        %v691 = vadd.f32 %v629, %v690
        %v692 = vpop.f32.mrf.mxu0
        %v693 = vpop.f32.mrf.mxu0
        %v694 = vadd.f32 %v629, %v693
        %v695 = vpop.f32.mrf.mxu0
        %696 = vmatprep.mubr.bf16.mxu0 0
        %697 = vmatmul.mubr.bf16.gmra.mxu0 %v648
        %v698 = vpop.f32.mrf.mxu0
        %v699 = vadd.f32 %v629, %v698
        %v700 = vpop.f32.mrf.mxu0
        %v701 = vpop.f32.mrf.mxu0
        %v702 = vadd.f32 %v629, %v701
        %v703 = vpop.f32.mrf.mxu0
        %704 = vmatprep.mubr.bf16.mxu0 0
        %705 = vmatmul.mubr.bf16.gmra.mxu0 %v651
        %v706 = vpop.f32.mrf.mxu0
        %v707 = vadd.f32 %v629, %v706
        %v708 = vpop.f32.mrf.mxu0
        %v709 = vpop.f32.mrf.mxu0
        %v710 = vadd.f32 %v629, %v709
        %v711 = vpop.f32.mrf.mxu0
        %712 = vmatprep.mubr.bf16.mxu0 0
        %713 = vmatmul.mubr.bf16.gmra.mxu0 %v654
        %v714 = vpop.f32.mrf.mxu0
        %v715 = vadd.f32 %v629, %v714
        %v716 = vpop.f32.mrf.mxu0
        %v717 = vpop.f32.mrf.mxu0
        %v718 = vadd.f32 %v629, %v717
        %v719 = vpop.f32.mrf.mxu0
        %720 = vdwg.mxu0
        %v721 = vld [vmem:[%s2] sm:$0x1]
        %v722 = vld [vmem:[%s3] sm:$0x1]
        %v723 = vld [vmem:[%s4] sm:$0xff]
        %v724 = vld [vmem:[%s4 + $0x8] sm:$0xff]
        %v725 = vld [vmem:[%s4 + $0x10] sm:$0xff]
        %v726 = vld [vmem:[%s4 + $0x18] sm:$0xff]
        %v727 = vld [vmem:[%s4 + $0x20] sm:$0xff]
        %v728 = vld [vmem:[%s4 + $0x28] sm:$0xff]
        %v729 = vld [vmem:[%s4 + $0x30] sm:$0xff]
        %v730 = vld [vmem:[%s4 + $0x38] sm:$0xff]
        %v731 = vld [vmem:[%s5] sm:$0xff]
        %v732 = vld [vmem:[%s5 + $0x8] sm:$0xff]
        %vm733 = vcmask 523264
        %v735 = vsel %vm733, %v600, 0
        %v738 = vsel %vm733, %v601, 0
        %v741 = vsel %vm733, %v602, 0
        %v744 = vsel %vm733, %v603, 0
        %v747 = vsel %vm733, %v604, 0
        %v750 = vsel %vm733, %v605, 0
        %v753 = vsel %vm733, %v606, 0
        %v756 = vsel %vm733, %v607, 0
        %758 = vmatprep.subr.mxu0 0.0
        %759 = vmatpush1.msra.mxu0 0.0
        %760 = vmatprep.subr.mxu0 0.0
        %761 = vmatpush1.msra.mxu0 0.0
        %762 = vmatprep.subr.mxu0 0.0
        %763 = vmatpush1.msra.mxu0 0.0
        %764 = vmatprep.subr.mxu0 0.0
        %765 = vmatpush1.msra.mxu0 0.0
        %766 = vmatprep.subr.mxu0 0.0
        %767 = vmatpush1.msra.mxu0 0.0
        %768 = vmatprep.subr.mxu0 0.0
        %769 = vmatpush1.msra.mxu0 0.0
        %770 = vmatprep.subr.mxu0 0.0
        %771 = vmatpush1.msra.mxu0 0.0
        %772 = vmatprep.subr.mxu0 0.0
        %773 = vmatpush1.msra.mxu0 0.0
        %774 = vmatprep.subr.mxu0 0.0
        %v775 = vand.u32 %v730, 4294901760
        %776 = vmatpush1.msra.mxu0 %v775
        %777 = vmatprep.subr.mxu0 0.0
        %v778 = vand.u32 %v729, 4294901760
        %779 = vmatpush1.msra.mxu0 %v778
        %780 = vmatprep.subr.mxu0 0.0
        %v781 = vand.u32 %v728, 4294901760
        %782 = vmatpush1.msra.mxu0 %v781
        %783 = vmatprep.subr.mxu0 0.0
        %v784 = vand.u32 %v727, 4294901760
        %785 = vmatpush1.msra.mxu0 %v784
        %786 = vmatprep.subr.mxu0 0.0
        %v787 = vand.u32 %v726, 4294901760
        %788 = vmatpush1.msra.mxu0 %v787
        %789 = vmatprep.subr.mxu0 0.0
        %v790 = vand.u32 %v725, 4294901760
        %791 = vmatpush1.msra.mxu0 %v790
        %792 = vmatprep.subr.mxu0 0.0
        %v793 = vand.u32 %v724, 4294901760
        %794 = vmatpush1.msra.mxu0 %v793
        %795 = vmatprep.subr.mxu0 0.0
        %v796 = vand.u32 %v723, 4294901760
        %797 = vmatpush1.msra.mxu0 %v796
        %798 = vmatprep.subr.mxu0 0.0
        %799 = vmatpush2.msra.mxu0 0.0
        %800 = vmatprep.subr.mxu0 0.0
        %801 = vmatpush2.msra.mxu0 0.0
        %802 = vmatprep.subr.mxu0 0.0
        %803 = vmatpush2.msra.mxu0 0.0
        %804 = vmatprep.subr.mxu0 0.0
        %805 = vmatpush2.msra.mxu0 0.0
        %806 = vmatprep.subr.mxu0 0.0
        %807 = vmatpush2.msra.mxu0 0.0
        %808 = vmatprep.subr.mxu0 0.0
        %809 = vmatpush2.msra.mxu0 0.0
        %810 = vmatprep.subr.mxu0 0.0
        %811 = vmatpush2.msra.mxu0 0.0
        %812 = vmatprep.subr.mxu0 0.0
        %813 = vmatpush2.msra.mxu0 0.0
        %814 = vmatprep.subr.mxu0 0.0
        %815 = vmatpush2.msra.mxu0 0.0
        %816 = vmatprep.subr.mxu0 0.0
        %817 = vmatpush2.msra.mxu0 0.0
        %818 = vmatprep.subr.mxu0 0.0
        %819 = vmatpush2.msra.mxu0 0.0
        %820 = vmatprep.subr.mxu0 0.0
        %821 = vmatpush2.msra.mxu0 0.0
        %822 = vmatprep.subr.mxu0 0.0
        %823 = vmatpush2.msra.mxu0 0.0
        %824 = vmatprep.subr.mxu0 0.0
        %825 = vmatpush2.msra.mxu0 0.0
        %826 = vmatprep.subr.mxu0 0.0
        %827 = vmatpush2.msra.mxu0 0.0
        %828 = vmatprep.subr.mxu0 0.0
        %829 = vmatpush2.msra.mxu0 0.0
        %830 = vmatprep.mubr.f32.mxu0 0.0
        %v831 = vand.u32 %v735, 4294901760
        %v832 = vsub.f32 %v735, %v831
        %v833 = vand.u32 %v832, 4294901760
        %v834 = vsub.f32 %v832, %v833
        %v835 = vand.u32 %v834, 4294901760
        %836 = vmatmul.mubr.f32.gmra.mxu0 %v835
        %v837 = vpop.f32.mrf.mxu0
        %v838 = vadd.f32 0.0, %v837
        %v839 = vpop.f32.mrf.mxu0
        %840 = vmatprep.mubr.f32.mxu0 0.0
        %v841 = vand.u32 %v738, 4294901760
        %v842 = vsub.f32 %v738, %v841
        %v843 = vand.u32 %v842, 4294901760
        %v844 = vsub.f32 %v842, %v843
        %v845 = vand.u32 %v844, 4294901760
        %846 = vmatmul.mubr.f32.gmra.mxu0 %v845
        %v847 = vpop.f32.mrf.mxu0
        %v848 = vadd.f32 0.0, %v847
        %v849 = vpop.f32.mrf.mxu0
        %850 = vmatprep.mubr.f32.mxu0 0.0
        %v851 = vand.u32 %v741, 4294901760
        %v852 = vsub.f32 %v741, %v851
        %v853 = vand.u32 %v852, 4294901760
        %v854 = vsub.f32 %v852, %v853
        %v855 = vand.u32 %v854, 4294901760
        %856 = vmatmul.mubr.f32.gmra.mxu0 %v855
        %v857 = vpop.f32.mrf.mxu0
        %v858 = vadd.f32 0.0, %v857
        %v859 = vpop.f32.mrf.mxu0
        %860 = vmatprep.mubr.f32.mxu0 0.0
        %v861 = vand.u32 %v744, 4294901760
        %v862 = vsub.f32 %v744, %v861
        %v863 = vand.u32 %v862, 4294901760
        %v864 = vsub.f32 %v862, %v863
        %v865 = vand.u32 %v864, 4294901760
        %866 = vmatmul.mubr.f32.gmra.mxu0 %v865
        %v867 = vpop.f32.mrf.mxu0
        %v868 = vadd.f32 0.0, %v867
        %v869 = vpop.f32.mrf.mxu0
        %870 = vmatprep.mubr.f32.mxu0 0.0
        %v871 = vand.u32 %v747, 4294901760
        %v872 = vsub.f32 %v747, %v871
        %v873 = vand.u32 %v872, 4294901760
        %v874 = vsub.f32 %v872, %v873
        %v875 = vand.u32 %v874, 4294901760
        %876 = vmatmul.mubr.f32.gmra.mxu0 %v875
        %v877 = vpop.f32.mrf.mxu0
        %v878 = vadd.f32 0.0, %v877
        %v879 = vpop.f32.mrf.mxu0
        %880 = vmatprep.mubr.f32.mxu0 0.0
        %v881 = vand.u32 %v750, 4294901760
        %v882 = vsub.f32 %v750, %v881
        %v883 = vand.u32 %v882, 4294901760
        %v884 = vsub.f32 %v882, %v883
        %v885 = vand.u32 %v884, 4294901760
        %886 = vmatmul.mubr.f32.gmra.mxu0 %v885
        %v887 = vpop.f32.mrf.mxu0
        %v888 = vadd.f32 0.0, %v887
        %v889 = vpop.f32.mrf.mxu0
        %890 = vmatprep.mubr.f32.mxu0 0.0
        %v891 = vand.u32 %v753, 4294901760
        %v892 = vsub.f32 %v753, %v891
        %v893 = vand.u32 %v892, 4294901760
        %v894 = vsub.f32 %v892, %v893
        %v895 = vand.u32 %v894, 4294901760
        %896 = vmatmul.mubr.f32.gmra.mxu0 %v895
        %v897 = vpop.f32.mrf.mxu0
        %v898 = vadd.f32 0.0, %v897
        %v899 = vpop.f32.mrf.mxu0
        %900 = vmatprep.mubr.f32.mxu0 0.0
        %v901 = vand.u32 %v756, 4294901760
        %v902 = vsub.f32 %v756, %v901
        %v903 = vand.u32 %v902, 4294901760
        %v904 = vsub.f32 %v902, %v903
        %v905 = vand.u32 %v904, 4294901760
        %906 = vmatmul.mubr.f32.gmra.mxu0 %v905
        %v907 = vpop.f32.mrf.mxu0
        %v908 = vadd.f32 0.0, %v907
        %v909 = vpop.f32.mrf.mxu0
        %910 = vdwg.mxu0
        %911 = vmatprep.subr.mxu0 0.0
        %912 = vmatpush1.msra.mxu0 0.0
        %913 = vmatprep.subr.mxu0 0.0
        %914 = vmatpush1.msra.mxu0 0.0
        %915 = vmatprep.subr.mxu0 0.0
        %916 = vmatpush1.msra.mxu0 0.0
        %917 = vmatprep.subr.mxu0 0.0
        %918 = vmatpush1.msra.mxu0 0.0
        %919 = vmatprep.subr.mxu0 0.0
        %920 = vmatpush1.msra.mxu0 0.0
        %921 = vmatprep.subr.mxu0 0.0
        %922 = vmatpush1.msra.mxu0 0.0
        %923 = vmatprep.subr.mxu0 0.0
        %924 = vmatpush1.msra.mxu0 0.0
        %925 = vmatprep.subr.mxu0 0.0
        %926 = vmatpush1.msra.mxu0 0.0
        %927 = vmatprep.subr.mxu0 0.0
        %v928 = vand.u32 %v730, 4294901760
        %v929 = vsub.f32 %v730, %v928
        %v930 = vand.u32 %v929, 4294901760
        %v931 = vsub.f32 %v929, %v930
        %v932 = vand.u32 %v931, 4294901760
        %933 = vmatpush1.msra.mxu0 %v932
        %934 = vmatprep.subr.mxu0 0.0
        %v935 = vand.u32 %v729, 4294901760
        %v936 = vsub.f32 %v729, %v935
        %v937 = vand.u32 %v936, 4294901760
        %v938 = vsub.f32 %v936, %v937
        %v939 = vand.u32 %v938, 4294901760
        %940 = vmatpush1.msra.mxu0 %v939
        %941 = vmatprep.subr.mxu0 0.0
        %v942 = vand.u32 %v728, 4294901760
        %v943 = vsub.f32 %v728, %v942
        %v944 = vand.u32 %v943, 4294901760
        %v945 = vsub.f32 %v943, %v944
        %v946 = vand.u32 %v945, 4294901760
        %947 = vmatpush1.msra.mxu0 %v946
        %948 = vmatprep.subr.mxu0 0.0
        %v949 = vand.u32 %v727, 4294901760
        %v950 = vsub.f32 %v727, %v949
        %v951 = vand.u32 %v950, 4294901760
        %v952 = vsub.f32 %v950, %v951
        %v953 = vand.u32 %v952, 4294901760
        %954 = vmatpush1.msra.mxu0 %v953
        %955 = vmatprep.subr.mxu0 0.0
        %v956 = vand.u32 %v726, 4294901760
        %v957 = vsub.f32 %v726, %v956
        %v958 = vand.u32 %v957, 4294901760
        %v959 = vsub.f32 %v957, %v958
        %v960 = vand.u32 %v959, 4294901760
        %961 = vmatpush1.msra.mxu0 %v960
        %962 = vmatprep.subr.mxu0 0.0
        %v963 = vand.u32 %v725, 4294901760
        %v964 = vsub.f32 %v725, %v963
        %v965 = vand.u32 %v964, 4294901760
        %v966 = vsub.f32 %v964, %v965
        %v967 = vand.u32 %v966, 4294901760
        %968 = vmatpush1.msra.mxu0 %v967
        %969 = vmatprep.subr.mxu0 0.0
        %v970 = vand.u32 %v724, 4294901760
        %v971 = vsub.f32 %v724, %v970
        %v972 = vand.u32 %v971, 4294901760
        %v973 = vsub.f32 %v971, %v972
        %v974 = vand.u32 %v973, 4294901760
        %975 = vmatpush1.msra.mxu0 %v974
        %976 = vmatprep.subr.mxu0 0.0
        %v977 = vand.u32 %v723, 4294901760
        %v978 = vsub.f32 %v723, %v977
        %v979 = vand.u32 %v978, 4294901760
        %v980 = vsub.f32 %v978, %v979
        %v981 = vand.u32 %v980, 4294901760
        %982 = vmatpush1.msra.mxu0 %v981
        %983 = vmatprep.subr.mxu0 0.0
        %984 = vmatpush2.msra.mxu0 0.0
        %985 = vmatprep.subr.mxu0 0.0
        %986 = vmatpush2.msra.mxu0 0.0
        %987 = vmatprep.subr.mxu0 0.0
        %988 = vmatpush2.msra.mxu0 0.0
        %989 = vmatprep.subr.mxu0 0.0
        %990 = vmatpush2.msra.mxu0 0.0
        %991 = vmatprep.subr.mxu0 0.0
        %992 = vmatpush2.msra.mxu0 0.0
        %993 = vmatprep.subr.mxu0 0.0
        %994 = vmatpush2.msra.mxu0 0.0
        %995 = vmatprep.subr.mxu0 0.0
        %996 = vmatpush2.msra.mxu0 0.0
        %997 = vmatprep.subr.mxu0 0.0
        %998 = vmatpush2.msra.mxu0 0.0
        %999 = vmatprep.subr.mxu0 0.0
        %1000 = vmatpush2.msra.mxu0 0.0
        %1001 = vmatprep.subr.mxu0 0.0
        %1002 = vmatpush2.msra.mxu0 0.0
        %1003 = vmatprep.subr.mxu0 0.0
        %1004 = vmatpush2.msra.mxu0 0.0
        %1005 = vmatprep.subr.mxu0 0.0
        %1006 = vmatpush2.msra.mxu0 0.0
        %1007 = vmatprep.subr.mxu0 0.0
        %1008 = vmatpush2.msra.mxu0 0.0
        %1009 = vmatprep.subr.mxu0 0.0
        %1010 = vmatpush2.msra.mxu0 0.0
        %1011 = vmatprep.subr.mxu0 0.0
        %1012 = vmatpush2.msra.mxu0 0.0
        %1013 = vmatprep.subr.mxu0 0.0
        %1014 = vmatpush2.msra.mxu0 0.0
        %1015 = vmatprep.mubr.f32.mxu0 0.0
        %v1016 = vand.u32 %v735, 4294901760
        %1017 = vmatmul.mubr.f32.gmra.mxu0 %v1016
        %v1018 = vpop.f32.mrf.mxu0
        %v1019 = vadd.f32 %v838, %v1018
        %v1020 = vpop.f32.mrf.mxu0
        %1021 = vmatprep.mubr.f32.mxu0 0.0
        %v1022 = vand.u32 %v738, 4294901760
        %1023 = vmatmul.mubr.f32.gmra.mxu0 %v1022
        %v1024 = vpop.f32.mrf.mxu0
        %v1025 = vadd.f32 %v848, %v1024
        %v1026 = vpop.f32.mrf.mxu0
        %1027 = vmatprep.mubr.f32.mxu0 0.0
        %v1028 = vand.u32 %v741, 4294901760
        %1029 = vmatmul.mubr.f32.gmra.mxu0 %v1028
        %v1030 = vpop.f32.mrf.mxu0
        %v1031 = vadd.f32 %v858, %v1030
        %v1032 = vpop.f32.mrf.mxu0
        %1033 = vmatprep.mubr.f32.mxu0 0.0
        %v1034 = vand.u32 %v744, 4294901760
        %1035 = vmatmul.mubr.f32.gmra.mxu0 %v1034
        %v1036 = vpop.f32.mrf.mxu0
        %v1037 = vadd.f32 %v868, %v1036
        %v1038 = vpop.f32.mrf.mxu0
        %1039 = vmatprep.mubr.f32.mxu0 0.0
        %v1040 = vand.u32 %v747, 4294901760
        %1041 = vmatmul.mubr.f32.gmra.mxu0 %v1040
        %v1042 = vpop.f32.mrf.mxu0
        %v1043 = vadd.f32 %v878, %v1042
        %v1044 = vpop.f32.mrf.mxu0
        %1045 = vmatprep.mubr.f32.mxu0 0.0
        %v1046 = vand.u32 %v750, 4294901760
        %1047 = vmatmul.mubr.f32.gmra.mxu0 %v1046
        %v1048 = vpop.f32.mrf.mxu0
        %v1049 = vadd.f32 %v888, %v1048
        %v1050 = vpop.f32.mrf.mxu0
        %1051 = vmatprep.mubr.f32.mxu0 0.0
        %v1052 = vand.u32 %v753, 4294901760
        %1053 = vmatmul.mubr.f32.gmra.mxu0 %v1052
        %v1054 = vpop.f32.mrf.mxu0
        %v1055 = vadd.f32 %v898, %v1054
        %v1056 = vpop.f32.mrf.mxu0
        %1057 = vmatprep.mubr.f32.mxu0 0.0
        %v1058 = vand.u32 %v756, 4294901760
        %1059 = vmatmul.mubr.f32.gmra.mxu0 %v1058
        %v1060 = vpop.f32.mrf.mxu0
        %v1061 = vadd.f32 %v908, %v1060
        %v1062 = vpop.f32.mrf.mxu0
        %1063 = vdwg.mxu0
        %1064 = vmatprep.subr.mxu0 0.0
        %1065 = vmatpush1.msra.mxu0 0.0
        %1066 = vmatprep.subr.mxu0 0.0
        %1067 = vmatpush1.msra.mxu0 0.0
        %1068 = vmatprep.subr.mxu0 0.0
        %1069 = vmatpush1.msra.mxu0 0.0
        %1070 = vmatprep.subr.mxu0 0.0
        %1071 = vmatpush1.msra.mxu0 0.0
        %1072 = vmatprep.subr.mxu0 0.0
        %1073 = vmatpush1.msra.mxu0 0.0
        %1074 = vmatprep.subr.mxu0 0.0
        %1075 = vmatpush1.msra.mxu0 0.0
        %1076 = vmatprep.subr.mxu0 0.0
        %1077 = vmatpush1.msra.mxu0 0.0
        %1078 = vmatprep.subr.mxu0 0.0
        %1079 = vmatpush1.msra.mxu0 0.0
        %1080 = vmatprep.subr.mxu0 0.0
        %v1081 = vand.u32 %v730, 4294901760
        %v1082 = vsub.f32 %v730, %v1081
        %1083 = vmatpush1.msra.mxu0 %v1082
        %1084 = vmatprep.subr.mxu0 0.0
        %v1085 = vand.u32 %v729, 4294901760
        %v1086 = vsub.f32 %v729, %v1085
        %1087 = vmatpush1.msra.mxu0 %v1086
        %1088 = vmatprep.subr.mxu0 0.0
        %v1089 = vand.u32 %v728, 4294901760
        %v1090 = vsub.f32 %v728, %v1089
        %1091 = vmatpush1.msra.mxu0 %v1090
        %1092 = vmatprep.subr.mxu0 0.0
        %v1093 = vand.u32 %v727, 4294901760
        %v1094 = vsub.f32 %v727, %v1093
        %1095 = vmatpush1.msra.mxu0 %v1094
        %1096 = vmatprep.subr.mxu0 0.0
        %v1097 = vand.u32 %v726, 4294901760
        %v1098 = vsub.f32 %v726, %v1097
        %1099 = vmatpush1.msra.mxu0 %v1098
        %1100 = vmatprep.subr.mxu0 0.0
        %v1101 = vand.u32 %v725, 4294901760
        %v1102 = vsub.f32 %v725, %v1101
        %1103 = vmatpush1.msra.mxu0 %v1102
        %1104 = vmatprep.subr.mxu0 0.0
        %v1105 = vand.u32 %v724, 4294901760
        %v1106 = vsub.f32 %v724, %v1105
        %1107 = vmatpush1.msra.mxu0 %v1106
        %1108 = vmatprep.subr.mxu0 0.0
        %v1109 = vand.u32 %v723, 4294901760
        %v1110 = vsub.f32 %v723, %v1109
        %1111 = vmatpush1.msra.mxu0 %v1110
        %1112 = vmatprep.subr.mxu0 0.0
        %1113 = vmatpush2.msra.mxu0 0.0
        %1114 = vmatprep.subr.mxu0 0.0
        %1115 = vmatpush2.msra.mxu0 0.0
        %1116 = vmatprep.subr.mxu0 0.0
        %1117 = vmatpush2.msra.mxu0 0.0
        %1118 = vmatprep.subr.mxu0 0.0
        %1119 = vmatpush2.msra.mxu0 0.0
        %1120 = vmatprep.subr.mxu0 0.0
        %1121 = vmatpush2.msra.mxu0 0.0
        %1122 = vmatprep.subr.mxu0 0.0
        %1123 = vmatpush2.msra.mxu0 0.0
        %1124 = vmatprep.subr.mxu0 0.0
        %1125 = vmatpush2.msra.mxu0 0.0
        %1126 = vmatprep.subr.mxu0 0.0
        %1127 = vmatpush2.msra.mxu0 0.0
        %1128 = vmatprep.subr.mxu0 0.0
        %1129 = vmatpush2.msra.mxu0 0.0
        %1130 = vmatprep.subr.mxu0 0.0
        %1131 = vmatpush2.msra.mxu0 0.0
        %1132 = vmatprep.subr.mxu0 0.0
        %1133 = vmatpush2.msra.mxu0 0.0
        %1134 = vmatprep.subr.mxu0 0.0
        %1135 = vmatpush2.msra.mxu0 0.0
        %1136 = vmatprep.subr.mxu0 0.0
        %1137 = vmatpush2.msra.mxu0 0.0
        %1138 = vmatprep.subr.mxu0 0.0
        %1139 = vmatpush2.msra.mxu0 0.0
        %1140 = vmatprep.subr.mxu0 0.0
        %1141 = vmatpush2.msra.mxu0 0.0
        %1142 = vmatprep.subr.mxu0 0.0
        %1143 = vmatpush2.msra.mxu0 0.0
        %1144 = vmatprep.mubr.f32.mxu0 0.0
        %v1145 = vand.u32 %v735, 4294901760
        %v1146 = vsub.f32 %v735, %v1145
        %1147 = vmatmul.mubr.f32.gmra.mxu0 %v1146
        %v1148 = vpop.f32.mrf.mxu0
        %v1149 = vadd.f32 %v1019, %v1148
        %v1150 = vpop.f32.mrf.mxu0
        %1151 = vmatprep.mubr.f32.mxu0 0.0
        %v1152 = vand.u32 %v738, 4294901760
        %v1153 = vsub.f32 %v738, %v1152
        %1154 = vmatmul.mubr.f32.gmra.mxu0 %v1153
        %v1155 = vpop.f32.mrf.mxu0
        %v1156 = vadd.f32 %v1025, %v1155
        %v1157 = vpop.f32.mrf.mxu0
        %1158 = vmatprep.mubr.f32.mxu0 0.0
        %v1159 = vand.u32 %v741, 4294901760
        %v1160 = vsub.f32 %v741, %v1159
        %1161 = vmatmul.mubr.f32.gmra.mxu0 %v1160
        %v1162 = vpop.f32.mrf.mxu0
        %v1163 = vadd.f32 %v1031, %v1162
        %v1164 = vpop.f32.mrf.mxu0
        %1165 = vmatprep.mubr.f32.mxu0 0.0
        %v1166 = vand.u32 %v744, 4294901760
        %v1167 = vsub.f32 %v744, %v1166
        %1168 = vmatmul.mubr.f32.gmra.mxu0 %v1167
        %v1169 = vpop.f32.mrf.mxu0
        %v1170 = vadd.f32 %v1037, %v1169
        %v1171 = vpop.f32.mrf.mxu0
        %1172 = vmatprep.mubr.f32.mxu0 0.0
        %v1173 = vand.u32 %v747, 4294901760
        %v1174 = vsub.f32 %v747, %v1173
        %1175 = vmatmul.mubr.f32.gmra.mxu0 %v1174
        %v1176 = vpop.f32.mrf.mxu0
        %v1177 = vadd.f32 %v1043, %v1176
        %v1178 = vpop.f32.mrf.mxu0
        %1179 = vmatprep.mubr.f32.mxu0 0.0
        %v1180 = vand.u32 %v750, 4294901760
        %v1181 = vsub.f32 %v750, %v1180
        %1182 = vmatmul.mubr.f32.gmra.mxu0 %v1181
        %v1183 = vpop.f32.mrf.mxu0
        %v1184 = vadd.f32 %v1049, %v1183
        %v1185 = vpop.f32.mrf.mxu0
        %1186 = vmatprep.mubr.f32.mxu0 0.0
        %v1187 = vand.u32 %v753, 4294901760
        %v1188 = vsub.f32 %v753, %v1187
        %1189 = vmatmul.mubr.f32.gmra.mxu0 %v1188
        %v1190 = vpop.f32.mrf.mxu0
        %v1191 = vadd.f32 %v1055, %v1190
        %v1192 = vpop.f32.mrf.mxu0
        %1193 = vmatprep.mubr.f32.mxu0 0.0
        %v1194 = vand.u32 %v756, 4294901760
        %v1195 = vsub.f32 %v756, %v1194
        %1196 = vmatmul.mubr.f32.gmra.mxu0 %v1195
        %v1197 = vpop.f32.mrf.mxu0
        %v1198 = vadd.f32 %v1061, %v1197
        %v1199 = vpop.f32.mrf.mxu0
        %1200 = vdwg.mxu0
        %1201 = vmatprep.subr.mxu0 0.0
        %1202 = vmatpush1.msra.mxu0 0.0
        %1203 = vmatprep.subr.mxu0 0.0
        %1204 = vmatpush1.msra.mxu0 0.0
        %1205 = vmatprep.subr.mxu0 0.0
        %1206 = vmatpush1.msra.mxu0 0.0
        %1207 = vmatprep.subr.mxu0 0.0
        %1208 = vmatpush1.msra.mxu0 0.0
        %1209 = vmatprep.subr.mxu0 0.0
        %1210 = vmatpush1.msra.mxu0 0.0
        %1211 = vmatprep.subr.mxu0 0.0
        %1212 = vmatpush1.msra.mxu0 0.0
        %1213 = vmatprep.subr.mxu0 0.0
        %1214 = vmatpush1.msra.mxu0 0.0
        %1215 = vmatprep.subr.mxu0 0.0
        %1216 = vmatpush1.msra.mxu0 0.0
        %1217 = vmatprep.subr.mxu0 0.0
        %v1218 = vand.u32 %v730, 4294901760
        %1219 = vmatpush1.msra.mxu0 %v1218
        %1220 = vmatprep.subr.mxu0 0.0
        %v1221 = vand.u32 %v729, 4294901760
        %1222 = vmatpush1.msra.mxu0 %v1221
        %1223 = vmatprep.subr.mxu0 0.0
        %v1224 = vand.u32 %v728, 4294901760
        %1225 = vmatpush1.msra.mxu0 %v1224
        %1226 = vmatprep.subr.mxu0 0.0
        %v1227 = vand.u32 %v727, 4294901760
        %1228 = vmatpush1.msra.mxu0 %v1227
        %1229 = vmatprep.subr.mxu0 0.0
        %v1230 = vand.u32 %v726, 4294901760
        %1231 = vmatpush1.msra.mxu0 %v1230
        %1232 = vmatprep.subr.mxu0 0.0
        %v1233 = vand.u32 %v725, 4294901760
        %1234 = vmatpush1.msra.mxu0 %v1233
        %1235 = vmatprep.subr.mxu0 0.0
        %v1236 = vand.u32 %v724, 4294901760
        %1237 = vmatpush1.msra.mxu0 %v1236
        %1238 = vmatprep.subr.mxu0 0.0
        %v1239 = vand.u32 %v723, 4294901760
        %1240 = vmatpush1.msra.mxu0 %v1239
        %1241 = vmatprep.subr.mxu0 0.0
        %1242 = vmatpush2.msra.mxu0 0.0
        %1243 = vmatprep.subr.mxu0 0.0
        %1244 = vmatpush2.msra.mxu0 0.0
        %1245 = vmatprep.subr.mxu0 0.0
        %1246 = vmatpush2.msra.mxu0 0.0
        %1247 = vmatprep.subr.mxu0 0.0
        %1248 = vmatpush2.msra.mxu0 0.0
        %1249 = vmatprep.subr.mxu0 0.0
        %1250 = vmatpush2.msra.mxu0 0.0
        %1251 = vmatprep.subr.mxu0 0.0
        %1252 = vmatpush2.msra.mxu0 0.0
        %1253 = vmatprep.subr.mxu0 0.0
        %1254 = vmatpush2.msra.mxu0 0.0
        %1255 = vmatprep.subr.mxu0 0.0
        %1256 = vmatpush2.msra.mxu0 0.0
        %1257 = vmatprep.subr.mxu0 0.0
        %1258 = vmatpush2.msra.mxu0 0.0
        %1259 = vmatprep.subr.mxu0 0.0
        %1260 = vmatpush2.msra.mxu0 0.0
        %1261 = vmatprep.subr.mxu0 0.0
        %1262 = vmatpush2.msra.mxu0 0.0
        %1263 = vmatprep.subr.mxu0 0.0
        %1264 = vmatpush2.msra.mxu0 0.0
        %1265 = vmatprep.subr.mxu0 0.0
        %1266 = vmatpush2.msra.mxu0 0.0
        %1267 = vmatprep.subr.mxu0 0.0
        %1268 = vmatpush2.msra.mxu0 0.0
        %1269 = vmatprep.subr.mxu0 0.0
        %1270 = vmatpush2.msra.mxu0 0.0
        %1271 = vmatprep.subr.mxu0 0.0
        %1272 = vmatpush2.msra.mxu0 0.0
        %1273 = vmatprep.mubr.f32.mxu0 0.0
        %v1274 = vand.u32 %v735, 4294901760
        %v1275 = vsub.f32 %v735, %v1274
        %v1276 = vand.u32 %v1275, 4294901760
        %1277 = vmatmul.mubr.f32.gmra.mxu0 %v1276
        %v1278 = vpop.f32.mrf.mxu0
        %v1279 = vadd.f32 %v1149, %v1278
        %v1280 = vpop.f32.mrf.mxu0
        %1281 = vmatprep.mubr.f32.mxu0 0.0
        %v1282 = vand.u32 %v738, 4294901760
        %v1283 = vsub.f32 %v738, %v1282
        %v1284 = vand.u32 %v1283, 4294901760
        %1285 = vmatmul.mubr.f32.gmra.mxu0 %v1284
        %v1286 = vpop.f32.mrf.mxu0
        %v1287 = vadd.f32 %v1156, %v1286
        %v1288 = vpop.f32.mrf.mxu0
        %1289 = vmatprep.mubr.f32.mxu0 0.0
        %v1290 = vand.u32 %v741, 4294901760
        %v1291 = vsub.f32 %v741, %v1290
        %v1292 = vand.u32 %v1291, 4294901760
        %1293 = vmatmul.mubr.f32.gmra.mxu0 %v1292
        %v1294 = vpop.f32.mrf.mxu0
        %v1295 = vadd.f32 %v1163, %v1294
        %v1296 = vpop.f32.mrf.mxu0
        %1297 = vmatprep.mubr.f32.mxu0 0.0
        %v1298 = vand.u32 %v744, 4294901760
        %v1299 = vsub.f32 %v744, %v1298
        %v1300 = vand.u32 %v1299, 4294901760
        %1301 = vmatmul.mubr.f32.gmra.mxu0 %v1300
        %v1302 = vpop.f32.mrf.mxu0
        %v1303 = vadd.f32 %v1170, %v1302
        %v1304 = vpop.f32.mrf.mxu0
        %1305 = vmatprep.mubr.f32.mxu0 0.0
        %v1306 = vand.u32 %v747, 4294901760
        %v1307 = vsub.f32 %v747, %v1306
        %v1308 = vand.u32 %v1307, 4294901760
        %1309 = vmatmul.mubr.f32.gmra.mxu0 %v1308
        %v1310 = vpop.f32.mrf.mxu0
        %v1311 = vadd.f32 %v1177, %v1310
        %v1312 = vpop.f32.mrf.mxu0
        %1313 = vmatprep.mubr.f32.mxu0 0.0
        %v1314 = vand.u32 %v750, 4294901760
        %v1315 = vsub.f32 %v750, %v1314
        %v1316 = vand.u32 %v1315, 4294901760
        %1317 = vmatmul.mubr.f32.gmra.mxu0 %v1316
        %v1318 = vpop.f32.mrf.mxu0
        %v1319 = vadd.f32 %v1184, %v1318
        %v1320 = vpop.f32.mrf.mxu0
        %1321 = vmatprep.mubr.f32.mxu0 0.0
        %v1322 = vand.u32 %v753, 4294901760
        %v1323 = vsub.f32 %v753, %v1322
        %v1324 = vand.u32 %v1323, 4294901760
        %1325 = vmatmul.mubr.f32.gmra.mxu0 %v1324
        %v1326 = vpop.f32.mrf.mxu0
        %v1327 = vadd.f32 %v1191, %v1326
        %v1328 = vpop.f32.mrf.mxu0
        %1329 = vmatprep.mubr.f32.mxu0 0.0
        %v1330 = vand.u32 %v756, 4294901760
        %v1331 = vsub.f32 %v756, %v1330
        %v1332 = vand.u32 %v1331, 4294901760
        %1333 = vmatmul.mubr.f32.gmra.mxu0 %v1332
        %v1334 = vpop.f32.mrf.mxu0
        %v1335 = vadd.f32 %v1198, %v1334
        %v1336 = vpop.f32.mrf.mxu0
        %1337 = vdwg.mxu0
        %1338 = vmatprep.subr.mxu0 0.0
        %1339 = vmatpush1.msra.mxu0 0.0
        %1340 = vmatprep.subr.mxu0 0.0
        %1341 = vmatpush1.msra.mxu0 0.0
        %1342 = vmatprep.subr.mxu0 0.0
        %1343 = vmatpush1.msra.mxu0 0.0
        %1344 = vmatprep.subr.mxu0 0.0
        %1345 = vmatpush1.msra.mxu0 0.0
        %1346 = vmatprep.subr.mxu0 0.0
        %1347 = vmatpush1.msra.mxu0 0.0
        %1348 = vmatprep.subr.mxu0 0.0
        %1349 = vmatpush1.msra.mxu0 0.0
        %1350 = vmatprep.subr.mxu0 0.0
        %1351 = vmatpush1.msra.mxu0 0.0
        %1352 = vmatprep.subr.mxu0 0.0
        %1353 = vmatpush1.msra.mxu0 0.0
        %1354 = vmatprep.subr.mxu0 0.0
        %v1355 = vand.u32 %v730, 4294901760
        %v1356 = vsub.f32 %v730, %v1355
        %v1357 = vand.u32 %v1356, 4294901760
        %1358 = vmatpush1.msra.mxu0 %v1357
        %1359 = vmatprep.subr.mxu0 0.0
        %v1360 = vand.u32 %v729, 4294901760
        %v1361 = vsub.f32 %v729, %v1360
        %v1362 = vand.u32 %v1361, 4294901760
        %1363 = vmatpush1.msra.mxu0 %v1362
        %1364 = vmatprep.subr.mxu0 0.0
        %v1365 = vand.u32 %v728, 4294901760
        %v1366 = vsub.f32 %v728, %v1365
        %v1367 = vand.u32 %v1366, 4294901760
        %1368 = vmatpush1.msra.mxu0 %v1367
        %1369 = vmatprep.subr.mxu0 0.0
        %v1370 = vand.u32 %v727, 4294901760
        %v1371 = vsub.f32 %v727, %v1370
        %v1372 = vand.u32 %v1371, 4294901760
        %1373 = vmatpush1.msra.mxu0 %v1372
        %1374 = vmatprep.subr.mxu0 0.0
        %v1375 = vand.u32 %v726, 4294901760
        %v1376 = vsub.f32 %v726, %v1375
        %v1377 = vand.u32 %v1376, 4294901760
        %1378 = vmatpush1.msra.mxu0 %v1377
        %1379 = vmatprep.subr.mxu0 0.0
        %v1380 = vand.u32 %v725, 4294901760
        %v1381 = vsub.f32 %v725, %v1380
        %v1382 = vand.u32 %v1381, 4294901760
        %1383 = vmatpush1.msra.mxu0 %v1382
        %1384 = vmatprep.subr.mxu0 0.0
        %v1385 = vand.u32 %v724, 4294901760
        %v1386 = vsub.f32 %v724, %v1385
        %v1387 = vand.u32 %v1386, 4294901760
        %1388 = vmatpush1.msra.mxu0 %v1387
        %1389 = vmatprep.subr.mxu0 0.0
        %v1390 = vand.u32 %v723, 4294901760
        %v1391 = vsub.f32 %v723, %v1390
        %v1392 = vand.u32 %v1391, 4294901760
        %1393 = vmatpush1.msra.mxu0 %v1392
        %1394 = vmatprep.subr.mxu0 0.0
        %1395 = vmatpush2.msra.mxu0 0.0
        %1396 = vmatprep.subr.mxu0 0.0
        %1397 = vmatpush2.msra.mxu0 0.0
        %1398 = vmatprep.subr.mxu0 0.0
        %1399 = vmatpush2.msra.mxu0 0.0
        %1400 = vmatprep.subr.mxu0 0.0
        %1401 = vmatpush2.msra.mxu0 0.0
        %1402 = vmatprep.subr.mxu0 0.0
        %1403 = vmatpush2.msra.mxu0 0.0
        %1404 = vmatprep.subr.mxu0 0.0
        %1405 = vmatpush2.msra.mxu0 0.0
        %1406 = vmatprep.subr.mxu0 0.0
        %1407 = vmatpush2.msra.mxu0 0.0
        %1408 = vmatprep.subr.mxu0 0.0
        %1409 = vmatpush2.msra.mxu0 0.0
        %1410 = vmatprep.subr.mxu0 0.0
        %1411 = vmatpush2.msra.mxu0 0.0
        %1412 = vmatprep.subr.mxu0 0.0
        %1413 = vmatpush2.msra.mxu0 0.0
        %1414 = vmatprep.subr.mxu0 0.0
        %1415 = vmatpush2.msra.mxu0 0.0
        %1416 = vmatprep.subr.mxu0 0.0
        %1417 = vmatpush2.msra.mxu0 0.0
        %1418 = vmatprep.subr.mxu0 0.0
        %1419 = vmatpush2.msra.mxu0 0.0
        %1420 = vmatprep.subr.mxu0 0.0
        %1421 = vmatpush2.msra.mxu0 0.0
        %1422 = vmatprep.subr.mxu0 0.0
        %1423 = vmatpush2.msra.mxu0 0.0
        %1424 = vmatprep.subr.mxu0 0.0
        %1425 = vmatpush2.msra.mxu0 0.0
        %1426 = vmatprep.mubr.f32.mxu0 0.0
        %v1427 = vand.u32 %v735, 4294901760
        %1428 = vmatmul.mubr.f32.gmra.mxu0 %v1427
        %v1429 = vpop.f32.mrf.mxu0
        %v1430 = vadd.f32 %v1279, %v1429
        %v1431 = vpop.f32.mrf.mxu0
        %1432 = vmatprep.mubr.f32.mxu0 0.0
        %v1433 = vand.u32 %v738, 4294901760
        %1434 = vmatmul.mubr.f32.gmra.mxu0 %v1433
        %v1435 = vpop.f32.mrf.mxu0
        %v1436 = vadd.f32 %v1287, %v1435
        %v1437 = vpop.f32.mrf.mxu0
        %1438 = vmatprep.mubr.f32.mxu0 0.0
        %v1439 = vand.u32 %v741, 4294901760
        %1440 = vmatmul.mubr.f32.gmra.mxu0 %v1439
        %v1441 = vpop.f32.mrf.mxu0
        %v1442 = vadd.f32 %v1295, %v1441
        %v1443 = vpop.f32.mrf.mxu0
        %1444 = vmatprep.mubr.f32.mxu0 0.0
        %v1445 = vand.u32 %v744, 4294901760
        %1446 = vmatmul.mubr.f32.gmra.mxu0 %v1445
        %v1447 = vpop.f32.mrf.mxu0
        %v1448 = vadd.f32 %v1303, %v1447
        %v1449 = vpop.f32.mrf.mxu0
        %1450 = vmatprep.mubr.f32.mxu0 0.0
        %v1451 = vand.u32 %v747, 4294901760
        %1452 = vmatmul.mubr.f32.gmra.mxu0 %v1451
        %v1453 = vpop.f32.mrf.mxu0
        %v1454 = vadd.f32 %v1311, %v1453
        %v1455 = vpop.f32.mrf.mxu0
        %1456 = vmatprep.mubr.f32.mxu0 0.0
        %v1457 = vand.u32 %v750, 4294901760
        %1458 = vmatmul.mubr.f32.gmra.mxu0 %v1457
        %v1459 = vpop.f32.mrf.mxu0
        %v1460 = vadd.f32 %v1319, %v1459
        %v1461 = vpop.f32.mrf.mxu0
        %1462 = vmatprep.mubr.f32.mxu0 0.0
        %v1463 = vand.u32 %v753, 4294901760
        %1464 = vmatmul.mubr.f32.gmra.mxu0 %v1463
        %v1465 = vpop.f32.mrf.mxu0
        %v1466 = vadd.f32 %v1327, %v1465
        %v1467 = vpop.f32.mrf.mxu0
        %1468 = vmatprep.mubr.f32.mxu0 0.0
        %v1469 = vand.u32 %v756, 4294901760
        %1470 = vmatmul.mubr.f32.gmra.mxu0 %v1469
        %v1471 = vpop.f32.mrf.mxu0
        %v1472 = vadd.f32 %v1335, %v1471
        %v1473 = vpop.f32.mrf.mxu0
        %1474 = vdwg.mxu0
        %1475 = vmatprep.subr.mxu0 0.0
        %1476 = vmatpush1.msra.mxu0 0.0
        %1477 = vmatprep.subr.mxu0 0.0
        %1478 = vmatpush1.msra.mxu0 0.0
        %1479 = vmatprep.subr.mxu0 0.0
        %1480 = vmatpush1.msra.mxu0 0.0
        %1481 = vmatprep.subr.mxu0 0.0
        %1482 = vmatpush1.msra.mxu0 0.0
        %1483 = vmatprep.subr.mxu0 0.0
        %1484 = vmatpush1.msra.mxu0 0.0
        %1485 = vmatprep.subr.mxu0 0.0
        %1486 = vmatpush1.msra.mxu0 0.0
        %1487 = vmatprep.subr.mxu0 0.0
        %1488 = vmatpush1.msra.mxu0 0.0
        %1489 = vmatprep.subr.mxu0 0.0
        %1490 = vmatpush1.msra.mxu0 0.0
        %1491 = vmatprep.subr.mxu0 0.0
        %v1492 = vand.u32 %v730, 4294901760
        %1493 = vmatpush1.msra.mxu0 %v1492
        %1494 = vmatprep.subr.mxu0 0.0
        %v1495 = vand.u32 %v729, 4294901760
        %1496 = vmatpush1.msra.mxu0 %v1495
        %1497 = vmatprep.subr.mxu0 0.0
        %v1498 = vand.u32 %v728, 4294901760
        %1499 = vmatpush1.msra.mxu0 %v1498
        %1500 = vmatprep.subr.mxu0 0.0
        %v1501 = vand.u32 %v727, 4294901760
        %1502 = vmatpush1.msra.mxu0 %v1501
        %1503 = vmatprep.subr.mxu0 0.0
        %v1504 = vand.u32 %v726, 4294901760
        %1505 = vmatpush1.msra.mxu0 %v1504
        %1506 = vmatprep.subr.mxu0 0.0
        %v1507 = vand.u32 %v725, 4294901760
        %1508 = vmatpush1.msra.mxu0 %v1507
        %1509 = vmatprep.subr.mxu0 0.0
        %v1510 = vand.u32 %v724, 4294901760
        %1511 = vmatpush1.msra.mxu0 %v1510
        %1512 = vmatprep.subr.mxu0 0.0
        %v1513 = vand.u32 %v723, 4294901760
        %1514 = vmatpush1.msra.mxu0 %v1513
        %1515 = vmatprep.subr.mxu0 0.0
        %1516 = vmatpush2.msra.mxu0 0.0
        %1517 = vmatprep.subr.mxu0 0.0
        %1518 = vmatpush2.msra.mxu0 0.0
        %1519 = vmatprep.subr.mxu0 0.0
        %1520 = vmatpush2.msra.mxu0 0.0
        %1521 = vmatprep.subr.mxu0 0.0
        %1522 = vmatpush2.msra.mxu0 0.0
        %1523 = vmatprep.subr.mxu0 0.0
        %1524 = vmatpush2.msra.mxu0 0.0
        %1525 = vmatprep.subr.mxu0 0.0
        %1526 = vmatpush2.msra.mxu0 0.0
        %1527 = vmatprep.subr.mxu0 0.0
        %1528 = vmatpush2.msra.mxu0 0.0
        %1529 = vmatprep.subr.mxu0 0.0
        %1530 = vmatpush2.msra.mxu0 0.0
        %1531 = vmatprep.subr.mxu0 0.0
        %1532 = vmatpush2.msra.mxu0 0.0
        %1533 = vmatprep.subr.mxu0 0.0
        %1534 = vmatpush2.msra.mxu0 0.0
        %1535 = vmatprep.subr.mxu0 0.0
        %1536 = vmatpush2.msra.mxu0 0.0
        %1537 = vmatprep.subr.mxu0 0.0
        %1538 = vmatpush2.msra.mxu0 0.0
        %1539 = vmatprep.subr.mxu0 0.0
        %1540 = vmatpush2.msra.mxu0 0.0
        %1541 = vmatprep.subr.mxu0 0.0
        %1542 = vmatpush2.msra.mxu0 0.0
        %1543 = vmatprep.subr.mxu0 0.0
        %1544 = vmatpush2.msra.mxu0 0.0
        %1545 = vmatprep.subr.mxu0 0.0
        %1546 = vmatpush2.msra.mxu0 0.0
        %1547 = vmatprep.mubr.f32.mxu0 0.0
        %v1548 = vand.u32 %v735, 4294901760
        %1549 = vmatmul.mubr.f32.gmra.mxu0 %v1548
        %v1550 = vpop.f32.mrf.mxu0
        %v1551 = vadd.f32 %v1430, %v1550
        %v1552 = vpop.f32.mrf.mxu0
        %1553 = vmatprep.mubr.f32.mxu0 0.0
        %v1554 = vand.u32 %v738, 4294901760
        %1555 = vmatmul.mubr.f32.gmra.mxu0 %v1554
        %v1556 = vpop.f32.mrf.mxu0
        %v1557 = vadd.f32 %v1436, %v1556
        %v1558 = vpop.f32.mrf.mxu0
        %1559 = vmatprep.mubr.f32.mxu0 0.0
        %v1560 = vand.u32 %v741, 4294901760
        %1561 = vmatmul.mubr.f32.gmra.mxu0 %v1560
        %v1562 = vpop.f32.mrf.mxu0
        %v1563 = vadd.f32 %v1442, %v1562
        %v1564 = vpop.f32.mrf.mxu0
        %1565 = vmatprep.mubr.f32.mxu0 0.0
        %v1566 = vand.u32 %v744, 4294901760
        %1567 = vmatmul.mubr.f32.gmra.mxu0 %v1566
        %v1568 = vpop.f32.mrf.mxu0
        %v1569 = vadd.f32 %v1448, %v1568
        %v1570 = vpop.f32.mrf.mxu0
        %1571 = vmatprep.mubr.f32.mxu0 0.0
        %v1572 = vand.u32 %v747, 4294901760
        %1573 = vmatmul.mubr.f32.gmra.mxu0 %v1572
        %v1574 = vpop.f32.mrf.mxu0
        %v1575 = vadd.f32 %v1454, %v1574
        %v1576 = vpop.f32.mrf.mxu0
        %1577 = vmatprep.mubr.f32.mxu0 0.0
        %v1578 = vand.u32 %v750, 4294901760
        %1579 = vmatmul.mubr.f32.gmra.mxu0 %v1578
        %v1580 = vpop.f32.mrf.mxu0
        %v1581 = vadd.f32 %v1460, %v1580
        %v1582 = vpop.f32.mrf.mxu0
        %1583 = vmatprep.mubr.f32.mxu0 0.0
        %v1584 = vand.u32 %v753, 4294901760
        %1585 = vmatmul.mubr.f32.gmra.mxu0 %v1584
        %v1586 = vpop.f32.mrf.mxu0
        %v1587 = vadd.f32 %v1466, %v1586
        %v1588 = vpop.f32.mrf.mxu0
        %1589 = vmatprep.mubr.f32.mxu0 0.0
        %v1590 = vand.u32 %v756, 4294901760
        %1591 = vmatmul.mubr.f32.gmra.mxu0 %v1590
        %v1592 = vpop.f32.mrf.mxu0
        %v1593 = vadd.f32 %v1472, %v1592
        %v1594 = vpop.f32.mrf.mxu0
        %1595 = vdwg.mxu0
        %v1596 = vmul.f32 %v600, %v600
        %v1597 = vmul.f32 %v601, %v601
        %v1598 = vmul.f32 %v602, %v602
        %v1599 = vmul.f32 %v603, %v603
        %v1600 = vmul.f32 %v604, %v604
        %v1601 = vmul.f32 %v605, %v605
        %v1602 = vmul.f32 %v606, %v606
        %v1603 = vmul.f32 %v607, %v607
        %v1605 = vsel %vm733, %v1596, 0
        %v1608 = vsel %vm733, %v1597, 0
        %v1611 = vsel %vm733, %v1598, 0
        %v1614 = vsel %vm733, %v1599, 0
        %v1617 = vsel %vm733, %v1600, 0
        %v1620 = vsel %vm733, %v1601, 0
        %v1623 = vsel %vm733, %v1602, 0
        %v1626 = vsel %vm733, %v1603, 0
        %1628 = vmatprep.subr.mxu0 0.0
        %1629 = vmatpush1.msra.mxu0 0.0
        %1630 = vmatprep.subr.mxu0 0.0
        %1631 = vmatpush1.msra.mxu0 0.0
        %1632 = vmatprep.subr.mxu0 0.0
        %1633 = vmatpush1.msra.mxu0 0.0
        %1634 = vmatprep.subr.mxu0 0.0
        %1635 = vmatpush1.msra.mxu0 0.0
        %1636 = vmatprep.subr.mxu0 0.0
        %1637 = vmatpush1.msra.mxu0 0.0
        %1638 = vmatprep.subr.mxu0 0.0
        %1639 = vmatpush1.msra.mxu0 0.0
        %1640 = vmatprep.subr.mxu0 0.0
        %1641 = vmatpush1.msra.mxu0 0.0
        %1642 = vmatprep.subr.mxu0 0.0
        %1643 = vmatpush1.msra.mxu0 0.0
        %1644 = vmatprep.subr.mxu0 0.0
        %v1645 = vand.u32 %v730, 4294901760
        %1646 = vmatpush1.msra.mxu0 %v1645
        %1647 = vmatprep.subr.mxu0 0.0
        %v1648 = vand.u32 %v729, 4294901760
        %1649 = vmatpush1.msra.mxu0 %v1648
        %1650 = vmatprep.subr.mxu0 0.0
        %v1651 = vand.u32 %v728, 4294901760
        %1652 = vmatpush1.msra.mxu0 %v1651
        %1653 = vmatprep.subr.mxu0 0.0
        %v1654 = vand.u32 %v727, 4294901760
        %1655 = vmatpush1.msra.mxu0 %v1654
        %1656 = vmatprep.subr.mxu0 0.0
        %v1657 = vand.u32 %v726, 4294901760
        %1658 = vmatpush1.msra.mxu0 %v1657
        %1659 = vmatprep.subr.mxu0 0.0
        %v1660 = vand.u32 %v725, 4294901760
        %1661 = vmatpush1.msra.mxu0 %v1660
        %1662 = vmatprep.subr.mxu0 0.0
        %v1663 = vand.u32 %v724, 4294901760
        %1664 = vmatpush1.msra.mxu0 %v1663
        %1665 = vmatprep.subr.mxu0 0.0
        %v1666 = vand.u32 %v723, 4294901760
        %1667 = vmatpush1.msra.mxu0 %v1666
        %1668 = vmatprep.subr.mxu0 0.0
        %1669 = vmatpush2.msra.mxu0 0.0
        %1670 = vmatprep.subr.mxu0 0.0
        %1671 = vmatpush2.msra.mxu0 0.0
        %1672 = vmatprep.subr.mxu0 0.0
        %1673 = vmatpush2.msra.mxu0 0.0
        %1674 = vmatprep.subr.mxu0 0.0
        %1675 = vmatpush2.msra.mxu0 0.0
        %1676 = vmatprep.subr.mxu0 0.0
        %1677 = vmatpush2.msra.mxu0 0.0
        %1678 = vmatprep.subr.mxu0 0.0
        %1679 = vmatpush2.msra.mxu0 0.0
        %1680 = vmatprep.subr.mxu0 0.0
        %1681 = vmatpush2.msra.mxu0 0.0
        %1682 = vmatprep.subr.mxu0 0.0
        %1683 = vmatpush2.msra.mxu0 0.0
        %1684 = vmatprep.subr.mxu0 0.0
        %1685 = vmatpush2.msra.mxu0 0.0
        %1686 = vmatprep.subr.mxu0 0.0
        %1687 = vmatpush2.msra.mxu0 0.0
        %1688 = vmatprep.subr.mxu0 0.0
        %1689 = vmatpush2.msra.mxu0 0.0
        %1690 = vmatprep.subr.mxu0 0.0
        %1691 = vmatpush2.msra.mxu0 0.0
        %1692 = vmatprep.subr.mxu0 0.0
        %1693 = vmatpush2.msra.mxu0 0.0
        %1694 = vmatprep.subr.mxu0 0.0
        %1695 = vmatpush2.msra.mxu0 0.0
        %1696 = vmatprep.subr.mxu0 0.0
        %1697 = vmatpush2.msra.mxu0 0.0
        %1698 = vmatprep.subr.mxu0 0.0
        %1699 = vmatpush2.msra.mxu0 0.0
        %1700 = vmatprep.mubr.f32.mxu0 0.0
        %v1701 = vand.u32 %v1605, 4294901760
        %v1702 = vsub.f32 %v1605, %v1701
        %v1703 = vand.u32 %v1702, 4294901760
        %v1704 = vsub.f32 %v1702, %v1703
        %v1705 = vand.u32 %v1704, 4294901760
        %1706 = vmatmul.mubr.f32.gmra.mxu0 %v1705
        %v1707 = vpop.f32.mrf.mxu0
        %v1708 = vadd.f32 0.0, %v1707
        %v1709 = vpop.f32.mrf.mxu0
        %1710 = vmatprep.mubr.f32.mxu0 0.0
        %v1711 = vand.u32 %v1608, 4294901760
        %v1712 = vsub.f32 %v1608, %v1711
        %v1713 = vand.u32 %v1712, 4294901760
        %v1714 = vsub.f32 %v1712, %v1713
        %v1715 = vand.u32 %v1714, 4294901760
        %1716 = vmatmul.mubr.f32.gmra.mxu0 %v1715
        %v1717 = vpop.f32.mrf.mxu0
        %v1718 = vadd.f32 0.0, %v1717
        %v1719 = vpop.f32.mrf.mxu0
        %1720 = vmatprep.mubr.f32.mxu0 0.0
        %v1721 = vand.u32 %v1611, 4294901760
        %v1722 = vsub.f32 %v1611, %v1721
        %v1723 = vand.u32 %v1722, 4294901760
        %v1724 = vsub.f32 %v1722, %v1723
        %v1725 = vand.u32 %v1724, 4294901760
        %1726 = vmatmul.mubr.f32.gmra.mxu0 %v1725
        %v1727 = vpop.f32.mrf.mxu0
        %v1728 = vadd.f32 0.0, %v1727
        %v1729 = vpop.f32.mrf.mxu0
        %1730 = vmatprep.mubr.f32.mxu0 0.0
        %v1731 = vand.u32 %v1614, 4294901760
        %v1732 = vsub.f32 %v1614, %v1731
        %v1733 = vand.u32 %v1732, 4294901760
        %v1734 = vsub.f32 %v1732, %v1733
        %v1735 = vand.u32 %v1734, 4294901760
        %1736 = vmatmul.mubr.f32.gmra.mxu0 %v1735
        %v1737 = vpop.f32.mrf.mxu0
        %v1738 = vadd.f32 0.0, %v1737
        %v1739 = vpop.f32.mrf.mxu0
        %1740 = vmatprep.mubr.f32.mxu0 0.0
        %v1741 = vand.u32 %v1617, 4294901760
        %v1742 = vsub.f32 %v1617, %v1741
        %v1743 = vand.u32 %v1742, 4294901760
        %v1744 = vsub.f32 %v1742, %v1743
        %v1745 = vand.u32 %v1744, 4294901760
        %1746 = vmatmul.mubr.f32.gmra.mxu0 %v1745
        %v1747 = vpop.f32.mrf.mxu0
        %v1748 = vadd.f32 0.0, %v1747
        %v1749 = vpop.f32.mrf.mxu0
        %1750 = vmatprep.mubr.f32.mxu0 0.0
        %v1751 = vand.u32 %v1620, 4294901760
        %v1752 = vsub.f32 %v1620, %v1751
        %v1753 = vand.u32 %v1752, 4294901760
        %v1754 = vsub.f32 %v1752, %v1753
        %v1755 = vand.u32 %v1754, 4294901760
        %1756 = vmatmul.mubr.f32.gmra.mxu0 %v1755
        %v1757 = vpop.f32.mrf.mxu0
        %v1758 = vadd.f32 0.0, %v1757
        %v1759 = vpop.f32.mrf.mxu0
        %1760 = vmatprep.mubr.f32.mxu0 0.0
        %v1761 = vand.u32 %v1623, 4294901760
        %v1762 = vsub.f32 %v1623, %v1761
        %v1763 = vand.u32 %v1762, 4294901760
        %v1764 = vsub.f32 %v1762, %v1763
        %v1765 = vand.u32 %v1764, 4294901760
        %1766 = vmatmul.mubr.f32.gmra.mxu0 %v1765
        %v1767 = vpop.f32.mrf.mxu0
        %v1768 = vadd.f32 0.0, %v1767
        %v1769 = vpop.f32.mrf.mxu0
        %1770 = vmatprep.mubr.f32.mxu0 0.0
        %v1771 = vand.u32 %v1626, 4294901760
        %v1772 = vsub.f32 %v1626, %v1771
        %v1773 = vand.u32 %v1772, 4294901760
        %v1774 = vsub.f32 %v1772, %v1773
        %v1775 = vand.u32 %v1774, 4294901760
        %1776 = vmatmul.mubr.f32.gmra.mxu0 %v1775
        %v1777 = vpop.f32.mrf.mxu0
        %v1778 = vadd.f32 0.0, %v1777
        %v1779 = vpop.f32.mrf.mxu0
        %1780 = vdwg.mxu0
        %1781 = vmatprep.subr.mxu0 0.0
        %1782 = vmatpush1.msra.mxu0 0.0
        %1783 = vmatprep.subr.mxu0 0.0
        %1784 = vmatpush1.msra.mxu0 0.0
        %1785 = vmatprep.subr.mxu0 0.0
        %1786 = vmatpush1.msra.mxu0 0.0
        %1787 = vmatprep.subr.mxu0 0.0
        %1788 = vmatpush1.msra.mxu0 0.0
        %1789 = vmatprep.subr.mxu0 0.0
        %1790 = vmatpush1.msra.mxu0 0.0
        %1791 = vmatprep.subr.mxu0 0.0
        %1792 = vmatpush1.msra.mxu0 0.0
        %1793 = vmatprep.subr.mxu0 0.0
        %1794 = vmatpush1.msra.mxu0 0.0
        %1795 = vmatprep.subr.mxu0 0.0
        %1796 = vmatpush1.msra.mxu0 0.0
        %1797 = vmatprep.subr.mxu0 0.0
        %v1798 = vand.u32 %v730, 4294901760
        %v1799 = vsub.f32 %v730, %v1798
        %v1800 = vand.u32 %v1799, 4294901760
        %v1801 = vsub.f32 %v1799, %v1800
        %v1802 = vand.u32 %v1801, 4294901760
        %1803 = vmatpush1.msra.mxu0 %v1802
        %1804 = vmatprep.subr.mxu0 0.0
        %v1805 = vand.u32 %v729, 4294901760
        %v1806 = vsub.f32 %v729, %v1805
        %v1807 = vand.u32 %v1806, 4294901760
        %v1808 = vsub.f32 %v1806, %v1807
        %v1809 = vand.u32 %v1808, 4294901760
        %1810 = vmatpush1.msra.mxu0 %v1809
        %1811 = vmatprep.subr.mxu0 0.0
        %v1812 = vand.u32 %v728, 4294901760
        %v1813 = vsub.f32 %v728, %v1812
        %v1814 = vand.u32 %v1813, 4294901760
        %v1815 = vsub.f32 %v1813, %v1814
        %v1816 = vand.u32 %v1815, 4294901760
        %1817 = vmatpush1.msra.mxu0 %v1816
        %1818 = vmatprep.subr.mxu0 0.0
        %v1819 = vand.u32 %v727, 4294901760
        %v1820 = vsub.f32 %v727, %v1819
        %v1821 = vand.u32 %v1820, 4294901760
        %v1822 = vsub.f32 %v1820, %v1821
        %v1823 = vand.u32 %v1822, 4294901760
        %1824 = vmatpush1.msra.mxu0 %v1823
        %1825 = vmatprep.subr.mxu0 0.0
        %v1826 = vand.u32 %v726, 4294901760
        %v1827 = vsub.f32 %v726, %v1826
        %v1828 = vand.u32 %v1827, 4294901760
        %v1829 = vsub.f32 %v1827, %v1828
        %v1830 = vand.u32 %v1829, 4294901760
        %1831 = vmatpush1.msra.mxu0 %v1830
        %1832 = vmatprep.subr.mxu0 0.0
        %v1833 = vand.u32 %v725, 4294901760
        %v1834 = vsub.f32 %v725, %v1833
        %v1835 = vand.u32 %v1834, 4294901760
        %v1836 = vsub.f32 %v1834, %v1835
        %v1837 = vand.u32 %v1836, 4294901760
        %1838 = vmatpush1.msra.mxu0 %v1837
        %1839 = vmatprep.subr.mxu0 0.0
        %v1840 = vand.u32 %v724, 4294901760
        %v1841 = vsub.f32 %v724, %v1840
        %v1842 = vand.u32 %v1841, 4294901760
        %v1843 = vsub.f32 %v1841, %v1842
        %v1844 = vand.u32 %v1843, 4294901760
        %1845 = vmatpush1.msra.mxu0 %v1844
        %1846 = vmatprep.subr.mxu0 0.0
        %v1847 = vand.u32 %v723, 4294901760
        %v1848 = vsub.f32 %v723, %v1847
        %v1849 = vand.u32 %v1848, 4294901760
        %v1850 = vsub.f32 %v1848, %v1849
        %v1851 = vand.u32 %v1850, 4294901760
        %1852 = vmatpush1.msra.mxu0 %v1851
        %1853 = vmatprep.subr.mxu0 0.0
        %1854 = vmatpush2.msra.mxu0 0.0
        %1855 = vmatprep.subr.mxu0 0.0
        %1856 = vmatpush2.msra.mxu0 0.0
        %1857 = vmatprep.subr.mxu0 0.0
        %1858 = vmatpush2.msra.mxu0 0.0
        %1859 = vmatprep.subr.mxu0 0.0
        %1860 = vmatpush2.msra.mxu0 0.0
        %1861 = vmatprep.subr.mxu0 0.0
        %1862 = vmatpush2.msra.mxu0 0.0
        %1863 = vmatprep.subr.mxu0 0.0
        %1864 = vmatpush2.msra.mxu0 0.0
        %1865 = vmatprep.subr.mxu0 0.0
        %1866 = vmatpush2.msra.mxu0 0.0
        %1867 = vmatprep.subr.mxu0 0.0
        %1868 = vmatpush2.msra.mxu0 0.0
        %1869 = vmatprep.subr.mxu0 0.0
        %1870 = vmatpush2.msra.mxu0 0.0
        %1871 = vmatprep.subr.mxu0 0.0
        %1872 = vmatpush2.msra.mxu0 0.0
        %1873 = vmatprep.subr.mxu0 0.0
        %1874 = vmatpush2.msra.mxu0 0.0
        %1875 = vmatprep.subr.mxu0 0.0
        %1876 = vmatpush2.msra.mxu0 0.0
        %1877 = vmatprep.subr.mxu0 0.0
        %1878 = vmatpush2.msra.mxu0 0.0
        %1879 = vmatprep.subr.mxu0 0.0
        %1880 = vmatpush2.msra.mxu0 0.0
        %1881 = vmatprep.subr.mxu0 0.0
        %1882 = vmatpush2.msra.mxu0 0.0
        %1883 = vmatprep.subr.mxu0 0.0
        %1884 = vmatpush2.msra.mxu0 0.0
        %1885 = vmatprep.mubr.f32.mxu0 0.0
        %v1886 = vand.u32 %v1605, 4294901760
        %1887 = vmatmul.mubr.f32.gmra.mxu0 %v1886
        %v1888 = vpop.f32.mrf.mxu0
        %v1889 = vadd.f32 %v1708, %v1888
        %v1890 = vpop.f32.mrf.mxu0
        %1891 = vmatprep.mubr.f32.mxu0 0.0
        %v1892 = vand.u32 %v1608, 4294901760
        %1893 = vmatmul.mubr.f32.gmra.mxu0 %v1892
        %v1894 = vpop.f32.mrf.mxu0
        %v1895 = vadd.f32 %v1718, %v1894
        %v1896 = vpop.f32.mrf.mxu0
        %1897 = vmatprep.mubr.f32.mxu0 0.0
        %v1898 = vand.u32 %v1611, 4294901760
        %1899 = vmatmul.mubr.f32.gmra.mxu0 %v1898
        %v1900 = vpop.f32.mrf.mxu0
        %v1901 = vadd.f32 %v1728, %v1900
        %v1902 = vpop.f32.mrf.mxu0
        %1903 = vmatprep.mubr.f32.mxu0 0.0
        %v1904 = vand.u32 %v1614, 4294901760
        %1905 = vmatmul.mubr.f32.gmra.mxu0 %v1904
        %v1906 = vpop.f32.mrf.mxu0
        %v1907 = vadd.f32 %v1738, %v1906
        %v1908 = vpop.f32.mrf.mxu0
        %1909 = vmatprep.mubr.f32.mxu0 0.0
        %v1910 = vand.u32 %v1617, 4294901760
        %1911 = vmatmul.mubr.f32.gmra.mxu0 %v1910
        %v1912 = vpop.f32.mrf.mxu0
        %v1913 = vadd.f32 %v1748, %v1912
        %v1914 = vpop.f32.mrf.mxu0
        %1915 = vmatprep.mubr.f32.mxu0 0.0
        %v1916 = vand.u32 %v1620, 4294901760
        %1917 = vmatmul.mubr.f32.gmra.mxu0 %v1916
        %v1918 = vpop.f32.mrf.mxu0
        %v1919 = vadd.f32 %v1758, %v1918
        %v1920 = vpop.f32.mrf.mxu0
        %1921 = vmatprep.mubr.f32.mxu0 0.0
        %v1922 = vand.u32 %v1623, 4294901760
        %1923 = vmatmul.mubr.f32.gmra.mxu0 %v1922
        %v1924 = vpop.f32.mrf.mxu0
        %v1925 = vadd.f32 %v1768, %v1924
        %v1926 = vpop.f32.mrf.mxu0
        %1927 = vmatprep.mubr.f32.mxu0 0.0
        %v1928 = vand.u32 %v1626, 4294901760
        %1929 = vmatmul.mubr.f32.gmra.mxu0 %v1928
        %v1930 = vpop.f32.mrf.mxu0
        %v1931 = vadd.f32 %v1778, %v1930
        %v1932 = vpop.f32.mrf.mxu0
        %1933 = vdwg.mxu0
        %1934 = vmatprep.subr.mxu0 0.0
        %1935 = vmatpush1.msra.mxu0 0.0
        %1936 = vmatprep.subr.mxu0 0.0
        %1937 = vmatpush1.msra.mxu0 0.0
        %1938 = vmatprep.subr.mxu0 0.0
        %1939 = vmatpush1.msra.mxu0 0.0
        %1940 = vmatprep.subr.mxu0 0.0
        %1941 = vmatpush1.msra.mxu0 0.0
        %1942 = vmatprep.subr.mxu0 0.0
        %1943 = vmatpush1.msra.mxu0 0.0
        %1944 = vmatprep.subr.mxu0 0.0
        %1945 = vmatpush1.msra.mxu0 0.0
        %1946 = vmatprep.subr.mxu0 0.0
        %1947 = vmatpush1.msra.mxu0 0.0
        %1948 = vmatprep.subr.mxu0 0.0
        %1949 = vmatpush1.msra.mxu0 0.0
        %1950 = vmatprep.subr.mxu0 0.0
        %v1951 = vand.u32 %v730, 4294901760
        %v1952 = vsub.f32 %v730, %v1951
        %1953 = vmatpush1.msra.mxu0 %v1952
        %1954 = vmatprep.subr.mxu0 0.0
        %v1955 = vand.u32 %v729, 4294901760
        %v1956 = vsub.f32 %v729, %v1955
        %1957 = vmatpush1.msra.mxu0 %v1956
        %1958 = vmatprep.subr.mxu0 0.0
        %v1959 = vand.u32 %v728, 4294901760
        %v1960 = vsub.f32 %v728, %v1959
        %1961 = vmatpush1.msra.mxu0 %v1960
        %1962 = vmatprep.subr.mxu0 0.0
        %v1963 = vand.u32 %v727, 4294901760
        %v1964 = vsub.f32 %v727, %v1963
        %1965 = vmatpush1.msra.mxu0 %v1964
        %1966 = vmatprep.subr.mxu0 0.0
        %v1967 = vand.u32 %v726, 4294901760
        %v1968 = vsub.f32 %v726, %v1967
        %1969 = vmatpush1.msra.mxu0 %v1968
        %1970 = vmatprep.subr.mxu0 0.0
        %v1971 = vand.u32 %v725, 4294901760
        %v1972 = vsub.f32 %v725, %v1971
        %1973 = vmatpush1.msra.mxu0 %v1972
        %1974 = vmatprep.subr.mxu0 0.0
        %v1975 = vand.u32 %v724, 4294901760
        %v1976 = vsub.f32 %v724, %v1975
        %1977 = vmatpush1.msra.mxu0 %v1976
        %1978 = vmatprep.subr.mxu0 0.0
        %v1979 = vand.u32 %v723, 4294901760
        %v1980 = vsub.f32 %v723, %v1979
        %1981 = vmatpush1.msra.mxu0 %v1980
        %1982 = vmatprep.subr.mxu0 0.0
        %1983 = vmatpush2.msra.mxu0 0.0
        %1984 = vmatprep.subr.mxu0 0.0
        %1985 = vmatpush2.msra.mxu0 0.0
        %1986 = vmatprep.subr.mxu0 0.0
        %1987 = vmatpush2.msra.mxu0 0.0
        %1988 = vmatprep.subr.mxu0 0.0
        %1989 = vmatpush2.msra.mxu0 0.0
        %1990 = vmatprep.subr.mxu0 0.0
        %1991 = vmatpush2.msra.mxu0 0.0
        %1992 = vmatprep.subr.mxu0 0.0
        %1993 = vmatpush2.msra.mxu0 0.0
        %1994 = vmatprep.subr.mxu0 0.0
        %1995 = vmatpush2.msra.mxu0 0.0
        %1996 = vmatprep.subr.mxu0 0.0
        %1997 = vmatpush2.msra.mxu0 0.0
        %1998 = vmatprep.subr.mxu0 0.0
        %1999 = vmatpush2.msra.mxu0 0.0
        %2000 = vmatprep.subr.mxu0 0.0
        %2001 = vmatpush2.msra.mxu0 0.0
        %2002 = vmatprep.subr.mxu0 0.0
        %2003 = vmatpush2.msra.mxu0 0.0
        %2004 = vmatprep.subr.mxu0 0.0
        %2005 = vmatpush2.msra.mxu0 0.0
        %2006 = vmatprep.subr.mxu0 0.0
        %2007 = vmatpush2.msra.mxu0 0.0
        %2008 = vmatprep.subr.mxu0 0.0
        %2009 = vmatpush2.msra.mxu0 0.0
        %2010 = vmatprep.subr.mxu0 0.0
        %2011 = vmatpush2.msra.mxu0 0.0
        %2012 = vmatprep.subr.mxu0 0.0
        %2013 = vmatpush2.msra.mxu0 0.0
        %2014 = vmatprep.mubr.f32.mxu0 0.0
        %v2015 = vand.u32 %v1605, 4294901760
        %v2016 = vsub.f32 %v1605, %v2015
        %2017 = vmatmul.mubr.f32.gmra.mxu0 %v2016
        %v2018 = vpop.f32.mrf.mxu0
        %v2019 = vadd.f32 %v1889, %v2018
        %v2020 = vpop.f32.mrf.mxu0
        %2021 = vmatprep.mubr.f32.mxu0 0.0
        %v2022 = vand.u32 %v1608, 4294901760
        %v2023 = vsub.f32 %v1608, %v2022
        %2024 = vmatmul.mubr.f32.gmra.mxu0 %v2023
        %v2025 = vpop.f32.mrf.mxu0
        %v2026 = vadd.f32 %v1895, %v2025
        %v2027 = vpop.f32.mrf.mxu0
        %2028 = vmatprep.mubr.f32.mxu0 0.0
        %v2029 = vand.u32 %v1611, 4294901760
        %v2030 = vsub.f32 %v1611, %v2029
        %2031 = vmatmul.mubr.f32.gmra.mxu0 %v2030
        %v2032 = vpop.f32.mrf.mxu0
        %v2033 = vadd.f32 %v1901, %v2032
        %v2034 = vpop.f32.mrf.mxu0
        %2035 = vmatprep.mubr.f32.mxu0 0.0
        %v2036 = vand.u32 %v1614, 4294901760
        %v2037 = vsub.f32 %v1614, %v2036
        %2038 = vmatmul.mubr.f32.gmra.mxu0 %v2037
        %v2039 = vpop.f32.mrf.mxu0
        %v2040 = vadd.f32 %v1907, %v2039
        %v2041 = vpop.f32.mrf.mxu0
        %2042 = vmatprep.mubr.f32.mxu0 0.0
        %v2043 = vand.u32 %v1617, 4294901760
        %v2044 = vsub.f32 %v1617, %v2043
        %2045 = vmatmul.mubr.f32.gmra.mxu0 %v2044
        %v2046 = vpop.f32.mrf.mxu0
        %v2047 = vadd.f32 %v1913, %v2046
        %v2048 = vpop.f32.mrf.mxu0
        %2049 = vmatprep.mubr.f32.mxu0 0.0
        %v2050 = vand.u32 %v1620, 4294901760
        %v2051 = vsub.f32 %v1620, %v2050
        %2052 = vmatmul.mubr.f32.gmra.mxu0 %v2051
        %v2053 = vpop.f32.mrf.mxu0
        %v2054 = vadd.f32 %v1919, %v2053
        %v2055 = vpop.f32.mrf.mxu0
        %2056 = vmatprep.mubr.f32.mxu0 0.0
        %v2057 = vand.u32 %v1623, 4294901760
        %v2058 = vsub.f32 %v1623, %v2057
        %2059 = vmatmul.mubr.f32.gmra.mxu0 %v2058
        %v2060 = vpop.f32.mrf.mxu0
        %v2061 = vadd.f32 %v1925, %v2060
        %v2062 = vpop.f32.mrf.mxu0
        %2063 = vmatprep.mubr.f32.mxu0 0.0
        %v2064 = vand.u32 %v1626, 4294901760
        %v2065 = vsub.f32 %v1626, %v2064
        %2066 = vmatmul.mubr.f32.gmra.mxu0 %v2065
        %v2067 = vpop.f32.mrf.mxu0
        %v2068 = vadd.f32 %v1931, %v2067
        %v2069 = vpop.f32.mrf.mxu0
        %2070 = vdwg.mxu0
        %2071 = vmatprep.subr.mxu0 0.0
        %2072 = vmatpush1.msra.mxu0 0.0
        %2073 = vmatprep.subr.mxu0 0.0
        %2074 = vmatpush1.msra.mxu0 0.0
        %2075 = vmatprep.subr.mxu0 0.0
        %2076 = vmatpush1.msra.mxu0 0.0
        %2077 = vmatprep.subr.mxu0 0.0
        %2078 = vmatpush1.msra.mxu0 0.0
        %2079 = vmatprep.subr.mxu0 0.0
        %2080 = vmatpush1.msra.mxu0 0.0
        %2081 = vmatprep.subr.mxu0 0.0
        %2082 = vmatpush1.msra.mxu0 0.0
        %2083 = vmatprep.subr.mxu0 0.0
        %2084 = vmatpush1.msra.mxu0 0.0
        %2085 = vmatprep.subr.mxu0 0.0
        %2086 = vmatpush1.msra.mxu0 0.0
        %2087 = vmatprep.subr.mxu0 0.0
        %v2088 = vand.u32 %v730, 4294901760
        %2089 = vmatpush1.msra.mxu0 %v2088
        %2090 = vmatprep.subr.mxu0 0.0
        %v2091 = vand.u32 %v729, 4294901760
        %2092 = vmatpush1.msra.mxu0 %v2091
        %2093 = vmatprep.subr.mxu0 0.0
        %v2094 = vand.u32 %v728, 4294901760
        %2095 = vmatpush1.msra.mxu0 %v2094
        %2096 = vmatprep.subr.mxu0 0.0
        %v2097 = vand.u32 %v727, 4294901760
        %2098 = vmatpush1.msra.mxu0 %v2097
        %2099 = vmatprep.subr.mxu0 0.0
        %v2100 = vand.u32 %v726, 4294901760
        %2101 = vmatpush1.msra.mxu0 %v2100
        %2102 = vmatprep.subr.mxu0 0.0
        %v2103 = vand.u32 %v725, 4294901760
        %2104 = vmatpush1.msra.mxu0 %v2103
        %2105 = vmatprep.subr.mxu0 0.0
        %v2106 = vand.u32 %v724, 4294901760
        %2107 = vmatpush1.msra.mxu0 %v2106
        %2108 = vmatprep.subr.mxu0 0.0
        %v2109 = vand.u32 %v723, 4294901760
        %2110 = vmatpush1.msra.mxu0 %v2109
        %2111 = vmatprep.subr.mxu0 0.0
        %2112 = vmatpush2.msra.mxu0 0.0
        %2113 = vmatprep.subr.mxu0 0.0
        %2114 = vmatpush2.msra.mxu0 0.0
        %2115 = vmatprep.subr.mxu0 0.0
        %2116 = vmatpush2.msra.mxu0 0.0
        %2117 = vmatprep.subr.mxu0 0.0
        %2118 = vmatpush2.msra.mxu0 0.0
        %2119 = vmatprep.subr.mxu0 0.0
        %2120 = vmatpush2.msra.mxu0 0.0
        %2121 = vmatprep.subr.mxu0 0.0
        %2122 = vmatpush2.msra.mxu0 0.0
        %2123 = vmatprep.subr.mxu0 0.0
        %2124 = vmatpush2.msra.mxu0 0.0
        %2125 = vmatprep.subr.mxu0 0.0
        %2126 = vmatpush2.msra.mxu0 0.0
        %2127 = vmatprep.subr.mxu0 0.0
        %2128 = vmatpush2.msra.mxu0 0.0
        %2129 = vmatprep.subr.mxu0 0.0
        %2130 = vmatpush2.msra.mxu0 0.0
        %2131 = vmatprep.subr.mxu0 0.0
        %2132 = vmatpush2.msra.mxu0 0.0
        %2133 = vmatprep.subr.mxu0 0.0
        %2134 = vmatpush2.msra.mxu0 0.0
        %2135 = vmatprep.subr.mxu0 0.0
        %2136 = vmatpush2.msra.mxu0 0.0
        %2137 = vmatprep.subr.mxu0 0.0
        %2138 = vmatpush2.msra.mxu0 0.0
        %2139 = vmatprep.subr.mxu0 0.0
        %2140 = vmatpush2.msra.mxu0 0.0
        %2141 = vmatprep.subr.mxu0 0.0
        %2142 = vmatpush2.msra.mxu0 0.0
        %2143 = vmatprep.mubr.f32.mxu0 0.0
        %v2144 = vand.u32 %v1605, 4294901760
        %v2145 = vsub.f32 %v1605, %v2144
        %v2146 = vand.u32 %v2145, 4294901760
        %2147 = vmatmul.mubr.f32.gmra.mxu0 %v2146
        %v2148 = vpop.f32.mrf.mxu0
        %v2149 = vadd.f32 %v2019, %v2148
        %v2150 = vpop.f32.mrf.mxu0
        %2151 = vmatprep.mubr.f32.mxu0 0.0
        %v2152 = vand.u32 %v1608, 4294901760
        %v2153 = vsub.f32 %v1608, %v2152
        %v2154 = vand.u32 %v2153, 4294901760
        %2155 = vmatmul.mubr.f32.gmra.mxu0 %v2154
        %v2156 = vpop.f32.mrf.mxu0
        %v2157 = vadd.f32 %v2026, %v2156
        %v2158 = vpop.f32.mrf.mxu0
        %2159 = vmatprep.mubr.f32.mxu0 0.0
        %v2160 = vand.u32 %v1611, 4294901760
        %v2161 = vsub.f32 %v1611, %v2160
        %v2162 = vand.u32 %v2161, 4294901760
        %2163 = vmatmul.mubr.f32.gmra.mxu0 %v2162
        %v2164 = vpop.f32.mrf.mxu0
        %v2165 = vadd.f32 %v2033, %v2164
        %v2166 = vpop.f32.mrf.mxu0
        %2167 = vmatprep.mubr.f32.mxu0 0.0
        %v2168 = vand.u32 %v1614, 4294901760
        %v2169 = vsub.f32 %v1614, %v2168
        %v2170 = vand.u32 %v2169, 4294901760
        %2171 = vmatmul.mubr.f32.gmra.mxu0 %v2170
        %v2172 = vpop.f32.mrf.mxu0
        %v2173 = vadd.f32 %v2040, %v2172
        %v2174 = vpop.f32.mrf.mxu0
        %2175 = vmatprep.mubr.f32.mxu0 0.0
        %v2176 = vand.u32 %v1617, 4294901760
        %v2177 = vsub.f32 %v1617, %v2176
        %v2178 = vand.u32 %v2177, 4294901760
        %2179 = vmatmul.mubr.f32.gmra.mxu0 %v2178
        %v2180 = vpop.f32.mrf.mxu0
        %v2181 = vadd.f32 %v2047, %v2180
        %v2182 = vpop.f32.mrf.mxu0
        %2183 = vmatprep.mubr.f32.mxu0 0.0
        %v2184 = vand.u32 %v1620, 4294901760
        %v2185 = vsub.f32 %v1620, %v2184
        %v2186 = vand.u32 %v2185, 4294901760
        %2187 = vmatmul.mubr.f32.gmra.mxu0 %v2186
        %v2188 = vpop.f32.mrf.mxu0
        %v2189 = vadd.f32 %v2054, %v2188
        %v2190 = vpop.f32.mrf.mxu0
        %2191 = vmatprep.mubr.f32.mxu0 0.0
        %v2192 = vand.u32 %v1623, 4294901760
        %v2193 = vsub.f32 %v1623, %v2192
        %v2194 = vand.u32 %v2193, 4294901760
        %2195 = vmatmul.mubr.f32.gmra.mxu0 %v2194
        %v2196 = vpop.f32.mrf.mxu0
        %v2197 = vadd.f32 %v2061, %v2196
        %v2198 = vpop.f32.mrf.mxu0
        %2199 = vmatprep.mubr.f32.mxu0 0.0
        %v2200 = vand.u32 %v1626, 4294901760
        %v2201 = vsub.f32 %v1626, %v2200
        %v2202 = vand.u32 %v2201, 4294901760
        %2203 = vmatmul.mubr.f32.gmra.mxu0 %v2202
        %v2204 = vpop.f32.mrf.mxu0
        %v2205 = vadd.f32 %v2068, %v2204
        %v2206 = vpop.f32.mrf.mxu0
        %2207 = vdwg.mxu0
        %2208 = vmatprep.subr.mxu0 0.0
        %2209 = vmatpush1.msra.mxu0 0.0
        %2210 = vmatprep.subr.mxu0 0.0
        %2211 = vmatpush1.msra.mxu0 0.0
        %2212 = vmatprep.subr.mxu0 0.0
        %2213 = vmatpush1.msra.mxu0 0.0
        %2214 = vmatprep.subr.mxu0 0.0
        %2215 = vmatpush1.msra.mxu0 0.0
        %2216 = vmatprep.subr.mxu0 0.0
        %2217 = vmatpush1.msra.mxu0 0.0
        %2218 = vmatprep.subr.mxu0 0.0
        %2219 = vmatpush1.msra.mxu0 0.0
        %2220 = vmatprep.subr.mxu0 0.0
        %2221 = vmatpush1.msra.mxu0 0.0
        %2222 = vmatprep.subr.mxu0 0.0
        %2223 = vmatpush1.msra.mxu0 0.0
        %2224 = vmatprep.subr.mxu0 0.0
        %v2225 = vand.u32 %v730, 4294901760
        %v2226 = vsub.f32 %v730, %v2225
        %v2227 = vand.u32 %v2226, 4294901760
        %2228 = vmatpush1.msra.mxu0 %v2227
        %2229 = vmatprep.subr.mxu0 0.0
        %v2230 = vand.u32 %v729, 4294901760
        %v2231 = vsub.f32 %v729, %v2230
        %v2232 = vand.u32 %v2231, 4294901760
        %2233 = vmatpush1.msra.mxu0 %v2232
        %2234 = vmatprep.subr.mxu0 0.0
        %v2235 = vand.u32 %v728, 4294901760
        %v2236 = vsub.f32 %v728, %v2235
        %v2237 = vand.u32 %v2236, 4294901760
        %2238 = vmatpush1.msra.mxu0 %v2237
        %2239 = vmatprep.subr.mxu0 0.0
        %v2240 = vand.u32 %v727, 4294901760
        %v2241 = vsub.f32 %v727, %v2240
        %v2242 = vand.u32 %v2241, 4294901760
        %2243 = vmatpush1.msra.mxu0 %v2242
        %2244 = vmatprep.subr.mxu0 0.0
        %v2245 = vand.u32 %v726, 4294901760
        %v2246 = vsub.f32 %v726, %v2245
        %v2247 = vand.u32 %v2246, 4294901760
        %2248 = vmatpush1.msra.mxu0 %v2247
        %2249 = vmatprep.subr.mxu0 0.0
        %v2250 = vand.u32 %v725, 4294901760
        %v2251 = vsub.f32 %v725, %v2250
        %v2252 = vand.u32 %v2251, 4294901760
        %2253 = vmatpush1.msra.mxu0 %v2252
        %2254 = vmatprep.subr.mxu0 0.0
        %v2255 = vand.u32 %v724, 4294901760
        %v2256 = vsub.f32 %v724, %v2255
        %v2257 = vand.u32 %v2256, 4294901760
        %2258 = vmatpush1.msra.mxu0 %v2257
        %2259 = vmatprep.subr.mxu0 0.0
        %v2260 = vand.u32 %v723, 4294901760
        %v2261 = vsub.f32 %v723, %v2260
        %v2262 = vand.u32 %v2261, 4294901760
        %2263 = vmatpush1.msra.mxu0 %v2262
        %2264 = vmatprep.subr.mxu0 0.0
        %2265 = vmatpush2.msra.mxu0 0.0
        %2266 = vmatprep.subr.mxu0 0.0
        %2267 = vmatpush2.msra.mxu0 0.0
        %2268 = vmatprep.subr.mxu0 0.0
        %2269 = vmatpush2.msra.mxu0 0.0
        %2270 = vmatprep.subr.mxu0 0.0
        %2271 = vmatpush2.msra.mxu0 0.0
        %2272 = vmatprep.subr.mxu0 0.0
        %2273 = vmatpush2.msra.mxu0 0.0
        %2274 = vmatprep.subr.mxu0 0.0
        %2275 = vmatpush2.msra.mxu0 0.0
        %2276 = vmatprep.subr.mxu0 0.0
        %2277 = vmatpush2.msra.mxu0 0.0
        %2278 = vmatprep.subr.mxu0 0.0
        %2279 = vmatpush2.msra.mxu0 0.0
        %2280 = vmatprep.subr.mxu0 0.0
        %2281 = vmatpush2.msra.mxu0 0.0
        %2282 = vmatprep.subr.mxu0 0.0
        %2283 = vmatpush2.msra.mxu0 0.0
        %2284 = vmatprep.subr.mxu0 0.0
        %2285 = vmatpush2.msra.mxu0 0.0
        %2286 = vmatprep.subr.mxu0 0.0
        %2287 = vmatpush2.msra.mxu0 0.0
        %2288 = vmatprep.subr.mxu0 0.0
        %2289 = vmatpush2.msra.mxu0 0.0
        %2290 = vmatprep.subr.mxu0 0.0
        %2291 = vmatpush2.msra.mxu0 0.0
        %2292 = vmatprep.subr.mxu0 0.0
        %2293 = vmatpush2.msra.mxu0 0.0
        %2294 = vmatprep.subr.mxu0 0.0
        %2295 = vmatpush2.msra.mxu0 0.0
        %2296 = vmatprep.mubr.f32.mxu0 0.0
        %v2297 = vand.u32 %v1605, 4294901760
        %2298 = vmatmul.mubr.f32.gmra.mxu0 %v2297
        %v2299 = vpop.f32.mrf.mxu0
        %v2300 = vadd.f32 %v2149, %v2299
        %v2301 = vpop.f32.mrf.mxu0
        %2302 = vmatprep.mubr.f32.mxu0 0.0
        %v2303 = vand.u32 %v1608, 4294901760
        %2304 = vmatmul.mubr.f32.gmra.mxu0 %v2303
        %v2305 = vpop.f32.mrf.mxu0
        %v2306 = vadd.f32 %v2157, %v2305
        %v2307 = vpop.f32.mrf.mxu0
        %2308 = vmatprep.mubr.f32.mxu0 0.0
        %v2309 = vand.u32 %v1611, 4294901760
        %2310 = vmatmul.mubr.f32.gmra.mxu0 %v2309
        %v2311 = vpop.f32.mrf.mxu0
        %v2312 = vadd.f32 %v2165, %v2311
        %v2313 = vpop.f32.mrf.mxu0
        %2314 = vmatprep.mubr.f32.mxu0 0.0
        %v2315 = vand.u32 %v1614, 4294901760
        %2316 = vmatmul.mubr.f32.gmra.mxu0 %v2315
        %v2317 = vpop.f32.mrf.mxu0
        %v2318 = vadd.f32 %v2173, %v2317
        %v2319 = vpop.f32.mrf.mxu0
        %2320 = vmatprep.mubr.f32.mxu0 0.0
        %v2321 = vand.u32 %v1617, 4294901760
        %2322 = vmatmul.mubr.f32.gmra.mxu0 %v2321
        %v2323 = vpop.f32.mrf.mxu0
        %v2324 = vadd.f32 %v2181, %v2323
        %v2325 = vpop.f32.mrf.mxu0
        %2326 = vmatprep.mubr.f32.mxu0 0.0
        %v2327 = vand.u32 %v1620, 4294901760
        %2328 = vmatmul.mubr.f32.gmra.mxu0 %v2327
        %v2329 = vpop.f32.mrf.mxu0
        %v2330 = vadd.f32 %v2189, %v2329
        %v2331 = vpop.f32.mrf.mxu0
        %2332 = vmatprep.mubr.f32.mxu0 0.0
        %v2333 = vand.u32 %v1623, 4294901760
        %2334 = vmatmul.mubr.f32.gmra.mxu0 %v2333
        %v2335 = vpop.f32.mrf.mxu0
        %v2336 = vadd.f32 %v2197, %v2335
        %v2337 = vpop.f32.mrf.mxu0
        %2338 = vmatprep.mubr.f32.mxu0 0.0
        %v2339 = vand.u32 %v1626, 4294901760
        %2340 = vmatmul.mubr.f32.gmra.mxu0 %v2339
        %v2341 = vpop.f32.mrf.mxu0
        %v2342 = vadd.f32 %v2205, %v2341
        %v2343 = vpop.f32.mrf.mxu0
        %2344 = vdwg.mxu0
        %2345 = vmatprep.subr.mxu0 0.0
        %2346 = vmatpush1.msra.mxu0 0.0
        %2347 = vmatprep.subr.mxu0 0.0
        %2348 = vmatpush1.msra.mxu0 0.0
        %2349 = vmatprep.subr.mxu0 0.0
        %2350 = vmatpush1.msra.mxu0 0.0
        %2351 = vmatprep.subr.mxu0 0.0
        %2352 = vmatpush1.msra.mxu0 0.0
        %2353 = vmatprep.subr.mxu0 0.0
        %2354 = vmatpush1.msra.mxu0 0.0
        %2355 = vmatprep.subr.mxu0 0.0
        %2356 = vmatpush1.msra.mxu0 0.0
        %2357 = vmatprep.subr.mxu0 0.0
        %2358 = vmatpush1.msra.mxu0 0.0
        %2359 = vmatprep.subr.mxu0 0.0
        %2360 = vmatpush1.msra.mxu0 0.0
        %2361 = vmatprep.subr.mxu0 0.0
        %v2362 = vand.u32 %v730, 4294901760
        %2363 = vmatpush1.msra.mxu0 %v2362
        %2364 = vmatprep.subr.mxu0 0.0
        %v2365 = vand.u32 %v729, 4294901760
        %2366 = vmatpush1.msra.mxu0 %v2365
        %2367 = vmatprep.subr.mxu0 0.0
        %v2368 = vand.u32 %v728, 4294901760
        %2369 = vmatpush1.msra.mxu0 %v2368
        %2370 = vmatprep.subr.mxu0 0.0
        %v2371 = vand.u32 %v727, 4294901760
        %2372 = vmatpush1.msra.mxu0 %v2371
        %2373 = vmatprep.subr.mxu0 0.0
        %v2374 = vand.u32 %v726, 4294901760
        %2375 = vmatpush1.msra.mxu0 %v2374
        %2376 = vmatprep.subr.mxu0 0.0
        %v2377 = vand.u32 %v725, 4294901760
        %2378 = vmatpush1.msra.mxu0 %v2377
        %2379 = vmatprep.subr.mxu0 0.0
        %v2380 = vand.u32 %v724, 4294901760
        %2381 = vmatpush1.msra.mxu0 %v2380
        %2382 = vmatprep.subr.mxu0 0.0
        %v2383 = vand.u32 %v723, 4294901760
        %2384 = vmatpush1.msra.mxu0 %v2383
        %2385 = vmatprep.subr.mxu0 0.0
        %2386 = vmatpush2.msra.mxu0 0.0
        %2387 = vmatprep.subr.mxu0 0.0
        %2388 = vmatpush2.msra.mxu0 0.0
        %2389 = vmatprep.subr.mxu0 0.0
        %2390 = vmatpush2.msra.mxu0 0.0
        %2391 = vmatprep.subr.mxu0 0.0
        %2392 = vmatpush2.msra.mxu0 0.0
        %2393 = vmatprep.subr.mxu0 0.0
        %2394 = vmatpush2.msra.mxu0 0.0
        %2395 = vmatprep.subr.mxu0 0.0
        %2396 = vmatpush2.msra.mxu0 0.0
        %2397 = vmatprep.subr.mxu0 0.0
        %2398 = vmatpush2.msra.mxu0 0.0
        %2399 = vmatprep.subr.mxu0 0.0
        %2400 = vmatpush2.msra.mxu0 0.0
        %2401 = vmatprep.subr.mxu0 0.0
        %2402 = vmatpush2.msra.mxu0 0.0
        %2403 = vmatprep.subr.mxu0 0.0
        %2404 = vmatpush2.msra.mxu0 0.0
        %2405 = vmatprep.subr.mxu0 0.0
        %2406 = vmatpush2.msra.mxu0 0.0
        %2407 = vmatprep.subr.mxu0 0.0
        %2408 = vmatpush2.msra.mxu0 0.0
        %2409 = vmatprep.subr.mxu0 0.0
        %2410 = vmatpush2.msra.mxu0 0.0
        %2411 = vmatprep.subr.mxu0 0.0
        %2412 = vmatpush2.msra.mxu0 0.0
        %2413 = vmatprep.subr.mxu0 0.0
        %2414 = vmatpush2.msra.mxu0 0.0
        %2415 = vmatprep.subr.mxu0 0.0
        %2416 = vmatpush2.msra.mxu0 0.0
        %2417 = vmatprep.mubr.f32.mxu0 0.0
        %v2418 = vand.u32 %v1605, 4294901760
        %2419 = vmatmul.mubr.f32.gmra.mxu0 %v2418
        %v2420 = vpop.f32.mrf.mxu0
        %v2421 = vadd.f32 %v2300, %v2420
        %v2422 = vpop.f32.mrf.mxu0
        %2423 = vmatprep.mubr.f32.mxu0 0.0
        %v2424 = vand.u32 %v1608, 4294901760
        %2425 = vmatmul.mubr.f32.gmra.mxu0 %v2424
        %v2426 = vpop.f32.mrf.mxu0
        %v2427 = vadd.f32 %v2306, %v2426
        %v2428 = vpop.f32.mrf.mxu0
        %2429 = vmatprep.mubr.f32.mxu0 0.0
        %v2430 = vand.u32 %v1611, 4294901760
        %2431 = vmatmul.mubr.f32.gmra.mxu0 %v2430
        %v2432 = vpop.f32.mrf.mxu0
        %v2433 = vadd.f32 %v2312, %v2432
        %v2434 = vpop.f32.mrf.mxu0
        %2435 = vmatprep.mubr.f32.mxu0 0.0
        %v2436 = vand.u32 %v1614, 4294901760
        %2437 = vmatmul.mubr.f32.gmra.mxu0 %v2436
        %v2438 = vpop.f32.mrf.mxu0
        %v2439 = vadd.f32 %v2318, %v2438
        %v2440 = vpop.f32.mrf.mxu0
        %2441 = vmatprep.mubr.f32.mxu0 0.0
        %v2442 = vand.u32 %v1617, 4294901760
        %2443 = vmatmul.mubr.f32.gmra.mxu0 %v2442
        %v2444 = vpop.f32.mrf.mxu0
        %v2445 = vadd.f32 %v2324, %v2444
        %v2446 = vpop.f32.mrf.mxu0
        %2447 = vmatprep.mubr.f32.mxu0 0.0
        %v2448 = vand.u32 %v1620, 4294901760
        %2449 = vmatmul.mubr.f32.gmra.mxu0 %v2448
        %v2450 = vpop.f32.mrf.mxu0
        %v2451 = vadd.f32 %v2330, %v2450
        %v2452 = vpop.f32.mrf.mxu0
        %2453 = vmatprep.mubr.f32.mxu0 0.0
        %v2454 = vand.u32 %v1623, 4294901760
        %2455 = vmatmul.mubr.f32.gmra.mxu0 %v2454
        %v2456 = vpop.f32.mrf.mxu0
        %v2457 = vadd.f32 %v2336, %v2456
        %v2458 = vpop.f32.mrf.mxu0
        %2459 = vmatprep.mubr.f32.mxu0 0.0
        %v2460 = vand.u32 %v1626, 4294901760
        %2461 = vmatmul.mubr.f32.gmra.mxu0 %v2460
        %v2462 = vpop.f32.mrf.mxu0
        %v2463 = vadd.f32 %v2342, %v2462
        %v2464 = vpop.f32.mrf.mxu0
        %2465 = vdwg.mxu0
        %v2466 = vmul.f32 %v1551, %v1551
        %v2467 = vmul.f32 %v1557, %v1557
        %v2468 = vmul.f32 %v1563, %v1563
        %v2469 = vmul.f32 %v1569, %v1569
        %v2470 = vmul.f32 %v1575, %v1575
        %v2471 = vmul.f32 %v1581, %v1581
        %v2472 = vmul.f32 %v1587, %v1587
        %v2473 = vmul.f32 %v1593, %v1593
        %v2474 = vsub.f32 %v2421, %v2466
        %v2475 = vsub.f32 %v2427, %v2467
        %v2476 = vsub.f32 %v2433, %v2468
        %v2477 = vsub.f32 %v2439, %v2469
        %v2478 = vsub.f32 %v2445, %v2470
        %v2479 = vsub.f32 %v2451, %v2471
        %v2480 = vsub.f32 %v2457, %v2472
        %v2481 = vsub.f32 %v2463, %v2473
        %v2482 = vmax.f32 %v2474, 0.0
        %v2483 = vmax.f32 %v2475, 0.0
        %v2484 = vmax.f32 %v2476, 0.0
        %v2485 = vmax.f32 %v2477, 0.0
        %v2486 = vmax.f32 %v2478, 0.0
        %v2487 = vmax.f32 %v2479, 0.0
        %v2488 = vmax.f32 %v2480, 0.0
        %v2489 = vmax.f32 %v2481, 0.0
        %vm2490 = vcmask 130048
        %v2492 = vsel %vm2490, %v1551, 0
        %v2495 = vsel %vm2490, %v1557, 0
        %v2498 = vsel %vm2490, %v1563, 0
        %v2501 = vsel %vm2490, %v1569, 0
        %v2504 = vsel %vm2490, %v1575, 0
        %v2507 = vsel %vm2490, %v1581, 0
        %v2510 = vsel %vm2490, %v1587, 0
        %v2513 = vsel %vm2490, %v1593, 0
        %2515 = vmatprep.subr.mxu0 0.0
        %2516 = vmatpush1.msra.mxu0 0.0
        %2517 = vmatprep.subr.mxu0 0.0
        %2518 = vmatpush1.msra.mxu0 0.0
        %2519 = vmatprep.subr.mxu0 0.0
        %2520 = vmatpush1.msra.mxu0 0.0
        %2521 = vmatprep.subr.mxu0 0.0
        %2522 = vmatpush1.msra.mxu0 0.0
        %2523 = vmatprep.subr.mxu0 0.0
        %2524 = vmatpush1.msra.mxu0 0.0
        %2525 = vmatprep.subr.mxu0 0.0
        %2526 = vmatpush1.msra.mxu0 0.0
        %2527 = vmatprep.subr.mxu0 0.0
        %2528 = vmatpush1.msra.mxu0 0.0
        %2529 = vmatprep.subr.mxu0 0.0
        %2530 = vmatpush1.msra.mxu0 0.0
        %2531 = vmatprep.subr.mxu0 0.0
        %2532 = vmatpush1.msra.mxu0 0.0
        %2533 = vmatprep.subr.mxu0 0.0
        %2534 = vmatpush1.msra.mxu0 0.0
        %2535 = vmatprep.subr.mxu0 0.0
        %2536 = vmatpush1.msra.mxu0 0.0
        %2537 = vmatprep.subr.mxu0 0.0
        %2538 = vmatpush1.msra.mxu0 0.0
        %2539 = vmatprep.subr.mxu0 0.0
        %2540 = vmatpush1.msra.mxu0 0.0
        %2541 = vmatprep.subr.mxu0 0.0
        %2542 = vmatpush1.msra.mxu0 0.0
        %2543 = vmatprep.subr.mxu0 0.0
        %v2544 = vand.u32 %v732, 4294901760
        %2545 = vmatpush1.msra.mxu0 %v2544
        %2546 = vmatprep.subr.mxu0 0.0
        %v2547 = vand.u32 %v731, 4294901760
        %2548 = vmatpush1.msra.mxu0 %v2547
        %2549 = vmatprep.subr.mxu0 0.0
        %2550 = vmatpush2.msra.mxu0 0.0
        %2551 = vmatprep.subr.mxu0 0.0
        %2552 = vmatpush2.msra.mxu0 0.0
        %2553 = vmatprep.subr.mxu0 0.0
        %2554 = vmatpush2.msra.mxu0 0.0
        %2555 = vmatprep.subr.mxu0 0.0
        %2556 = vmatpush2.msra.mxu0 0.0
        %2557 = vmatprep.subr.mxu0 0.0
        %2558 = vmatpush2.msra.mxu0 0.0
        %2559 = vmatprep.subr.mxu0 0.0
        %2560 = vmatpush2.msra.mxu0 0.0
        %2561 = vmatprep.subr.mxu0 0.0
        %2562 = vmatpush2.msra.mxu0 0.0
        %2563 = vmatprep.subr.mxu0 0.0
        %2564 = vmatpush2.msra.mxu0 0.0
        %2565 = vmatprep.subr.mxu0 0.0
        %2566 = vmatpush2.msra.mxu0 0.0
        %2567 = vmatprep.subr.mxu0 0.0
        %2568 = vmatpush2.msra.mxu0 0.0
        %2569 = vmatprep.subr.mxu0 0.0
        %2570 = vmatpush2.msra.mxu0 0.0
        %2571 = vmatprep.subr.mxu0 0.0
        %2572 = vmatpush2.msra.mxu0 0.0
        %2573 = vmatprep.subr.mxu0 0.0
        %2574 = vmatpush2.msra.mxu0 0.0
        %2575 = vmatprep.subr.mxu0 0.0
        %2576 = vmatpush2.msra.mxu0 0.0
        %2577 = vmatprep.subr.mxu0 0.0
        %2578 = vmatpush2.msra.mxu0 0.0
        %2579 = vmatprep.subr.mxu0 0.0
        %2580 = vmatpush2.msra.mxu0 0.0
        %2581 = vmatprep.mubr.f32.mxu0 0.0
        %v2582 = vand.u32 %v2492, 4294901760
        %v2583 = vsub.f32 %v2492, %v2582
        %v2584 = vand.u32 %v2583, 4294901760
        %v2585 = vsub.f32 %v2583, %v2584
        %v2586 = vand.u32 %v2585, 4294901760
        %2587 = vmatmul.mubr.f32.gmra.mxu0 %v2586
        %v2588 = vpop.f32.mrf.mxu0
        %v2589 = vadd.f32 0.0, %v2588
        %v2590 = vpop.f32.mrf.mxu0
        %2591 = vmatprep.mubr.f32.mxu0 0.0
        %v2592 = vand.u32 %v2495, 4294901760
        %v2593 = vsub.f32 %v2495, %v2592
        %v2594 = vand.u32 %v2593, 4294901760
        %v2595 = vsub.f32 %v2593, %v2594
        %v2596 = vand.u32 %v2595, 4294901760
        %2597 = vmatmul.mubr.f32.gmra.mxu0 %v2596
        %v2598 = vpop.f32.mrf.mxu0
        %v2599 = vadd.f32 0.0, %v2598
        %v2600 = vpop.f32.mrf.mxu0
        %2601 = vmatprep.mubr.f32.mxu0 0.0
        %v2602 = vand.u32 %v2498, 4294901760
        %v2603 = vsub.f32 %v2498, %v2602
        %v2604 = vand.u32 %v2603, 4294901760
        %v2605 = vsub.f32 %v2603, %v2604
        %v2606 = vand.u32 %v2605, 4294901760
        %2607 = vmatmul.mubr.f32.gmra.mxu0 %v2606
        %v2608 = vpop.f32.mrf.mxu0
        %v2609 = vadd.f32 0.0, %v2608
        %v2610 = vpop.f32.mrf.mxu0
        %2611 = vmatprep.mubr.f32.mxu0 0.0
        %v2612 = vand.u32 %v2501, 4294901760
        %v2613 = vsub.f32 %v2501, %v2612
        %v2614 = vand.u32 %v2613, 4294901760
        %v2615 = vsub.f32 %v2613, %v2614
        %v2616 = vand.u32 %v2615, 4294901760
        %2617 = vmatmul.mubr.f32.gmra.mxu0 %v2616
        %v2618 = vpop.f32.mrf.mxu0
        %v2619 = vadd.f32 0.0, %v2618
        %v2620 = vpop.f32.mrf.mxu0
        %2621 = vmatprep.mubr.f32.mxu0 0.0
        %v2622 = vand.u32 %v2504, 4294901760
        %v2623 = vsub.f32 %v2504, %v2622
        %v2624 = vand.u32 %v2623, 4294901760
        %v2625 = vsub.f32 %v2623, %v2624
        %v2626 = vand.u32 %v2625, 4294901760
        %2627 = vmatmul.mubr.f32.gmra.mxu0 %v2626
        %v2628 = vpop.f32.mrf.mxu0
        %v2629 = vadd.f32 0.0, %v2628
        %v2630 = vpop.f32.mrf.mxu0
        %2631 = vmatprep.mubr.f32.mxu0 0.0
        %v2632 = vand.u32 %v2507, 4294901760
        %v2633 = vsub.f32 %v2507, %v2632
        %v2634 = vand.u32 %v2633, 4294901760
        %v2635 = vsub.f32 %v2633, %v2634
        %v2636 = vand.u32 %v2635, 4294901760
        %2637 = vmatmul.mubr.f32.gmra.mxu0 %v2636
        %v2638 = vpop.f32.mrf.mxu0
        %v2639 = vadd.f32 0.0, %v2638
        %v2640 = vpop.f32.mrf.mxu0
        %2641 = vmatprep.mubr.f32.mxu0 0.0
        %v2642 = vand.u32 %v2510, 4294901760
        %v2643 = vsub.f32 %v2510, %v2642
        %v2644 = vand.u32 %v2643, 4294901760
        %v2645 = vsub.f32 %v2643, %v2644
        %v2646 = vand.u32 %v2645, 4294901760
        %2647 = vmatmul.mubr.f32.gmra.mxu0 %v2646
        %v2648 = vpop.f32.mrf.mxu0
        %v2649 = vadd.f32 0.0, %v2648
        %v2650 = vpop.f32.mrf.mxu0
        %2651 = vmatprep.mubr.f32.mxu0 0.0
        %v2652 = vand.u32 %v2513, 4294901760
        %v2653 = vsub.f32 %v2513, %v2652
        %v2654 = vand.u32 %v2653, 4294901760
        %v2655 = vsub.f32 %v2653, %v2654
        %v2656 = vand.u32 %v2655, 4294901760
        %2657 = vmatmul.mubr.f32.gmra.mxu0 %v2656
        %v2658 = vpop.f32.mrf.mxu0
        %v2659 = vadd.f32 0.0, %v2658
        %v2660 = vpop.f32.mrf.mxu0
        %2661 = vdwg.mxu0
        %2662 = vmatprep.subr.mxu0 0.0
        %2663 = vmatpush1.msra.mxu0 0.0
        %2664 = vmatprep.subr.mxu0 0.0
        %2665 = vmatpush1.msra.mxu0 0.0
        %2666 = vmatprep.subr.mxu0 0.0
        %2667 = vmatpush1.msra.mxu0 0.0
        %2668 = vmatprep.subr.mxu0 0.0
        %2669 = vmatpush1.msra.mxu0 0.0
        %2670 = vmatprep.subr.mxu0 0.0
        %2671 = vmatpush1.msra.mxu0 0.0
        %2672 = vmatprep.subr.mxu0 0.0
        %2673 = vmatpush1.msra.mxu0 0.0
        %2674 = vmatprep.subr.mxu0 0.0
        %2675 = vmatpush1.msra.mxu0 0.0
        %2676 = vmatprep.subr.mxu0 0.0
        %2677 = vmatpush1.msra.mxu0 0.0
        %2678 = vmatprep.subr.mxu0 0.0
        %2679 = vmatpush1.msra.mxu0 0.0
        %2680 = vmatprep.subr.mxu0 0.0
        %2681 = vmatpush1.msra.mxu0 0.0
        %2682 = vmatprep.subr.mxu0 0.0
        %2683 = vmatpush1.msra.mxu0 0.0
        %2684 = vmatprep.subr.mxu0 0.0
        %2685 = vmatpush1.msra.mxu0 0.0
        %2686 = vmatprep.subr.mxu0 0.0
        %2687 = vmatpush1.msra.mxu0 0.0
        %2688 = vmatprep.subr.mxu0 0.0
        %2689 = vmatpush1.msra.mxu0 0.0
        %2690 = vmatprep.subr.mxu0 0.0
        %v2691 = vand.u32 %v732, 4294901760
        %v2692 = vsub.f32 %v732, %v2691
        %v2693 = vand.u32 %v2692, 4294901760
        %v2694 = vsub.f32 %v2692, %v2693
        %v2695 = vand.u32 %v2694, 4294901760
        %2696 = vmatpush1.msra.mxu0 %v2695
        %2697 = vmatprep.subr.mxu0 0.0
        %v2698 = vand.u32 %v731, 4294901760
        %v2699 = vsub.f32 %v731, %v2698
        %v2700 = vand.u32 %v2699, 4294901760
        %v2701 = vsub.f32 %v2699, %v2700
        %v2702 = vand.u32 %v2701, 4294901760
        %2703 = vmatpush1.msra.mxu0 %v2702
        %2704 = vmatprep.subr.mxu0 0.0
        %2705 = vmatpush2.msra.mxu0 0.0
        %2706 = vmatprep.subr.mxu0 0.0
        %2707 = vmatpush2.msra.mxu0 0.0
        %2708 = vmatprep.subr.mxu0 0.0
        %2709 = vmatpush2.msra.mxu0 0.0
        %2710 = vmatprep.subr.mxu0 0.0
        %2711 = vmatpush2.msra.mxu0 0.0
        %2712 = vmatprep.subr.mxu0 0.0
        %2713 = vmatpush2.msra.mxu0 0.0
        %2714 = vmatprep.subr.mxu0 0.0
        %2715 = vmatpush2.msra.mxu0 0.0
        %2716 = vmatprep.subr.mxu0 0.0
        %2717 = vmatpush2.msra.mxu0 0.0
        %2718 = vmatprep.subr.mxu0 0.0
        %2719 = vmatpush2.msra.mxu0 0.0
        %2720 = vmatprep.subr.mxu0 0.0
        %2721 = vmatpush2.msra.mxu0 0.0
        %2722 = vmatprep.subr.mxu0 0.0
        %2723 = vmatpush2.msra.mxu0 0.0
        %2724 = vmatprep.subr.mxu0 0.0
        %2725 = vmatpush2.msra.mxu0 0.0
        %2726 = vmatprep.subr.mxu0 0.0
        %2727 = vmatpush2.msra.mxu0 0.0
        %2728 = vmatprep.subr.mxu0 0.0
        %2729 = vmatpush2.msra.mxu0 0.0
        %2730 = vmatprep.subr.mxu0 0.0
        %2731 = vmatpush2.msra.mxu0 0.0
        %2732 = vmatprep.subr.mxu0 0.0
        %2733 = vmatpush2.msra.mxu0 0.0
        %2734 = vmatprep.subr.mxu0 0.0
        %2735 = vmatpush2.msra.mxu0 0.0
        %2736 = vmatprep.mubr.f32.mxu0 0.0
        %v2737 = vand.u32 %v2492, 4294901760
        %2738 = vmatmul.mubr.f32.gmra.mxu0 %v2737
        %v2739 = vpop.f32.mrf.mxu0
        %v2740 = vadd.f32 %v2589, %v2739
        %v2741 = vpop.f32.mrf.mxu0
        %2742 = vmatprep.mubr.f32.mxu0 0.0
        %v2743 = vand.u32 %v2495, 4294901760
        %2744 = vmatmul.mubr.f32.gmra.mxu0 %v2743
        %v2745 = vpop.f32.mrf.mxu0
        %v2746 = vadd.f32 %v2599, %v2745
        %v2747 = vpop.f32.mrf.mxu0
        %2748 = vmatprep.mubr.f32.mxu0 0.0
        %v2749 = vand.u32 %v2498, 4294901760
        %2750 = vmatmul.mubr.f32.gmra.mxu0 %v2749
        %v2751 = vpop.f32.mrf.mxu0
        %v2752 = vadd.f32 %v2609, %v2751
        %v2753 = vpop.f32.mrf.mxu0
        %2754 = vmatprep.mubr.f32.mxu0 0.0
        %v2755 = vand.u32 %v2501, 4294901760
        %2756 = vmatmul.mubr.f32.gmra.mxu0 %v2755
        %v2757 = vpop.f32.mrf.mxu0
        %v2758 = vadd.f32 %v2619, %v2757
        %v2759 = vpop.f32.mrf.mxu0
        %2760 = vmatprep.mubr.f32.mxu0 0.0
        %v2761 = vand.u32 %v2504, 4294901760
        %2762 = vmatmul.mubr.f32.gmra.mxu0 %v2761
        %v2763 = vpop.f32.mrf.mxu0
        %v2764 = vadd.f32 %v2629, %v2763
        %v2765 = vpop.f32.mrf.mxu0
        %2766 = vmatprep.mubr.f32.mxu0 0.0
        %v2767 = vand.u32 %v2507, 4294901760
        %2768 = vmatmul.mubr.f32.gmra.mxu0 %v2767
        %v2769 = vpop.f32.mrf.mxu0
        %v2770 = vadd.f32 %v2639, %v2769
        %v2771 = vpop.f32.mrf.mxu0
        %2772 = vmatprep.mubr.f32.mxu0 0.0
        %v2773 = vand.u32 %v2510, 4294901760
        %2774 = vmatmul.mubr.f32.gmra.mxu0 %v2773
        %v2775 = vpop.f32.mrf.mxu0
        %v2776 = vadd.f32 %v2649, %v2775
        %v2777 = vpop.f32.mrf.mxu0
        %2778 = vmatprep.mubr.f32.mxu0 0.0
        %v2779 = vand.u32 %v2513, 4294901760
        %2780 = vmatmul.mubr.f32.gmra.mxu0 %v2779
        %v2781 = vpop.f32.mrf.mxu0
        %v2782 = vadd.f32 %v2659, %v2781
        %v2783 = vpop.f32.mrf.mxu0
        %2784 = vdwg.mxu0
        %2785 = vmatprep.subr.mxu0 0.0
        %2786 = vmatpush1.msra.mxu0 0.0
        %2787 = vmatprep.subr.mxu0 0.0
        %2788 = vmatpush1.msra.mxu0 0.0
        %2789 = vmatprep.subr.mxu0 0.0
        %2790 = vmatpush1.msra.mxu0 0.0
        %2791 = vmatprep.subr.mxu0 0.0
        %2792 = vmatpush1.msra.mxu0 0.0
        %2793 = vmatprep.subr.mxu0 0.0
        %2794 = vmatpush1.msra.mxu0 0.0
        %2795 = vmatprep.subr.mxu0 0.0
        %2796 = vmatpush1.msra.mxu0 0.0
        %2797 = vmatprep.subr.mxu0 0.0
        %2798 = vmatpush1.msra.mxu0 0.0
        %2799 = vmatprep.subr.mxu0 0.0
        %2800 = vmatpush1.msra.mxu0 0.0
        %2801 = vmatprep.subr.mxu0 0.0
        %2802 = vmatpush1.msra.mxu0 0.0
        %2803 = vmatprep.subr.mxu0 0.0
        %2804 = vmatpush1.msra.mxu0 0.0
        %2805 = vmatprep.subr.mxu0 0.0
        %2806 = vmatpush1.msra.mxu0 0.0
        %2807 = vmatprep.subr.mxu0 0.0
        %2808 = vmatpush1.msra.mxu0 0.0
        %2809 = vmatprep.subr.mxu0 0.0
        %2810 = vmatpush1.msra.mxu0 0.0
        %2811 = vmatprep.subr.mxu0 0.0
        %2812 = vmatpush1.msra.mxu0 0.0
        %2813 = vmatprep.subr.mxu0 0.0
        %v2814 = vand.u32 %v732, 4294901760
        %v2815 = vsub.f32 %v732, %v2814
        %2816 = vmatpush1.msra.mxu0 %v2815
        %2817 = vmatprep.subr.mxu0 0.0
        %v2818 = vand.u32 %v731, 4294901760
        %v2819 = vsub.f32 %v731, %v2818
        %2820 = vmatpush1.msra.mxu0 %v2819
        %2821 = vmatprep.subr.mxu0 0.0
        %2822 = vmatpush2.msra.mxu0 0.0
        %2823 = vmatprep.subr.mxu0 0.0
        %2824 = vmatpush2.msra.mxu0 0.0
        %2825 = vmatprep.subr.mxu0 0.0
        %2826 = vmatpush2.msra.mxu0 0.0
        %2827 = vmatprep.subr.mxu0 0.0
        %2828 = vmatpush2.msra.mxu0 0.0
        %2829 = vmatprep.subr.mxu0 0.0
        %2830 = vmatpush2.msra.mxu0 0.0
        %2831 = vmatprep.subr.mxu0 0.0
        %2832 = vmatpush2.msra.mxu0 0.0
        %2833 = vmatprep.subr.mxu0 0.0
        %2834 = vmatpush2.msra.mxu0 0.0
        %2835 = vmatprep.subr.mxu0 0.0
        %2836 = vmatpush2.msra.mxu0 0.0
        %2837 = vmatprep.subr.mxu0 0.0
        %2838 = vmatpush2.msra.mxu0 0.0
        %2839 = vmatprep.subr.mxu0 0.0
        %2840 = vmatpush2.msra.mxu0 0.0
        %2841 = vmatprep.subr.mxu0 0.0
        %2842 = vmatpush2.msra.mxu0 0.0
        %2843 = vmatprep.subr.mxu0 0.0
        %2844 = vmatpush2.msra.mxu0 0.0
        %2845 = vmatprep.subr.mxu0 0.0
        %2846 = vmatpush2.msra.mxu0 0.0
        %2847 = vmatprep.subr.mxu0 0.0
        %2848 = vmatpush2.msra.mxu0 0.0
        %2849 = vmatprep.subr.mxu0 0.0
        %2850 = vmatpush2.msra.mxu0 0.0
        %2851 = vmatprep.subr.mxu0 0.0
        %2852 = vmatpush2.msra.mxu0 0.0
        %2853 = vmatprep.mubr.f32.mxu0 0.0
        %v2854 = vand.u32 %v2492, 4294901760
        %v2855 = vsub.f32 %v2492, %v2854
        %2856 = vmatmul.mubr.f32.gmra.mxu0 %v2855
        %v2857 = vpop.f32.mrf.mxu0
        %v2858 = vadd.f32 %v2740, %v2857
        %v2859 = vpop.f32.mrf.mxu0
        %2860 = vmatprep.mubr.f32.mxu0 0.0
        %v2861 = vand.u32 %v2495, 4294901760
        %v2862 = vsub.f32 %v2495, %v2861
        %2863 = vmatmul.mubr.f32.gmra.mxu0 %v2862
        %v2864 = vpop.f32.mrf.mxu0
        %v2865 = vadd.f32 %v2746, %v2864
        %v2866 = vpop.f32.mrf.mxu0
        %2867 = vmatprep.mubr.f32.mxu0 0.0
        %v2868 = vand.u32 %v2498, 4294901760
        %v2869 = vsub.f32 %v2498, %v2868
        %2870 = vmatmul.mubr.f32.gmra.mxu0 %v2869
        %v2871 = vpop.f32.mrf.mxu0
        %v2872 = vadd.f32 %v2752, %v2871
        %v2873 = vpop.f32.mrf.mxu0
        %2874 = vmatprep.mubr.f32.mxu0 0.0
        %v2875 = vand.u32 %v2501, 4294901760
        %v2876 = vsub.f32 %v2501, %v2875
        %2877 = vmatmul.mubr.f32.gmra.mxu0 %v2876
        %v2878 = vpop.f32.mrf.mxu0
        %v2879 = vadd.f32 %v2758, %v2878
        %v2880 = vpop.f32.mrf.mxu0
        %2881 = vmatprep.mubr.f32.mxu0 0.0
        %v2882 = vand.u32 %v2504, 4294901760
        %v2883 = vsub.f32 %v2504, %v2882
        %2884 = vmatmul.mubr.f32.gmra.mxu0 %v2883
        %v2885 = vpop.f32.mrf.mxu0
        %v2886 = vadd.f32 %v2764, %v2885
        %v2887 = vpop.f32.mrf.mxu0
        %2888 = vmatprep.mubr.f32.mxu0 0.0
        %v2889 = vand.u32 %v2507, 4294901760
        %v2890 = vsub.f32 %v2507, %v2889
        %2891 = vmatmul.mubr.f32.gmra.mxu0 %v2890
        %v2892 = vpop.f32.mrf.mxu0
        %v2893 = vadd.f32 %v2770, %v2892
        %v2894 = vpop.f32.mrf.mxu0
        %2895 = vmatprep.mubr.f32.mxu0 0.0
        %v2896 = vand.u32 %v2510, 4294901760
        %v2897 = vsub.f32 %v2510, %v2896
        %2898 = vmatmul.mubr.f32.gmra.mxu0 %v2897
        %v2899 = vpop.f32.mrf.mxu0
        %v2900 = vadd.f32 %v2776, %v2899
        %v2901 = vpop.f32.mrf.mxu0
        %2902 = vmatprep.mubr.f32.mxu0 0.0
        %v2903 = vand.u32 %v2513, 4294901760
        %v2904 = vsub.f32 %v2513, %v2903
        %2905 = vmatmul.mubr.f32.gmra.mxu0 %v2904
        %v2906 = vpop.f32.mrf.mxu0
        %v2907 = vadd.f32 %v2782, %v2906
        %v2908 = vpop.f32.mrf.mxu0
        %2909 = vdwg.mxu0
        %2910 = vmatprep.subr.mxu0 0.0
        %2911 = vmatpush1.msra.mxu0 0.0
        %2912 = vmatprep.subr.mxu0 0.0
        %2913 = vmatpush1.msra.mxu0 0.0
        %2914 = vmatprep.subr.mxu0 0.0
        %2915 = vmatpush1.msra.mxu0 0.0
        %2916 = vmatprep.subr.mxu0 0.0
        %2917 = vmatpush1.msra.mxu0 0.0
        %2918 = vmatprep.subr.mxu0 0.0
        %2919 = vmatpush1.msra.mxu0 0.0
        %2920 = vmatprep.subr.mxu0 0.0
        %2921 = vmatpush1.msra.mxu0 0.0
        %2922 = vmatprep.subr.mxu0 0.0
        %2923 = vmatpush1.msra.mxu0 0.0
        %2924 = vmatprep.subr.mxu0 0.0
        %2925 = vmatpush1.msra.mxu0 0.0
        %2926 = vmatprep.subr.mxu0 0.0
        %2927 = vmatpush1.msra.mxu0 0.0
        %2928 = vmatprep.subr.mxu0 0.0
        %2929 = vmatpush1.msra.mxu0 0.0
        %2930 = vmatprep.subr.mxu0 0.0
        %2931 = vmatpush1.msra.mxu0 0.0
        %2932 = vmatprep.subr.mxu0 0.0
        %2933 = vmatpush1.msra.mxu0 0.0
        %2934 = vmatprep.subr.mxu0 0.0
        %2935 = vmatpush1.msra.mxu0 0.0
        %2936 = vmatprep.subr.mxu0 0.0
        %2937 = vmatpush1.msra.mxu0 0.0
        %2938 = vmatprep.subr.mxu0 0.0
        %v2939 = vand.u32 %v732, 4294901760
        %2940 = vmatpush1.msra.mxu0 %v2939
        %2941 = vmatprep.subr.mxu0 0.0
        %v2942 = vand.u32 %v731, 4294901760
        %2943 = vmatpush1.msra.mxu0 %v2942
        %2944 = vmatprep.subr.mxu0 0.0
        %2945 = vmatpush2.msra.mxu0 0.0
        %2946 = vmatprep.subr.mxu0 0.0
        %2947 = vmatpush2.msra.mxu0 0.0
        %2948 = vmatprep.subr.mxu0 0.0
        %2949 = vmatpush2.msra.mxu0 0.0
        %2950 = vmatprep.subr.mxu0 0.0
        %2951 = vmatpush2.msra.mxu0 0.0
        %2952 = vmatprep.subr.mxu0 0.0
        %2953 = vmatpush2.msra.mxu0 0.0
        %2954 = vmatprep.subr.mxu0 0.0
        %2955 = vmatpush2.msra.mxu0 0.0
        %2956 = vmatprep.subr.mxu0 0.0
        %2957 = vmatpush2.msra.mxu0 0.0
        %2958 = vmatprep.subr.mxu0 0.0
        %2959 = vmatpush2.msra.mxu0 0.0
        %2960 = vmatprep.subr.mxu0 0.0
        %2961 = vmatpush2.msra.mxu0 0.0
        %2962 = vmatprep.subr.mxu0 0.0
        %2963 = vmatpush2.msra.mxu0 0.0
        %2964 = vmatprep.subr.mxu0 0.0
        %2965 = vmatpush2.msra.mxu0 0.0
        %2966 = vmatprep.subr.mxu0 0.0
        %2967 = vmatpush2.msra.mxu0 0.0
        %2968 = vmatprep.subr.mxu0 0.0
        %2969 = vmatpush2.msra.mxu0 0.0
        %2970 = vmatprep.subr.mxu0 0.0
        %2971 = vmatpush2.msra.mxu0 0.0
        %2972 = vmatprep.subr.mxu0 0.0
        %2973 = vmatpush2.msra.mxu0 0.0
        %2974 = vmatprep.subr.mxu0 0.0
        %2975 = vmatpush2.msra.mxu0 0.0
        %2976 = vmatprep.mubr.f32.mxu0 0.0
        %v2977 = vand.u32 %v2492, 4294901760
        %v2978 = vsub.f32 %v2492, %v2977
        %v2979 = vand.u32 %v2978, 4294901760
        %2980 = vmatmul.mubr.f32.gmra.mxu0 %v2979
        %v2981 = vpop.f32.mrf.mxu0
        %v2982 = vadd.f32 %v2858, %v2981
        %v2983 = vpop.f32.mrf.mxu0
        %2984 = vmatprep.mubr.f32.mxu0 0.0
        %v2985 = vand.u32 %v2495, 4294901760
        %v2986 = vsub.f32 %v2495, %v2985
        %v2987 = vand.u32 %v2986, 4294901760
        %2988 = vmatmul.mubr.f32.gmra.mxu0 %v2987
        %v2989 = vpop.f32.mrf.mxu0
        %v2990 = vadd.f32 %v2865, %v2989
        %v2991 = vpop.f32.mrf.mxu0
        %2992 = vmatprep.mubr.f32.mxu0 0.0
        %v2993 = vand.u32 %v2498, 4294901760
        %v2994 = vsub.f32 %v2498, %v2993
        %v2995 = vand.u32 %v2994, 4294901760
        %2996 = vmatmul.mubr.f32.gmra.mxu0 %v2995
        %v2997 = vpop.f32.mrf.mxu0
        %v2998 = vadd.f32 %v2872, %v2997
        %v2999 = vpop.f32.mrf.mxu0
        %3000 = vmatprep.mubr.f32.mxu0 0.0
        %v3001 = vand.u32 %v2501, 4294901760
        %v3002 = vsub.f32 %v2501, %v3001
        %v3003 = vand.u32 %v3002, 4294901760
        %3004 = vmatmul.mubr.f32.gmra.mxu0 %v3003
        %v3005 = vpop.f32.mrf.mxu0
        %v3006 = vadd.f32 %v2879, %v3005
        %v3007 = vpop.f32.mrf.mxu0
        %3008 = vmatprep.mubr.f32.mxu0 0.0
        %v3009 = vand.u32 %v2504, 4294901760
        %v3010 = vsub.f32 %v2504, %v3009
        %v3011 = vand.u32 %v3010, 4294901760
        %3012 = vmatmul.mubr.f32.gmra.mxu0 %v3011
        %v3013 = vpop.f32.mrf.mxu0
        %v3014 = vadd.f32 %v2886, %v3013
        %v3015 = vpop.f32.mrf.mxu0
        %3016 = vmatprep.mubr.f32.mxu0 0.0
        %v3017 = vand.u32 %v2507, 4294901760
        %v3018 = vsub.f32 %v2507, %v3017
        %v3019 = vand.u32 %v3018, 4294901760
        %3020 = vmatmul.mubr.f32.gmra.mxu0 %v3019
        %v3021 = vpop.f32.mrf.mxu0
        %v3022 = vadd.f32 %v2893, %v3021
        %v3023 = vpop.f32.mrf.mxu0
        %3024 = vmatprep.mubr.f32.mxu0 0.0
        %v3025 = vand.u32 %v2510, 4294901760
        %v3026 = vsub.f32 %v2510, %v3025
        %v3027 = vand.u32 %v3026, 4294901760
        %3028 = vmatmul.mubr.f32.gmra.mxu0 %v3027
        %v3029 = vpop.f32.mrf.mxu0
        %v3030 = vadd.f32 %v2900, %v3029
        %v3031 = vpop.f32.mrf.mxu0
        %3032 = vmatprep.mubr.f32.mxu0 0.0
        %v3033 = vand.u32 %v2513, 4294901760
        %v3034 = vsub.f32 %v2513, %v3033
        %v3035 = vand.u32 %v3034, 4294901760
        %3036 = vmatmul.mubr.f32.gmra.mxu0 %v3035
        %v3037 = vpop.f32.mrf.mxu0
        %v3038 = vadd.f32 %v2907, %v3037
        %v3039 = vpop.f32.mrf.mxu0
        %3040 = vdwg.mxu0
        %3041 = vmatprep.subr.mxu0 0.0
        %3042 = vmatpush1.msra.mxu0 0.0
        %3043 = vmatprep.subr.mxu0 0.0
        %3044 = vmatpush1.msra.mxu0 0.0
        %3045 = vmatprep.subr.mxu0 0.0
        %3046 = vmatpush1.msra.mxu0 0.0
        %3047 = vmatprep.subr.mxu0 0.0
        %3048 = vmatpush1.msra.mxu0 0.0
        %3049 = vmatprep.subr.mxu0 0.0
        %3050 = vmatpush1.msra.mxu0 0.0
        %3051 = vmatprep.subr.mxu0 0.0
        %3052 = vmatpush1.msra.mxu0 0.0
        %3053 = vmatprep.subr.mxu0 0.0
        %3054 = vmatpush1.msra.mxu0 0.0
        %3055 = vmatprep.subr.mxu0 0.0
        %3056 = vmatpush1.msra.mxu0 0.0
        %3057 = vmatprep.subr.mxu0 0.0
        %3058 = vmatpush1.msra.mxu0 0.0
        %3059 = vmatprep.subr.mxu0 0.0
        %3060 = vmatpush1.msra.mxu0 0.0
        %3061 = vmatprep.subr.mxu0 0.0
        %3062 = vmatpush1.msra.mxu0 0.0
        %3063 = vmatprep.subr.mxu0 0.0
        %3064 = vmatpush1.msra.mxu0 0.0
        %3065 = vmatprep.subr.mxu0 0.0
        %3066 = vmatpush1.msra.mxu0 0.0
        %3067 = vmatprep.subr.mxu0 0.0
        %3068 = vmatpush1.msra.mxu0 0.0
        %3069 = vmatprep.subr.mxu0 0.0
        %v3070 = vand.u32 %v732, 4294901760
        %v3071 = vsub.f32 %v732, %v3070
        %v3072 = vand.u32 %v3071, 4294901760
        %3073 = vmatpush1.msra.mxu0 %v3072
        %3074 = vmatprep.subr.mxu0 0.0
        %v3075 = vand.u32 %v731, 4294901760
        %v3076 = vsub.f32 %v731, %v3075
        %v3077 = vand.u32 %v3076, 4294901760
        %3078 = vmatpush1.msra.mxu0 %v3077
        %3079 = vmatprep.subr.mxu0 0.0
        %3080 = vmatpush2.msra.mxu0 0.0
        %3081 = vmatprep.subr.mxu0 0.0
        %3082 = vmatpush2.msra.mxu0 0.0
        %3083 = vmatprep.subr.mxu0 0.0
        %3084 = vmatpush2.msra.mxu0 0.0
        %3085 = vmatprep.subr.mxu0 0.0
        %3086 = vmatpush2.msra.mxu0 0.0
        %3087 = vmatprep.subr.mxu0 0.0
        %3088 = vmatpush2.msra.mxu0 0.0
        %3089 = vmatprep.subr.mxu0 0.0
        %3090 = vmatpush2.msra.mxu0 0.0
        %3091 = vmatprep.subr.mxu0 0.0
        %3092 = vmatpush2.msra.mxu0 0.0
        %3093 = vmatprep.subr.mxu0 0.0
        %3094 = vmatpush2.msra.mxu0 0.0
        %3095 = vmatprep.subr.mxu0 0.0
        %3096 = vmatpush2.msra.mxu0 0.0
        %3097 = vmatprep.subr.mxu0 0.0
        %3098 = vmatpush2.msra.mxu0 0.0
        %3099 = vmatprep.subr.mxu0 0.0
        %3100 = vmatpush2.msra.mxu0 0.0
        %3101 = vmatprep.subr.mxu0 0.0
        %3102 = vmatpush2.msra.mxu0 0.0
        %3103 = vmatprep.subr.mxu0 0.0
        %3104 = vmatpush2.msra.mxu0 0.0
        %3105 = vmatprep.subr.mxu0 0.0
        %3106 = vmatpush2.msra.mxu0 0.0
        %3107 = vmatprep.subr.mxu0 0.0
        %3108 = vmatpush2.msra.mxu0 0.0
        %3109 = vmatprep.subr.mxu0 0.0
        %3110 = vmatpush2.msra.mxu0 0.0
        %3111 = vmatprep.mubr.f32.mxu0 0.0
        %v3112 = vand.u32 %v2492, 4294901760
        %3113 = vmatmul.mubr.f32.gmra.mxu0 %v3112
        %v3114 = vpop.f32.mrf.mxu0
        %v3115 = vadd.f32 %v2982, %v3114
        %v3116 = vpop.f32.mrf.mxu0
        %3117 = vmatprep.mubr.f32.mxu0 0.0
        %v3118 = vand.u32 %v2495, 4294901760
        %3119 = vmatmul.mubr.f32.gmra.mxu0 %v3118
        %v3120 = vpop.f32.mrf.mxu0
        %v3121 = vadd.f32 %v2990, %v3120
        %v3122 = vpop.f32.mrf.mxu0
        %3123 = vmatprep.mubr.f32.mxu0 0.0
        %v3124 = vand.u32 %v2498, 4294901760
        %3125 = vmatmul.mubr.f32.gmra.mxu0 %v3124
        %v3126 = vpop.f32.mrf.mxu0
        %v3127 = vadd.f32 %v2998, %v3126
        %v3128 = vpop.f32.mrf.mxu0
        %3129 = vmatprep.mubr.f32.mxu0 0.0
        %v3130 = vand.u32 %v2501, 4294901760
        %3131 = vmatmul.mubr.f32.gmra.mxu0 %v3130
        %v3132 = vpop.f32.mrf.mxu0
        %v3133 = vadd.f32 %v3006, %v3132
        %v3134 = vpop.f32.mrf.mxu0
        %3135 = vmatprep.mubr.f32.mxu0 0.0
        %v3136 = vand.u32 %v2504, 4294901760
        %3137 = vmatmul.mubr.f32.gmra.mxu0 %v3136
        %v3138 = vpop.f32.mrf.mxu0
        %v3139 = vadd.f32 %v3014, %v3138
        %v3140 = vpop.f32.mrf.mxu0
        %3141 = vmatprep.mubr.f32.mxu0 0.0
        %v3142 = vand.u32 %v2507, 4294901760
        %3143 = vmatmul.mubr.f32.gmra.mxu0 %v3142
        %v3144 = vpop.f32.mrf.mxu0
        %v3145 = vadd.f32 %v3022, %v3144
        %v3146 = vpop.f32.mrf.mxu0
        %3147 = vmatprep.mubr.f32.mxu0 0.0
        %v3148 = vand.u32 %v2510, 4294901760
        %3149 = vmatmul.mubr.f32.gmra.mxu0 %v3148
        %v3150 = vpop.f32.mrf.mxu0
        %v3151 = vadd.f32 %v3030, %v3150
        %v3152 = vpop.f32.mrf.mxu0
        %3153 = vmatprep.mubr.f32.mxu0 0.0
        %v3154 = vand.u32 %v2513, 4294901760
        %3155 = vmatmul.mubr.f32.gmra.mxu0 %v3154
        %v3156 = vpop.f32.mrf.mxu0
        %v3157 = vadd.f32 %v3038, %v3156
        %v3158 = vpop.f32.mrf.mxu0
        %3159 = vdwg.mxu0
        %3160 = vmatprep.subr.mxu0 0.0
        %3161 = vmatpush1.msra.mxu0 0.0
        %3162 = vmatprep.subr.mxu0 0.0
        %3163 = vmatpush1.msra.mxu0 0.0
        %3164 = vmatprep.subr.mxu0 0.0
        %3165 = vmatpush1.msra.mxu0 0.0
        %3166 = vmatprep.subr.mxu0 0.0
        %3167 = vmatpush1.msra.mxu0 0.0
        %3168 = vmatprep.subr.mxu0 0.0
        %3169 = vmatpush1.msra.mxu0 0.0
        %3170 = vmatprep.subr.mxu0 0.0
        %3171 = vmatpush1.msra.mxu0 0.0
        %3172 = vmatprep.subr.mxu0 0.0
        %3173 = vmatpush1.msra.mxu0 0.0
        %3174 = vmatprep.subr.mxu0 0.0
        %3175 = vmatpush1.msra.mxu0 0.0
        %3176 = vmatprep.subr.mxu0 0.0
        %3177 = vmatpush1.msra.mxu0 0.0
        %3178 = vmatprep.subr.mxu0 0.0
        %3179 = vmatpush1.msra.mxu0 0.0
        %3180 = vmatprep.subr.mxu0 0.0
        %3181 = vmatpush1.msra.mxu0 0.0
        %3182 = vmatprep.subr.mxu0 0.0
        %3183 = vmatpush1.msra.mxu0 0.0
        %3184 = vmatprep.subr.mxu0 0.0
        %3185 = vmatpush1.msra.mxu0 0.0
        %3186 = vmatprep.subr.mxu0 0.0
        %3187 = vmatpush1.msra.mxu0 0.0
        %3188 = vmatprep.subr.mxu0 0.0
        %v3189 = vand.u32 %v732, 4294901760
        %3190 = vmatpush1.msra.mxu0 %v3189
        %3191 = vmatprep.subr.mxu0 0.0
        %v3192 = vand.u32 %v731, 4294901760
        %3193 = vmatpush1.msra.mxu0 %v3192
        %3194 = vmatprep.subr.mxu0 0.0
        %3195 = vmatpush2.msra.mxu0 0.0
        %3196 = vmatprep.subr.mxu0 0.0
        %3197 = vmatpush2.msra.mxu0 0.0
        %3198 = vmatprep.subr.mxu0 0.0
        %3199 = vmatpush2.msra.mxu0 0.0
        %3200 = vmatprep.subr.mxu0 0.0
        %3201 = vmatpush2.msra.mxu0 0.0
        %3202 = vmatprep.subr.mxu0 0.0
        %3203 = vmatpush2.msra.mxu0 0.0
        %3204 = vmatprep.subr.mxu0 0.0
        %3205 = vmatpush2.msra.mxu0 0.0
        %3206 = vmatprep.subr.mxu0 0.0
        %3207 = vmatpush2.msra.mxu0 0.0
        %3208 = vmatprep.subr.mxu0 0.0
        %3209 = vmatpush2.msra.mxu0 0.0
        %3210 = vmatprep.subr.mxu0 0.0
        %3211 = vmatpush2.msra.mxu0 0.0
        %3212 = vmatprep.subr.mxu0 0.0
        %3213 = vmatpush2.msra.mxu0 0.0
        %3214 = vmatprep.subr.mxu0 0.0
        %3215 = vmatpush2.msra.mxu0 0.0
        %3216 = vmatprep.subr.mxu0 0.0
        %3217 = vmatpush2.msra.mxu0 0.0
        %3218 = vmatprep.subr.mxu0 0.0
        %3219 = vmatpush2.msra.mxu0 0.0
        %3220 = vmatprep.subr.mxu0 0.0
        %3221 = vmatpush2.msra.mxu0 0.0
        %3222 = vmatprep.subr.mxu0 0.0
        %3223 = vmatpush2.msra.mxu0 0.0
        %3224 = vmatprep.subr.mxu0 0.0
        %3225 = vmatpush2.msra.mxu0 0.0
        %3226 = vmatprep.mubr.f32.mxu0 0.0
        %v3227 = vand.u32 %v2492, 4294901760
        %3228 = vmatmul.mubr.f32.gmra.mxu0 %v3227
        %v3229 = vpop.f32.mrf.mxu0
        %v3230 = vadd.f32 %v3115, %v3229
        %v3231 = vpop.f32.mrf.mxu0
        %3232 = vmatprep.mubr.f32.mxu0 0.0
        %v3233 = vand.u32 %v2495, 4294901760
        %3234 = vmatmul.mubr.f32.gmra.mxu0 %v3233
        %v3235 = vpop.f32.mrf.mxu0
        %v3236 = vadd.f32 %v3121, %v3235
        %v3237 = vpop.f32.mrf.mxu0
        %3238 = vmatprep.mubr.f32.mxu0 0.0
        %v3239 = vand.u32 %v2498, 4294901760
        %3240 = vmatmul.mubr.f32.gmra.mxu0 %v3239
        %v3241 = vpop.f32.mrf.mxu0
        %v3242 = vadd.f32 %v3127, %v3241
        %v3243 = vpop.f32.mrf.mxu0
        %3244 = vmatprep.mubr.f32.mxu0 0.0
        %v3245 = vand.u32 %v2501, 4294901760
        %3246 = vmatmul.mubr.f32.gmra.mxu0 %v3245
        %v3247 = vpop.f32.mrf.mxu0
        %v3248 = vadd.f32 %v3133, %v3247
        %v3249 = vpop.f32.mrf.mxu0
        %3250 = vmatprep.mubr.f32.mxu0 0.0
        %v3251 = vand.u32 %v2504, 4294901760
        %3252 = vmatmul.mubr.f32.gmra.mxu0 %v3251
        %v3253 = vpop.f32.mrf.mxu0
        %v3254 = vadd.f32 %v3139, %v3253
        %v3255 = vpop.f32.mrf.mxu0
        %3256 = vmatprep.mubr.f32.mxu0 0.0
        %v3257 = vand.u32 %v2507, 4294901760
        %3258 = vmatmul.mubr.f32.gmra.mxu0 %v3257
        %v3259 = vpop.f32.mrf.mxu0
        %v3260 = vadd.f32 %v3145, %v3259
        %v3261 = vpop.f32.mrf.mxu0
        %3262 = vmatprep.mubr.f32.mxu0 0.0
        %v3263 = vand.u32 %v2510, 4294901760
        %3264 = vmatmul.mubr.f32.gmra.mxu0 %v3263
        %v3265 = vpop.f32.mrf.mxu0
        %v3266 = vadd.f32 %v3151, %v3265
        %v3267 = vpop.f32.mrf.mxu0
        %3268 = vmatprep.mubr.f32.mxu0 0.0
        %v3269 = vand.u32 %v2513, 4294901760
        %3270 = vmatmul.mubr.f32.gmra.mxu0 %v3269
        %v3271 = vpop.f32.mrf.mxu0
        %v3272 = vadd.f32 %v3157, %v3271
        %v3273 = vpop.f32.mrf.mxu0
        %3274 = vdwg.mxu0
        %v3275 = vsub.f32 %v600, %v3230
        %v3276 = vsub.f32 %v601, %v3236
        %v3277 = vsub.f32 %v602, %v3242
        %v3278 = vsub.f32 %v603, %v3248
        %v3279 = vsub.f32 %v604, %v3254
        %v3280 = vsub.f32 %v605, %v3260
        %v3281 = vsub.f32 %v606, %v3266
        %v3282 = vsub.f32 %v607, %v3272
        %v3284 = vsel %vm2490, %v2482, 0
        %v3287 = vsel %vm2490, %v2483, 0
        %v3290 = vsel %vm2490, %v2484, 0
        %v3293 = vsel %vm2490, %v2485, 0
        %v3296 = vsel %vm2490, %v2486, 0
        %v3299 = vsel %vm2490, %v2487, 0
        %v3302 = vsel %vm2490, %v2488, 0
        %v3305 = vsel %vm2490, %v2489, 0
        %3307 = vmatprep.subr.mxu0 0.0
        %3308 = vmatpush1.msra.mxu0 0.0
        %3309 = vmatprep.subr.mxu0 0.0
        %3310 = vmatpush1.msra.mxu0 0.0
        %3311 = vmatprep.subr.mxu0 0.0
        %3312 = vmatpush1.msra.mxu0 0.0
        %3313 = vmatprep.subr.mxu0 0.0
        %3314 = vmatpush1.msra.mxu0 0.0
        %3315 = vmatprep.subr.mxu0 0.0
        %3316 = vmatpush1.msra.mxu0 0.0
        %3317 = vmatprep.subr.mxu0 0.0
        %3318 = vmatpush1.msra.mxu0 0.0
        %3319 = vmatprep.subr.mxu0 0.0
        %3320 = vmatpush1.msra.mxu0 0.0
        %3321 = vmatprep.subr.mxu0 0.0
        %3322 = vmatpush1.msra.mxu0 0.0
        %3323 = vmatprep.subr.mxu0 0.0
        %3324 = vmatpush1.msra.mxu0 0.0
        %3325 = vmatprep.subr.mxu0 0.0
        %3326 = vmatpush1.msra.mxu0 0.0
        %3327 = vmatprep.subr.mxu0 0.0
        %3328 = vmatpush1.msra.mxu0 0.0
        %3329 = vmatprep.subr.mxu0 0.0
        %3330 = vmatpush1.msra.mxu0 0.0
        %3331 = vmatprep.subr.mxu0 0.0
        %3332 = vmatpush1.msra.mxu0 0.0
        %3333 = vmatprep.subr.mxu0 0.0
        %3334 = vmatpush1.msra.mxu0 0.0
        %3335 = vmatprep.subr.mxu0 0.0
        %v3336 = vand.u32 %v732, 4294901760
        %3337 = vmatpush1.msra.mxu0 %v3336
        %3338 = vmatprep.subr.mxu0 0.0
        %v3339 = vand.u32 %v731, 4294901760
        %3340 = vmatpush1.msra.mxu0 %v3339
        %3341 = vmatprep.subr.mxu0 0.0
        %3342 = vmatpush2.msra.mxu0 0.0
        %3343 = vmatprep.subr.mxu0 0.0
        %3344 = vmatpush2.msra.mxu0 0.0
        %3345 = vmatprep.subr.mxu0 0.0
        %3346 = vmatpush2.msra.mxu0 0.0
        %3347 = vmatprep.subr.mxu0 0.0
        %3348 = vmatpush2.msra.mxu0 0.0
        %3349 = vmatprep.subr.mxu0 0.0
        %3350 = vmatpush2.msra.mxu0 0.0
        %3351 = vmatprep.subr.mxu0 0.0
        %3352 = vmatpush2.msra.mxu0 0.0
        %3353 = vmatprep.subr.mxu0 0.0
        %3354 = vmatpush2.msra.mxu0 0.0
        %3355 = vmatprep.subr.mxu0 0.0
        %3356 = vmatpush2.msra.mxu0 0.0
        %3357 = vmatprep.subr.mxu0 0.0
        %3358 = vmatpush2.msra.mxu0 0.0
        %3359 = vmatprep.subr.mxu0 0.0
        %3360 = vmatpush2.msra.mxu0 0.0
        %3361 = vmatprep.subr.mxu0 0.0
        %3362 = vmatpush2.msra.mxu0 0.0
        %3363 = vmatprep.subr.mxu0 0.0
        %3364 = vmatpush2.msra.mxu0 0.0
        %3365 = vmatprep.subr.mxu0 0.0
        %3366 = vmatpush2.msra.mxu0 0.0
        %3367 = vmatprep.subr.mxu0 0.0
        %3368 = vmatpush2.msra.mxu0 0.0
        %3369 = vmatprep.subr.mxu0 0.0
        %3370 = vmatpush2.msra.mxu0 0.0
        %3371 = vmatprep.subr.mxu0 0.0
        %3372 = vmatpush2.msra.mxu0 0.0
        %3373 = vmatprep.mubr.f32.mxu0 0.0
        %v3374 = vand.u32 %v3284, 4294901760
        %v3375 = vsub.f32 %v3284, %v3374
        %v3376 = vand.u32 %v3375, 4294901760
        %v3377 = vsub.f32 %v3375, %v3376
        %v3378 = vand.u32 %v3377, 4294901760
        %3379 = vmatmul.mubr.f32.gmra.mxu0 %v3378
        %v3380 = vpop.f32.mrf.mxu0
        %v3381 = vadd.f32 1e-05, %v3380
        %v3382 = vpop.f32.mrf.mxu0
        %3383 = vmatprep.mubr.f32.mxu0 0.0
        %v3384 = vand.u32 %v3287, 4294901760
        %v3385 = vsub.f32 %v3287, %v3384
        %v3386 = vand.u32 %v3385, 4294901760
        %v3387 = vsub.f32 %v3385, %v3386
        %v3388 = vand.u32 %v3387, 4294901760
        %3389 = vmatmul.mubr.f32.gmra.mxu0 %v3388
        %v3390 = vpop.f32.mrf.mxu0
        %v3391 = vadd.f32 1e-05, %v3390
        %v3392 = vpop.f32.mrf.mxu0
        %3393 = vmatprep.mubr.f32.mxu0 0.0
        %v3394 = vand.u32 %v3290, 4294901760
        %v3395 = vsub.f32 %v3290, %v3394
        %v3396 = vand.u32 %v3395, 4294901760
        %v3397 = vsub.f32 %v3395, %v3396
        %v3398 = vand.u32 %v3397, 4294901760
        %3399 = vmatmul.mubr.f32.gmra.mxu0 %v3398
        %v3400 = vpop.f32.mrf.mxu0
        %v3401 = vadd.f32 1e-05, %v3400
        %v3402 = vpop.f32.mrf.mxu0
        %3403 = vmatprep.mubr.f32.mxu0 0.0
        %v3404 = vand.u32 %v3293, 4294901760
        %v3405 = vsub.f32 %v3293, %v3404
        %v3406 = vand.u32 %v3405, 4294901760
        %v3407 = vsub.f32 %v3405, %v3406
        %v3408 = vand.u32 %v3407, 4294901760
        %3409 = vmatmul.mubr.f32.gmra.mxu0 %v3408
        %v3410 = vpop.f32.mrf.mxu0
        %v3411 = vadd.f32 1e-05, %v3410
        %v3412 = vpop.f32.mrf.mxu0
        %3413 = vmatprep.mubr.f32.mxu0 0.0
        %v3414 = vand.u32 %v3296, 4294901760
        %v3415 = vsub.f32 %v3296, %v3414
        %v3416 = vand.u32 %v3415, 4294901760
        %v3417 = vsub.f32 %v3415, %v3416
        %v3418 = vand.u32 %v3417, 4294901760
        %3419 = vmatmul.mubr.f32.gmra.mxu0 %v3418
        %v3420 = vpop.f32.mrf.mxu0
        %v3421 = vadd.f32 1e-05, %v3420
        %v3422 = vpop.f32.mrf.mxu0
        %3423 = vmatprep.mubr.f32.mxu0 0.0
        %v3424 = vand.u32 %v3299, 4294901760
        %v3425 = vsub.f32 %v3299, %v3424
        %v3426 = vand.u32 %v3425, 4294901760
        %v3427 = vsub.f32 %v3425, %v3426
        %v3428 = vand.u32 %v3427, 4294901760
        %3429 = vmatmul.mubr.f32.gmra.mxu0 %v3428
        %v3430 = vpop.f32.mrf.mxu0
        %v3431 = vadd.f32 1e-05, %v3430
        %v3432 = vpop.f32.mrf.mxu0
        %3433 = vmatprep.mubr.f32.mxu0 0.0
        %v3434 = vand.u32 %v3302, 4294901760
        %v3435 = vsub.f32 %v3302, %v3434
        %v3436 = vand.u32 %v3435, 4294901760
        %v3437 = vsub.f32 %v3435, %v3436
        %v3438 = vand.u32 %v3437, 4294901760
        %3439 = vmatmul.mubr.f32.gmra.mxu0 %v3438
        %v3440 = vpop.f32.mrf.mxu0
        %v3441 = vadd.f32 1e-05, %v3440
        %v3442 = vpop.f32.mrf.mxu0
        %3443 = vmatprep.mubr.f32.mxu0 0.0
        %v3444 = vand.u32 %v3305, 4294901760
        %v3445 = vsub.f32 %v3305, %v3444
        %v3446 = vand.u32 %v3445, 4294901760
        %v3447 = vsub.f32 %v3445, %v3446
        %v3448 = vand.u32 %v3447, 4294901760
        %3449 = vmatmul.mubr.f32.gmra.mxu0 %v3448
        %v3450 = vpop.f32.mrf.mxu0
        %v3451 = vadd.f32 1e-05, %v3450
        %v3452 = vpop.f32.mrf.mxu0
        %3453 = vdwg.mxu0
        %3454 = vmatprep.subr.mxu0 0.0
        %3455 = vmatpush1.msra.mxu0 0.0
        %3456 = vmatprep.subr.mxu0 0.0
        %3457 = vmatpush1.msra.mxu0 0.0
        %3458 = vmatprep.subr.mxu0 0.0
        %3459 = vmatpush1.msra.mxu0 0.0
        %3460 = vmatprep.subr.mxu0 0.0
        %3461 = vmatpush1.msra.mxu0 0.0
        %3462 = vmatprep.subr.mxu0 0.0
        %3463 = vmatpush1.msra.mxu0 0.0
        %3464 = vmatprep.subr.mxu0 0.0
        %3465 = vmatpush1.msra.mxu0 0.0
        %3466 = vmatprep.subr.mxu0 0.0
        %3467 = vmatpush1.msra.mxu0 0.0
        %3468 = vmatprep.subr.mxu0 0.0
        %3469 = vmatpush1.msra.mxu0 0.0
        %3470 = vmatprep.subr.mxu0 0.0
        %3471 = vmatpush1.msra.mxu0 0.0
        %3472 = vmatprep.subr.mxu0 0.0
        %3473 = vmatpush1.msra.mxu0 0.0
        %3474 = vmatprep.subr.mxu0 0.0
        %3475 = vmatpush1.msra.mxu0 0.0
        %3476 = vmatprep.subr.mxu0 0.0
        %3477 = vmatpush1.msra.mxu0 0.0
        %3478 = vmatprep.subr.mxu0 0.0
        %3479 = vmatpush1.msra.mxu0 0.0
        %3480 = vmatprep.subr.mxu0 0.0
        %3481 = vmatpush1.msra.mxu0 0.0
        %3482 = vmatprep.subr.mxu0 0.0
        %v3483 = vand.u32 %v732, 4294901760
        %v3484 = vsub.f32 %v732, %v3483
        %v3485 = vand.u32 %v3484, 4294901760
        %v3486 = vsub.f32 %v3484, %v3485
        %v3487 = vand.u32 %v3486, 4294901760
        %3488 = vmatpush1.msra.mxu0 %v3487
        %3489 = vmatprep.subr.mxu0 0.0
        %v3490 = vand.u32 %v731, 4294901760
        %v3491 = vsub.f32 %v731, %v3490
        %v3492 = vand.u32 %v3491, 4294901760
        %v3493 = vsub.f32 %v3491, %v3492
        %v3494 = vand.u32 %v3493, 4294901760
        %3495 = vmatpush1.msra.mxu0 %v3494
        %3496 = vmatprep.subr.mxu0 0.0
        %3497 = vmatpush2.msra.mxu0 0.0
        %3498 = vmatprep.subr.mxu0 0.0
        %3499 = vmatpush2.msra.mxu0 0.0
        %3500 = vmatprep.subr.mxu0 0.0
        %3501 = vmatpush2.msra.mxu0 0.0
        %3502 = vmatprep.subr.mxu0 0.0
        %3503 = vmatpush2.msra.mxu0 0.0
        %3504 = vmatprep.subr.mxu0 0.0
        %3505 = vmatpush2.msra.mxu0 0.0
        %3506 = vmatprep.subr.mxu0 0.0
        %3507 = vmatpush2.msra.mxu0 0.0
        %3508 = vmatprep.subr.mxu0 0.0
        %3509 = vmatpush2.msra.mxu0 0.0
        %3510 = vmatprep.subr.mxu0 0.0
        %3511 = vmatpush2.msra.mxu0 0.0
        %3512 = vmatprep.subr.mxu0 0.0
        %3513 = vmatpush2.msra.mxu0 0.0
        %3514 = vmatprep.subr.mxu0 0.0
        %3515 = vmatpush2.msra.mxu0 0.0
        %3516 = vmatprep.subr.mxu0 0.0
        %3517 = vmatpush2.msra.mxu0 0.0
        %3518 = vmatprep.subr.mxu0 0.0
        %3519 = vmatpush2.msra.mxu0 0.0
        %3520 = vmatprep.subr.mxu0 0.0
        %3521 = vmatpush2.msra.mxu0 0.0
        %3522 = vmatprep.subr.mxu0 0.0
        %3523 = vmatpush2.msra.mxu0 0.0
        %3524 = vmatprep.subr.mxu0 0.0
        %3525 = vmatpush2.msra.mxu0 0.0
        %3526 = vmatprep.subr.mxu0 0.0
        %3527 = vmatpush2.msra.mxu0 0.0
        %3528 = vmatprep.mubr.f32.mxu0 0.0
        %v3529 = vand.u32 %v3284, 4294901760
        %3530 = vmatmul.mubr.f32.gmra.mxu0 %v3529
        %v3531 = vpop.f32.mrf.mxu0
        %v3532 = vadd.f32 %v3381, %v3531
        %v3533 = vpop.f32.mrf.mxu0
        %3534 = vmatprep.mubr.f32.mxu0 0.0
        %v3535 = vand.u32 %v3287, 4294901760
        %3536 = vmatmul.mubr.f32.gmra.mxu0 %v3535
        %v3537 = vpop.f32.mrf.mxu0
        %v3538 = vadd.f32 %v3391, %v3537
        %v3539 = vpop.f32.mrf.mxu0
        %3540 = vmatprep.mubr.f32.mxu0 0.0
        %v3541 = vand.u32 %v3290, 4294901760
        %3542 = vmatmul.mubr.f32.gmra.mxu0 %v3541
        %v3543 = vpop.f32.mrf.mxu0
        %v3544 = vadd.f32 %v3401, %v3543
        %v3545 = vpop.f32.mrf.mxu0
        %3546 = vmatprep.mubr.f32.mxu0 0.0
        %v3547 = vand.u32 %v3293, 4294901760
        %3548 = vmatmul.mubr.f32.gmra.mxu0 %v3547
        %v3549 = vpop.f32.mrf.mxu0
        %v3550 = vadd.f32 %v3411, %v3549
        %v3551 = vpop.f32.mrf.mxu0
        %3552 = vmatprep.mubr.f32.mxu0 0.0
        %v3553 = vand.u32 %v3296, 4294901760
        %3554 = vmatmul.mubr.f32.gmra.mxu0 %v3553
        %v3555 = vpop.f32.mrf.mxu0
        %v3556 = vadd.f32 %v3421, %v3555
        %v3557 = vpop.f32.mrf.mxu0
        %3558 = vmatprep.mubr.f32.mxu0 0.0
        %v3559 = vand.u32 %v3299, 4294901760
        %3560 = vmatmul.mubr.f32.gmra.mxu0 %v3559
        %v3561 = vpop.f32.mrf.mxu0
        %v3562 = vadd.f32 %v3431, %v3561
        %v3563 = vpop.f32.mrf.mxu0
        %3564 = vmatprep.mubr.f32.mxu0 0.0
        %v3565 = vand.u32 %v3302, 4294901760
        %3566 = vmatmul.mubr.f32.gmra.mxu0 %v3565
        %v3567 = vpop.f32.mrf.mxu0
        %v3568 = vadd.f32 %v3441, %v3567
        %v3569 = vpop.f32.mrf.mxu0
        %3570 = vmatprep.mubr.f32.mxu0 0.0
        %v3571 = vand.u32 %v3305, 4294901760
        %3572 = vmatmul.mubr.f32.gmra.mxu0 %v3571
        %v3573 = vpop.f32.mrf.mxu0
        %v3574 = vadd.f32 %v3451, %v3573
        %v3575 = vpop.f32.mrf.mxu0
        %3576 = vdwg.mxu0
        %3577 = vmatprep.subr.mxu0 0.0
        %3578 = vmatpush1.msra.mxu0 0.0
        %3579 = vmatprep.subr.mxu0 0.0
        %3580 = vmatpush1.msra.mxu0 0.0
        %3581 = vmatprep.subr.mxu0 0.0
        %3582 = vmatpush1.msra.mxu0 0.0
        %3583 = vmatprep.subr.mxu0 0.0
        %3584 = vmatpush1.msra.mxu0 0.0
        %3585 = vmatprep.subr.mxu0 0.0
        %3586 = vmatpush1.msra.mxu0 0.0
        %3587 = vmatprep.subr.mxu0 0.0
        %3588 = vmatpush1.msra.mxu0 0.0
        %3589 = vmatprep.subr.mxu0 0.0
        %3590 = vmatpush1.msra.mxu0 0.0
        %3591 = vmatprep.subr.mxu0 0.0
        %3592 = vmatpush1.msra.mxu0 0.0
        %3593 = vmatprep.subr.mxu0 0.0
        %3594 = vmatpush1.msra.mxu0 0.0
        %3595 = vmatprep.subr.mxu0 0.0
        %3596 = vmatpush1.msra.mxu0 0.0
        %3597 = vmatprep.subr.mxu0 0.0
        %3598 = vmatpush1.msra.mxu0 0.0
        %3599 = vmatprep.subr.mxu0 0.0
        %3600 = vmatpush1.msra.mxu0 0.0
        %3601 = vmatprep.subr.mxu0 0.0
        %3602 = vmatpush1.msra.mxu0 0.0
        %3603 = vmatprep.subr.mxu0 0.0
        %3604 = vmatpush1.msra.mxu0 0.0
        %3605 = vmatprep.subr.mxu0 0.0
        %v3606 = vand.u32 %v732, 4294901760
        %v3607 = vsub.f32 %v732, %v3606
        %3608 = vmatpush1.msra.mxu0 %v3607
        %3609 = vmatprep.subr.mxu0 0.0
        %v3610 = vand.u32 %v731, 4294901760
        %v3611 = vsub.f32 %v731, %v3610
        %3612 = vmatpush1.msra.mxu0 %v3611
        %3613 = vmatprep.subr.mxu0 0.0
        %3614 = vmatpush2.msra.mxu0 0.0
        %3615 = vmatprep.subr.mxu0 0.0
        %3616 = vmatpush2.msra.mxu0 0.0
        %3617 = vmatprep.subr.mxu0 0.0
        %3618 = vmatpush2.msra.mxu0 0.0
        %3619 = vmatprep.subr.mxu0 0.0
        %3620 = vmatpush2.msra.mxu0 0.0
        %3621 = vmatprep.subr.mxu0 0.0
        %3622 = vmatpush2.msra.mxu0 0.0
        %3623 = vmatprep.subr.mxu0 0.0
        %3624 = vmatpush2.msra.mxu0 0.0
        %3625 = vmatprep.subr.mxu0 0.0
        %3626 = vmatpush2.msra.mxu0 0.0
        %3627 = vmatprep.subr.mxu0 0.0
        %3628 = vmatpush2.msra.mxu0 0.0
        %3629 = vmatprep.subr.mxu0 0.0
        %3630 = vmatpush2.msra.mxu0 0.0
        %3631 = vmatprep.subr.mxu0 0.0
        %3632 = vmatpush2.msra.mxu0 0.0
        %3633 = vmatprep.subr.mxu0 0.0
        %3634 = vmatpush2.msra.mxu0 0.0
        %3635 = vmatprep.subr.mxu0 0.0
        %3636 = vmatpush2.msra.mxu0 0.0
        %3637 = vmatprep.subr.mxu0 0.0
        %3638 = vmatpush2.msra.mxu0 0.0
        %3639 = vmatprep.subr.mxu0 0.0
        %3640 = vmatpush2.msra.mxu0 0.0
        %3641 = vmatprep.subr.mxu0 0.0
        %3642 = vmatpush2.msra.mxu0 0.0
        %3643 = vmatprep.subr.mxu0 0.0
        %3644 = vmatpush2.msra.mxu0 0.0
        %3645 = vmatprep.mubr.f32.mxu0 0.0
        %v3646 = vand.u32 %v3284, 4294901760
        %v3647 = vsub.f32 %v3284, %v3646
        %3648 = vmatmul.mubr.f32.gmra.mxu0 %v3647
        %v3649 = vpop.f32.mrf.mxu0
        %v3650 = vadd.f32 %v3532, %v3649
        %v3651 = vpop.f32.mrf.mxu0
        %3652 = vmatprep.mubr.f32.mxu0 0.0
        %v3653 = vand.u32 %v3287, 4294901760
        %v3654 = vsub.f32 %v3287, %v3653
        %3655 = vmatmul.mubr.f32.gmra.mxu0 %v3654
        %v3656 = vpop.f32.mrf.mxu0
        %v3657 = vadd.f32 %v3538, %v3656
        %v3658 = vpop.f32.mrf.mxu0
        %3659 = vmatprep.mubr.f32.mxu0 0.0
        %v3660 = vand.u32 %v3290, 4294901760
        %v3661 = vsub.f32 %v3290, %v3660
        %3662 = vmatmul.mubr.f32.gmra.mxu0 %v3661
        %v3663 = vpop.f32.mrf.mxu0
        %v3664 = vadd.f32 %v3544, %v3663
        %v3665 = vpop.f32.mrf.mxu0
        %3666 = vmatprep.mubr.f32.mxu0 0.0
        %v3667 = vand.u32 %v3293, 4294901760
        %v3668 = vsub.f32 %v3293, %v3667
        %3669 = vmatmul.mubr.f32.gmra.mxu0 %v3668
        %v3670 = vpop.f32.mrf.mxu0
        %v3671 = vadd.f32 %v3550, %v3670
        %v3672 = vpop.f32.mrf.mxu0
        %3673 = vmatprep.mubr.f32.mxu0 0.0
        %v3674 = vand.u32 %v3296, 4294901760
        %v3675 = vsub.f32 %v3296, %v3674
        %3676 = vmatmul.mubr.f32.gmra.mxu0 %v3675
        %v3677 = vpop.f32.mrf.mxu0
        %v3678 = vadd.f32 %v3556, %v3677
        %v3679 = vpop.f32.mrf.mxu0
        %3680 = vmatprep.mubr.f32.mxu0 0.0
        %v3681 = vand.u32 %v3299, 4294901760
        %v3682 = vsub.f32 %v3299, %v3681
        %3683 = vmatmul.mubr.f32.gmra.mxu0 %v3682
        %v3684 = vpop.f32.mrf.mxu0
        %v3685 = vadd.f32 %v3562, %v3684
        %v3686 = vpop.f32.mrf.mxu0
        %3687 = vmatprep.mubr.f32.mxu0 0.0
        %v3688 = vand.u32 %v3302, 4294901760
        %v3689 = vsub.f32 %v3302, %v3688
        %3690 = vmatmul.mubr.f32.gmra.mxu0 %v3689
        %v3691 = vpop.f32.mrf.mxu0
        %v3692 = vadd.f32 %v3568, %v3691
        %v3693 = vpop.f32.mrf.mxu0
        %3694 = vmatprep.mubr.f32.mxu0 0.0
        %v3695 = vand.u32 %v3305, 4294901760
        %v3696 = vsub.f32 %v3305, %v3695
        %3697 = vmatmul.mubr.f32.gmra.mxu0 %v3696
        %v3698 = vpop.f32.mrf.mxu0
        %v3699 = vadd.f32 %v3574, %v3698
        %v3700 = vpop.f32.mrf.mxu0
        %3701 = vdwg.mxu0
        %3702 = vmatprep.subr.mxu0 0.0
        %3703 = vmatpush1.msra.mxu0 0.0
        %3704 = vmatprep.subr.mxu0 0.0
        %3705 = vmatpush1.msra.mxu0 0.0
        %3706 = vmatprep.subr.mxu0 0.0
        %3707 = vmatpush1.msra.mxu0 0.0
        %3708 = vmatprep.subr.mxu0 0.0
        %3709 = vmatpush1.msra.mxu0 0.0
        %3710 = vmatprep.subr.mxu0 0.0
        %3711 = vmatpush1.msra.mxu0 0.0
        %3712 = vmatprep.subr.mxu0 0.0
        %3713 = vmatpush1.msra.mxu0 0.0
        %3714 = vmatprep.subr.mxu0 0.0
        %3715 = vmatpush1.msra.mxu0 0.0
        %3716 = vmatprep.subr.mxu0 0.0
        %3717 = vmatpush1.msra.mxu0 0.0
        %3718 = vmatprep.subr.mxu0 0.0
        %3719 = vmatpush1.msra.mxu0 0.0
        %3720 = vmatprep.subr.mxu0 0.0
        %3721 = vmatpush1.msra.mxu0 0.0
        %3722 = vmatprep.subr.mxu0 0.0
        %3723 = vmatpush1.msra.mxu0 0.0
        %3724 = vmatprep.subr.mxu0 0.0
        %3725 = vmatpush1.msra.mxu0 0.0
        %3726 = vmatprep.subr.mxu0 0.0
        %3727 = vmatpush1.msra.mxu0 0.0
        %3728 = vmatprep.subr.mxu0 0.0
        %3729 = vmatpush1.msra.mxu0 0.0
        %3730 = vmatprep.subr.mxu0 0.0
        %v3731 = vand.u32 %v732, 4294901760
        %3732 = vmatpush1.msra.mxu0 %v3731
        %3733 = vmatprep.subr.mxu0 0.0
        %v3734 = vand.u32 %v731, 4294901760
        %3735 = vmatpush1.msra.mxu0 %v3734
        %3736 = vmatprep.subr.mxu0 0.0
        %3737 = vmatpush2.msra.mxu0 0.0
        %3738 = vmatprep.subr.mxu0 0.0
        %3739 = vmatpush2.msra.mxu0 0.0
        %3740 = vmatprep.subr.mxu0 0.0
        %3741 = vmatpush2.msra.mxu0 0.0
        %3742 = vmatprep.subr.mxu0 0.0
        %3743 = vmatpush2.msra.mxu0 0.0
        %3744 = vmatprep.subr.mxu0 0.0
        %3745 = vmatpush2.msra.mxu0 0.0
        %3746 = vmatprep.subr.mxu0 0.0
        %3747 = vmatpush2.msra.mxu0 0.0
        %3748 = vmatprep.subr.mxu0 0.0
        %3749 = vmatpush2.msra.mxu0 0.0
        %3750 = vmatprep.subr.mxu0 0.0
        %3751 = vmatpush2.msra.mxu0 0.0
        %3752 = vmatprep.subr.mxu0 0.0
        %3753 = vmatpush2.msra.mxu0 0.0
        %3754 = vmatprep.subr.mxu0 0.0
        %3755 = vmatpush2.msra.mxu0 0.0
        %3756 = vmatprep.subr.mxu0 0.0
        %3757 = vmatpush2.msra.mxu0 0.0
        %3758 = vmatprep.subr.mxu0 0.0
        %3759 = vmatpush2.msra.mxu0 0.0
        %3760 = vmatprep.subr.mxu0 0.0
        %3761 = vmatpush2.msra.mxu0 0.0
        %3762 = vmatprep.subr.mxu0 0.0
        %3763 = vmatpush2.msra.mxu0 0.0
        %3764 = vmatprep.subr.mxu0 0.0
        %3765 = vmatpush2.msra.mxu0 0.0
        %3766 = vmatprep.subr.mxu0 0.0
        %3767 = vmatpush2.msra.mxu0 0.0
        %3768 = vmatprep.mubr.f32.mxu0 0.0
        %v3769 = vand.u32 %v3284, 4294901760
        %v3770 = vsub.f32 %v3284, %v3769
        %v3771 = vand.u32 %v3770, 4294901760
        %3772 = vmatmul.mubr.f32.gmra.mxu0 %v3771
        %v3773 = vpop.f32.mrf.mxu0
        %v3774 = vadd.f32 %v3650, %v3773
        %v3775 = vpop.f32.mrf.mxu0
        %3776 = vmatprep.mubr.f32.mxu0 0.0
        %v3777 = vand.u32 %v3287, 4294901760
        %v3778 = vsub.f32 %v3287, %v3777
        %v3779 = vand.u32 %v3778, 4294901760
        %3780 = vmatmul.mubr.f32.gmra.mxu0 %v3779
        %v3781 = vpop.f32.mrf.mxu0
        %v3782 = vadd.f32 %v3657, %v3781
        %v3783 = vpop.f32.mrf.mxu0
        %3784 = vmatprep.mubr.f32.mxu0 0.0
        %v3785 = vand.u32 %v3290, 4294901760
        %v3786 = vsub.f32 %v3290, %v3785
        %v3787 = vand.u32 %v3786, 4294901760
        %3788 = vmatmul.mubr.f32.gmra.mxu0 %v3787
        %v3789 = vpop.f32.mrf.mxu0
        %v3790 = vadd.f32 %v3664, %v3789
        %v3791 = vpop.f32.mrf.mxu0
        %3792 = vmatprep.mubr.f32.mxu0 0.0
        %v3793 = vand.u32 %v3293, 4294901760
        %v3794 = vsub.f32 %v3293, %v3793
        %v3795 = vand.u32 %v3794, 4294901760
        %3796 = vmatmul.mubr.f32.gmra.mxu0 %v3795
        %v3797 = vpop.f32.mrf.mxu0
        %v3798 = vadd.f32 %v3671, %v3797
        %v3799 = vpop.f32.mrf.mxu0
        %3800 = vmatprep.mubr.f32.mxu0 0.0
        %v3801 = vand.u32 %v3296, 4294901760
        %v3802 = vsub.f32 %v3296, %v3801
        %v3803 = vand.u32 %v3802, 4294901760
        %3804 = vmatmul.mubr.f32.gmra.mxu0 %v3803
        %v3805 = vpop.f32.mrf.mxu0
        %v3806 = vadd.f32 %v3678, %v3805
        %v3807 = vpop.f32.mrf.mxu0
        %3808 = vmatprep.mubr.f32.mxu0 0.0
        %v3809 = vand.u32 %v3299, 4294901760
        %v3810 = vsub.f32 %v3299, %v3809
        %v3811 = vand.u32 %v3810, 4294901760
        %3812 = vmatmul.mubr.f32.gmra.mxu0 %v3811
        %v3813 = vpop.f32.mrf.mxu0
        %v3814 = vadd.f32 %v3685, %v3813
        %v3815 = vpop.f32.mrf.mxu0
        %3816 = vmatprep.mubr.f32.mxu0 0.0
        %v3817 = vand.u32 %v3302, 4294901760
        %v3818 = vsub.f32 %v3302, %v3817
        %v3819 = vand.u32 %v3818, 4294901760
        %3820 = vmatmul.mubr.f32.gmra.mxu0 %v3819
        %v3821 = vpop.f32.mrf.mxu0
        %v3822 = vadd.f32 %v3692, %v3821
        %v3823 = vpop.f32.mrf.mxu0
        %3824 = vmatprep.mubr.f32.mxu0 0.0
        %v3825 = vand.u32 %v3305, 4294901760
        %v3826 = vsub.f32 %v3305, %v3825
        %v3827 = vand.u32 %v3826, 4294901760
        %3828 = vmatmul.mubr.f32.gmra.mxu0 %v3827
        %v3829 = vpop.f32.mrf.mxu0
        %v3830 = vadd.f32 %v3699, %v3829
        %v3831 = vpop.f32.mrf.mxu0
        %3832 = vdwg.mxu0
        %3833 = vmatprep.subr.mxu0 0.0
        %3834 = vmatpush1.msra.mxu0 0.0
        %3835 = vmatprep.subr.mxu0 0.0
        %3836 = vmatpush1.msra.mxu0 0.0
        %3837 = vmatprep.subr.mxu0 0.0
        %3838 = vmatpush1.msra.mxu0 0.0
        %3839 = vmatprep.subr.mxu0 0.0
        %3840 = vmatpush1.msra.mxu0 0.0
        %3841 = vmatprep.subr.mxu0 0.0
        %3842 = vmatpush1.msra.mxu0 0.0
        %3843 = vmatprep.subr.mxu0 0.0
        %3844 = vmatpush1.msra.mxu0 0.0
        %3845 = vmatprep.subr.mxu0 0.0
        %3846 = vmatpush1.msra.mxu0 0.0
        %3847 = vmatprep.subr.mxu0 0.0
        %3848 = vmatpush1.msra.mxu0 0.0
        %3849 = vmatprep.subr.mxu0 0.0
        %3850 = vmatpush1.msra.mxu0 0.0
        %3851 = vmatprep.subr.mxu0 0.0
        %3852 = vmatpush1.msra.mxu0 0.0
        %3853 = vmatprep.subr.mxu0 0.0
        %3854 = vmatpush1.msra.mxu0 0.0
        %3855 = vmatprep.subr.mxu0 0.0
        %3856 = vmatpush1.msra.mxu0 0.0
        %3857 = vmatprep.subr.mxu0 0.0
        %3858 = vmatpush1.msra.mxu0 0.0
        %3859 = vmatprep.subr.mxu0 0.0
        %3860 = vmatpush1.msra.mxu0 0.0
        %3861 = vmatprep.subr.mxu0 0.0
        %v3862 = vand.u32 %v732, 4294901760
        %v3863 = vsub.f32 %v732, %v3862
        %v3864 = vand.u32 %v3863, 4294901760
        %3865 = vmatpush1.msra.mxu0 %v3864
        %3866 = vmatprep.subr.mxu0 0.0
        %v3867 = vand.u32 %v731, 4294901760
        %v3868 = vsub.f32 %v731, %v3867
        %v3869 = vand.u32 %v3868, 4294901760
        %3870 = vmatpush1.msra.mxu0 %v3869
        %3871 = vmatprep.subr.mxu0 0.0
        %3872 = vmatpush2.msra.mxu0 0.0
        %3873 = vmatprep.subr.mxu0 0.0
        %3874 = vmatpush2.msra.mxu0 0.0
        %3875 = vmatprep.subr.mxu0 0.0
        %3876 = vmatpush2.msra.mxu0 0.0
        %3877 = vmatprep.subr.mxu0 0.0
        %3878 = vmatpush2.msra.mxu0 0.0
        %3879 = vmatprep.subr.mxu0 0.0
        %3880 = vmatpush2.msra.mxu0 0.0
        %3881 = vmatprep.subr.mxu0 0.0
        %3882 = vmatpush2.msra.mxu0 0.0
        %3883 = vmatprep.subr.mxu0 0.0
        %3884 = vmatpush2.msra.mxu0 0.0
        %3885 = vmatprep.subr.mxu0 0.0
        %3886 = vmatpush2.msra.mxu0 0.0
        %3887 = vmatprep.subr.mxu0 0.0
        %3888 = vmatpush2.msra.mxu0 0.0
        %3889 = vmatprep.subr.mxu0 0.0
        %3890 = vmatpush2.msra.mxu0 0.0
        %3891 = vmatprep.subr.mxu0 0.0
        %3892 = vmatpush2.msra.mxu0 0.0
        %3893 = vmatprep.subr.mxu0 0.0
        %3894 = vmatpush2.msra.mxu0 0.0
        %3895 = vmatprep.subr.mxu0 0.0
        %3896 = vmatpush2.msra.mxu0 0.0
        %3897 = vmatprep.subr.mxu0 0.0
        %3898 = vmatpush2.msra.mxu0 0.0
        %3899 = vmatprep.subr.mxu0 0.0
        %3900 = vmatpush2.msra.mxu0 0.0
        %3901 = vmatprep.subr.mxu0 0.0
        %3902 = vmatpush2.msra.mxu0 0.0
        %3903 = vmatprep.mubr.f32.mxu0 0.0
        %v3904 = vand.u32 %v3284, 4294901760
        %3905 = vmatmul.mubr.f32.gmra.mxu0 %v3904
        %v3906 = vpop.f32.mrf.mxu0
        %v3907 = vadd.f32 %v3774, %v3906
        %v3908 = vpop.f32.mrf.mxu0
        %3909 = vmatprep.mubr.f32.mxu0 0.0
        %v3910 = vand.u32 %v3287, 4294901760
        %3911 = vmatmul.mubr.f32.gmra.mxu0 %v3910
        %v3912 = vpop.f32.mrf.mxu0
        %v3913 = vadd.f32 %v3782, %v3912
        %v3914 = vpop.f32.mrf.mxu0
        %3915 = vmatprep.mubr.f32.mxu0 0.0
        %v3916 = vand.u32 %v3290, 4294901760
        %3917 = vmatmul.mubr.f32.gmra.mxu0 %v3916
        %v3918 = vpop.f32.mrf.mxu0
        %v3919 = vadd.f32 %v3790, %v3918
        %v3920 = vpop.f32.mrf.mxu0
        %3921 = vmatprep.mubr.f32.mxu0 0.0
        %v3922 = vand.u32 %v3293, 4294901760
        %3923 = vmatmul.mubr.f32.gmra.mxu0 %v3922
        %v3924 = vpop.f32.mrf.mxu0
        %v3925 = vadd.f32 %v3798, %v3924
        %v3926 = vpop.f32.mrf.mxu0
        %3927 = vmatprep.mubr.f32.mxu0 0.0
        %v3928 = vand.u32 %v3296, 4294901760
        %3929 = vmatmul.mubr.f32.gmra.mxu0 %v3928
        %v3930 = vpop.f32.mrf.mxu0
        %v3931 = vadd.f32 %v3806, %v3930
        %v3932 = vpop.f32.mrf.mxu0
        %3933 = vmatprep.mubr.f32.mxu0 0.0
        %v3934 = vand.u32 %v3299, 4294901760
        %3935 = vmatmul.mubr.f32.gmra.mxu0 %v3934
        %v3936 = vpop.f32.mrf.mxu0
        %v3937 = vadd.f32 %v3814, %v3936
        %v3938 = vpop.f32.mrf.mxu0
        %3939 = vmatprep.mubr.f32.mxu0 0.0
        %v3940 = vand.u32 %v3302, 4294901760
        %3941 = vmatmul.mubr.f32.gmra.mxu0 %v3940
        %v3942 = vpop.f32.mrf.mxu0
        %v3943 = vadd.f32 %v3822, %v3942
        %v3944 = vpop.f32.mrf.mxu0
        %3945 = vmatprep.mubr.f32.mxu0 0.0
        %v3946 = vand.u32 %v3305, 4294901760
        %3947 = vmatmul.mubr.f32.gmra.mxu0 %v3946
        %v3948 = vpop.f32.mrf.mxu0
        %v3949 = vadd.f32 %v3830, %v3948
        %v3950 = vpop.f32.mrf.mxu0
        %3951 = vdwg.mxu0
        %3952 = vmatprep.subr.mxu0 0.0
        %3953 = vmatpush1.msra.mxu0 0.0
        %3954 = vmatprep.subr.mxu0 0.0
        %3955 = vmatpush1.msra.mxu0 0.0
        %3956 = vmatprep.subr.mxu0 0.0
        %3957 = vmatpush1.msra.mxu0 0.0
        %3958 = vmatprep.subr.mxu0 0.0
        %3959 = vmatpush1.msra.mxu0 0.0
        %3960 = vmatprep.subr.mxu0 0.0
        %3961 = vmatpush1.msra.mxu0 0.0
        %3962 = vmatprep.subr.mxu0 0.0
        %3963 = vmatpush1.msra.mxu0 0.0
        %3964 = vmatprep.subr.mxu0 0.0
        %3965 = vmatpush1.msra.mxu0 0.0
        %3966 = vmatprep.subr.mxu0 0.0
        %3967 = vmatpush1.msra.mxu0 0.0
        %3968 = vmatprep.subr.mxu0 0.0
        %3969 = vmatpush1.msra.mxu0 0.0
        %3970 = vmatprep.subr.mxu0 0.0
        %3971 = vmatpush1.msra.mxu0 0.0
        %3972 = vmatprep.subr.mxu0 0.0
        %3973 = vmatpush1.msra.mxu0 0.0
        %3974 = vmatprep.subr.mxu0 0.0
        %3975 = vmatpush1.msra.mxu0 0.0
        %3976 = vmatprep.subr.mxu0 0.0
        %3977 = vmatpush1.msra.mxu0 0.0
        %3978 = vmatprep.subr.mxu0 0.0
        %3979 = vmatpush1.msra.mxu0 0.0
        %3980 = vmatprep.subr.mxu0 0.0
        %v3981 = vand.u32 %v732, 4294901760
        %3982 = vmatpush1.msra.mxu0 %v3981
        %3983 = vmatprep.subr.mxu0 0.0
        %v3984 = vand.u32 %v731, 4294901760
        %3985 = vmatpush1.msra.mxu0 %v3984
        %3986 = vmatprep.subr.mxu0 0.0
        %3987 = vmatpush2.msra.mxu0 0.0
        %3988 = vmatprep.subr.mxu0 0.0
        %3989 = vmatpush2.msra.mxu0 0.0
        %3990 = vmatprep.subr.mxu0 0.0
        %3991 = vmatpush2.msra.mxu0 0.0
        %3992 = vmatprep.subr.mxu0 0.0
        %3993 = vmatpush2.msra.mxu0 0.0
        %3994 = vmatprep.subr.mxu0 0.0
        %3995 = vmatpush2.msra.mxu0 0.0
        %3996 = vmatprep.subr.mxu0 0.0
        %3997 = vmatpush2.msra.mxu0 0.0
        %3998 = vmatprep.subr.mxu0 0.0
        %3999 = vmatpush2.msra.mxu0 0.0
        %4000 = vmatprep.subr.mxu0 0.0
        %4001 = vmatpush2.msra.mxu0 0.0
        %4002 = vmatprep.subr.mxu0 0.0
        %4003 = vmatpush2.msra.mxu0 0.0
        %4004 = vmatprep.subr.mxu0 0.0
        %4005 = vmatpush2.msra.mxu0 0.0
        %4006 = vmatprep.subr.mxu0 0.0
        %4007 = vmatpush2.msra.mxu0 0.0
        %4008 = vmatprep.subr.mxu0 0.0
        %4009 = vmatpush2.msra.mxu0 0.0
        %4010 = vmatprep.subr.mxu0 0.0
        %4011 = vmatpush2.msra.mxu0 0.0
        %4012 = vmatprep.subr.mxu0 0.0
        %4013 = vmatpush2.msra.mxu0 0.0
        %4014 = vmatprep.subr.mxu0 0.0
        %4015 = vmatpush2.msra.mxu0 0.0
        %4016 = vmatprep.subr.mxu0 0.0
        %4017 = vmatpush2.msra.mxu0 0.0
        %4018 = vmatprep.mubr.f32.mxu0 0.0
        %v4019 = vand.u32 %v3284, 4294901760
        %4020 = vmatmul.mubr.f32.gmra.mxu0 %v4019
        %v4021 = vpop.f32.mrf.mxu0
        %v4022 = vadd.f32 %v3907, %v4021
        %v4023 = vpop.f32.mrf.mxu0
        %4024 = vmatprep.mubr.f32.mxu0 0.0
        %v4025 = vand.u32 %v3287, 4294901760
        %4026 = vmatmul.mubr.f32.gmra.mxu0 %v4025
        %v4027 = vpop.f32.mrf.mxu0
        %v4028 = vadd.f32 %v3913, %v4027
        %v4029 = vpop.f32.mrf.mxu0
        %4030 = vmatprep.mubr.f32.mxu0 0.0
        %v4031 = vand.u32 %v3290, 4294901760
        %4032 = vmatmul.mubr.f32.gmra.mxu0 %v4031
        %v4033 = vpop.f32.mrf.mxu0
        %v4034 = vadd.f32 %v3919, %v4033
        %v4035 = vpop.f32.mrf.mxu0
        %4036 = vmatprep.mubr.f32.mxu0 0.0
        %v4037 = vand.u32 %v3293, 4294901760
        %4038 = vmatmul.mubr.f32.gmra.mxu0 %v4037
        %v4039 = vpop.f32.mrf.mxu0
        %v4040 = vadd.f32 %v3925, %v4039
        %v4041 = vpop.f32.mrf.mxu0
        %4042 = vmatprep.mubr.f32.mxu0 0.0
        %v4043 = vand.u32 %v3296, 4294901760
        %4044 = vmatmul.mubr.f32.gmra.mxu0 %v4043
        %v4045 = vpop.f32.mrf.mxu0
        %v4046 = vadd.f32 %v3931, %v4045
        %v4047 = vpop.f32.mrf.mxu0
        %4048 = vmatprep.mubr.f32.mxu0 0.0
        %v4049 = vand.u32 %v3299, 4294901760
        %4050 = vmatmul.mubr.f32.gmra.mxu0 %v4049
        %v4051 = vpop.f32.mrf.mxu0
        %v4052 = vadd.f32 %v3937, %v4051
        %v4053 = vpop.f32.mrf.mxu0
        %4054 = vmatprep.mubr.f32.mxu0 0.0
        %v4055 = vand.u32 %v3302, 4294901760
        %4056 = vmatmul.mubr.f32.gmra.mxu0 %v4055
        %v4057 = vpop.f32.mrf.mxu0
        %v4058 = vadd.f32 %v3943, %v4057
        %v4059 = vpop.f32.mrf.mxu0
        %4060 = vmatprep.mubr.f32.mxu0 0.0
        %v4061 = vand.u32 %v3305, 4294901760
        %4062 = vmatmul.mubr.f32.gmra.mxu0 %v4061
        %v4063 = vpop.f32.mrf.mxu0
        %v4064 = vadd.f32 %v3949, %v4063
        %v4065 = vpop.f32.mrf.mxu0
        %4066 = vdwg.mxu0
        %v4067 = vrsqrt.pop %v4022
        %v4068 = vrsqrt.pop %v4028
        %v4069 = vrsqrt.pop %v4034
        %v4070 = vrsqrt.pop %v4040
        %v4071 = vrsqrt.pop %v4046
        %v4072 = vrsqrt.pop %v4052
        %v4073 = vrsqrt.pop %v4058
        %v4074 = vrsqrt.pop %v4064
        %v4075 = vmul.f32 %v3275, %v4067
        %v4076 = vmul.f32 %v3276, %v4068
        %v4077 = vmul.f32 %v3277, %v4069
        %v4078 = vmul.f32 %v3278, %v4070
        %v4079 = vmul.f32 %v3279, %v4071
        %v4080 = vmul.f32 %v3280, %v4072
        %v4081 = vmul.f32 %v3281, %v4073
        %v4082 = vmul.f32 %v3282, %v4074
        %v4084 = vlaneseq
        %v4085 = vshrl.u32 %v4084, 7
        %v4086 = vsub.s32 0, %v4085
        %v4087 = vrot.slane %v721, %v4086
        %v4089 = vmul.f32 %v4075, %v4087
        %v4090 = vmul.f32 %v4076, %v4087
        %v4091 = vmul.f32 %v4077, %v4087
        %v4092 = vmul.f32 %v4078, %v4087
        %v4093 = vmul.f32 %v4079, %v4087
        %v4094 = vmul.f32 %v4080, %v4087
        %v4095 = vmul.f32 %v4081, %v4087
        %v4096 = vmul.f32 %v4082, %v4087
        %v4098 = vlaneseq
        %v4099 = vshrl.u32 %v4098, 7
        %v4100 = vsub.s32 0, %v4099
        %v4101 = vrot.slane %v722, %v4100
        %v4103 = vadd.f32 %v4089, %v4101
        %v4104 = vadd.f32 %v4090, %v4101
        %v4105 = vadd.f32 %v4091, %v4101
        %v4106 = vadd.f32 %v4092, %v4101
        %v4107 = vadd.f32 %v4093, %v4101
        %v4108 = vadd.f32 %v4094, %v4101
        %v4109 = vadd.f32 %v4095, %v4101
        %v4110 = vadd.f32 %v4096, %v4101
        %v4111 = vxor.u32 %v4103, 2147483648
        %v4112 = vxor.u32 %v4104, 2147483648
        %v4113 = vxor.u32 %v4105, 2147483648
        %v4114 = vxor.u32 %v4106, 2147483648
        %v4115 = vxor.u32 %v4107, 2147483648
        %v4116 = vxor.u32 %v4108, 2147483648
        %v4117 = vxor.u32 %v4109, 2147483648
        %v4118 = vxor.u32 %v4110, 2147483648
        %v4119 = vmul.f32 %v4111, 1.442695
        %v4120 = vpow.pop %v4119
        %v4121 = vmul.f32 %v4112, 1.442695
        %v4122 = vpow.pop %v4121
        %v4123 = vmul.f32 %v4113, 1.442695
        %v4124 = vpow.pop %v4123
        %v4125 = vmul.f32 %v4114, 1.442695
        %v4126 = vpow.pop %v4125
        %v4127 = vmul.f32 %v4115, 1.442695
        %v4128 = vpow.pop %v4127
        %v4129 = vmul.f32 %v4116, 1.442695
        %v4130 = vpow.pop %v4129
        %v4131 = vmul.f32 %v4117, 1.442695
        %v4132 = vpow.pop %v4131
        %v4133 = vmul.f32 %v4118, 1.442695
        %v4134 = vpow.pop %v4133
        %v4135 = vadd.f32 %v4120, 1.0
        %v4136 = vadd.f32 %v4122, 1.0
        %v4137 = vadd.f32 %v4124, 1.0
        %v4138 = vadd.f32 %v4126, 1.0
        %v4139 = vadd.f32 %v4128, 1.0
        %v4140 = vadd.f32 %v4130, 1.0
        %v4141 = vadd.f32 %v4132, 1.0
        %v4142 = vadd.f32 %v4134, 1.0
        %v4143 = vrcp.pop %v4135
        %v4144 = vmul.f32 1.0, %v4143
        %v4145 = vrcp.pop %v4136
        %v4146 = vmul.f32 1.0, %v4145
        %v4147 = vrcp.pop %v4137
        %v4148 = vmul.f32 1.0, %v4147
        %v4149 = vrcp.pop %v4138
        %v4150 = vmul.f32 1.0, %v4149
        %v4151 = vrcp.pop %v4139
        %v4152 = vmul.f32 1.0, %v4151
        %v4153 = vrcp.pop %v4140
        %v4154 = vmul.f32 1.0, %v4153
        %v4155 = vrcp.pop %v4141
        %v4156 = vmul.f32 1.0, %v4155
        %v4157 = vrcp.pop %v4142
        %v4158 = vmul.f32 1.0, %v4157
        %v4159 = vmul.f32 %v4103, %v4144
        %v4160 = vmul.f32 %v4104, %v4146
        %v4161 = vmul.f32 %v4105, %v4148
        %v4162 = vmul.f32 %v4106, %v4150
        %v4163 = vmul.f32 %v4107, %v4152
        %v4164 = vmul.f32 %v4108, %v4154
        %v4165 = vmul.f32 %v4109, %v4156
        %v4166 = vmul.f32 %v4110, %v4158
        %v4167 = vpack.c.bf16 %v4160, %v4159
        %v4168 = vpack.c.bf16 %v4162, %v4161
        %v4169 = vpack.c.bf16 %v4164, %v4163
        %v4170 = vpack.c.bf16 %v4166, %v4165
        %v4171 = vld [vmem:[%s6] sm:$0xf]
        %v4172 = vld [vmem:[%s6 + $0x4] sm:$0xf]
        %v4173 = vld [vmem:[%s6 + $0x8] sm:$0xf]
        %v4174 = vld [vmem:[%s6 + $0xc] sm:$0xf]
        %v4175 = vld [vmem:[%s6 + $0x10] sm:$0xf]
        %v4176 = vld [vmem:[%s6 + $0x14] sm:$0xf]
        %v4177 = vld [vmem:[%s6 + $0x18] sm:$0xf]
        %v4178 = vld [vmem:[%s6 + $0x1c] sm:$0xf]
        %v4179 = vld [vmem:[%s7] sm:$0x1]
        %v4181 = vlaneseq
        %v4182 = vshrl.u32 %v4181, 7
        %v4183 = vsub.s32 0, %v4182
        %v4184 = vrot.slane %v4179, %v4183
        %v4194 = vunpack.c.l.b16 %v4171
        %v4195 = vunpack.c.l.b16 %v4172
        %v4196 = vunpack.c.l.b16 %v4173
        %v4197 = vunpack.c.l.b16 %v4174
        %v4198 = vunpack.c.l.b16 %v4175
        %v4199 = vunpack.c.l.b16 %v4176
        %v4200 = vunpack.c.l.b16 %v4177
        %v4201 = vunpack.c.l.b16 %v4178
        %v4202 = vpack.c.b16 %v4195, %v4194
        %v4203 = vpack.c.b16 %v4197, %v4196
        %v4204 = vpack.c.b16 %v4199, %v4198
        %v4205 = vpack.c.b16 %v4201, %v4200
        %v4211 = vsel %vm733, %v4167, 0
        %v4214 = vsel %vm733, %v4168, 0
        %v4217 = vsel %vm733, %v4169, 0
        %v4220 = vsel %vm733, %v4170, 0
        %4222 = vmatprep.subr.bf16.mxu0 0
        %4223 = vmatpush1.bf16.msra.mxu0 0
        %4224 = vmatprep.subr.bf16.mxu0 0
        %4225 = vmatpush1.bf16.msra.mxu0 0
        %4226 = vmatprep.subr.bf16.mxu0 0
        %4227 = vmatpush1.bf16.msra.mxu0 0
        %4228 = vmatprep.subr.bf16.mxu0 0
        %4229 = vmatpush1.bf16.msra.mxu0 0
        %4230 = vmatprep.subr.bf16.mxu0 0
        %4231 = vmatpush1.bf16.msra.mxu0 %v4205
        %4232 = vmatprep.subr.bf16.mxu0 0
        %4233 = vmatpush1.bf16.msra.mxu0 %v4204
        %4234 = vmatprep.subr.bf16.mxu0 0
        %4235 = vmatpush1.bf16.msra.mxu0 %v4203
        %4236 = vmatprep.subr.bf16.mxu0 0
        %4237 = vmatpush1.bf16.msra.mxu0 %v4202
        %4238 = vmatprep.subr.bf16.mxu0 0
        %4239 = vmatpush2.bf16.msra.mxu0 0
        %4240 = vmatprep.subr.bf16.mxu0 0
        %4241 = vmatpush2.bf16.msra.mxu0 0
        %4242 = vmatprep.subr.bf16.mxu0 0
        %4243 = vmatpush2.bf16.msra.mxu0 0
        %4244 = vmatprep.subr.bf16.mxu0 0
        %4245 = vmatpush2.bf16.msra.mxu0 0
        %4246 = vmatprep.subr.bf16.mxu0 0
        %4247 = vmatpush2.bf16.msra.mxu0 0
        %4248 = vmatprep.subr.bf16.mxu0 0
        %4249 = vmatpush2.bf16.msra.mxu0 0
        %4250 = vmatprep.subr.bf16.mxu0 0
        %4251 = vmatpush2.bf16.msra.mxu0 0
        %4252 = vmatprep.subr.bf16.mxu0 0
        %4253 = vmatpush2.bf16.msra.mxu0 0
        %4254 = vmatprep.mubr.bf16.mxu0 0
        %4255 = vmatmul.mubr.bf16.gmra.mxu0 %v4211
        %v4256 = vpop.f32.mrf.mxu0
        %v4257 = vadd.f32 %v4184, %v4256
        %v4258 = vpop.f32.mrf.mxu0
        %v4259 = vpop.f32.mrf.mxu0
        %v4260 = vadd.f32 %v4184, %v4259
        %v4261 = vpop.f32.mrf.mxu0
        %4262 = vmatprep.mubr.bf16.mxu0 0
        %4263 = vmatmul.mubr.bf16.gmra.mxu0 %v4214
        %v4264 = vpop.f32.mrf.mxu0
        %v4265 = vadd.f32 %v4184, %v4264
        %v4266 = vpop.f32.mrf.mxu0
        %v4267 = vpop.f32.mrf.mxu0
        %v4268 = vadd.f32 %v4184, %v4267
        %v4269 = vpop.f32.mrf.mxu0
        %4270 = vmatprep.mubr.bf16.mxu0 0
        %4271 = vmatmul.mubr.bf16.gmra.mxu0 %v4217
        %v4272 = vpop.f32.mrf.mxu0
        %v4273 = vadd.f32 %v4184, %v4272
        %v4274 = vpop.f32.mrf.mxu0
        %v4275 = vpop.f32.mrf.mxu0
        %v4276 = vadd.f32 %v4184, %v4275
        %v4277 = vpop.f32.mrf.mxu0
        %4278 = vmatprep.mubr.bf16.mxu0 0
        %4279 = vmatmul.mubr.bf16.gmra.mxu0 %v4220
        %v4280 = vpop.f32.mrf.mxu0
        %v4281 = vadd.f32 %v4184, %v4280
        %v4282 = vpop.f32.mrf.mxu0
        %v4283 = vpop.f32.mrf.mxu0
        %v4284 = vadd.f32 %v4184, %v4283
        %v4285 = vpop.f32.mrf.mxu0
        %4286 = vdwg.mxu0
        %v4287 = vadd.f32 %v4257, %v691
        %v4288 = vadd.f32 %v4260, %v694
        %v4289 = vadd.f32 %v4265, %v699
        %v4290 = vadd.f32 %v4268, %v702
        %v4291 = vadd.f32 %v4273, %v707
        %v4292 = vadd.f32 %v4276, %v710
        %v4293 = vadd.f32 %v4281, %v715
        %v4294 = vadd.f32 %v4284, %v718
        %v4295 = vld [vmem:[%s10] sm:$0x1]
        %v4296 = vld [vmem:[%s11] sm:$0x1]
        %v4297 = vld [vmem:[%s12] sm:$0xff]
        %v4298 = vld [vmem:[%s12 + $0x8] sm:$0xff]
        %v4299 = vld [vmem:[%s12 + $0x10] sm:$0xff]
        %v4300 = vld [vmem:[%s12 + $0x18] sm:$0xff]
        %v4301 = vld [vmem:[%s12 + $0x20] sm:$0xff]
        %v4302 = vld [vmem:[%s12 + $0x28] sm:$0xff]
        %v4303 = vld [vmem:[%s12 + $0x30] sm:$0xff]
        %v4304 = vld [vmem:[%s12 + $0x38] sm:$0xff]
        %v4305 = vld [vmem:[%s12 + $0x40] sm:$0xff]
        %v4306 = vld [vmem:[%s12 + $0x48] sm:$0xff]
        %v4307 = vld [vmem:[%s12 + $0x50] sm:$0xff]
        %v4308 = vld [vmem:[%s12 + $0x58] sm:$0xff]
        %v4309 = vld [vmem:[%s12 + $0x60] sm:$0xff]
        %v4310 = vld [vmem:[%s12 + $0x68] sm:$0xff]
        %v4311 = vld [vmem:[%s12 + $0x70] sm:$0xff]
        %v4312 = vld [vmem:[%s12 + $0x78] sm:$0xff]
        %v4313 = vld [vmem:[%s13] sm:$0xff]
        %v4314 = vld [vmem:[%s13 + $0x8] sm:$0xff]
        %4315 = vmatprep.subr.mxu0 0.0
        %v4316 = vand.u32 %v4312, 4294901760
        %4317 = vmatpush1.msra.mxu0 %v4316
        %4318 = vmatprep.subr.mxu0 0.0
        %v4319 = vand.u32 %v4311, 4294901760
        %4320 = vmatpush1.msra.mxu0 %v4319
        %4321 = vmatprep.subr.mxu0 0.0
        %v4322 = vand.u32 %v4310, 4294901760
        %4323 = vmatpush1.msra.mxu0 %v4322
        %4324 = vmatprep.subr.mxu0 0.0
        %v4325 = vand.u32 %v4309, 4294901760
        %4326 = vmatpush1.msra.mxu0 %v4325
        %4327 = vmatprep.subr.mxu0 0.0
        %v4328 = vand.u32 %v4308, 4294901760
        %4329 = vmatpush1.msra.mxu0 %v4328
        %4330 = vmatprep.subr.mxu0 0.0
        %v4331 = vand.u32 %v4307, 4294901760
        %4332 = vmatpush1.msra.mxu0 %v4331
        %4333 = vmatprep.subr.mxu0 0.0
        %v4334 = vand.u32 %v4306, 4294901760
        %4335 = vmatpush1.msra.mxu0 %v4334
        %4336 = vmatprep.subr.mxu0 0.0
        %v4337 = vand.u32 %v4305, 4294901760
        %4338 = vmatpush1.msra.mxu0 %v4337
        %4339 = vmatprep.subr.mxu0 0.0
        %v4340 = vand.u32 %v4304, 4294901760
        %4341 = vmatpush1.msra.mxu0 %v4340
        %4342 = vmatprep.subr.mxu0 0.0
        %v4343 = vand.u32 %v4303, 4294901760
        %4344 = vmatpush1.msra.mxu0 %v4343
        %4345 = vmatprep.subr.mxu0 0.0
        %v4346 = vand.u32 %v4302, 4294901760
        %4347 = vmatpush1.msra.mxu0 %v4346
        %4348 = vmatprep.subr.mxu0 0.0
        %v4349 = vand.u32 %v4301, 4294901760
        %4350 = vmatpush1.msra.mxu0 %v4349
        %4351 = vmatprep.subr.mxu0 0.0
        %v4352 = vand.u32 %v4300, 4294901760
        %4353 = vmatpush1.msra.mxu0 %v4352
        %4354 = vmatprep.subr.mxu0 0.0
        %v4355 = vand.u32 %v4299, 4294901760
        %4356 = vmatpush1.msra.mxu0 %v4355
        %4357 = vmatprep.subr.mxu0 0.0
        %v4358 = vand.u32 %v4298, 4294901760
        %4359 = vmatpush1.msra.mxu0 %v4358
        %4360 = vmatprep.subr.mxu0 0.0
        %v4361 = vand.u32 %v4297, 4294901760
        %4362 = vmatpush1.msra.mxu0 %v4361
        %4363 = vmatprep.subr.mxu0 0.0
        %4364 = vmatpush2.msra.mxu0 0.0
        %4365 = vmatprep.subr.mxu0 0.0
        %4366 = vmatpush2.msra.mxu0 0.0
        %4367 = vmatprep.subr.mxu0 0.0
        %4368 = vmatpush2.msra.mxu0 0.0
        %4369 = vmatprep.subr.mxu0 0.0
        %4370 = vmatpush2.msra.mxu0 0.0
        %4371 = vmatprep.subr.mxu0 0.0
        %4372 = vmatpush2.msra.mxu0 0.0
        %4373 = vmatprep.subr.mxu0 0.0
        %4374 = vmatpush2.msra.mxu0 0.0
        %4375 = vmatprep.subr.mxu0 0.0
        %4376 = vmatpush2.msra.mxu0 0.0
        %4377 = vmatprep.subr.mxu0 0.0
        %4378 = vmatpush2.msra.mxu0 0.0
        %4379 = vmatprep.subr.mxu0 0.0
        %4380 = vmatpush2.msra.mxu0 0.0
        %4381 = vmatprep.subr.mxu0 0.0
        %4382 = vmatpush2.msra.mxu0 0.0
        %4383 = vmatprep.subr.mxu0 0.0
        %4384 = vmatpush2.msra.mxu0 0.0
        %4385 = vmatprep.subr.mxu0 0.0
        %4386 = vmatpush2.msra.mxu0 0.0
        %4387 = vmatprep.subr.mxu0 0.0
        %4388 = vmatpush2.msra.mxu0 0.0
        %4389 = vmatprep.subr.mxu0 0.0
        %4390 = vmatpush2.msra.mxu0 0.0
        %4391 = vmatprep.subr.mxu0 0.0
        %4392 = vmatpush2.msra.mxu0 0.0
        %4393 = vmatprep.subr.mxu0 0.0
        %4394 = vmatpush2.msra.mxu0 0.0
        %4395 = vmatprep.mubr.f32.mxu0 0.0
        %v4396 = vand.u32 %v4287, 4294901760
        %v4397 = vsub.f32 %v4287, %v4396
        %v4398 = vand.u32 %v4397, 4294901760
        %v4399 = vsub.f32 %v4397, %v4398
        %v4400 = vand.u32 %v4399, 4294901760
        %4401 = vmatmul.mubr.f32.gmra.mxu0 %v4400
        %v4402 = vpop.f32.mrf.mxu0
        %v4403 = vadd.f32 0.0, %v4402
        %v4404 = vpop.f32.mrf.mxu0
        %4405 = vmatprep.mubr.f32.mxu0 0.0
        %v4406 = vand.u32 %v4288, 4294901760
        %v4407 = vsub.f32 %v4288, %v4406
        %v4408 = vand.u32 %v4407, 4294901760
        %v4409 = vsub.f32 %v4407, %v4408
        %v4410 = vand.u32 %v4409, 4294901760
        %4411 = vmatmul.mubr.f32.gmra.mxu0 %v4410
        %v4412 = vpop.f32.mrf.mxu0
        %v4413 = vadd.f32 0.0, %v4412
        %v4414 = vpop.f32.mrf.mxu0
        %4415 = vmatprep.mubr.f32.mxu0 0.0
        %v4416 = vand.u32 %v4289, 4294901760
        %v4417 = vsub.f32 %v4289, %v4416
        %v4418 = vand.u32 %v4417, 4294901760
        %v4419 = vsub.f32 %v4417, %v4418
        %v4420 = vand.u32 %v4419, 4294901760
        %4421 = vmatmul.mubr.f32.gmra.mxu0 %v4420
        %v4422 = vpop.f32.mrf.mxu0
        %v4423 = vadd.f32 0.0, %v4422
        %v4424 = vpop.f32.mrf.mxu0
        %4425 = vmatprep.mubr.f32.mxu0 0.0
        %v4426 = vand.u32 %v4290, 4294901760
        %v4427 = vsub.f32 %v4290, %v4426
        %v4428 = vand.u32 %v4427, 4294901760
        %v4429 = vsub.f32 %v4427, %v4428
        %v4430 = vand.u32 %v4429, 4294901760
        %4431 = vmatmul.mubr.f32.gmra.mxu0 %v4430
        %v4432 = vpop.f32.mrf.mxu0
        %v4433 = vadd.f32 0.0, %v4432
        %v4434 = vpop.f32.mrf.mxu0
        %4435 = vmatprep.mubr.f32.mxu0 0.0
        %v4436 = vand.u32 %v4291, 4294901760
        %v4437 = vsub.f32 %v4291, %v4436
        %v4438 = vand.u32 %v4437, 4294901760
        %v4439 = vsub.f32 %v4437, %v4438
        %v4440 = vand.u32 %v4439, 4294901760
        %4441 = vmatmul.mubr.f32.gmra.mxu0 %v4440
        %v4442 = vpop.f32.mrf.mxu0
        %v4443 = vadd.f32 0.0, %v4442
        %v4444 = vpop.f32.mrf.mxu0
        %4445 = vmatprep.mubr.f32.mxu0 0.0
        %v4446 = vand.u32 %v4292, 4294901760
        %v4447 = vsub.f32 %v4292, %v4446
        %v4448 = vand.u32 %v4447, 4294901760
        %v4449 = vsub.f32 %v4447, %v4448
        %v4450 = vand.u32 %v4449, 4294901760
        %4451 = vmatmul.mubr.f32.gmra.mxu0 %v4450
        %v4452 = vpop.f32.mrf.mxu0
        %v4453 = vadd.f32 0.0, %v4452
        %v4454 = vpop.f32.mrf.mxu0
        %4455 = vmatprep.mubr.f32.mxu0 0.0
        %v4456 = vand.u32 %v4293, 4294901760
        %v4457 = vsub.f32 %v4293, %v4456
        %v4458 = vand.u32 %v4457, 4294901760
        %v4459 = vsub.f32 %v4457, %v4458
        %v4460 = vand.u32 %v4459, 4294901760
        %4461 = vmatmul.mubr.f32.gmra.mxu0 %v4460
        %v4462 = vpop.f32.mrf.mxu0
        %v4463 = vadd.f32 0.0, %v4462
        %v4464 = vpop.f32.mrf.mxu0
        %4465 = vmatprep.mubr.f32.mxu0 0.0
        %v4466 = vand.u32 %v4294, 4294901760
        %v4467 = vsub.f32 %v4294, %v4466
        %v4468 = vand.u32 %v4467, 4294901760
        %v4469 = vsub.f32 %v4467, %v4468
        %v4470 = vand.u32 %v4469, 4294901760
        %4471 = vmatmul.mubr.f32.gmra.mxu0 %v4470
        %v4472 = vpop.f32.mrf.mxu0
        %v4473 = vadd.f32 0.0, %v4472
        %v4474 = vpop.f32.mrf.mxu0
        %4475 = vdwg.mxu0
        %4476 = vmatprep.subr.mxu0 0.0
        %v4477 = vand.u32 %v4312, 4294901760
        %v4478 = vsub.f32 %v4312, %v4477
        %v4479 = vand.u32 %v4478, 4294901760
        %v4480 = vsub.f32 %v4478, %v4479
        %v4481 = vand.u32 %v4480, 4294901760
        %4482 = vmatpush1.msra.mxu0 %v4481
        %4483 = vmatprep.subr.mxu0 0.0
        %v4484 = vand.u32 %v4311, 4294901760
        %v4485 = vsub.f32 %v4311, %v4484
        %v4486 = vand.u32 %v4485, 4294901760
        %v4487 = vsub.f32 %v4485, %v4486
        %v4488 = vand.u32 %v4487, 4294901760
        %4489 = vmatpush1.msra.mxu0 %v4488
        %4490 = vmatprep.subr.mxu0 0.0
        %v4491 = vand.u32 %v4310, 4294901760
        %v4492 = vsub.f32 %v4310, %v4491
        %v4493 = vand.u32 %v4492, 4294901760
        %v4494 = vsub.f32 %v4492, %v4493
        %v4495 = vand.u32 %v4494, 4294901760
        %4496 = vmatpush1.msra.mxu0 %v4495
        %4497 = vmatprep.subr.mxu0 0.0
        %v4498 = vand.u32 %v4309, 4294901760
        %v4499 = vsub.f32 %v4309, %v4498
        %v4500 = vand.u32 %v4499, 4294901760
        %v4501 = vsub.f32 %v4499, %v4500
        %v4502 = vand.u32 %v4501, 4294901760
        %4503 = vmatpush1.msra.mxu0 %v4502
        %4504 = vmatprep.subr.mxu0 0.0
        %v4505 = vand.u32 %v4308, 4294901760
        %v4506 = vsub.f32 %v4308, %v4505
        %v4507 = vand.u32 %v4506, 4294901760
        %v4508 = vsub.f32 %v4506, %v4507
        %v4509 = vand.u32 %v4508, 4294901760
        %4510 = vmatpush1.msra.mxu0 %v4509
        %4511 = vmatprep.subr.mxu0 0.0
        %v4512 = vand.u32 %v4307, 4294901760
        %v4513 = vsub.f32 %v4307, %v4512
        %v4514 = vand.u32 %v4513, 4294901760
        %v4515 = vsub.f32 %v4513, %v4514
        %v4516 = vand.u32 %v4515, 4294901760
        %4517 = vmatpush1.msra.mxu0 %v4516
        %4518 = vmatprep.subr.mxu0 0.0
        %v4519 = vand.u32 %v4306, 4294901760
        %v4520 = vsub.f32 %v4306, %v4519
        %v4521 = vand.u32 %v4520, 4294901760
        %v4522 = vsub.f32 %v4520, %v4521
        %v4523 = vand.u32 %v4522, 4294901760
        %4524 = vmatpush1.msra.mxu0 %v4523
        %4525 = vmatprep.subr.mxu0 0.0
        %v4526 = vand.u32 %v4305, 4294901760
        %v4527 = vsub.f32 %v4305, %v4526
        %v4528 = vand.u32 %v4527, 4294901760
        %v4529 = vsub.f32 %v4527, %v4528
        %v4530 = vand.u32 %v4529, 4294901760
        %4531 = vmatpush1.msra.mxu0 %v4530
        %4532 = vmatprep.subr.mxu0 0.0
        %v4533 = vand.u32 %v4304, 4294901760
        %v4534 = vsub.f32 %v4304, %v4533
        %v4535 = vand.u32 %v4534, 4294901760
        %v4536 = vsub.f32 %v4534, %v4535
        %v4537 = vand.u32 %v4536, 4294901760
        %4538 = vmatpush1.msra.mxu0 %v4537
        %4539 = vmatprep.subr.mxu0 0.0
        %v4540 = vand.u32 %v4303, 4294901760
        %v4541 = vsub.f32 %v4303, %v4540
        %v4542 = vand.u32 %v4541, 4294901760
        %v4543 = vsub.f32 %v4541, %v4542
        %v4544 = vand.u32 %v4543, 4294901760
        %4545 = vmatpush1.msra.mxu0 %v4544
        %4546 = vmatprep.subr.mxu0 0.0
        %v4547 = vand.u32 %v4302, 4294901760
        %v4548 = vsub.f32 %v4302, %v4547
        %v4549 = vand.u32 %v4548, 4294901760
        %v4550 = vsub.f32 %v4548, %v4549
        %v4551 = vand.u32 %v4550, 4294901760
        %4552 = vmatpush1.msra.mxu0 %v4551
        %4553 = vmatprep.subr.mxu0 0.0
        %v4554 = vand.u32 %v4301, 4294901760
        %v4555 = vsub.f32 %v4301, %v4554
        %v4556 = vand.u32 %v4555, 4294901760
        %v4557 = vsub.f32 %v4555, %v4556
        %v4558 = vand.u32 %v4557, 4294901760
        %4559 = vmatpush1.msra.mxu0 %v4558
        %4560 = vmatprep.subr.mxu0 0.0
        %v4561 = vand.u32 %v4300, 4294901760
        %v4562 = vsub.f32 %v4300, %v4561
        %v4563 = vand.u32 %v4562, 4294901760
        %v4564 = vsub.f32 %v4562, %v4563
        %v4565 = vand.u32 %v4564, 4294901760
        %4566 = vmatpush1.msra.mxu0 %v4565
        %4567 = vmatprep.subr.mxu0 0.0
        %v4568 = vand.u32 %v4299, 4294901760
        %v4569 = vsub.f32 %v4299, %v4568
        %v4570 = vand.u32 %v4569, 4294901760
        %v4571 = vsub.f32 %v4569, %v4570
        %v4572 = vand.u32 %v4571, 4294901760
        %4573 = vmatpush1.msra.mxu0 %v4572
        %4574 = vmatprep.subr.mxu0 0.0
        %v4575 = vand.u32 %v4298, 4294901760
        %v4576 = vsub.f32 %v4298, %v4575
        %v4577 = vand.u32 %v4576, 4294901760
        %v4578 = vsub.f32 %v4576, %v4577
        %v4579 = vand.u32 %v4578, 4294901760
        %4580 = vmatpush1.msra.mxu0 %v4579
        %4581 = vmatprep.subr.mxu0 0.0
        %v4582 = vand.u32 %v4297, 4294901760
        %v4583 = vsub.f32 %v4297, %v4582
        %v4584 = vand.u32 %v4583, 4294901760
        %v4585 = vsub.f32 %v4583, %v4584
        %v4586 = vand.u32 %v4585, 4294901760
        %4587 = vmatpush1.msra.mxu0 %v4586
        %4588 = vmatprep.subr.mxu0 0.0
        %4589 = vmatpush2.msra.mxu0 0.0
        %4590 = vmatprep.subr.mxu0 0.0
        %4591 = vmatpush2.msra.mxu0 0.0
        %4592 = vmatprep.subr.mxu0 0.0
        %4593 = vmatpush2.msra.mxu0 0.0
        %4594 = vmatprep.subr.mxu0 0.0
        %4595 = vmatpush2.msra.mxu0 0.0
        %4596 = vmatprep.subr.mxu0 0.0
        %4597 = vmatpush2.msra.mxu0 0.0
        %4598 = vmatprep.subr.mxu0 0.0
        %4599 = vmatpush2.msra.mxu0 0.0
        %4600 = vmatprep.subr.mxu0 0.0
        %4601 = vmatpush2.msra.mxu0 0.0
        %4602 = vmatprep.subr.mxu0 0.0
        %4603 = vmatpush2.msra.mxu0 0.0
        %4604 = vmatprep.subr.mxu0 0.0
        %4605 = vmatpush2.msra.mxu0 0.0
        %4606 = vmatprep.subr.mxu0 0.0
        %4607 = vmatpush2.msra.mxu0 0.0
        %4608 = vmatprep.subr.mxu0 0.0
        %4609 = vmatpush2.msra.mxu0 0.0
        %4610 = vmatprep.subr.mxu0 0.0
        %4611 = vmatpush2.msra.mxu0 0.0
        %4612 = vmatprep.subr.mxu0 0.0
        %4613 = vmatpush2.msra.mxu0 0.0
        %4614 = vmatprep.subr.mxu0 0.0
        %4615 = vmatpush2.msra.mxu0 0.0
        %4616 = vmatprep.subr.mxu0 0.0
        %4617 = vmatpush2.msra.mxu0 0.0
        %4618 = vmatprep.subr.mxu0 0.0
        %4619 = vmatpush2.msra.mxu0 0.0
        %4620 = vmatprep.mubr.f32.mxu0 0.0
        %v4621 = vand.u32 %v4287, 4294901760
        %4622 = vmatmul.mubr.f32.gmra.mxu0 %v4621
        %v4623 = vpop.f32.mrf.mxu0
        %v4624 = vadd.f32 %v4403, %v4623
        %v4625 = vpop.f32.mrf.mxu0
        %4626 = vmatprep.mubr.f32.mxu0 0.0
        %v4627 = vand.u32 %v4288, 4294901760
        %4628 = vmatmul.mubr.f32.gmra.mxu0 %v4627
        %v4629 = vpop.f32.mrf.mxu0
        %v4630 = vadd.f32 %v4413, %v4629
        %v4631 = vpop.f32.mrf.mxu0
        %4632 = vmatprep.mubr.f32.mxu0 0.0
        %v4633 = vand.u32 %v4289, 4294901760
        %4634 = vmatmul.mubr.f32.gmra.mxu0 %v4633
        %v4635 = vpop.f32.mrf.mxu0
        %v4636 = vadd.f32 %v4423, %v4635
        %v4637 = vpop.f32.mrf.mxu0
        %4638 = vmatprep.mubr.f32.mxu0 0.0
        %v4639 = vand.u32 %v4290, 4294901760
        %4640 = vmatmul.mubr.f32.gmra.mxu0 %v4639
        %v4641 = vpop.f32.mrf.mxu0
        %v4642 = vadd.f32 %v4433, %v4641
        %v4643 = vpop.f32.mrf.mxu0
        %4644 = vmatprep.mubr.f32.mxu0 0.0
        %v4645 = vand.u32 %v4291, 4294901760
        %4646 = vmatmul.mubr.f32.gmra.mxu0 %v4645
        %v4647 = vpop.f32.mrf.mxu0
        %v4648 = vadd.f32 %v4443, %v4647
        %v4649 = vpop.f32.mrf.mxu0
        %4650 = vmatprep.mubr.f32.mxu0 0.0
        %v4651 = vand.u32 %v4292, 4294901760
        %4652 = vmatmul.mubr.f32.gmra.mxu0 %v4651
        %v4653 = vpop.f32.mrf.mxu0
        %v4654 = vadd.f32 %v4453, %v4653
        %v4655 = vpop.f32.mrf.mxu0
        %4656 = vmatprep.mubr.f32.mxu0 0.0
        %v4657 = vand.u32 %v4293, 4294901760
        %4658 = vmatmul.mubr.f32.gmra.mxu0 %v4657
        %v4659 = vpop.f32.mrf.mxu0
        %v4660 = vadd.f32 %v4463, %v4659
        %v4661 = vpop.f32.mrf.mxu0
        %4662 = vmatprep.mubr.f32.mxu0 0.0
        %v4663 = vand.u32 %v4294, 4294901760
        %4664 = vmatmul.mubr.f32.gmra.mxu0 %v4663
        %v4665 = vpop.f32.mrf.mxu0
        %v4666 = vadd.f32 %v4473, %v4665
        %v4667 = vpop.f32.mrf.mxu0
        %4668 = vdwg.mxu0
        %4669 = vmatprep.subr.mxu0 0.0
        %v4670 = vand.u32 %v4312, 4294901760
        %v4671 = vsub.f32 %v4312, %v4670
        %4672 = vmatpush1.msra.mxu0 %v4671
        %4673 = vmatprep.subr.mxu0 0.0
        %v4674 = vand.u32 %v4311, 4294901760
        %v4675 = vsub.f32 %v4311, %v4674
        %4676 = vmatpush1.msra.mxu0 %v4675
        %4677 = vmatprep.subr.mxu0 0.0
        %v4678 = vand.u32 %v4310, 4294901760
        %v4679 = vsub.f32 %v4310, %v4678
        %4680 = vmatpush1.msra.mxu0 %v4679
        %4681 = vmatprep.subr.mxu0 0.0
        %v4682 = vand.u32 %v4309, 4294901760
        %v4683 = vsub.f32 %v4309, %v4682
        %4684 = vmatpush1.msra.mxu0 %v4683
        %4685 = vmatprep.subr.mxu0 0.0
        %v4686 = vand.u32 %v4308, 4294901760
        %v4687 = vsub.f32 %v4308, %v4686
        %4688 = vmatpush1.msra.mxu0 %v4687
        %4689 = vmatprep.subr.mxu0 0.0
        %v4690 = vand.u32 %v4307, 4294901760
        %v4691 = vsub.f32 %v4307, %v4690
        %4692 = vmatpush1.msra.mxu0 %v4691
        %4693 = vmatprep.subr.mxu0 0.0
        %v4694 = vand.u32 %v4306, 4294901760
        %v4695 = vsub.f32 %v4306, %v4694
        %4696 = vmatpush1.msra.mxu0 %v4695
        %4697 = vmatprep.subr.mxu0 0.0
        %v4698 = vand.u32 %v4305, 4294901760
        %v4699 = vsub.f32 %v4305, %v4698
        %4700 = vmatpush1.msra.mxu0 %v4699
        %4701 = vmatprep.subr.mxu0 0.0
        %v4702 = vand.u32 %v4304, 4294901760
        %v4703 = vsub.f32 %v4304, %v4702
        %4704 = vmatpush1.msra.mxu0 %v4703
        %4705 = vmatprep.subr.mxu0 0.0
        %v4706 = vand.u32 %v4303, 4294901760
        %v4707 = vsub.f32 %v4303, %v4706
        %4708 = vmatpush1.msra.mxu0 %v4707
        %4709 = vmatprep.subr.mxu0 0.0
        %v4710 = vand.u32 %v4302, 4294901760
        %v4711 = vsub.f32 %v4302, %v4710
        %4712 = vmatpush1.msra.mxu0 %v4711
        %4713 = vmatprep.subr.mxu0 0.0
        %v4714 = vand.u32 %v4301, 4294901760
        %v4715 = vsub.f32 %v4301, %v4714
        %4716 = vmatpush1.msra.mxu0 %v4715
        %4717 = vmatprep.subr.mxu0 0.0
        %v4718 = vand.u32 %v4300, 4294901760
        %v4719 = vsub.f32 %v4300, %v4718
        %4720 = vmatpush1.msra.mxu0 %v4719
        %4721 = vmatprep.subr.mxu0 0.0
        %v4722 = vand.u32 %v4299, 4294901760
        %v4723 = vsub.f32 %v4299, %v4722
        %4724 = vmatpush1.msra.mxu0 %v4723
        %4725 = vmatprep.subr.mxu0 0.0
        %v4726 = vand.u32 %v4298, 4294901760
        %v4727 = vsub.f32 %v4298, %v4726
        %4728 = vmatpush1.msra.mxu0 %v4727
        %4729 = vmatprep.subr.mxu0 0.0
        %v4730 = vand.u32 %v4297, 4294901760
        %v4731 = vsub.f32 %v4297, %v4730
        %4732 = vmatpush1.msra.mxu0 %v4731
        %4733 = vmatprep.subr.mxu0 0.0
        %4734 = vmatpush2.msra.mxu0 0.0
        %4735 = vmatprep.subr.mxu0 0.0
        %4736 = vmatpush2.msra.mxu0 0.0
        %4737 = vmatprep.subr.mxu0 0.0
        %4738 = vmatpush2.msra.mxu0 0.0
        %4739 = vmatprep.subr.mxu0 0.0
        %4740 = vmatpush2.msra.mxu0 0.0
        %4741 = vmatprep.subr.mxu0 0.0
        %4742 = vmatpush2.msra.mxu0 0.0
        %4743 = vmatprep.subr.mxu0 0.0
        %4744 = vmatpush2.msra.mxu0 0.0
        %4745 = vmatprep.subr.mxu0 0.0
        %4746 = vmatpush2.msra.mxu0 0.0
        %4747 = vmatprep.subr.mxu0 0.0
        %4748 = vmatpush2.msra.mxu0 0.0
        %4749 = vmatprep.subr.mxu0 0.0
        %4750 = vmatpush2.msra.mxu0 0.0
        %4751 = vmatprep.subr.mxu0 0.0
        %4752 = vmatpush2.msra.mxu0 0.0
        %4753 = vmatprep.subr.mxu0 0.0
        %4754 = vmatpush2.msra.mxu0 0.0
        %4755 = vmatprep.subr.mxu0 0.0
        %4756 = vmatpush2.msra.mxu0 0.0
        %4757 = vmatprep.subr.mxu0 0.0
        %4758 = vmatpush2.msra.mxu0 0.0
        %4759 = vmatprep.subr.mxu0 0.0
        %4760 = vmatpush2.msra.mxu0 0.0
        %4761 = vmatprep.subr.mxu0 0.0
        %4762 = vmatpush2.msra.mxu0 0.0
        %4763 = vmatprep.subr.mxu0 0.0
        %4764 = vmatpush2.msra.mxu0 0.0
        %4765 = vmatprep.mubr.f32.mxu0 0.0
        %v4766 = vand.u32 %v4287, 4294901760
        %v4767 = vsub.f32 %v4287, %v4766
        %4768 = vmatmul.mubr.f32.gmra.mxu0 %v4767
        %v4769 = vpop.f32.mrf.mxu0
        %v4770 = vadd.f32 %v4624, %v4769
        %v4771 = vpop.f32.mrf.mxu0
        %4772 = vmatprep.mubr.f32.mxu0 0.0
        %v4773 = vand.u32 %v4288, 4294901760
        %v4774 = vsub.f32 %v4288, %v4773
        %4775 = vmatmul.mubr.f32.gmra.mxu0 %v4774
        %v4776 = vpop.f32.mrf.mxu0
        %v4777 = vadd.f32 %v4630, %v4776
        %v4778 = vpop.f32.mrf.mxu0
        %4779 = vmatprep.mubr.f32.mxu0 0.0
        %v4780 = vand.u32 %v4289, 4294901760
        %v4781 = vsub.f32 %v4289, %v4780
        %4782 = vmatmul.mubr.f32.gmra.mxu0 %v4781
        %v4783 = vpop.f32.mrf.mxu0
        %v4784 = vadd.f32 %v4636, %v4783
        %v4785 = vpop.f32.mrf.mxu0
        %4786 = vmatprep.mubr.f32.mxu0 0.0
        %v4787 = vand.u32 %v4290, 4294901760
        %v4788 = vsub.f32 %v4290, %v4787
        %4789 = vmatmul.mubr.f32.gmra.mxu0 %v4788
        %v4790 = vpop.f32.mrf.mxu0
        %v4791 = vadd.f32 %v4642, %v4790
        %v4792 = vpop.f32.mrf.mxu0
        %4793 = vmatprep.mubr.f32.mxu0 0.0
        %v4794 = vand.u32 %v4291, 4294901760
        %v4795 = vsub.f32 %v4291, %v4794
        %4796 = vmatmul.mubr.f32.gmra.mxu0 %v4795
        %v4797 = vpop.f32.mrf.mxu0
        %v4798 = vadd.f32 %v4648, %v4797
        %v4799 = vpop.f32.mrf.mxu0
        %4800 = vmatprep.mubr.f32.mxu0 0.0
        %v4801 = vand.u32 %v4292, 4294901760
        %v4802 = vsub.f32 %v4292, %v4801
        %4803 = vmatmul.mubr.f32.gmra.mxu0 %v4802
        %v4804 = vpop.f32.mrf.mxu0
        %v4805 = vadd.f32 %v4654, %v4804
        %v4806 = vpop.f32.mrf.mxu0
        %4807 = vmatprep.mubr.f32.mxu0 0.0
        %v4808 = vand.u32 %v4293, 4294901760
        %v4809 = vsub.f32 %v4293, %v4808
        %4810 = vmatmul.mubr.f32.gmra.mxu0 %v4809
        %v4811 = vpop.f32.mrf.mxu0
        %v4812 = vadd.f32 %v4660, %v4811
        %v4813 = vpop.f32.mrf.mxu0
        %4814 = vmatprep.mubr.f32.mxu0 0.0
        %v4815 = vand.u32 %v4294, 4294901760
        %v4816 = vsub.f32 %v4294, %v4815
        %4817 = vmatmul.mubr.f32.gmra.mxu0 %v4816
        %v4818 = vpop.f32.mrf.mxu0
        %v4819 = vadd.f32 %v4666, %v4818
        %v4820 = vpop.f32.mrf.mxu0
        %4821 = vdwg.mxu0
        %4822 = vmatprep.subr.mxu0 0.0
        %v4823 = vand.u32 %v4312, 4294901760
        %4824 = vmatpush1.msra.mxu0 %v4823
        %4825 = vmatprep.subr.mxu0 0.0
        %v4826 = vand.u32 %v4311, 4294901760
        %4827 = vmatpush1.msra.mxu0 %v4826
        %4828 = vmatprep.subr.mxu0 0.0
        %v4829 = vand.u32 %v4310, 4294901760
        %4830 = vmatpush1.msra.mxu0 %v4829
        %4831 = vmatprep.subr.mxu0 0.0
        %v4832 = vand.u32 %v4309, 4294901760
        %4833 = vmatpush1.msra.mxu0 %v4832
        %4834 = vmatprep.subr.mxu0 0.0
        %v4835 = vand.u32 %v4308, 4294901760
        %4836 = vmatpush1.msra.mxu0 %v4835
        %4837 = vmatprep.subr.mxu0 0.0
        %v4838 = vand.u32 %v4307, 4294901760
        %4839 = vmatpush1.msra.mxu0 %v4838
        %4840 = vmatprep.subr.mxu0 0.0
        %v4841 = vand.u32 %v4306, 4294901760
        %4842 = vmatpush1.msra.mxu0 %v4841
        %4843 = vmatprep.subr.mxu0 0.0
        %v4844 = vand.u32 %v4305, 4294901760
        %4845 = vmatpush1.msra.mxu0 %v4844
        %4846 = vmatprep.subr.mxu0 0.0
        %v4847 = vand.u32 %v4304, 4294901760
        %4848 = vmatpush1.msra.mxu0 %v4847
        %4849 = vmatprep.subr.mxu0 0.0
        %v4850 = vand.u32 %v4303, 4294901760
        %4851 = vmatpush1.msra.mxu0 %v4850
        %4852 = vmatprep.subr.mxu0 0.0
        %v4853 = vand.u32 %v4302, 4294901760
        %4854 = vmatpush1.msra.mxu0 %v4853
        %4855 = vmatprep.subr.mxu0 0.0
        %v4856 = vand.u32 %v4301, 4294901760
        %4857 = vmatpush1.msra.mxu0 %v4856
        %4858 = vmatprep.subr.mxu0 0.0
        %v4859 = vand.u32 %v4300, 4294901760
        %4860 = vmatpush1.msra.mxu0 %v4859
        %4861 = vmatprep.subr.mxu0 0.0
        %v4862 = vand.u32 %v4299, 4294901760
        %4863 = vmatpush1.msra.mxu0 %v4862
        %4864 = vmatprep.subr.mxu0 0.0
        %v4865 = vand.u32 %v4298, 4294901760
        %4866 = vmatpush1.msra.mxu0 %v4865
        %4867 = vmatprep.subr.mxu0 0.0
        %v4868 = vand.u32 %v4297, 4294901760
        %4869 = vmatpush1.msra.mxu0 %v4868
        %4870 = vmatprep.subr.mxu0 0.0
        %4871 = vmatpush2.msra.mxu0 0.0
        %4872 = vmatprep.subr.mxu0 0.0
        %4873 = vmatpush2.msra.mxu0 0.0
        %4874 = vmatprep.subr.mxu0 0.0
        %4875 = vmatpush2.msra.mxu0 0.0
        %4876 = vmatprep.subr.mxu0 0.0
        %4877 = vmatpush2.msra.mxu0 0.0
        %4878 = vmatprep.subr.mxu0 0.0
        %4879 = vmatpush2.msra.mxu0 0.0
        %4880 = vmatprep.subr.mxu0 0.0
        %4881 = vmatpush2.msra.mxu0 0.0
        %4882 = vmatprep.subr.mxu0 0.0
        %4883 = vmatpush2.msra.mxu0 0.0
        %4884 = vmatprep.subr.mxu0 0.0
        %4885 = vmatpush2.msra.mxu0 0.0
        %4886 = vmatprep.subr.mxu0 0.0
        %4887 = vmatpush2.msra.mxu0 0.0
        %4888 = vmatprep.subr.mxu0 0.0
        %4889 = vmatpush2.msra.mxu0 0.0
        %4890 = vmatprep.subr.mxu0 0.0
        %4891 = vmatpush2.msra.mxu0 0.0
        %4892 = vmatprep.subr.mxu0 0.0
        %4893 = vmatpush2.msra.mxu0 0.0
        %4894 = vmatprep.subr.mxu0 0.0
        %4895 = vmatpush2.msra.mxu0 0.0
        %4896 = vmatprep.subr.mxu0 0.0
        %4897 = vmatpush2.msra.mxu0 0.0
        %4898 = vmatprep.subr.mxu0 0.0
        %4899 = vmatpush2.msra.mxu0 0.0
        %4900 = vmatprep.subr.mxu0 0.0
        %4901 = vmatpush2.msra.mxu0 0.0
        %4902 = vmatprep.mubr.f32.mxu0 0.0
        %v4903 = vand.u32 %v4287, 4294901760
        %v4904 = vsub.f32 %v4287, %v4903
        %v4905 = vand.u32 %v4904, 4294901760
        %4906 = vmatmul.mubr.f32.gmra.mxu0 %v4905
        %v4907 = vpop.f32.mrf.mxu0
        %v4908 = vadd.f32 %v4770, %v4907
        %v4909 = vpop.f32.mrf.mxu0
        %4910 = vmatprep.mubr.f32.mxu0 0.0
        %v4911 = vand.u32 %v4288, 4294901760
        %v4912 = vsub.f32 %v4288, %v4911
        %v4913 = vand.u32 %v4912, 4294901760
        %4914 = vmatmul.mubr.f32.gmra.mxu0 %v4913
        %v4915 = vpop.f32.mrf.mxu0
        %v4916 = vadd.f32 %v4777, %v4915
        %v4917 = vpop.f32.mrf.mxu0
        %4918 = vmatprep.mubr.f32.mxu0 0.0
        %v4919 = vand.u32 %v4289, 4294901760
        %v4920 = vsub.f32 %v4289, %v4919
        %v4921 = vand.u32 %v4920, 4294901760
        %4922 = vmatmul.mubr.f32.gmra.mxu0 %v4921
        %v4923 = vpop.f32.mrf.mxu0
        %v4924 = vadd.f32 %v4784, %v4923
        %v4925 = vpop.f32.mrf.mxu0
        %4926 = vmatprep.mubr.f32.mxu0 0.0
        %v4927 = vand.u32 %v4290, 4294901760
        %v4928 = vsub.f32 %v4290, %v4927
        %v4929 = vand.u32 %v4928, 4294901760
        %4930 = vmatmul.mubr.f32.gmra.mxu0 %v4929
        %v4931 = vpop.f32.mrf.mxu0
        %v4932 = vadd.f32 %v4791, %v4931
        %v4933 = vpop.f32.mrf.mxu0
        %4934 = vmatprep.mubr.f32.mxu0 0.0
        %v4935 = vand.u32 %v4291, 4294901760
        %v4936 = vsub.f32 %v4291, %v4935
        %v4937 = vand.u32 %v4936, 4294901760
        %4938 = vmatmul.mubr.f32.gmra.mxu0 %v4937
        %v4939 = vpop.f32.mrf.mxu0
        %v4940 = vadd.f32 %v4798, %v4939
        %v4941 = vpop.f32.mrf.mxu0
        %4942 = vmatprep.mubr.f32.mxu0 0.0
        %v4943 = vand.u32 %v4292, 4294901760
        %v4944 = vsub.f32 %v4292, %v4943
        %v4945 = vand.u32 %v4944, 4294901760
        %4946 = vmatmul.mubr.f32.gmra.mxu0 %v4945
        %v4947 = vpop.f32.mrf.mxu0
        %v4948 = vadd.f32 %v4805, %v4947
        %v4949 = vpop.f32.mrf.mxu0
        %4950 = vmatprep.mubr.f32.mxu0 0.0
        %v4951 = vand.u32 %v4293, 4294901760
        %v4952 = vsub.f32 %v4293, %v4951
        %v4953 = vand.u32 %v4952, 4294901760
        %4954 = vmatmul.mubr.f32.gmra.mxu0 %v4953
        %v4955 = vpop.f32.mrf.mxu0
        %v4956 = vadd.f32 %v4812, %v4955
        %v4957 = vpop.f32.mrf.mxu0
        %4958 = vmatprep.mubr.f32.mxu0 0.0
        %v4959 = vand.u32 %v4294, 4294901760
        %v4960 = vsub.f32 %v4294, %v4959
        %v4961 = vand.u32 %v4960, 4294901760
        %4962 = vmatmul.mubr.f32.gmra.mxu0 %v4961
        %v4963 = vpop.f32.mrf.mxu0
        %v4964 = vadd.f32 %v4819, %v4963
        %v4965 = vpop.f32.mrf.mxu0
        %4966 = vdwg.mxu0
        %4967 = vmatprep.subr.mxu0 0.0
        %v4968 = vand.u32 %v4312, 4294901760
        %v4969 = vsub.f32 %v4312, %v4968
        %v4970 = vand.u32 %v4969, 4294901760
        %4971 = vmatpush1.msra.mxu0 %v4970
        %4972 = vmatprep.subr.mxu0 0.0
        %v4973 = vand.u32 %v4311, 4294901760
        %v4974 = vsub.f32 %v4311, %v4973
        %v4975 = vand.u32 %v4974, 4294901760
        %4976 = vmatpush1.msra.mxu0 %v4975
        %4977 = vmatprep.subr.mxu0 0.0
        %v4978 = vand.u32 %v4310, 4294901760
        %v4979 = vsub.f32 %v4310, %v4978
        %v4980 = vand.u32 %v4979, 4294901760
        %4981 = vmatpush1.msra.mxu0 %v4980
        %4982 = vmatprep.subr.mxu0 0.0
        %v4983 = vand.u32 %v4309, 4294901760
        %v4984 = vsub.f32 %v4309, %v4983
        %v4985 = vand.u32 %v4984, 4294901760
        %4986 = vmatpush1.msra.mxu0 %v4985
        %4987 = vmatprep.subr.mxu0 0.0
        %v4988 = vand.u32 %v4308, 4294901760
        %v4989 = vsub.f32 %v4308, %v4988
        %v4990 = vand.u32 %v4989, 4294901760
        %4991 = vmatpush1.msra.mxu0 %v4990
        %4992 = vmatprep.subr.mxu0 0.0
        %v4993 = vand.u32 %v4307, 4294901760
        %v4994 = vsub.f32 %v4307, %v4993
        %v4995 = vand.u32 %v4994, 4294901760
        %4996 = vmatpush1.msra.mxu0 %v4995
        %4997 = vmatprep.subr.mxu0 0.0
        %v4998 = vand.u32 %v4306, 4294901760
        %v4999 = vsub.f32 %v4306, %v4998
        %v5000 = vand.u32 %v4999, 4294901760
        %5001 = vmatpush1.msra.mxu0 %v5000
        %5002 = vmatprep.subr.mxu0 0.0
        %v5003 = vand.u32 %v4305, 4294901760
        %v5004 = vsub.f32 %v4305, %v5003
        %v5005 = vand.u32 %v5004, 4294901760
        %5006 = vmatpush1.msra.mxu0 %v5005
        %5007 = vmatprep.subr.mxu0 0.0
        %v5008 = vand.u32 %v4304, 4294901760
        %v5009 = vsub.f32 %v4304, %v5008
        %v5010 = vand.u32 %v5009, 4294901760
        %5011 = vmatpush1.msra.mxu0 %v5010
        %5012 = vmatprep.subr.mxu0 0.0
        %v5013 = vand.u32 %v4303, 4294901760
        %v5014 = vsub.f32 %v4303, %v5013
        %v5015 = vand.u32 %v5014, 4294901760
        %5016 = vmatpush1.msra.mxu0 %v5015
        %5017 = vmatprep.subr.mxu0 0.0
        %v5018 = vand.u32 %v4302, 4294901760
        %v5019 = vsub.f32 %v4302, %v5018
        %v5020 = vand.u32 %v5019, 4294901760
        %5021 = vmatpush1.msra.mxu0 %v5020
        %5022 = vmatprep.subr.mxu0 0.0
        %v5023 = vand.u32 %v4301, 4294901760
        %v5024 = vsub.f32 %v4301, %v5023
        %v5025 = vand.u32 %v5024, 4294901760
        %5026 = vmatpush1.msra.mxu0 %v5025
        %5027 = vmatprep.subr.mxu0 0.0
        %v5028 = vand.u32 %v4300, 4294901760
        %v5029 = vsub.f32 %v4300, %v5028
        %v5030 = vand.u32 %v5029, 4294901760
        %5031 = vmatpush1.msra.mxu0 %v5030
        %5032 = vmatprep.subr.mxu0 0.0
        %v5033 = vand.u32 %v4299, 4294901760
        %v5034 = vsub.f32 %v4299, %v5033
        %v5035 = vand.u32 %v5034, 4294901760
        %5036 = vmatpush1.msra.mxu0 %v5035
        %5037 = vmatprep.subr.mxu0 0.0
        %v5038 = vand.u32 %v4298, 4294901760
        %v5039 = vsub.f32 %v4298, %v5038
        %v5040 = vand.u32 %v5039, 4294901760
        %5041 = vmatpush1.msra.mxu0 %v5040
        %5042 = vmatprep.subr.mxu0 0.0
        %v5043 = vand.u32 %v4297, 4294901760
        %v5044 = vsub.f32 %v4297, %v5043
        %v5045 = vand.u32 %v5044, 4294901760
        %5046 = vmatpush1.msra.mxu0 %v5045
        %5047 = vmatprep.subr.mxu0 0.0
        %5048 = vmatpush2.msra.mxu0 0.0
        %5049 = vmatprep.subr.mxu0 0.0
        %5050 = vmatpush2.msra.mxu0 0.0
        %5051 = vmatprep.subr.mxu0 0.0
        %5052 = vmatpush2.msra.mxu0 0.0
        %5053 = vmatprep.subr.mxu0 0.0
        %5054 = vmatpush2.msra.mxu0 0.0
        %5055 = vmatprep.subr.mxu0 0.0
        %5056 = vmatpush2.msra.mxu0 0.0
        %5057 = vmatprep.subr.mxu0 0.0
        %5058 = vmatpush2.msra.mxu0 0.0
        %5059 = vmatprep.subr.mxu0 0.0
        %5060 = vmatpush2.msra.mxu0 0.0
        %5061 = vmatprep.subr.mxu0 0.0
        %5062 = vmatpush2.msra.mxu0 0.0
        %5063 = vmatprep.subr.mxu0 0.0
        %5064 = vmatpush2.msra.mxu0 0.0
        %5065 = vmatprep.subr.mxu0 0.0
        %5066 = vmatpush2.msra.mxu0 0.0
        %5067 = vmatprep.subr.mxu0 0.0
        %5068 = vmatpush2.msra.mxu0 0.0
        %5069 = vmatprep.subr.mxu0 0.0
        %5070 = vmatpush2.msra.mxu0 0.0
        %5071 = vmatprep.subr.mxu0 0.0
        %5072 = vmatpush2.msra.mxu0 0.0
        %5073 = vmatprep.subr.mxu0 0.0
        %5074 = vmatpush2.msra.mxu0 0.0
        %5075 = vmatprep.subr.mxu0 0.0
        %5076 = vmatpush2.msra.mxu0 0.0
        %5077 = vmatprep.subr.mxu0 0.0
        %5078 = vmatpush2.msra.mxu0 0.0
        %5079 = vmatprep.mubr.f32.mxu0 0.0
        %v5080 = vand.u32 %v4287, 4294901760
        %5081 = vmatmul.mubr.f32.gmra.mxu0 %v5080
        %v5082 = vpop.f32.mrf.mxu0
        %v5083 = vadd.f32 %v4908, %v5082
        %v5084 = vpop.f32.mrf.mxu0
        %5085 = vmatprep.mubr.f32.mxu0 0.0
        %v5086 = vand.u32 %v4288, 4294901760
        %5087 = vmatmul.mubr.f32.gmra.mxu0 %v5086
        %v5088 = vpop.f32.mrf.mxu0
        %v5089 = vadd.f32 %v4916, %v5088
        %v5090 = vpop.f32.mrf.mxu0
        %5091 = vmatprep.mubr.f32.mxu0 0.0
        %v5092 = vand.u32 %v4289, 4294901760
        %5093 = vmatmul.mubr.f32.gmra.mxu0 %v5092
        %v5094 = vpop.f32.mrf.mxu0
        %v5095 = vadd.f32 %v4924, %v5094
        %v5096 = vpop.f32.mrf.mxu0
        %5097 = vmatprep.mubr.f32.mxu0 0.0
        %v5098 = vand.u32 %v4290, 4294901760
        %5099 = vmatmul.mubr.f32.gmra.mxu0 %v5098
        %v5100 = vpop.f32.mrf.mxu0
        %v5101 = vadd.f32 %v4932, %v5100
        %v5102 = vpop.f32.mrf.mxu0
        %5103 = vmatprep.mubr.f32.mxu0 0.0
        %v5104 = vand.u32 %v4291, 4294901760
        %5105 = vmatmul.mubr.f32.gmra.mxu0 %v5104
        %v5106 = vpop.f32.mrf.mxu0
        %v5107 = vadd.f32 %v4940, %v5106
        %v5108 = vpop.f32.mrf.mxu0
        %5109 = vmatprep.mubr.f32.mxu0 0.0
        %v5110 = vand.u32 %v4292, 4294901760
        %5111 = vmatmul.mubr.f32.gmra.mxu0 %v5110
        %v5112 = vpop.f32.mrf.mxu0
        %v5113 = vadd.f32 %v4948, %v5112
        %v5114 = vpop.f32.mrf.mxu0
        %5115 = vmatprep.mubr.f32.mxu0 0.0
        %v5116 = vand.u32 %v4293, 4294901760
        %5117 = vmatmul.mubr.f32.gmra.mxu0 %v5116
        %v5118 = vpop.f32.mrf.mxu0
        %v5119 = vadd.f32 %v4956, %v5118
        %v5120 = vpop.f32.mrf.mxu0
        %5121 = vmatprep.mubr.f32.mxu0 0.0
        %v5122 = vand.u32 %v4294, 4294901760
        %5123 = vmatmul.mubr.f32.gmra.mxu0 %v5122
        %v5124 = vpop.f32.mrf.mxu0
        %v5125 = vadd.f32 %v4964, %v5124
        %v5126 = vpop.f32.mrf.mxu0
        %5127 = vdwg.mxu0
        %5128 = vmatprep.subr.mxu0 0.0
        %v5129 = vand.u32 %v4312, 4294901760
        %5130 = vmatpush1.msra.mxu0 %v5129
        %5131 = vmatprep.subr.mxu0 0.0
        %v5132 = vand.u32 %v4311, 4294901760
        %5133 = vmatpush1.msra.mxu0 %v5132
        %5134 = vmatprep.subr.mxu0 0.0
        %v5135 = vand.u32 %v4310, 4294901760
        %5136 = vmatpush1.msra.mxu0 %v5135
        %5137 = vmatprep.subr.mxu0 0.0
        %v5138 = vand.u32 %v4309, 4294901760
        %5139 = vmatpush1.msra.mxu0 %v5138
        %5140 = vmatprep.subr.mxu0 0.0
        %v5141 = vand.u32 %v4308, 4294901760
        %5142 = vmatpush1.msra.mxu0 %v5141
        %5143 = vmatprep.subr.mxu0 0.0
        %v5144 = vand.u32 %v4307, 4294901760
        %5145 = vmatpush1.msra.mxu0 %v5144
        %5146 = vmatprep.subr.mxu0 0.0
        %v5147 = vand.u32 %v4306, 4294901760
        %5148 = vmatpush1.msra.mxu0 %v5147
        %5149 = vmatprep.subr.mxu0 0.0
        %v5150 = vand.u32 %v4305, 4294901760
        %5151 = vmatpush1.msra.mxu0 %v5150
        %5152 = vmatprep.subr.mxu0 0.0
        %v5153 = vand.u32 %v4304, 4294901760
        %5154 = vmatpush1.msra.mxu0 %v5153
        %5155 = vmatprep.subr.mxu0 0.0
        %v5156 = vand.u32 %v4303, 4294901760
        %5157 = vmatpush1.msra.mxu0 %v5156
        %5158 = vmatprep.subr.mxu0 0.0
        %v5159 = vand.u32 %v4302, 4294901760
        %5160 = vmatpush1.msra.mxu0 %v5159
        %5161 = vmatprep.subr.mxu0 0.0
        %v5162 = vand.u32 %v4301, 4294901760
        %5163 = vmatpush1.msra.mxu0 %v5162
        %5164 = vmatprep.subr.mxu0 0.0
        %v5165 = vand.u32 %v4300, 4294901760
        %5166 = vmatpush1.msra.mxu0 %v5165
        %5167 = vmatprep.subr.mxu0 0.0
        %v5168 = vand.u32 %v4299, 4294901760
        %5169 = vmatpush1.msra.mxu0 %v5168
        %5170 = vmatprep.subr.mxu0 0.0
        %v5171 = vand.u32 %v4298, 4294901760
        %5172 = vmatpush1.msra.mxu0 %v5171
        %5173 = vmatprep.subr.mxu0 0.0
        %v5174 = vand.u32 %v4297, 4294901760
        %5175 = vmatpush1.msra.mxu0 %v5174
        %5176 = vmatprep.subr.mxu0 0.0
        %5177 = vmatpush2.msra.mxu0 0.0
        %5178 = vmatprep.subr.mxu0 0.0
        %5179 = vmatpush2.msra.mxu0 0.0
        %5180 = vmatprep.subr.mxu0 0.0
        %5181 = vmatpush2.msra.mxu0 0.0
        %5182 = vmatprep.subr.mxu0 0.0
        %5183 = vmatpush2.msra.mxu0 0.0
        %5184 = vmatprep.subr.mxu0 0.0
        %5185 = vmatpush2.msra.mxu0 0.0
        %5186 = vmatprep.subr.mxu0 0.0
        %5187 = vmatpush2.msra.mxu0 0.0
        %5188 = vmatprep.subr.mxu0 0.0
        %5189 = vmatpush2.msra.mxu0 0.0
        %5190 = vmatprep.subr.mxu0 0.0
        %5191 = vmatpush2.msra.mxu0 0.0
        %5192 = vmatprep.subr.mxu0 0.0
        %5193 = vmatpush2.msra.mxu0 0.0
        %5194 = vmatprep.subr.mxu0 0.0
        %5195 = vmatpush2.msra.mxu0 0.0
        %5196 = vmatprep.subr.mxu0 0.0
        %5197 = vmatpush2.msra.mxu0 0.0
        %5198 = vmatprep.subr.mxu0 0.0
        %5199 = vmatpush2.msra.mxu0 0.0
        %5200 = vmatprep.subr.mxu0 0.0
        %5201 = vmatpush2.msra.mxu0 0.0
        %5202 = vmatprep.subr.mxu0 0.0
        %5203 = vmatpush2.msra.mxu0 0.0
        %5204 = vmatprep.subr.mxu0 0.0
        %5205 = vmatpush2.msra.mxu0 0.0
        %5206 = vmatprep.subr.mxu0 0.0
        %5207 = vmatpush2.msra.mxu0 0.0
        %5208 = vmatprep.mubr.f32.mxu0 0.0
        %v5209 = vand.u32 %v4287, 4294901760
        %5210 = vmatmul.mubr.f32.gmra.mxu0 %v5209
        %v5211 = vpop.f32.mrf.mxu0
        %v5212 = vadd.f32 %v5083, %v5211
        %v5213 = vpop.f32.mrf.mxu0
        %5214 = vmatprep.mubr.f32.mxu0 0.0
        %v5215 = vand.u32 %v4288, 4294901760
        %5216 = vmatmul.mubr.f32.gmra.mxu0 %v5215
        %v5217 = vpop.f32.mrf.mxu0
        %v5218 = vadd.f32 %v5089, %v5217
        %v5219 = vpop.f32.mrf.mxu0
        %5220 = vmatprep.mubr.f32.mxu0 0.0
        %v5221 = vand.u32 %v4289, 4294901760
        %5222 = vmatmul.mubr.f32.gmra.mxu0 %v5221
        %v5223 = vpop.f32.mrf.mxu0
        %v5224 = vadd.f32 %v5095, %v5223
        %v5225 = vpop.f32.mrf.mxu0
        %5226 = vmatprep.mubr.f32.mxu0 0.0
        %v5227 = vand.u32 %v4290, 4294901760
        %5228 = vmatmul.mubr.f32.gmra.mxu0 %v5227
        %v5229 = vpop.f32.mrf.mxu0
        %v5230 = vadd.f32 %v5101, %v5229
        %v5231 = vpop.f32.mrf.mxu0
        %5232 = vmatprep.mubr.f32.mxu0 0.0
        %v5233 = vand.u32 %v4291, 4294901760
        %5234 = vmatmul.mubr.f32.gmra.mxu0 %v5233
        %v5235 = vpop.f32.mrf.mxu0
        %v5236 = vadd.f32 %v5107, %v5235
        %v5237 = vpop.f32.mrf.mxu0
        %5238 = vmatprep.mubr.f32.mxu0 0.0
        %v5239 = vand.u32 %v4292, 4294901760
        %5240 = vmatmul.mubr.f32.gmra.mxu0 %v5239
        %v5241 = vpop.f32.mrf.mxu0
        %v5242 = vadd.f32 %v5113, %v5241
        %v5243 = vpop.f32.mrf.mxu0
        %5244 = vmatprep.mubr.f32.mxu0 0.0
        %v5245 = vand.u32 %v4293, 4294901760
        %5246 = vmatmul.mubr.f32.gmra.mxu0 %v5245
        %v5247 = vpop.f32.mrf.mxu0
        %v5248 = vadd.f32 %v5119, %v5247
        %v5249 = vpop.f32.mrf.mxu0
        %5250 = vmatprep.mubr.f32.mxu0 0.0
        %v5251 = vand.u32 %v4294, 4294901760
        %5252 = vmatmul.mubr.f32.gmra.mxu0 %v5251
        %v5253 = vpop.f32.mrf.mxu0
        %v5254 = vadd.f32 %v5125, %v5253
        %v5255 = vpop.f32.mrf.mxu0
        %5256 = vdwg.mxu0
        %v5257 = vmul.f32 %v4287, %v4287
        %v5258 = vmul.f32 %v4288, %v4288
        %v5259 = vmul.f32 %v4289, %v4289
        %v5260 = vmul.f32 %v4290, %v4290
        %v5261 = vmul.f32 %v4291, %v4291
        %v5262 = vmul.f32 %v4292, %v4292
        %v5263 = vmul.f32 %v4293, %v4293
        %v5264 = vmul.f32 %v4294, %v4294
        %5265 = vmatprep.subr.mxu0 0.0
        %v5266 = vand.u32 %v4312, 4294901760
        %5267 = vmatpush1.msra.mxu0 %v5266
        %5268 = vmatprep.subr.mxu0 0.0
        %v5269 = vand.u32 %v4311, 4294901760
        %5270 = vmatpush1.msra.mxu0 %v5269
        %5271 = vmatprep.subr.mxu0 0.0
        %v5272 = vand.u32 %v4310, 4294901760
        %5273 = vmatpush1.msra.mxu0 %v5272
        %5274 = vmatprep.subr.mxu0 0.0
        %v5275 = vand.u32 %v4309, 4294901760
        %5276 = vmatpush1.msra.mxu0 %v5275
        %5277 = vmatprep.subr.mxu0 0.0
        %v5278 = vand.u32 %v4308, 4294901760
        %5279 = vmatpush1.msra.mxu0 %v5278
        %5280 = vmatprep.subr.mxu0 0.0
        %v5281 = vand.u32 %v4307, 4294901760
        %5282 = vmatpush1.msra.mxu0 %v5281
        %5283 = vmatprep.subr.mxu0 0.0
        %v5284 = vand.u32 %v4306, 4294901760
        %5285 = vmatpush1.msra.mxu0 %v5284
        %5286 = vmatprep.subr.mxu0 0.0
        %v5287 = vand.u32 %v4305, 4294901760
        %5288 = vmatpush1.msra.mxu0 %v5287
        %5289 = vmatprep.subr.mxu0 0.0
        %v5290 = vand.u32 %v4304, 4294901760
        %5291 = vmatpush1.msra.mxu0 %v5290
        %5292 = vmatprep.subr.mxu0 0.0
        %v5293 = vand.u32 %v4303, 4294901760
        %5294 = vmatpush1.msra.mxu0 %v5293
        %5295 = vmatprep.subr.mxu0 0.0
        %v5296 = vand.u32 %v4302, 4294901760
        %5297 = vmatpush1.msra.mxu0 %v5296
        %5298 = vmatprep.subr.mxu0 0.0
        %v5299 = vand.u32 %v4301, 4294901760
        %5300 = vmatpush1.msra.mxu0 %v5299
        %5301 = vmatprep.subr.mxu0 0.0
        %v5302 = vand.u32 %v4300, 4294901760
        %5303 = vmatpush1.msra.mxu0 %v5302
        %5304 = vmatprep.subr.mxu0 0.0
        %v5305 = vand.u32 %v4299, 4294901760
        %5306 = vmatpush1.msra.mxu0 %v5305
        %5307 = vmatprep.subr.mxu0 0.0
        %v5308 = vand.u32 %v4298, 4294901760
        %5309 = vmatpush1.msra.mxu0 %v5308
        %5310 = vmatprep.subr.mxu0 0.0
        %v5311 = vand.u32 %v4297, 4294901760
        %5312 = vmatpush1.msra.mxu0 %v5311
        %5313 = vmatprep.subr.mxu0 0.0
        %5314 = vmatpush2.msra.mxu0 0.0
        %5315 = vmatprep.subr.mxu0 0.0
        %5316 = vmatpush2.msra.mxu0 0.0
        %5317 = vmatprep.subr.mxu0 0.0
        %5318 = vmatpush2.msra.mxu0 0.0
        %5319 = vmatprep.subr.mxu0 0.0
        %5320 = vmatpush2.msra.mxu0 0.0
        %5321 = vmatprep.subr.mxu0 0.0
        %5322 = vmatpush2.msra.mxu0 0.0
        %5323 = vmatprep.subr.mxu0 0.0
        %5324 = vmatpush2.msra.mxu0 0.0
        %5325 = vmatprep.subr.mxu0 0.0
        %5326 = vmatpush2.msra.mxu0 0.0
        %5327 = vmatprep.subr.mxu0 0.0
        %5328 = vmatpush2.msra.mxu0 0.0
        %5329 = vmatprep.subr.mxu0 0.0
        %5330 = vmatpush2.msra.mxu0 0.0
        %5331 = vmatprep.subr.mxu0 0.0
        %5332 = vmatpush2.msra.mxu0 0.0
        %5333 = vmatprep.subr.mxu0 0.0
        %5334 = vmatpush2.msra.mxu0 0.0
        %5335 = vmatprep.subr.mxu0 0.0
        %5336 = vmatpush2.msra.mxu0 0.0
        %5337 = vmatprep.subr.mxu0 0.0
        %5338 = vmatpush2.msra.mxu0 0.0
        %5339 = vmatprep.subr.mxu0 0.0
        %5340 = vmatpush2.msra.mxu0 0.0
        %5341 = vmatprep.subr.mxu0 0.0
        %5342 = vmatpush2.msra.mxu0 0.0
        %5343 = vmatprep.subr.mxu0 0.0
        %5344 = vmatpush2.msra.mxu0 0.0
        %5345 = vmatprep.mubr.f32.mxu0 0.0
        %v5346 = vand.u32 %v5257, 4294901760
        %v5347 = vsub.f32 %v5257, %v5346
        %v5348 = vand.u32 %v5347, 4294901760
        %v5349 = vsub.f32 %v5347, %v5348
        %v5350 = vand.u32 %v5349, 4294901760
        %5351 = vmatmul.mubr.f32.gmra.mxu0 %v5350
        %v5352 = vpop.f32.mrf.mxu0
        %v5353 = vadd.f32 0.0, %v5352
        %v5354 = vpop.f32.mrf.mxu0
        %5355 = vmatprep.mubr.f32.mxu0 0.0
        %v5356 = vand.u32 %v5258, 4294901760
        %v5357 = vsub.f32 %v5258, %v5356
        %v5358 = vand.u32 %v5357, 4294901760
        %v5359 = vsub.f32 %v5357, %v5358
        %v5360 = vand.u32 %v5359, 4294901760
        %5361 = vmatmul.mubr.f32.gmra.mxu0 %v5360
        %v5362 = vpop.f32.mrf.mxu0
        %v5363 = vadd.f32 0.0, %v5362
        %v5364 = vpop.f32.mrf.mxu0
        %5365 = vmatprep.mubr.f32.mxu0 0.0
        %v5366 = vand.u32 %v5259, 4294901760
        %v5367 = vsub.f32 %v5259, %v5366
        %v5368 = vand.u32 %v5367, 4294901760
        %v5369 = vsub.f32 %v5367, %v5368
        %v5370 = vand.u32 %v5369, 4294901760
        %5371 = vmatmul.mubr.f32.gmra.mxu0 %v5370
        %v5372 = vpop.f32.mrf.mxu0
        %v5373 = vadd.f32 0.0, %v5372
        %v5374 = vpop.f32.mrf.mxu0
        %5375 = vmatprep.mubr.f32.mxu0 0.0
        %v5376 = vand.u32 %v5260, 4294901760
        %v5377 = vsub.f32 %v5260, %v5376
        %v5378 = vand.u32 %v5377, 4294901760
        %v5379 = vsub.f32 %v5377, %v5378
        %v5380 = vand.u32 %v5379, 4294901760
        %5381 = vmatmul.mubr.f32.gmra.mxu0 %v5380
        %v5382 = vpop.f32.mrf.mxu0
        %v5383 = vadd.f32 0.0, %v5382
        %v5384 = vpop.f32.mrf.mxu0
        %5385 = vmatprep.mubr.f32.mxu0 0.0
        %v5386 = vand.u32 %v5261, 4294901760
        %v5387 = vsub.f32 %v5261, %v5386
        %v5388 = vand.u32 %v5387, 4294901760
        %v5389 = vsub.f32 %v5387, %v5388
        %v5390 = vand.u32 %v5389, 4294901760
        %5391 = vmatmul.mubr.f32.gmra.mxu0 %v5390
        %v5392 = vpop.f32.mrf.mxu0
        %v5393 = vadd.f32 0.0, %v5392
        %v5394 = vpop.f32.mrf.mxu0
        %5395 = vmatprep.mubr.f32.mxu0 0.0
        %v5396 = vand.u32 %v5262, 4294901760
        %v5397 = vsub.f32 %v5262, %v5396
        %v5398 = vand.u32 %v5397, 4294901760
        %v5399 = vsub.f32 %v5397, %v5398
        %v5400 = vand.u32 %v5399, 4294901760
        %5401 = vmatmul.mubr.f32.gmra.mxu0 %v5400
        %v5402 = vpop.f32.mrf.mxu0
        %v5403 = vadd.f32 0.0, %v5402
        %v5404 = vpop.f32.mrf.mxu0
        %5405 = vmatprep.mubr.f32.mxu0 0.0
        %v5406 = vand.u32 %v5263, 4294901760
        %v5407 = vsub.f32 %v5263, %v5406
        %v5408 = vand.u32 %v5407, 4294901760
        %v5409 = vsub.f32 %v5407, %v5408
        %v5410 = vand.u32 %v5409, 4294901760
        %5411 = vmatmul.mubr.f32.gmra.mxu0 %v5410
        %v5412 = vpop.f32.mrf.mxu0
        %v5413 = vadd.f32 0.0, %v5412
        %v5414 = vpop.f32.mrf.mxu0
        %5415 = vmatprep.mubr.f32.mxu0 0.0
        %v5416 = vand.u32 %v5264, 4294901760
        %v5417 = vsub.f32 %v5264, %v5416
        %v5418 = vand.u32 %v5417, 4294901760
        %v5419 = vsub.f32 %v5417, %v5418
        %v5420 = vand.u32 %v5419, 4294901760
        %5421 = vmatmul.mubr.f32.gmra.mxu0 %v5420
        %v5422 = vpop.f32.mrf.mxu0
        %v5423 = vadd.f32 0.0, %v5422
        %v5424 = vpop.f32.mrf.mxu0
        %5425 = vdwg.mxu0
        %5426 = vmatprep.subr.mxu0 0.0
        %v5427 = vand.u32 %v4312, 4294901760
        %v5428 = vsub.f32 %v4312, %v5427
        %v5429 = vand.u32 %v5428, 4294901760
        %v5430 = vsub.f32 %v5428, %v5429
        %v5431 = vand.u32 %v5430, 4294901760
        %5432 = vmatpush1.msra.mxu0 %v5431
        %5433 = vmatprep.subr.mxu0 0.0
        %v5434 = vand.u32 %v4311, 4294901760
        %v5435 = vsub.f32 %v4311, %v5434
        %v5436 = vand.u32 %v5435, 4294901760
        %v5437 = vsub.f32 %v5435, %v5436
        %v5438 = vand.u32 %v5437, 4294901760
        %5439 = vmatpush1.msra.mxu0 %v5438
        %5440 = vmatprep.subr.mxu0 0.0
        %v5441 = vand.u32 %v4310, 4294901760
        %v5442 = vsub.f32 %v4310, %v5441
        %v5443 = vand.u32 %v5442, 4294901760
        %v5444 = vsub.f32 %v5442, %v5443
        %v5445 = vand.u32 %v5444, 4294901760
        %5446 = vmatpush1.msra.mxu0 %v5445
        %5447 = vmatprep.subr.mxu0 0.0
        %v5448 = vand.u32 %v4309, 4294901760
        %v5449 = vsub.f32 %v4309, %v5448
        %v5450 = vand.u32 %v5449, 4294901760
        %v5451 = vsub.f32 %v5449, %v5450
        %v5452 = vand.u32 %v5451, 4294901760
        %5453 = vmatpush1.msra.mxu0 %v5452
        %5454 = vmatprep.subr.mxu0 0.0
        %v5455 = vand.u32 %v4308, 4294901760
        %v5456 = vsub.f32 %v4308, %v5455
        %v5457 = vand.u32 %v5456, 4294901760
        %v5458 = vsub.f32 %v5456, %v5457
        %v5459 = vand.u32 %v5458, 4294901760
        %5460 = vmatpush1.msra.mxu0 %v5459
        %5461 = vmatprep.subr.mxu0 0.0
        %v5462 = vand.u32 %v4307, 4294901760
        %v5463 = vsub.f32 %v4307, %v5462
        %v5464 = vand.u32 %v5463, 4294901760
        %v5465 = vsub.f32 %v5463, %v5464
        %v5466 = vand.u32 %v5465, 4294901760
        %5467 = vmatpush1.msra.mxu0 %v5466
        %5468 = vmatprep.subr.mxu0 0.0
        %v5469 = vand.u32 %v4306, 4294901760
        %v5470 = vsub.f32 %v4306, %v5469
        %v5471 = vand.u32 %v5470, 4294901760
        %v5472 = vsub.f32 %v5470, %v5471
        %v5473 = vand.u32 %v5472, 4294901760
        %5474 = vmatpush1.msra.mxu0 %v5473
        %5475 = vmatprep.subr.mxu0 0.0
        %v5476 = vand.u32 %v4305, 4294901760
        %v5477 = vsub.f32 %v4305, %v5476
        %v5478 = vand.u32 %v5477, 4294901760
        %v5479 = vsub.f32 %v5477, %v5478
        %v5480 = vand.u32 %v5479, 4294901760
        %5481 = vmatpush1.msra.mxu0 %v5480
        %5482 = vmatprep.subr.mxu0 0.0
        %v5483 = vand.u32 %v4304, 4294901760
        %v5484 = vsub.f32 %v4304, %v5483
        %v5485 = vand.u32 %v5484, 4294901760
        %v5486 = vsub.f32 %v5484, %v5485
        %v5487 = vand.u32 %v5486, 4294901760
        %5488 = vmatpush1.msra.mxu0 %v5487
        %5489 = vmatprep.subr.mxu0 0.0
        %v5490 = vand.u32 %v4303, 4294901760
        %v5491 = vsub.f32 %v4303, %v5490
        %v5492 = vand.u32 %v5491, 4294901760
        %v5493 = vsub.f32 %v5491, %v5492
        %v5494 = vand.u32 %v5493, 4294901760
        %5495 = vmatpush1.msra.mxu0 %v5494
        %5496 = vmatprep.subr.mxu0 0.0
        %v5497 = vand.u32 %v4302, 4294901760
        %v5498 = vsub.f32 %v4302, %v5497
        %v5499 = vand.u32 %v5498, 4294901760
        %v5500 = vsub.f32 %v5498, %v5499
        %v5501 = vand.u32 %v5500, 4294901760
        %5502 = vmatpush1.msra.mxu0 %v5501
        %5503 = vmatprep.subr.mxu0 0.0
        %v5504 = vand.u32 %v4301, 4294901760
        %v5505 = vsub.f32 %v4301, %v5504
        %v5506 = vand.u32 %v5505, 4294901760
        %v5507 = vsub.f32 %v5505, %v5506
        %v5508 = vand.u32 %v5507, 4294901760
        %5509 = vmatpush1.msra.mxu0 %v5508
        %5510 = vmatprep.subr.mxu0 0.0
        %v5511 = vand.u32 %v4300, 4294901760
        %v5512 = vsub.f32 %v4300, %v5511
        %v5513 = vand.u32 %v5512, 4294901760
        %v5514 = vsub.f32 %v5512, %v5513
        %v5515 = vand.u32 %v5514, 4294901760
        %5516 = vmatpush1.msra.mxu0 %v5515
        %5517 = vmatprep.subr.mxu0 0.0
        %v5518 = vand.u32 %v4299, 4294901760
        %v5519 = vsub.f32 %v4299, %v5518
        %v5520 = vand.u32 %v5519, 4294901760
        %v5521 = vsub.f32 %v5519, %v5520
        %v5522 = vand.u32 %v5521, 4294901760
        %5523 = vmatpush1.msra.mxu0 %v5522
        %5524 = vmatprep.subr.mxu0 0.0
        %v5525 = vand.u32 %v4298, 4294901760
        %v5526 = vsub.f32 %v4298, %v5525
        %v5527 = vand.u32 %v5526, 4294901760
        %v5528 = vsub.f32 %v5526, %v5527
        %v5529 = vand.u32 %v5528, 4294901760
        %5530 = vmatpush1.msra.mxu0 %v5529
        %5531 = vmatprep.subr.mxu0 0.0
        %v5532 = vand.u32 %v4297, 4294901760
        %v5533 = vsub.f32 %v4297, %v5532
        %v5534 = vand.u32 %v5533, 4294901760
        %v5535 = vsub.f32 %v5533, %v5534
        %v5536 = vand.u32 %v5535, 4294901760
        %5537 = vmatpush1.msra.mxu0 %v5536
        %5538 = vmatprep.subr.mxu0 0.0
        %5539 = vmatpush2.msra.mxu0 0.0
        %5540 = vmatprep.subr.mxu0 0.0
        %5541 = vmatpush2.msra.mxu0 0.0
        %5542 = vmatprep.subr.mxu0 0.0
        %5543 = vmatpush2.msra.mxu0 0.0
        %5544 = vmatprep.subr.mxu0 0.0
        %5545 = vmatpush2.msra.mxu0 0.0
        %5546 = vmatprep.subr.mxu0 0.0
        %5547 = vmatpush2.msra.mxu0 0.0
        %5548 = vmatprep.subr.mxu0 0.0
        %5549 = vmatpush2.msra.mxu0 0.0
        %5550 = vmatprep.subr.mxu0 0.0
        %5551 = vmatpush2.msra.mxu0 0.0
        %5552 = vmatprep.subr.mxu0 0.0
        %5553 = vmatpush2.msra.mxu0 0.0
        %5554 = vmatprep.subr.mxu0 0.0
        %5555 = vmatpush2.msra.mxu0 0.0
        %5556 = vmatprep.subr.mxu0 0.0
        %5557 = vmatpush2.msra.mxu0 0.0
        %5558 = vmatprep.subr.mxu0 0.0
        %5559 = vmatpush2.msra.mxu0 0.0
        %5560 = vmatprep.subr.mxu0 0.0
        %5561 = vmatpush2.msra.mxu0 0.0
        %5562 = vmatprep.subr.mxu0 0.0
        %5563 = vmatpush2.msra.mxu0 0.0
        %5564 = vmatprep.subr.mxu0 0.0
        %5565 = vmatpush2.msra.mxu0 0.0
        %5566 = vmatprep.subr.mxu0 0.0
        %5567 = vmatpush2.msra.mxu0 0.0
        %5568 = vmatprep.subr.mxu0 0.0
        %5569 = vmatpush2.msra.mxu0 0.0
        %5570 = vmatprep.mubr.f32.mxu0 0.0
        %v5571 = vand.u32 %v5257, 4294901760
        %5572 = vmatmul.mubr.f32.gmra.mxu0 %v5571
        %v5573 = vpop.f32.mrf.mxu0
        %v5574 = vadd.f32 %v5353, %v5573
        %v5575 = vpop.f32.mrf.mxu0
        %5576 = vmatprep.mubr.f32.mxu0 0.0
        %v5577 = vand.u32 %v5258, 4294901760
        %5578 = vmatmul.mubr.f32.gmra.mxu0 %v5577
        %v5579 = vpop.f32.mrf.mxu0
        %v5580 = vadd.f32 %v5363, %v5579
        %v5581 = vpop.f32.mrf.mxu0
        %5582 = vmatprep.mubr.f32.mxu0 0.0
        %v5583 = vand.u32 %v5259, 4294901760
        %5584 = vmatmul.mubr.f32.gmra.mxu0 %v5583
        %v5585 = vpop.f32.mrf.mxu0
        %v5586 = vadd.f32 %v5373, %v5585
        %v5587 = vpop.f32.mrf.mxu0
        %5588 = vmatprep.mubr.f32.mxu0 0.0
        %v5589 = vand.u32 %v5260, 4294901760
        %5590 = vmatmul.mubr.f32.gmra.mxu0 %v5589
        %v5591 = vpop.f32.mrf.mxu0
        %v5592 = vadd.f32 %v5383, %v5591
        %v5593 = vpop.f32.mrf.mxu0
        %5594 = vmatprep.mubr.f32.mxu0 0.0
        %v5595 = vand.u32 %v5261, 4294901760
        %5596 = vmatmul.mubr.f32.gmra.mxu0 %v5595
        %v5597 = vpop.f32.mrf.mxu0
        %v5598 = vadd.f32 %v5393, %v5597
        %v5599 = vpop.f32.mrf.mxu0
        %5600 = vmatprep.mubr.f32.mxu0 0.0
        %v5601 = vand.u32 %v5262, 4294901760
        %5602 = vmatmul.mubr.f32.gmra.mxu0 %v5601
        %v5603 = vpop.f32.mrf.mxu0
        %v5604 = vadd.f32 %v5403, %v5603
        %v5605 = vpop.f32.mrf.mxu0
        %5606 = vmatprep.mubr.f32.mxu0 0.0
        %v5607 = vand.u32 %v5263, 4294901760
        %5608 = vmatmul.mubr.f32.gmra.mxu0 %v5607
        %v5609 = vpop.f32.mrf.mxu0
        %v5610 = vadd.f32 %v5413, %v5609
        %v5611 = vpop.f32.mrf.mxu0
        %5612 = vmatprep.mubr.f32.mxu0 0.0
        %v5613 = vand.u32 %v5264, 4294901760
        %5614 = vmatmul.mubr.f32.gmra.mxu0 %v5613
        %v5615 = vpop.f32.mrf.mxu0
        %v5616 = vadd.f32 %v5423, %v5615
        %v5617 = vpop.f32.mrf.mxu0
        %5618 = vdwg.mxu0
        %5619 = vmatprep.subr.mxu0 0.0
        %v5620 = vand.u32 %v4312, 4294901760
        %v5621 = vsub.f32 %v4312, %v5620
        %5622 = vmatpush1.msra.mxu0 %v5621
        %5623 = vmatprep.subr.mxu0 0.0
        %v5624 = vand.u32 %v4311, 4294901760
        %v5625 = vsub.f32 %v4311, %v5624
        %5626 = vmatpush1.msra.mxu0 %v5625
        %5627 = vmatprep.subr.mxu0 0.0
        %v5628 = vand.u32 %v4310, 4294901760
        %v5629 = vsub.f32 %v4310, %v5628
        %5630 = vmatpush1.msra.mxu0 %v5629
        %5631 = vmatprep.subr.mxu0 0.0
        %v5632 = vand.u32 %v4309, 4294901760
        %v5633 = vsub.f32 %v4309, %v5632
        %5634 = vmatpush1.msra.mxu0 %v5633
        %5635 = vmatprep.subr.mxu0 0.0
        %v5636 = vand.u32 %v4308, 4294901760
        %v5637 = vsub.f32 %v4308, %v5636
        %5638 = vmatpush1.msra.mxu0 %v5637
        %5639 = vmatprep.subr.mxu0 0.0
        %v5640 = vand.u32 %v4307, 4294901760
        %v5641 = vsub.f32 %v4307, %v5640
        %5642 = vmatpush1.msra.mxu0 %v5641
        %5643 = vmatprep.subr.mxu0 0.0
        %v5644 = vand.u32 %v4306, 4294901760
        %v5645 = vsub.f32 %v4306, %v5644
        %5646 = vmatpush1.msra.mxu0 %v5645
        %5647 = vmatprep.subr.mxu0 0.0
        %v5648 = vand.u32 %v4305, 4294901760
        %v5649 = vsub.f32 %v4305, %v5648
        %5650 = vmatpush1.msra.mxu0 %v5649
        %5651 = vmatprep.subr.mxu0 0.0
        %v5652 = vand.u32 %v4304, 4294901760
        %v5653 = vsub.f32 %v4304, %v5652
        %5654 = vmatpush1.msra.mxu0 %v5653
        %5655 = vmatprep.subr.mxu0 0.0
        %v5656 = vand.u32 %v4303, 4294901760
        %v5657 = vsub.f32 %v4303, %v5656
        %5658 = vmatpush1.msra.mxu0 %v5657
        %5659 = vmatprep.subr.mxu0 0.0
        %v5660 = vand.u32 %v4302, 4294901760
        %v5661 = vsub.f32 %v4302, %v5660
        %5662 = vmatpush1.msra.mxu0 %v5661
        %5663 = vmatprep.subr.mxu0 0.0
        %v5664 = vand.u32 %v4301, 4294901760
        %v5665 = vsub.f32 %v4301, %v5664
        %5666 = vmatpush1.msra.mxu0 %v5665
        %5667 = vmatprep.subr.mxu0 0.0
        %v5668 = vand.u32 %v4300, 4294901760
        %v5669 = vsub.f32 %v4300, %v5668
        %5670 = vmatpush1.msra.mxu0 %v5669
        %5671 = vmatprep.subr.mxu0 0.0
        %v5672 = vand.u32 %v4299, 4294901760
        %v5673 = vsub.f32 %v4299, %v5672
        %5674 = vmatpush1.msra.mxu0 %v5673
        %5675 = vmatprep.subr.mxu0 0.0
        %v5676 = vand.u32 %v4298, 4294901760
        %v5677 = vsub.f32 %v4298, %v5676
        %5678 = vmatpush1.msra.mxu0 %v5677
        %5679 = vmatprep.subr.mxu0 0.0
        %v5680 = vand.u32 %v4297, 4294901760
        %v5681 = vsub.f32 %v4297, %v5680
        %5682 = vmatpush1.msra.mxu0 %v5681
        %5683 = vmatprep.subr.mxu0 0.0
        %5684 = vmatpush2.msra.mxu0 0.0
        %5685 = vmatprep.subr.mxu0 0.0
        %5686 = vmatpush2.msra.mxu0 0.0
        %5687 = vmatprep.subr.mxu0 0.0
        %5688 = vmatpush2.msra.mxu0 0.0
        %5689 = vmatprep.subr.mxu0 0.0
        %5690 = vmatpush2.msra.mxu0 0.0
        %5691 = vmatprep.subr.mxu0 0.0
        %5692 = vmatpush2.msra.mxu0 0.0
        %5693 = vmatprep.subr.mxu0 0.0
        %5694 = vmatpush2.msra.mxu0 0.0
        %5695 = vmatprep.subr.mxu0 0.0
        %5696 = vmatpush2.msra.mxu0 0.0
        %5697 = vmatprep.subr.mxu0 0.0
        %5698 = vmatpush2.msra.mxu0 0.0
        %5699 = vmatprep.subr.mxu0 0.0
        %5700 = vmatpush2.msra.mxu0 0.0
        %5701 = vmatprep.subr.mxu0 0.0
        %5702 = vmatpush2.msra.mxu0 0.0
        %5703 = vmatprep.subr.mxu0 0.0
        %5704 = vmatpush2.msra.mxu0 0.0
        %5705 = vmatprep.subr.mxu0 0.0
        %5706 = vmatpush2.msra.mxu0 0.0
        %5707 = vmatprep.subr.mxu0 0.0
        %5708 = vmatpush2.msra.mxu0 0.0
        %5709 = vmatprep.subr.mxu0 0.0
        %5710 = vmatpush2.msra.mxu0 0.0
        %5711 = vmatprep.subr.mxu0 0.0
        %5712 = vmatpush2.msra.mxu0 0.0
        %5713 = vmatprep.subr.mxu0 0.0
        %5714 = vmatpush2.msra.mxu0 0.0
        %5715 = vmatprep.mubr.f32.mxu0 0.0
        %v5716 = vand.u32 %v5257, 4294901760
        %v5717 = vsub.f32 %v5257, %v5716
        %5718 = vmatmul.mubr.f32.gmra.mxu0 %v5717
        %v5719 = vpop.f32.mrf.mxu0
        %v5720 = vadd.f32 %v5574, %v5719
        %v5721 = vpop.f32.mrf.mxu0
        %5722 = vmatprep.mubr.f32.mxu0 0.0
        %v5723 = vand.u32 %v5258, 4294901760
        %v5724 = vsub.f32 %v5258, %v5723
        %5725 = vmatmul.mubr.f32.gmra.mxu0 %v5724
        %v5726 = vpop.f32.mrf.mxu0
        %v5727 = vadd.f32 %v5580, %v5726
        %v5728 = vpop.f32.mrf.mxu0
        %5729 = vmatprep.mubr.f32.mxu0 0.0
        %v5730 = vand.u32 %v5259, 4294901760
        %v5731 = vsub.f32 %v5259, %v5730
        %5732 = vmatmul.mubr.f32.gmra.mxu0 %v5731
        %v5733 = vpop.f32.mrf.mxu0
        %v5734 = vadd.f32 %v5586, %v5733
        %v5735 = vpop.f32.mrf.mxu0
        %5736 = vmatprep.mubr.f32.mxu0 0.0
        %v5737 = vand.u32 %v5260, 4294901760
        %v5738 = vsub.f32 %v5260, %v5737
        %5739 = vmatmul.mubr.f32.gmra.mxu0 %v5738
        %v5740 = vpop.f32.mrf.mxu0
        %v5741 = vadd.f32 %v5592, %v5740
        %v5742 = vpop.f32.mrf.mxu0
        %5743 = vmatprep.mubr.f32.mxu0 0.0
        %v5744 = vand.u32 %v5261, 4294901760
        %v5745 = vsub.f32 %v5261, %v5744
        %5746 = vmatmul.mubr.f32.gmra.mxu0 %v5745
        %v5747 = vpop.f32.mrf.mxu0
        %v5748 = vadd.f32 %v5598, %v5747
        %v5749 = vpop.f32.mrf.mxu0
        %5750 = vmatprep.mubr.f32.mxu0 0.0
        %v5751 = vand.u32 %v5262, 4294901760
        %v5752 = vsub.f32 %v5262, %v5751
        %5753 = vmatmul.mubr.f32.gmra.mxu0 %v5752
        %v5754 = vpop.f32.mrf.mxu0
        %v5755 = vadd.f32 %v5604, %v5754
        %v5756 = vpop.f32.mrf.mxu0
        %5757 = vmatprep.mubr.f32.mxu0 0.0
        %v5758 = vand.u32 %v5263, 4294901760
        %v5759 = vsub.f32 %v5263, %v5758
        %5760 = vmatmul.mubr.f32.gmra.mxu0 %v5759
        %v5761 = vpop.f32.mrf.mxu0
        %v5762 = vadd.f32 %v5610, %v5761
        %v5763 = vpop.f32.mrf.mxu0
        %5764 = vmatprep.mubr.f32.mxu0 0.0
        %v5765 = vand.u32 %v5264, 4294901760
        %v5766 = vsub.f32 %v5264, %v5765
        %5767 = vmatmul.mubr.f32.gmra.mxu0 %v5766
        %v5768 = vpop.f32.mrf.mxu0
        %v5769 = vadd.f32 %v5616, %v5768
        %v5770 = vpop.f32.mrf.mxu0
        %5771 = vdwg.mxu0
        %5772 = vmatprep.subr.mxu0 0.0
        %v5773 = vand.u32 %v4312, 4294901760
        %5774 = vmatpush1.msra.mxu0 %v5773
        %5775 = vmatprep.subr.mxu0 0.0
        %v5776 = vand.u32 %v4311, 4294901760
        %5777 = vmatpush1.msra.mxu0 %v5776
        %5778 = vmatprep.subr.mxu0 0.0
        %v5779 = vand.u32 %v4310, 4294901760
        %5780 = vmatpush1.msra.mxu0 %v5779
        %5781 = vmatprep.subr.mxu0 0.0
        %v5782 = vand.u32 %v4309, 4294901760
        %5783 = vmatpush1.msra.mxu0 %v5782
        %5784 = vmatprep.subr.mxu0 0.0
        %v5785 = vand.u32 %v4308, 4294901760
        %5786 = vmatpush1.msra.mxu0 %v5785
        %5787 = vmatprep.subr.mxu0 0.0
        %v5788 = vand.u32 %v4307, 4294901760
        %5789 = vmatpush1.msra.mxu0 %v5788
        %5790 = vmatprep.subr.mxu0 0.0
        %v5791 = vand.u32 %v4306, 4294901760
        %5792 = vmatpush1.msra.mxu0 %v5791
        %5793 = vmatprep.subr.mxu0 0.0
        %v5794 = vand.u32 %v4305, 4294901760
        %5795 = vmatpush1.msra.mxu0 %v5794
        %5796 = vmatprep.subr.mxu0 0.0
        %v5797 = vand.u32 %v4304, 4294901760
        %5798 = vmatpush1.msra.mxu0 %v5797
        %5799 = vmatprep.subr.mxu0 0.0
        %v5800 = vand.u32 %v4303, 4294901760
        %5801 = vmatpush1.msra.mxu0 %v5800
        %5802 = vmatprep.subr.mxu0 0.0
        %v5803 = vand.u32 %v4302, 4294901760
        %5804 = vmatpush1.msra.mxu0 %v5803
        %5805 = vmatprep.subr.mxu0 0.0
        %v5806 = vand.u32 %v4301, 4294901760
        %5807 = vmatpush1.msra.mxu0 %v5806
        %5808 = vmatprep.subr.mxu0 0.0
        %v5809 = vand.u32 %v4300, 4294901760
        %5810 = vmatpush1.msra.mxu0 %v5809
        %5811 = vmatprep.subr.mxu0 0.0
        %v5812 = vand.u32 %v4299, 4294901760
        %5813 = vmatpush1.msra.mxu0 %v5812
        %5814 = vmatprep.subr.mxu0 0.0
        %v5815 = vand.u32 %v4298, 4294901760
        %5816 = vmatpush1.msra.mxu0 %v5815
        %5817 = vmatprep.subr.mxu0 0.0
        %v5818 = vand.u32 %v4297, 4294901760
        %5819 = vmatpush1.msra.mxu0 %v5818
        %5820 = vmatprep.subr.mxu0 0.0
        %5821 = vmatpush2.msra.mxu0 0.0
        %5822 = vmatprep.subr.mxu0 0.0
        %5823 = vmatpush2.msra.mxu0 0.0
        %5824 = vmatprep.subr.mxu0 0.0
        %5825 = vmatpush2.msra.mxu0 0.0
        %5826 = vmatprep.subr.mxu0 0.0
        %5827 = vmatpush2.msra.mxu0 0.0
        %5828 = vmatprep.subr.mxu0 0.0
        %5829 = vmatpush2.msra.mxu0 0.0
        %5830 = vmatprep.subr.mxu0 0.0
        %5831 = vmatpush2.msra.mxu0 0.0
        %5832 = vmatprep.subr.mxu0 0.0
        %5833 = vmatpush2.msra.mxu0 0.0
        %5834 = vmatprep.subr.mxu0 0.0
        %5835 = vmatpush2.msra.mxu0 0.0
        %5836 = vmatprep.subr.mxu0 0.0
        %5837 = vmatpush2.msra.mxu0 0.0
        %5838 = vmatprep.subr.mxu0 0.0
        %5839 = vmatpush2.msra.mxu0 0.0
        %5840 = vmatprep.subr.mxu0 0.0
        %5841 = vmatpush2.msra.mxu0 0.0
        %5842 = vmatprep.subr.mxu0 0.0
        %5843 = vmatpush2.msra.mxu0 0.0
        %5844 = vmatprep.subr.mxu0 0.0
        %5845 = vmatpush2.msra.mxu0 0.0
        %5846 = vmatprep.subr.mxu0 0.0
        %5847 = vmatpush2.msra.mxu0 0.0
        %5848 = vmatprep.subr.mxu0 0.0
        %5849 = vmatpush2.msra.mxu0 0.0
        %5850 = vmatprep.subr.mxu0 0.0
        %5851 = vmatpush2.msra.mxu0 0.0
        %5852 = vmatprep.mubr.f32.mxu0 0.0
        %v5853 = vand.u32 %v5257, 4294901760
        %v5854 = vsub.f32 %v5257, %v5853
        %v5855 = vand.u32 %v5854, 4294901760
        %5856 = vmatmul.mubr.f32.gmra.mxu0 %v5855
        %v5857 = vpop.f32.mrf.mxu0
        %v5858 = vadd.f32 %v5720, %v5857
        %v5859 = vpop.f32.mrf.mxu0
        %5860 = vmatprep.mubr.f32.mxu0 0.0
        %v5861 = vand.u32 %v5258, 4294901760
        %v5862 = vsub.f32 %v5258, %v5861
        %v5863 = vand.u32 %v5862, 4294901760
        %5864 = vmatmul.mubr.f32.gmra.mxu0 %v5863
        %v5865 = vpop.f32.mrf.mxu0
        %v5866 = vadd.f32 %v5727, %v5865
        %v5867 = vpop.f32.mrf.mxu0
        %5868 = vmatprep.mubr.f32.mxu0 0.0
        %v5869 = vand.u32 %v5259, 4294901760
        %v5870 = vsub.f32 %v5259, %v5869
        %v5871 = vand.u32 %v5870, 4294901760
        %5872 = vmatmul.mubr.f32.gmra.mxu0 %v5871
        %v5873 = vpop.f32.mrf.mxu0
        %v5874 = vadd.f32 %v5734, %v5873
        %v5875 = vpop.f32.mrf.mxu0
        %5876 = vmatprep.mubr.f32.mxu0 0.0
        %v5877 = vand.u32 %v5260, 4294901760
        %v5878 = vsub.f32 %v5260, %v5877
        %v5879 = vand.u32 %v5878, 4294901760
        %5880 = vmatmul.mubr.f32.gmra.mxu0 %v5879
        %v5881 = vpop.f32.mrf.mxu0
        %v5882 = vadd.f32 %v5741, %v5881
        %v5883 = vpop.f32.mrf.mxu0
        %5884 = vmatprep.mubr.f32.mxu0 0.0
        %v5885 = vand.u32 %v5261, 4294901760
        %v5886 = vsub.f32 %v5261, %v5885
        %v5887 = vand.u32 %v5886, 4294901760
        %5888 = vmatmul.mubr.f32.gmra.mxu0 %v5887
        %v5889 = vpop.f32.mrf.mxu0
        %v5890 = vadd.f32 %v5748, %v5889
        %v5891 = vpop.f32.mrf.mxu0
        %5892 = vmatprep.mubr.f32.mxu0 0.0
        %v5893 = vand.u32 %v5262, 4294901760
        %v5894 = vsub.f32 %v5262, %v5893
        %v5895 = vand.u32 %v5894, 4294901760
        %5896 = vmatmul.mubr.f32.gmra.mxu0 %v5895
        %v5897 = vpop.f32.mrf.mxu0
        %v5898 = vadd.f32 %v5755, %v5897
        %v5899 = vpop.f32.mrf.mxu0
        %5900 = vmatprep.mubr.f32.mxu0 0.0
        %v5901 = vand.u32 %v5263, 4294901760
        %v5902 = vsub.f32 %v5263, %v5901
        %v5903 = vand.u32 %v5902, 4294901760
        %5904 = vmatmul.mubr.f32.gmra.mxu0 %v5903
        %v5905 = vpop.f32.mrf.mxu0
        %v5906 = vadd.f32 %v5762, %v5905
        %v5907 = vpop.f32.mrf.mxu0
        %5908 = vmatprep.mubr.f32.mxu0 0.0
        %v5909 = vand.u32 %v5264, 4294901760
        %v5910 = vsub.f32 %v5264, %v5909
        %v5911 = vand.u32 %v5910, 4294901760
        %5912 = vmatmul.mubr.f32.gmra.mxu0 %v5911
        %v5913 = vpop.f32.mrf.mxu0
        %v5914 = vadd.f32 %v5769, %v5913
        %v5915 = vpop.f32.mrf.mxu0
        %5916 = vdwg.mxu0
        %5917 = vmatprep.subr.mxu0 0.0
        %v5918 = vand.u32 %v4312, 4294901760
        %v5919 = vsub.f32 %v4312, %v5918
        %v5920 = vand.u32 %v5919, 4294901760
        %5921 = vmatpush1.msra.mxu0 %v5920
        %5922 = vmatprep.subr.mxu0 0.0
        %v5923 = vand.u32 %v4311, 4294901760
        %v5924 = vsub.f32 %v4311, %v5923
        %v5925 = vand.u32 %v5924, 4294901760
        %5926 = vmatpush1.msra.mxu0 %v5925
        %5927 = vmatprep.subr.mxu0 0.0
        %v5928 = vand.u32 %v4310, 4294901760
        %v5929 = vsub.f32 %v4310, %v5928
        %v5930 = vand.u32 %v5929, 4294901760
        %5931 = vmatpush1.msra.mxu0 %v5930
        %5932 = vmatprep.subr.mxu0 0.0
        %v5933 = vand.u32 %v4309, 4294901760
        %v5934 = vsub.f32 %v4309, %v5933
        %v5935 = vand.u32 %v5934, 4294901760
        %5936 = vmatpush1.msra.mxu0 %v5935
        %5937 = vmatprep.subr.mxu0 0.0
        %v5938 = vand.u32 %v4308, 4294901760
        %v5939 = vsub.f32 %v4308, %v5938
        %v5940 = vand.u32 %v5939, 4294901760
        %5941 = vmatpush1.msra.mxu0 %v5940
        %5942 = vmatprep.subr.mxu0 0.0
        %v5943 = vand.u32 %v4307, 4294901760
        %v5944 = vsub.f32 %v4307, %v5943
        %v5945 = vand.u32 %v5944, 4294901760
        %5946 = vmatpush1.msra.mxu0 %v5945
        %5947 = vmatprep.subr.mxu0 0.0
        %v5948 = vand.u32 %v4306, 4294901760
        %v5949 = vsub.f32 %v4306, %v5948
        %v5950 = vand.u32 %v5949, 4294901760
        %5951 = vmatpush1.msra.mxu0 %v5950
        %5952 = vmatprep.subr.mxu0 0.0
        %v5953 = vand.u32 %v4305, 4294901760
        %v5954 = vsub.f32 %v4305, %v5953
        %v5955 = vand.u32 %v5954, 4294901760
        %5956 = vmatpush1.msra.mxu0 %v5955
        %5957 = vmatprep.subr.mxu0 0.0
        %v5958 = vand.u32 %v4304, 4294901760
        %v5959 = vsub.f32 %v4304, %v5958
        %v5960 = vand.u32 %v5959, 4294901760
        %5961 = vmatpush1.msra.mxu0 %v5960
        %5962 = vmatprep.subr.mxu0 0.0
        %v5963 = vand.u32 %v4303, 4294901760
        %v5964 = vsub.f32 %v4303, %v5963
        %v5965 = vand.u32 %v5964, 4294901760
        %5966 = vmatpush1.msra.mxu0 %v5965
        %5967 = vmatprep.subr.mxu0 0.0
        %v5968 = vand.u32 %v4302, 4294901760
        %v5969 = vsub.f32 %v4302, %v5968
        %v5970 = vand.u32 %v5969, 4294901760
        %5971 = vmatpush1.msra.mxu0 %v5970
        %5972 = vmatprep.subr.mxu0 0.0
        %v5973 = vand.u32 %v4301, 4294901760
        %v5974 = vsub.f32 %v4301, %v5973
        %v5975 = vand.u32 %v5974, 4294901760
        %5976 = vmatpush1.msra.mxu0 %v5975
        %5977 = vmatprep.subr.mxu0 0.0
        %v5978 = vand.u32 %v4300, 4294901760
        %v5979 = vsub.f32 %v4300, %v5978
        %v5980 = vand.u32 %v5979, 4294901760
        %5981 = vmatpush1.msra.mxu0 %v5980
        %5982 = vmatprep.subr.mxu0 0.0
        %v5983 = vand.u32 %v4299, 4294901760
        %v5984 = vsub.f32 %v4299, %v5983
        %v5985 = vand.u32 %v5984, 4294901760
        %5986 = vmatpush1.msra.mxu0 %v5985
        %5987 = vmatprep.subr.mxu0 0.0
        %v5988 = vand.u32 %v4298, 4294901760
        %v5989 = vsub.f32 %v4298, %v5988
        %v5990 = vand.u32 %v5989, 4294901760
        %5991 = vmatpush1.msra.mxu0 %v5990
        %5992 = vmatprep.subr.mxu0 0.0
        %v5993 = vand.u32 %v4297, 4294901760
        %v5994 = vsub.f32 %v4297, %v5993
        %v5995 = vand.u32 %v5994, 4294901760
        %5996 = vmatpush1.msra.mxu0 %v5995
        %5997 = vmatprep.subr.mxu0 0.0
        %5998 = vmatpush2.msra.mxu0 0.0
        %5999 = vmatprep.subr.mxu0 0.0
        %6000 = vmatpush2.msra.mxu0 0.0
        %6001 = vmatprep.subr.mxu0 0.0
        %6002 = vmatpush2.msra.mxu0 0.0
        %6003 = vmatprep.subr.mxu0 0.0
        %6004 = vmatpush2.msra.mxu0 0.0
        %6005 = vmatprep.subr.mxu0 0.0
        %6006 = vmatpush2.msra.mxu0 0.0
        %6007 = vmatprep.subr.mxu0 0.0
        %6008 = vmatpush2.msra.mxu0 0.0
        %6009 = vmatprep.subr.mxu0 0.0
        %6010 = vmatpush2.msra.mxu0 0.0
        %6011 = vmatprep.subr.mxu0 0.0
        %6012 = vmatpush2.msra.mxu0 0.0
        %6013 = vmatprep.subr.mxu0 0.0
        %6014 = vmatpush2.msra.mxu0 0.0
        %6015 = vmatprep.subr.mxu0 0.0
        %6016 = vmatpush2.msra.mxu0 0.0
        %6017 = vmatprep.subr.mxu0 0.0
        %6018 = vmatpush2.msra.mxu0 0.0
        %6019 = vmatprep.subr.mxu0 0.0
        %6020 = vmatpush2.msra.mxu0 0.0
        %6021 = vmatprep.subr.mxu0 0.0
        %6022 = vmatpush2.msra.mxu0 0.0
        %6023 = vmatprep.subr.mxu0 0.0
        %6024 = vmatpush2.msra.mxu0 0.0
        %6025 = vmatprep.subr.mxu0 0.0
        %6026 = vmatpush2.msra.mxu0 0.0
        %6027 = vmatprep.subr.mxu0 0.0
        %6028 = vmatpush2.msra.mxu0 0.0
        %6029 = vmatprep.mubr.f32.mxu0 0.0
        %v6030 = vand.u32 %v5257, 4294901760
        %6031 = vmatmul.mubr.f32.gmra.mxu0 %v6030
        %v6032 = vpop.f32.mrf.mxu0
        %v6033 = vadd.f32 %v5858, %v6032
        %v6034 = vpop.f32.mrf.mxu0
        %6035 = vmatprep.mubr.f32.mxu0 0.0
        %v6036 = vand.u32 %v5258, 4294901760
        %6037 = vmatmul.mubr.f32.gmra.mxu0 %v6036
        %v6038 = vpop.f32.mrf.mxu0
        %v6039 = vadd.f32 %v5866, %v6038
        %v6040 = vpop.f32.mrf.mxu0
        %6041 = vmatprep.mubr.f32.mxu0 0.0
        %v6042 = vand.u32 %v5259, 4294901760
        %6043 = vmatmul.mubr.f32.gmra.mxu0 %v6042
        %v6044 = vpop.f32.mrf.mxu0
        %v6045 = vadd.f32 %v5874, %v6044
        %v6046 = vpop.f32.mrf.mxu0
        %6047 = vmatprep.mubr.f32.mxu0 0.0
        %v6048 = vand.u32 %v5260, 4294901760
        %6049 = vmatmul.mubr.f32.gmra.mxu0 %v6048
        %v6050 = vpop.f32.mrf.mxu0
        %v6051 = vadd.f32 %v5882, %v6050
        %v6052 = vpop.f32.mrf.mxu0
        %6053 = vmatprep.mubr.f32.mxu0 0.0
        %v6054 = vand.u32 %v5261, 4294901760
        %6055 = vmatmul.mubr.f32.gmra.mxu0 %v6054
        %v6056 = vpop.f32.mrf.mxu0
        %v6057 = vadd.f32 %v5890, %v6056
        %v6058 = vpop.f32.mrf.mxu0
        %6059 = vmatprep.mubr.f32.mxu0 0.0
        %v6060 = vand.u32 %v5262, 4294901760
        %6061 = vmatmul.mubr.f32.gmra.mxu0 %v6060
        %v6062 = vpop.f32.mrf.mxu0
        %v6063 = vadd.f32 %v5898, %v6062
        %v6064 = vpop.f32.mrf.mxu0
        %6065 = vmatprep.mubr.f32.mxu0 0.0
        %v6066 = vand.u32 %v5263, 4294901760
        %6067 = vmatmul.mubr.f32.gmra.mxu0 %v6066
        %v6068 = vpop.f32.mrf.mxu0
        %v6069 = vadd.f32 %v5906, %v6068
        %v6070 = vpop.f32.mrf.mxu0
        %6071 = vmatprep.mubr.f32.mxu0 0.0
        %v6072 = vand.u32 %v5264, 4294901760
        %6073 = vmatmul.mubr.f32.gmra.mxu0 %v6072
        %v6074 = vpop.f32.mrf.mxu0
        %v6075 = vadd.f32 %v5914, %v6074
        %v6076 = vpop.f32.mrf.mxu0
        %6077 = vdwg.mxu0
        %6078 = vmatprep.subr.mxu0 0.0
        %v6079 = vand.u32 %v4312, 4294901760
        %6080 = vmatpush1.msra.mxu0 %v6079
        %6081 = vmatprep.subr.mxu0 0.0
        %v6082 = vand.u32 %v4311, 4294901760
        %6083 = vmatpush1.msra.mxu0 %v6082
        %6084 = vmatprep.subr.mxu0 0.0
        %v6085 = vand.u32 %v4310, 4294901760
        %6086 = vmatpush1.msra.mxu0 %v6085
        %6087 = vmatprep.subr.mxu0 0.0
        %v6088 = vand.u32 %v4309, 4294901760
        %6089 = vmatpush1.msra.mxu0 %v6088
        %6090 = vmatprep.subr.mxu0 0.0
        %v6091 = vand.u32 %v4308, 4294901760
        %6092 = vmatpush1.msra.mxu0 %v6091
        %6093 = vmatprep.subr.mxu0 0.0
        %v6094 = vand.u32 %v4307, 4294901760
        %6095 = vmatpush1.msra.mxu0 %v6094
        %6096 = vmatprep.subr.mxu0 0.0
        %v6097 = vand.u32 %v4306, 4294901760
        %6098 = vmatpush1.msra.mxu0 %v6097
        %6099 = vmatprep.subr.mxu0 0.0
        %v6100 = vand.u32 %v4305, 4294901760
        %6101 = vmatpush1.msra.mxu0 %v6100
        %6102 = vmatprep.subr.mxu0 0.0
        %v6103 = vand.u32 %v4304, 4294901760
        %6104 = vmatpush1.msra.mxu0 %v6103
        %6105 = vmatprep.subr.mxu0 0.0
        %v6106 = vand.u32 %v4303, 4294901760
        %6107 = vmatpush1.msra.mxu0 %v6106
        %6108 = vmatprep.subr.mxu0 0.0
        %v6109 = vand.u32 %v4302, 4294901760
        %6110 = vmatpush1.msra.mxu0 %v6109
        %6111 = vmatprep.subr.mxu0 0.0
        %v6112 = vand.u32 %v4301, 4294901760
        %6113 = vmatpush1.msra.mxu0 %v6112
        %6114 = vmatprep.subr.mxu0 0.0
        %v6115 = vand.u32 %v4300, 4294901760
        %6116 = vmatpush1.msra.mxu0 %v6115
        %6117 = vmatprep.subr.mxu0 0.0
        %v6118 = vand.u32 %v4299, 4294901760
        %6119 = vmatpush1.msra.mxu0 %v6118
        %6120 = vmatprep.subr.mxu0 0.0
        %v6121 = vand.u32 %v4298, 4294901760
        %6122 = vmatpush1.msra.mxu0 %v6121
        %6123 = vmatprep.subr.mxu0 0.0
        %v6124 = vand.u32 %v4297, 4294901760
        %6125 = vmatpush1.msra.mxu0 %v6124
        %6126 = vmatprep.subr.mxu0 0.0
        %6127 = vmatpush2.msra.mxu0 0.0
        %6128 = vmatprep.subr.mxu0 0.0
        %6129 = vmatpush2.msra.mxu0 0.0
        %6130 = vmatprep.subr.mxu0 0.0
        %6131 = vmatpush2.msra.mxu0 0.0
        %6132 = vmatprep.subr.mxu0 0.0
        %6133 = vmatpush2.msra.mxu0 0.0
        %6134 = vmatprep.subr.mxu0 0.0
        %6135 = vmatpush2.msra.mxu0 0.0
        %6136 = vmatprep.subr.mxu0 0.0
        %6137 = vmatpush2.msra.mxu0 0.0
        %6138 = vmatprep.subr.mxu0 0.0
        %6139 = vmatpush2.msra.mxu0 0.0
        %6140 = vmatprep.subr.mxu0 0.0
        %6141 = vmatpush2.msra.mxu0 0.0
        %6142 = vmatprep.subr.mxu0 0.0
        %6143 = vmatpush2.msra.mxu0 0.0
        %6144 = vmatprep.subr.mxu0 0.0
        %6145 = vmatpush2.msra.mxu0 0.0
        %6146 = vmatprep.subr.mxu0 0.0
        %6147 = vmatpush2.msra.mxu0 0.0
        %6148 = vmatprep.subr.mxu0 0.0
        %6149 = vmatpush2.msra.mxu0 0.0
        %6150 = vmatprep.subr.mxu0 0.0
        %6151 = vmatpush2.msra.mxu0 0.0
        %6152 = vmatprep.subr.mxu0 0.0
        %6153 = vmatpush2.msra.mxu0 0.0
        %6154 = vmatprep.subr.mxu0 0.0
        %6155 = vmatpush2.msra.mxu0 0.0
        %6156 = vmatprep.subr.mxu0 0.0
        %6157 = vmatpush2.msra.mxu0 0.0
        %6158 = vmatprep.mubr.f32.mxu0 0.0
        %v6159 = vand.u32 %v5257, 4294901760
        %6160 = vmatmul.mubr.f32.gmra.mxu0 %v6159
        %v6161 = vpop.f32.mrf.mxu0
        %v6162 = vadd.f32 %v6033, %v6161
        %v6163 = vpop.f32.mrf.mxu0
        %6164 = vmatprep.mubr.f32.mxu0 0.0
        %v6165 = vand.u32 %v5258, 4294901760
        %6166 = vmatmul.mubr.f32.gmra.mxu0 %v6165
        %v6167 = vpop.f32.mrf.mxu0
        %v6168 = vadd.f32 %v6039, %v6167
        %v6169 = vpop.f32.mrf.mxu0
        %6170 = vmatprep.mubr.f32.mxu0 0.0
        %v6171 = vand.u32 %v5259, 4294901760
        %6172 = vmatmul.mubr.f32.gmra.mxu0 %v6171
        %v6173 = vpop.f32.mrf.mxu0
        %v6174 = vadd.f32 %v6045, %v6173
        %v6175 = vpop.f32.mrf.mxu0
        %6176 = vmatprep.mubr.f32.mxu0 0.0
        %v6177 = vand.u32 %v5260, 4294901760
        %6178 = vmatmul.mubr.f32.gmra.mxu0 %v6177
        %v6179 = vpop.f32.mrf.mxu0
        %v6180 = vadd.f32 %v6051, %v6179
        %v6181 = vpop.f32.mrf.mxu0
        %6182 = vmatprep.mubr.f32.mxu0 0.0
        %v6183 = vand.u32 %v5261, 4294901760
        %6184 = vmatmul.mubr.f32.gmra.mxu0 %v6183
        %v6185 = vpop.f32.mrf.mxu0
        %v6186 = vadd.f32 %v6057, %v6185
        %v6187 = vpop.f32.mrf.mxu0
        %6188 = vmatprep.mubr.f32.mxu0 0.0
        %v6189 = vand.u32 %v5262, 4294901760
        %6190 = vmatmul.mubr.f32.gmra.mxu0 %v6189
        %v6191 = vpop.f32.mrf.mxu0
        %v6192 = vadd.f32 %v6063, %v6191
        %v6193 = vpop.f32.mrf.mxu0
        %6194 = vmatprep.mubr.f32.mxu0 0.0
        %v6195 = vand.u32 %v5263, 4294901760
        %6196 = vmatmul.mubr.f32.gmra.mxu0 %v6195
        %v6197 = vpop.f32.mrf.mxu0
        %v6198 = vadd.f32 %v6069, %v6197
        %v6199 = vpop.f32.mrf.mxu0
        %6200 = vmatprep.mubr.f32.mxu0 0.0
        %v6201 = vand.u32 %v5264, 4294901760
        %6202 = vmatmul.mubr.f32.gmra.mxu0 %v6201
        %v6203 = vpop.f32.mrf.mxu0
        %v6204 = vadd.f32 %v6075, %v6203
        %v6205 = vpop.f32.mrf.mxu0
        %6206 = vdwg.mxu0
        %v6207 = vmul.f32 %v5212, %v5212
        %v6208 = vmul.f32 %v5218, %v5218
        %v6209 = vmul.f32 %v5224, %v5224
        %v6210 = vmul.f32 %v5230, %v5230
        %v6211 = vmul.f32 %v5236, %v5236
        %v6212 = vmul.f32 %v5242, %v5242
        %v6213 = vmul.f32 %v5248, %v5248
        %v6214 = vmul.f32 %v5254, %v5254
        %v6215 = vsub.f32 %v6162, %v6207
        %v6216 = vsub.f32 %v6168, %v6208
        %v6217 = vsub.f32 %v6174, %v6209
        %v6218 = vsub.f32 %v6180, %v6210
        %v6219 = vsub.f32 %v6186, %v6211
        %v6220 = vsub.f32 %v6192, %v6212
        %v6221 = vsub.f32 %v6198, %v6213
        %v6222 = vsub.f32 %v6204, %v6214
        %v6223 = vmax.f32 %v6215, 0.0
        %v6224 = vmax.f32 %v6216, 0.0
        %v6225 = vmax.f32 %v6217, 0.0
        %v6226 = vmax.f32 %v6218, 0.0
        %v6227 = vmax.f32 %v6219, 0.0
        %v6228 = vmax.f32 %v6220, 0.0
        %v6229 = vmax.f32 %v6221, 0.0
        %v6230 = vmax.f32 %v6222, 0.0
        %v6232 = vsel %vm2490, %v5212, 0
        %v6235 = vsel %vm2490, %v5218, 0
        %v6238 = vsel %vm2490, %v5224, 0
        %v6241 = vsel %vm2490, %v5230, 0
        %v6244 = vsel %vm2490, %v5236, 0
        %v6247 = vsel %vm2490, %v5242, 0
        %v6250 = vsel %vm2490, %v5248, 0
        %v6253 = vsel %vm2490, %v5254, 0
        %6255 = vmatprep.subr.mxu0 0.0
        %6256 = vmatpush1.msra.mxu0 0.0
        %6257 = vmatprep.subr.mxu0 0.0
        %6258 = vmatpush1.msra.mxu0 0.0
        %6259 = vmatprep.subr.mxu0 0.0
        %6260 = vmatpush1.msra.mxu0 0.0
        %6261 = vmatprep.subr.mxu0 0.0
        %6262 = vmatpush1.msra.mxu0 0.0
        %6263 = vmatprep.subr.mxu0 0.0
        %6264 = vmatpush1.msra.mxu0 0.0
        %6265 = vmatprep.subr.mxu0 0.0
        %6266 = vmatpush1.msra.mxu0 0.0
        %6267 = vmatprep.subr.mxu0 0.0
        %6268 = vmatpush1.msra.mxu0 0.0
        %6269 = vmatprep.subr.mxu0 0.0
        %6270 = vmatpush1.msra.mxu0 0.0
        %6271 = vmatprep.subr.mxu0 0.0
        %6272 = vmatpush1.msra.mxu0 0.0
        %6273 = vmatprep.subr.mxu0 0.0
        %6274 = vmatpush1.msra.mxu0 0.0
        %6275 = vmatprep.subr.mxu0 0.0
        %6276 = vmatpush1.msra.mxu0 0.0
        %6277 = vmatprep.subr.mxu0 0.0
        %6278 = vmatpush1.msra.mxu0 0.0
        %6279 = vmatprep.subr.mxu0 0.0
        %6280 = vmatpush1.msra.mxu0 0.0
        %6281 = vmatprep.subr.mxu0 0.0
        %6282 = vmatpush1.msra.mxu0 0.0
        %6283 = vmatprep.subr.mxu0 0.0
        %v6284 = vand.u32 %v4314, 4294901760
        %6285 = vmatpush1.msra.mxu0 %v6284
        %6286 = vmatprep.subr.mxu0 0.0
        %v6287 = vand.u32 %v4313, 4294901760
        %6288 = vmatpush1.msra.mxu0 %v6287
        %6289 = vmatprep.subr.mxu0 0.0
        %6290 = vmatpush2.msra.mxu0 0.0
        %6291 = vmatprep.subr.mxu0 0.0
        %6292 = vmatpush2.msra.mxu0 0.0
        %6293 = vmatprep.subr.mxu0 0.0
        %6294 = vmatpush2.msra.mxu0 0.0
        %6295 = vmatprep.subr.mxu0 0.0
        %6296 = vmatpush2.msra.mxu0 0.0
        %6297 = vmatprep.subr.mxu0 0.0
        %6298 = vmatpush2.msra.mxu0 0.0
        %6299 = vmatprep.subr.mxu0 0.0
        %6300 = vmatpush2.msra.mxu0 0.0
        %6301 = vmatprep.subr.mxu0 0.0
        %6302 = vmatpush2.msra.mxu0 0.0
        %6303 = vmatprep.subr.mxu0 0.0
        %6304 = vmatpush2.msra.mxu0 0.0
        %6305 = vmatprep.subr.mxu0 0.0
        %6306 = vmatpush2.msra.mxu0 0.0
        %6307 = vmatprep.subr.mxu0 0.0
        %6308 = vmatpush2.msra.mxu0 0.0
        %6309 = vmatprep.subr.mxu0 0.0
        %6310 = vmatpush2.msra.mxu0 0.0
        %6311 = vmatprep.subr.mxu0 0.0
        %6312 = vmatpush2.msra.mxu0 0.0
        %6313 = vmatprep.subr.mxu0 0.0
        %6314 = vmatpush2.msra.mxu0 0.0
        %6315 = vmatprep.subr.mxu0 0.0
        %6316 = vmatpush2.msra.mxu0 0.0
        %6317 = vmatprep.subr.mxu0 0.0
        %6318 = vmatpush2.msra.mxu0 0.0
        %6319 = vmatprep.subr.mxu0 0.0
        %6320 = vmatpush2.msra.mxu0 0.0
        %6321 = vmatprep.mubr.f32.mxu0 0.0
        %v6322 = vand.u32 %v6232, 4294901760
        %v6323 = vsub.f32 %v6232, %v6322
        %v6324 = vand.u32 %v6323, 4294901760
        %v6325 = vsub.f32 %v6323, %v6324
        %v6326 = vand.u32 %v6325, 4294901760
        %6327 = vmatmul.mubr.f32.gmra.mxu0 %v6326
        %v6328 = vpop.f32.mrf.mxu0
        %v6329 = vadd.f32 0.0, %v6328
        %v6330 = vpop.f32.mrf.mxu0
        %6331 = vmatprep.mubr.f32.mxu0 0.0
        %v6332 = vand.u32 %v6235, 4294901760
        %v6333 = vsub.f32 %v6235, %v6332
        %v6334 = vand.u32 %v6333, 4294901760
        %v6335 = vsub.f32 %v6333, %v6334
        %v6336 = vand.u32 %v6335, 4294901760
        %6337 = vmatmul.mubr.f32.gmra.mxu0 %v6336
        %v6338 = vpop.f32.mrf.mxu0
        %v6339 = vadd.f32 0.0, %v6338
        %v6340 = vpop.f32.mrf.mxu0
        %6341 = vmatprep.mubr.f32.mxu0 0.0
        %v6342 = vand.u32 %v6238, 4294901760
        %v6343 = vsub.f32 %v6238, %v6342
        %v6344 = vand.u32 %v6343, 4294901760
        %v6345 = vsub.f32 %v6343, %v6344
        %v6346 = vand.u32 %v6345, 4294901760
        %6347 = vmatmul.mubr.f32.gmra.mxu0 %v6346
        %v6348 = vpop.f32.mrf.mxu0
        %v6349 = vadd.f32 0.0, %v6348
        %v6350 = vpop.f32.mrf.mxu0
        %6351 = vmatprep.mubr.f32.mxu0 0.0
        %v6352 = vand.u32 %v6241, 4294901760
        %v6353 = vsub.f32 %v6241, %v6352
        %v6354 = vand.u32 %v6353, 4294901760
        %v6355 = vsub.f32 %v6353, %v6354
        %v6356 = vand.u32 %v6355, 4294901760
        %6357 = vmatmul.mubr.f32.gmra.mxu0 %v6356
        %v6358 = vpop.f32.mrf.mxu0
        %v6359 = vadd.f32 0.0, %v6358
        %v6360 = vpop.f32.mrf.mxu0
        %6361 = vmatprep.mubr.f32.mxu0 0.0
        %v6362 = vand.u32 %v6244, 4294901760
        %v6363 = vsub.f32 %v6244, %v6362
        %v6364 = vand.u32 %v6363, 4294901760
        %v6365 = vsub.f32 %v6363, %v6364
        %v6366 = vand.u32 %v6365, 4294901760
        %6367 = vmatmul.mubr.f32.gmra.mxu0 %v6366
        %v6368 = vpop.f32.mrf.mxu0
        %v6369 = vadd.f32 0.0, %v6368
        %v6370 = vpop.f32.mrf.mxu0
        %6371 = vmatprep.mubr.f32.mxu0 0.0
        %v6372 = vand.u32 %v6247, 4294901760
        %v6373 = vsub.f32 %v6247, %v6372
        %v6374 = vand.u32 %v6373, 4294901760
        %v6375 = vsub.f32 %v6373, %v6374
        %v6376 = vand.u32 %v6375, 4294901760
        %6377 = vmatmul.mubr.f32.gmra.mxu0 %v6376
        %v6378 = vpop.f32.mrf.mxu0
        %v6379 = vadd.f32 0.0, %v6378
        %v6380 = vpop.f32.mrf.mxu0
        %6381 = vmatprep.mubr.f32.mxu0 0.0
        %v6382 = vand.u32 %v6250, 4294901760
        %v6383 = vsub.f32 %v6250, %v6382
        %v6384 = vand.u32 %v6383, 4294901760
        %v6385 = vsub.f32 %v6383, %v6384
        %v6386 = vand.u32 %v6385, 4294901760
        %6387 = vmatmul.mubr.f32.gmra.mxu0 %v6386
        %v6388 = vpop.f32.mrf.mxu0
        %v6389 = vadd.f32 0.0, %v6388
        %v6390 = vpop.f32.mrf.mxu0
        %6391 = vmatprep.mubr.f32.mxu0 0.0
        %v6392 = vand.u32 %v6253, 4294901760
        %v6393 = vsub.f32 %v6253, %v6392
        %v6394 = vand.u32 %v6393, 4294901760
        %v6395 = vsub.f32 %v6393, %v6394
        %v6396 = vand.u32 %v6395, 4294901760
        %6397 = vmatmul.mubr.f32.gmra.mxu0 %v6396
        %v6398 = vpop.f32.mrf.mxu0
        %v6399 = vadd.f32 0.0, %v6398
        %v6400 = vpop.f32.mrf.mxu0
        %6401 = vdwg.mxu0
        %6402 = vmatprep.subr.mxu0 0.0
        %6403 = vmatpush1.msra.mxu0 0.0
        %6404 = vmatprep.subr.mxu0 0.0
        %6405 = vmatpush1.msra.mxu0 0.0
        %6406 = vmatprep.subr.mxu0 0.0
        %6407 = vmatpush1.msra.mxu0 0.0
        %6408 = vmatprep.subr.mxu0 0.0
        %6409 = vmatpush1.msra.mxu0 0.0
        %6410 = vmatprep.subr.mxu0 0.0
        %6411 = vmatpush1.msra.mxu0 0.0
        %6412 = vmatprep.subr.mxu0 0.0
        %6413 = vmatpush1.msra.mxu0 0.0
        %6414 = vmatprep.subr.mxu0 0.0
        %6415 = vmatpush1.msra.mxu0 0.0
        %6416 = vmatprep.subr.mxu0 0.0
        %6417 = vmatpush1.msra.mxu0 0.0
        %6418 = vmatprep.subr.mxu0 0.0
        %6419 = vmatpush1.msra.mxu0 0.0
        %6420 = vmatprep.subr.mxu0 0.0
        %6421 = vmatpush1.msra.mxu0 0.0
        %6422 = vmatprep.subr.mxu0 0.0
        %6423 = vmatpush1.msra.mxu0 0.0
        %6424 = vmatprep.subr.mxu0 0.0
        %6425 = vmatpush1.msra.mxu0 0.0
        %6426 = vmatprep.subr.mxu0 0.0
        %6427 = vmatpush1.msra.mxu0 0.0
        %6428 = vmatprep.subr.mxu0 0.0
        %6429 = vmatpush1.msra.mxu0 0.0
        %6430 = vmatprep.subr.mxu0 0.0
        %v6431 = vand.u32 %v4314, 4294901760
        %v6432 = vsub.f32 %v4314, %v6431
        %v6433 = vand.u32 %v6432, 4294901760
        %v6434 = vsub.f32 %v6432, %v6433
        %v6435 = vand.u32 %v6434, 4294901760
        %6436 = vmatpush1.msra.mxu0 %v6435
        %6437 = vmatprep.subr.mxu0 0.0
        %v6438 = vand.u32 %v4313, 4294901760
        %v6439 = vsub.f32 %v4313, %v6438
        %v6440 = vand.u32 %v6439, 4294901760
        %v6441 = vsub.f32 %v6439, %v6440
        %v6442 = vand.u32 %v6441, 4294901760
        %6443 = vmatpush1.msra.mxu0 %v6442
        %6444 = vmatprep.subr.mxu0 0.0
        %6445 = vmatpush2.msra.mxu0 0.0
        %6446 = vmatprep.subr.mxu0 0.0
        %6447 = vmatpush2.msra.mxu0 0.0
        %6448 = vmatprep.subr.mxu0 0.0
        %6449 = vmatpush2.msra.mxu0 0.0
        %6450 = vmatprep.subr.mxu0 0.0
        %6451 = vmatpush2.msra.mxu0 0.0
        %6452 = vmatprep.subr.mxu0 0.0
        %6453 = vmatpush2.msra.mxu0 0.0
        %6454 = vmatprep.subr.mxu0 0.0
        %6455 = vmatpush2.msra.mxu0 0.0
        %6456 = vmatprep.subr.mxu0 0.0
        %6457 = vmatpush2.msra.mxu0 0.0
        %6458 = vmatprep.subr.mxu0 0.0
        %6459 = vmatpush2.msra.mxu0 0.0
        %6460 = vmatprep.subr.mxu0 0.0
        %6461 = vmatpush2.msra.mxu0 0.0
        %6462 = vmatprep.subr.mxu0 0.0
        %6463 = vmatpush2.msra.mxu0 0.0
        %6464 = vmatprep.subr.mxu0 0.0
        %6465 = vmatpush2.msra.mxu0 0.0
        %6466 = vmatprep.subr.mxu0 0.0
        %6467 = vmatpush2.msra.mxu0 0.0
        %6468 = vmatprep.subr.mxu0 0.0
        %6469 = vmatpush2.msra.mxu0 0.0
        %6470 = vmatprep.subr.mxu0 0.0
        %6471 = vmatpush2.msra.mxu0 0.0
        %6472 = vmatprep.subr.mxu0 0.0
        %6473 = vmatpush2.msra.mxu0 0.0
        %6474 = vmatprep.subr.mxu0 0.0
        %6475 = vmatpush2.msra.mxu0 0.0
        %6476 = vmatprep.mubr.f32.mxu0 0.0
        %v6477 = vand.u32 %v6232, 4294901760
        %6478 = vmatmul.mubr.f32.gmra.mxu0 %v6477
        %v6479 = vpop.f32.mrf.mxu0
        %v6480 = vadd.f32 %v6329, %v6479
        %v6481 = vpop.f32.mrf.mxu0
        %6482 = vmatprep.mubr.f32.mxu0 0.0
        %v6483 = vand.u32 %v6235, 4294901760
        %6484 = vmatmul.mubr.f32.gmra.mxu0 %v6483
        %v6485 = vpop.f32.mrf.mxu0
        %v6486 = vadd.f32 %v6339, %v6485
        %v6487 = vpop.f32.mrf.mxu0
        %6488 = vmatprep.mubr.f32.mxu0 0.0
        %v6489 = vand.u32 %v6238, 4294901760
        %6490 = vmatmul.mubr.f32.gmra.mxu0 %v6489
        %v6491 = vpop.f32.mrf.mxu0
        %v6492 = vadd.f32 %v6349, %v6491
        %v6493 = vpop.f32.mrf.mxu0
        %6494 = vmatprep.mubr.f32.mxu0 0.0
        %v6495 = vand.u32 %v6241, 4294901760
        %6496 = vmatmul.mubr.f32.gmra.mxu0 %v6495
        %v6497 = vpop.f32.mrf.mxu0
        %v6498 = vadd.f32 %v6359, %v6497
        %v6499 = vpop.f32.mrf.mxu0
        %6500 = vmatprep.mubr.f32.mxu0 0.0
        %v6501 = vand.u32 %v6244, 4294901760
        %6502 = vmatmul.mubr.f32.gmra.mxu0 %v6501
        %v6503 = vpop.f32.mrf.mxu0
        %v6504 = vadd.f32 %v6369, %v6503
        %v6505 = vpop.f32.mrf.mxu0
        %6506 = vmatprep.mubr.f32.mxu0 0.0
        %v6507 = vand.u32 %v6247, 4294901760
        %6508 = vmatmul.mubr.f32.gmra.mxu0 %v6507
        %v6509 = vpop.f32.mrf.mxu0
        %v6510 = vadd.f32 %v6379, %v6509
        %v6511 = vpop.f32.mrf.mxu0
        %6512 = vmatprep.mubr.f32.mxu0 0.0
        %v6513 = vand.u32 %v6250, 4294901760
        %6514 = vmatmul.mubr.f32.gmra.mxu0 %v6513
        %v6515 = vpop.f32.mrf.mxu0
        %v6516 = vadd.f32 %v6389, %v6515
        %v6517 = vpop.f32.mrf.mxu0
        %6518 = vmatprep.mubr.f32.mxu0 0.0
        %v6519 = vand.u32 %v6253, 4294901760
        %6520 = vmatmul.mubr.f32.gmra.mxu0 %v6519
        %v6521 = vpop.f32.mrf.mxu0
        %v6522 = vadd.f32 %v6399, %v6521
        %v6523 = vpop.f32.mrf.mxu0
        %6524 = vdwg.mxu0
        %6525 = vmatprep.subr.mxu0 0.0
        %6526 = vmatpush1.msra.mxu0 0.0
        %6527 = vmatprep.subr.mxu0 0.0
        %6528 = vmatpush1.msra.mxu0 0.0
        %6529 = vmatprep.subr.mxu0 0.0
        %6530 = vmatpush1.msra.mxu0 0.0
        %6531 = vmatprep.subr.mxu0 0.0
        %6532 = vmatpush1.msra.mxu0 0.0
        %6533 = vmatprep.subr.mxu0 0.0
        %6534 = vmatpush1.msra.mxu0 0.0
        %6535 = vmatprep.subr.mxu0 0.0
        %6536 = vmatpush1.msra.mxu0 0.0
        %6537 = vmatprep.subr.mxu0 0.0
        %6538 = vmatpush1.msra.mxu0 0.0
        %6539 = vmatprep.subr.mxu0 0.0
        %6540 = vmatpush1.msra.mxu0 0.0
        %6541 = vmatprep.subr.mxu0 0.0
        %6542 = vmatpush1.msra.mxu0 0.0
        %6543 = vmatprep.subr.mxu0 0.0
        %6544 = vmatpush1.msra.mxu0 0.0
        %6545 = vmatprep.subr.mxu0 0.0
        %6546 = vmatpush1.msra.mxu0 0.0
        %6547 = vmatprep.subr.mxu0 0.0
        %6548 = vmatpush1.msra.mxu0 0.0
        %6549 = vmatprep.subr.mxu0 0.0
        %6550 = vmatpush1.msra.mxu0 0.0
        %6551 = vmatprep.subr.mxu0 0.0
        %6552 = vmatpush1.msra.mxu0 0.0
        %6553 = vmatprep.subr.mxu0 0.0
        %v6554 = vand.u32 %v4314, 4294901760
        %v6555 = vsub.f32 %v4314, %v6554
        %6556 = vmatpush1.msra.mxu0 %v6555
        %6557 = vmatprep.subr.mxu0 0.0
        %v6558 = vand.u32 %v4313, 4294901760
        %v6559 = vsub.f32 %v4313, %v6558
        %6560 = vmatpush1.msra.mxu0 %v6559
        %6561 = vmatprep.subr.mxu0 0.0
        %6562 = vmatpush2.msra.mxu0 0.0
        %6563 = vmatprep.subr.mxu0 0.0
        %6564 = vmatpush2.msra.mxu0 0.0
        %6565 = vmatprep.subr.mxu0 0.0
        %6566 = vmatpush2.msra.mxu0 0.0
        %6567 = vmatprep.subr.mxu0 0.0
        %6568 = vmatpush2.msra.mxu0 0.0
        %6569 = vmatprep.subr.mxu0 0.0
        %6570 = vmatpush2.msra.mxu0 0.0
        %6571 = vmatprep.subr.mxu0 0.0
        %6572 = vmatpush2.msra.mxu0 0.0
        %6573 = vmatprep.subr.mxu0 0.0
        %6574 = vmatpush2.msra.mxu0 0.0
        %6575 = vmatprep.subr.mxu0 0.0
        %6576 = vmatpush2.msra.mxu0 0.0
        %6577 = vmatprep.subr.mxu0 0.0
        %6578 = vmatpush2.msra.mxu0 0.0
        %6579 = vmatprep.subr.mxu0 0.0
        %6580 = vmatpush2.msra.mxu0 0.0
        %6581 = vmatprep.subr.mxu0 0.0
        %6582 = vmatpush2.msra.mxu0 0.0
        %6583 = vmatprep.subr.mxu0 0.0
        %6584 = vmatpush2.msra.mxu0 0.0
        %6585 = vmatprep.subr.mxu0 0.0
        %6586 = vmatpush2.msra.mxu0 0.0
        %6587 = vmatprep.subr.mxu0 0.0
        %6588 = vmatpush2.msra.mxu0 0.0
        %6589 = vmatprep.subr.mxu0 0.0
        %6590 = vmatpush2.msra.mxu0 0.0
        %6591 = vmatprep.subr.mxu0 0.0
        %6592 = vmatpush2.msra.mxu0 0.0
        %6593 = vmatprep.mubr.f32.mxu0 0.0
        %v6594 = vand.u32 %v6232, 4294901760
        %v6595 = vsub.f32 %v6232, %v6594
        %6596 = vmatmul.mubr.f32.gmra.mxu0 %v6595
        %v6597 = vpop.f32.mrf.mxu0
        %v6598 = vadd.f32 %v6480, %v6597
        %v6599 = vpop.f32.mrf.mxu0
        %6600 = vmatprep.mubr.f32.mxu0 0.0
        %v6601 = vand.u32 %v6235, 4294901760
        %v6602 = vsub.f32 %v6235, %v6601
        %6603 = vmatmul.mubr.f32.gmra.mxu0 %v6602
        %v6604 = vpop.f32.mrf.mxu0
        %v6605 = vadd.f32 %v6486, %v6604
        %v6606 = vpop.f32.mrf.mxu0
        %6607 = vmatprep.mubr.f32.mxu0 0.0
        %v6608 = vand.u32 %v6238, 4294901760
        %v6609 = vsub.f32 %v6238, %v6608
        %6610 = vmatmul.mubr.f32.gmra.mxu0 %v6609
        %v6611 = vpop.f32.mrf.mxu0
        %v6612 = vadd.f32 %v6492, %v6611
        %v6613 = vpop.f32.mrf.mxu0
        %6614 = vmatprep.mubr.f32.mxu0 0.0
        %v6615 = vand.u32 %v6241, 4294901760
        %v6616 = vsub.f32 %v6241, %v6615
        %6617 = vmatmul.mubr.f32.gmra.mxu0 %v6616
        %v6618 = vpop.f32.mrf.mxu0
        %v6619 = vadd.f32 %v6498, %v6618
        %v6620 = vpop.f32.mrf.mxu0
        %6621 = vmatprep.mubr.f32.mxu0 0.0
        %v6622 = vand.u32 %v6244, 4294901760
        %v6623 = vsub.f32 %v6244, %v6622
        %6624 = vmatmul.mubr.f32.gmra.mxu0 %v6623
        %v6625 = vpop.f32.mrf.mxu0
        %v6626 = vadd.f32 %v6504, %v6625
        %v6627 = vpop.f32.mrf.mxu0
        %6628 = vmatprep.mubr.f32.mxu0 0.0
        %v6629 = vand.u32 %v6247, 4294901760
        %v6630 = vsub.f32 %v6247, %v6629
        %6631 = vmatmul.mubr.f32.gmra.mxu0 %v6630
        %v6632 = vpop.f32.mrf.mxu0
        %v6633 = vadd.f32 %v6510, %v6632
        %v6634 = vpop.f32.mrf.mxu0
        %6635 = vmatprep.mubr.f32.mxu0 0.0
        %v6636 = vand.u32 %v6250, 4294901760
        %v6637 = vsub.f32 %v6250, %v6636
        %6638 = vmatmul.mubr.f32.gmra.mxu0 %v6637
        %v6639 = vpop.f32.mrf.mxu0
        %v6640 = vadd.f32 %v6516, %v6639
        %v6641 = vpop.f32.mrf.mxu0
        %6642 = vmatprep.mubr.f32.mxu0 0.0
        %v6643 = vand.u32 %v6253, 4294901760
        %v6644 = vsub.f32 %v6253, %v6643
        %6645 = vmatmul.mubr.f32.gmra.mxu0 %v6644
        %v6646 = vpop.f32.mrf.mxu0
        %v6647 = vadd.f32 %v6522, %v6646
        %v6648 = vpop.f32.mrf.mxu0
        %6649 = vdwg.mxu0
        %6650 = vmatprep.subr.mxu0 0.0
        %6651 = vmatpush1.msra.mxu0 0.0
        %6652 = vmatprep.subr.mxu0 0.0
        %6653 = vmatpush1.msra.mxu0 0.0
        %6654 = vmatprep.subr.mxu0 0.0
        %6655 = vmatpush1.msra.mxu0 0.0
        %6656 = vmatprep.subr.mxu0 0.0
        %6657 = vmatpush1.msra.mxu0 0.0
        %6658 = vmatprep.subr.mxu0 0.0
        %6659 = vmatpush1.msra.mxu0 0.0
        %6660 = vmatprep.subr.mxu0 0.0
        %6661 = vmatpush1.msra.mxu0 0.0
        %6662 = vmatprep.subr.mxu0 0.0
        %6663 = vmatpush1.msra.mxu0 0.0
        %6664 = vmatprep.subr.mxu0 0.0
        %6665 = vmatpush1.msra.mxu0 0.0
        %6666 = vmatprep.subr.mxu0 0.0
        %6667 = vmatpush1.msra.mxu0 0.0
        %6668 = vmatprep.subr.mxu0 0.0
        %6669 = vmatpush1.msra.mxu0 0.0
        %6670 = vmatprep.subr.mxu0 0.0
        %6671 = vmatpush1.msra.mxu0 0.0
        %6672 = vmatprep.subr.mxu0 0.0
        %6673 = vmatpush1.msra.mxu0 0.0
        %6674 = vmatprep.subr.mxu0 0.0
        %6675 = vmatpush1.msra.mxu0 0.0
        %6676 = vmatprep.subr.mxu0 0.0
        %6677 = vmatpush1.msra.mxu0 0.0
        %6678 = vmatprep.subr.mxu0 0.0
        %v6679 = vand.u32 %v4314, 4294901760
        %6680 = vmatpush1.msra.mxu0 %v6679
        %6681 = vmatprep.subr.mxu0 0.0
        %v6682 = vand.u32 %v4313, 4294901760
        %6683 = vmatpush1.msra.mxu0 %v6682
        %6684 = vmatprep.subr.mxu0 0.0
        %6685 = vmatpush2.msra.mxu0 0.0
        %6686 = vmatprep.subr.mxu0 0.0
        %6687 = vmatpush2.msra.mxu0 0.0
        %6688 = vmatprep.subr.mxu0 0.0
        %6689 = vmatpush2.msra.mxu0 0.0
        %6690 = vmatprep.subr.mxu0 0.0
        %6691 = vmatpush2.msra.mxu0 0.0
        %6692 = vmatprep.subr.mxu0 0.0
        %6693 = vmatpush2.msra.mxu0 0.0
        %6694 = vmatprep.subr.mxu0 0.0
        %6695 = vmatpush2.msra.mxu0 0.0
        %6696 = vmatprep.subr.mxu0 0.0
        %6697 = vmatpush2.msra.mxu0 0.0
        %6698 = vmatprep.subr.mxu0 0.0
        %6699 = vmatpush2.msra.mxu0 0.0
        %6700 = vmatprep.subr.mxu0 0.0
        %6701 = vmatpush2.msra.mxu0 0.0
        %6702 = vmatprep.subr.mxu0 0.0
        %6703 = vmatpush2.msra.mxu0 0.0
        %6704 = vmatprep.subr.mxu0 0.0
        %6705 = vmatpush2.msra.mxu0 0.0
        %6706 = vmatprep.subr.mxu0 0.0
        %6707 = vmatpush2.msra.mxu0 0.0
        %6708 = vmatprep.subr.mxu0 0.0
        %6709 = vmatpush2.msra.mxu0 0.0
        %6710 = vmatprep.subr.mxu0 0.0
        %6711 = vmatpush2.msra.mxu0 0.0
        %6712 = vmatprep.subr.mxu0 0.0
        %6713 = vmatpush2.msra.mxu0 0.0
        %6714 = vmatprep.subr.mxu0 0.0
        %6715 = vmatpush2.msra.mxu0 0.0
        %6716 = vmatprep.mubr.f32.mxu0 0.0
        %v6717 = vand.u32 %v6232, 4294901760
        %v6718 = vsub.f32 %v6232, %v6717
        %v6719 = vand.u32 %v6718, 4294901760
        %6720 = vmatmul.mubr.f32.gmra.mxu0 %v6719
        %v6721 = vpop.f32.mrf.mxu0
        %v6722 = vadd.f32 %v6598, %v6721
        %v6723 = vpop.f32.mrf.mxu0
        %6724 = vmatprep.mubr.f32.mxu0 0.0
        %v6725 = vand.u32 %v6235, 4294901760
        %v6726 = vsub.f32 %v6235, %v6725
        %v6727 = vand.u32 %v6726, 4294901760
        %6728 = vmatmul.mubr.f32.gmra.mxu0 %v6727
        %v6729 = vpop.f32.mrf.mxu0
        %v6730 = vadd.f32 %v6605, %v6729
        %v6731 = vpop.f32.mrf.mxu0
        %6732 = vmatprep.mubr.f32.mxu0 0.0
        %v6733 = vand.u32 %v6238, 4294901760
        %v6734 = vsub.f32 %v6238, %v6733
        %v6735 = vand.u32 %v6734, 4294901760
        %6736 = vmatmul.mubr.f32.gmra.mxu0 %v6735
        %v6737 = vpop.f32.mrf.mxu0
        %v6738 = vadd.f32 %v6612, %v6737
        %v6739 = vpop.f32.mrf.mxu0
        %6740 = vmatprep.mubr.f32.mxu0 0.0
        %v6741 = vand.u32 %v6241, 4294901760
        %v6742 = vsub.f32 %v6241, %v6741
        %v6743 = vand.u32 %v6742, 4294901760
        %6744 = vmatmul.mubr.f32.gmra.mxu0 %v6743
        %v6745 = vpop.f32.mrf.mxu0
        %v6746 = vadd.f32 %v6619, %v6745
        %v6747 = vpop.f32.mrf.mxu0
        %6748 = vmatprep.mubr.f32.mxu0 0.0
        %v6749 = vand.u32 %v6244, 4294901760
        %v6750 = vsub.f32 %v6244, %v6749
        %v6751 = vand.u32 %v6750, 4294901760
        %6752 = vmatmul.mubr.f32.gmra.mxu0 %v6751
        %v6753 = vpop.f32.mrf.mxu0
        %v6754 = vadd.f32 %v6626, %v6753
        %v6755 = vpop.f32.mrf.mxu0
        %6756 = vmatprep.mubr.f32.mxu0 0.0
        %v6757 = vand.u32 %v6247, 4294901760
        %v6758 = vsub.f32 %v6247, %v6757
        %v6759 = vand.u32 %v6758, 4294901760
        %6760 = vmatmul.mubr.f32.gmra.mxu0 %v6759
        %v6761 = vpop.f32.mrf.mxu0
        %v6762 = vadd.f32 %v6633, %v6761
        %v6763 = vpop.f32.mrf.mxu0
        %6764 = vmatprep.mubr.f32.mxu0 0.0
        %v6765 = vand.u32 %v6250, 4294901760
        %v6766 = vsub.f32 %v6250, %v6765
        %v6767 = vand.u32 %v6766, 4294901760
        %6768 = vmatmul.mubr.f32.gmra.mxu0 %v6767
        %v6769 = vpop.f32.mrf.mxu0
        %v6770 = vadd.f32 %v6640, %v6769
        %v6771 = vpop.f32.mrf.mxu0
        %6772 = vmatprep.mubr.f32.mxu0 0.0
        %v6773 = vand.u32 %v6253, 4294901760
        %v6774 = vsub.f32 %v6253, %v6773
        %v6775 = vand.u32 %v6774, 4294901760
        %6776 = vmatmul.mubr.f32.gmra.mxu0 %v6775
        %v6777 = vpop.f32.mrf.mxu0
        %v6778 = vadd.f32 %v6647, %v6777
        %v6779 = vpop.f32.mrf.mxu0
        %6780 = vdwg.mxu0
        %6781 = vmatprep.subr.mxu0 0.0
        %6782 = vmatpush1.msra.mxu0 0.0
        %6783 = vmatprep.subr.mxu0 0.0
        %6784 = vmatpush1.msra.mxu0 0.0
        %6785 = vmatprep.subr.mxu0 0.0
        %6786 = vmatpush1.msra.mxu0 0.0
        %6787 = vmatprep.subr.mxu0 0.0
        %6788 = vmatpush1.msra.mxu0 0.0
        %6789 = vmatprep.subr.mxu0 0.0
        %6790 = vmatpush1.msra.mxu0 0.0
        %6791 = vmatprep.subr.mxu0 0.0
        %6792 = vmatpush1.msra.mxu0 0.0
        %6793 = vmatprep.subr.mxu0 0.0
        %6794 = vmatpush1.msra.mxu0 0.0
        %6795 = vmatprep.subr.mxu0 0.0
        %6796 = vmatpush1.msra.mxu0 0.0
        %6797 = vmatprep.subr.mxu0 0.0
        %6798 = vmatpush1.msra.mxu0 0.0
        %6799 = vmatprep.subr.mxu0 0.0
        %6800 = vmatpush1.msra.mxu0 0.0
        %6801 = vmatprep.subr.mxu0 0.0
        %6802 = vmatpush1.msra.mxu0 0.0
        %6803 = vmatprep.subr.mxu0 0.0
        %6804 = vmatpush1.msra.mxu0 0.0
        %6805 = vmatprep.subr.mxu0 0.0
        %6806 = vmatpush1.msra.mxu0 0.0
        %6807 = vmatprep.subr.mxu0 0.0
        %6808 = vmatpush1.msra.mxu0 0.0
        %6809 = vmatprep.subr.mxu0 0.0
        %v6810 = vand.u32 %v4314, 4294901760
        %v6811 = vsub.f32 %v4314, %v6810
        %v6812 = vand.u32 %v6811, 4294901760
        %6813 = vmatpush1.msra.mxu0 %v6812
        %6814 = vmatprep.subr.mxu0 0.0
        %v6815 = vand.u32 %v4313, 4294901760
        %v6816 = vsub.f32 %v4313, %v6815
        %v6817 = vand.u32 %v6816, 4294901760
        %6818 = vmatpush1.msra.mxu0 %v6817
        %6819 = vmatprep.subr.mxu0 0.0
        %6820 = vmatpush2.msra.mxu0 0.0
        %6821 = vmatprep.subr.mxu0 0.0
        %6822 = vmatpush2.msra.mxu0 0.0
        %6823 = vmatprep.subr.mxu0 0.0
        %6824 = vmatpush2.msra.mxu0 0.0
        %6825 = vmatprep.subr.mxu0 0.0
        %6826 = vmatpush2.msra.mxu0 0.0
        %6827 = vmatprep.subr.mxu0 0.0
        %6828 = vmatpush2.msra.mxu0 0.0
        %6829 = vmatprep.subr.mxu0 0.0
        %6830 = vmatpush2.msra.mxu0 0.0
        %6831 = vmatprep.subr.mxu0 0.0
        %6832 = vmatpush2.msra.mxu0 0.0
        %6833 = vmatprep.subr.mxu0 0.0
        %6834 = vmatpush2.msra.mxu0 0.0
        %6835 = vmatprep.subr.mxu0 0.0
        %6836 = vmatpush2.msra.mxu0 0.0
        %6837 = vmatprep.subr.mxu0 0.0
        %6838 = vmatpush2.msra.mxu0 0.0
        %6839 = vmatprep.subr.mxu0 0.0
        %6840 = vmatpush2.msra.mxu0 0.0
        %6841 = vmatprep.subr.mxu0 0.0
        %6842 = vmatpush2.msra.mxu0 0.0
        %6843 = vmatprep.subr.mxu0 0.0
        %6844 = vmatpush2.msra.mxu0 0.0
        %6845 = vmatprep.subr.mxu0 0.0
        %6846 = vmatpush2.msra.mxu0 0.0
        %6847 = vmatprep.subr.mxu0 0.0
        %6848 = vmatpush2.msra.mxu0 0.0
        %6849 = vmatprep.subr.mxu0 0.0
        %6850 = vmatpush2.msra.mxu0 0.0
        %6851 = vmatprep.mubr.f32.mxu0 0.0
        %v6852 = vand.u32 %v6232, 4294901760
        %6853 = vmatmul.mubr.f32.gmra.mxu0 %v6852
        %v6854 = vpop.f32.mrf.mxu0
        %v6855 = vadd.f32 %v6722, %v6854
        %v6856 = vpop.f32.mrf.mxu0
        %6857 = vmatprep.mubr.f32.mxu0 0.0
        %v6858 = vand.u32 %v6235, 4294901760
        %6859 = vmatmul.mubr.f32.gmra.mxu0 %v6858
        %v6860 = vpop.f32.mrf.mxu0
        %v6861 = vadd.f32 %v6730, %v6860
        %v6862 = vpop.f32.mrf.mxu0
        %6863 = vmatprep.mubr.f32.mxu0 0.0
        %v6864 = vand.u32 %v6238, 4294901760
        %6865 = vmatmul.mubr.f32.gmra.mxu0 %v6864
        %v6866 = vpop.f32.mrf.mxu0
        %v6867 = vadd.f32 %v6738, %v6866
        %v6868 = vpop.f32.mrf.mxu0
        %6869 = vmatprep.mubr.f32.mxu0 0.0
        %v6870 = vand.u32 %v6241, 4294901760
        %6871 = vmatmul.mubr.f32.gmra.mxu0 %v6870
        %v6872 = vpop.f32.mrf.mxu0
        %v6873 = vadd.f32 %v6746, %v6872
        %v6874 = vpop.f32.mrf.mxu0
        %6875 = vmatprep.mubr.f32.mxu0 0.0
        %v6876 = vand.u32 %v6244, 4294901760
        %6877 = vmatmul.mubr.f32.gmra.mxu0 %v6876
        %v6878 = vpop.f32.mrf.mxu0
        %v6879 = vadd.f32 %v6754, %v6878
        %v6880 = vpop.f32.mrf.mxu0
        %6881 = vmatprep.mubr.f32.mxu0 0.0
        %v6882 = vand.u32 %v6247, 4294901760
        %6883 = vmatmul.mubr.f32.gmra.mxu0 %v6882
        %v6884 = vpop.f32.mrf.mxu0
        %v6885 = vadd.f32 %v6762, %v6884
        %v6886 = vpop.f32.mrf.mxu0
        %6887 = vmatprep.mubr.f32.mxu0 0.0
        %v6888 = vand.u32 %v6250, 4294901760
        %6889 = vmatmul.mubr.f32.gmra.mxu0 %v6888
        %v6890 = vpop.f32.mrf.mxu0
        %v6891 = vadd.f32 %v6770, %v6890
        %v6892 = vpop.f32.mrf.mxu0
        %6893 = vmatprep.mubr.f32.mxu0 0.0
        %v6894 = vand.u32 %v6253, 4294901760
        %6895 = vmatmul.mubr.f32.gmra.mxu0 %v6894
        %v6896 = vpop.f32.mrf.mxu0
        %v6897 = vadd.f32 %v6778, %v6896
        %v6898 = vpop.f32.mrf.mxu0
        %6899 = vdwg.mxu0
        %6900 = vmatprep.subr.mxu0 0.0
        %6901 = vmatpush1.msra.mxu0 0.0
        %6902 = vmatprep.subr.mxu0 0.0
        %6903 = vmatpush1.msra.mxu0 0.0
        %6904 = vmatprep.subr.mxu0 0.0
        %6905 = vmatpush1.msra.mxu0 0.0
        %6906 = vmatprep.subr.mxu0 0.0
        %6907 = vmatpush1.msra.mxu0 0.0
        %6908 = vmatprep.subr.mxu0 0.0
        %6909 = vmatpush1.msra.mxu0 0.0
        %6910 = vmatprep.subr.mxu0 0.0
        %6911 = vmatpush1.msra.mxu0 0.0
        %6912 = vmatprep.subr.mxu0 0.0
        %6913 = vmatpush1.msra.mxu0 0.0
        %6914 = vmatprep.subr.mxu0 0.0
        %6915 = vmatpush1.msra.mxu0 0.0
        %6916 = vmatprep.subr.mxu0 0.0
        %6917 = vmatpush1.msra.mxu0 0.0
        %6918 = vmatprep.subr.mxu0 0.0
        %6919 = vmatpush1.msra.mxu0 0.0
        %6920 = vmatprep.subr.mxu0 0.0
        %6921 = vmatpush1.msra.mxu0 0.0
        %6922 = vmatprep.subr.mxu0 0.0
        %6923 = vmatpush1.msra.mxu0 0.0
        %6924 = vmatprep.subr.mxu0 0.0
        %6925 = vmatpush1.msra.mxu0 0.0
        %6926 = vmatprep.subr.mxu0 0.0
        %6927 = vmatpush1.msra.mxu0 0.0
        %6928 = vmatprep.subr.mxu0 0.0
        %v6929 = vand.u32 %v4314, 4294901760
        %6930 = vmatpush1.msra.mxu0 %v6929
        %6931 = vmatprep.subr.mxu0 0.0
        %v6932 = vand.u32 %v4313, 4294901760
        %6933 = vmatpush1.msra.mxu0 %v6932
        %6934 = vmatprep.subr.mxu0 0.0
        %6935 = vmatpush2.msra.mxu0 0.0
        %6936 = vmatprep.subr.mxu0 0.0
        %6937 = vmatpush2.msra.mxu0 0.0
        %6938 = vmatprep.subr.mxu0 0.0
        %6939 = vmatpush2.msra.mxu0 0.0
        %6940 = vmatprep.subr.mxu0 0.0
        %6941 = vmatpush2.msra.mxu0 0.0
        %6942 = vmatprep.subr.mxu0 0.0
        %6943 = vmatpush2.msra.mxu0 0.0
        %6944 = vmatprep.subr.mxu0 0.0
        %6945 = vmatpush2.msra.mxu0 0.0
        %6946 = vmatprep.subr.mxu0 0.0
        %6947 = vmatpush2.msra.mxu0 0.0
        %6948 = vmatprep.subr.mxu0 0.0
        %6949 = vmatpush2.msra.mxu0 0.0
        %6950 = vmatprep.subr.mxu0 0.0
        %6951 = vmatpush2.msra.mxu0 0.0
        %6952 = vmatprep.subr.mxu0 0.0
        %6953 = vmatpush2.msra.mxu0 0.0
        %6954 = vmatprep.subr.mxu0 0.0
        %6955 = vmatpush2.msra.mxu0 0.0
        %6956 = vmatprep.subr.mxu0 0.0
        %6957 = vmatpush2.msra.mxu0 0.0
        %6958 = vmatprep.subr.mxu0 0.0
        %6959 = vmatpush2.msra.mxu0 0.0
        %6960 = vmatprep.subr.mxu0 0.0
        %6961 = vmatpush2.msra.mxu0 0.0
        %6962 = vmatprep.subr.mxu0 0.0
        %6963 = vmatpush2.msra.mxu0 0.0
        %6964 = vmatprep.subr.mxu0 0.0
        %6965 = vmatpush2.msra.mxu0 0.0
        %6966 = vmatprep.mubr.f32.mxu0 0.0
        %v6967 = vand.u32 %v6232, 4294901760
        %6968 = vmatmul.mubr.f32.gmra.mxu0 %v6967
        %v6969 = vpop.f32.mrf.mxu0
        %v6970 = vadd.f32 %v6855, %v6969
        %v6971 = vpop.f32.mrf.mxu0
        %6972 = vmatprep.mubr.f32.mxu0 0.0
        %v6973 = vand.u32 %v6235, 4294901760
        %6974 = vmatmul.mubr.f32.gmra.mxu0 %v6973
        %v6975 = vpop.f32.mrf.mxu0
        %v6976 = vadd.f32 %v6861, %v6975
        %v6977 = vpop.f32.mrf.mxu0
        %6978 = vmatprep.mubr.f32.mxu0 0.0
        %v6979 = vand.u32 %v6238, 4294901760
        %6980 = vmatmul.mubr.f32.gmra.mxu0 %v6979
        %v6981 = vpop.f32.mrf.mxu0
        %v6982 = vadd.f32 %v6867, %v6981
        %v6983 = vpop.f32.mrf.mxu0
        %6984 = vmatprep.mubr.f32.mxu0 0.0
        %v6985 = vand.u32 %v6241, 4294901760
        %6986 = vmatmul.mubr.f32.gmra.mxu0 %v6985
        %v6987 = vpop.f32.mrf.mxu0
        %v6988 = vadd.f32 %v6873, %v6987
        %v6989 = vpop.f32.mrf.mxu0
        %6990 = vmatprep.mubr.f32.mxu0 0.0
        %v6991 = vand.u32 %v6244, 4294901760
        %6992 = vmatmul.mubr.f32.gmra.mxu0 %v6991
        %v6993 = vpop.f32.mrf.mxu0
        %v6994 = vadd.f32 %v6879, %v6993
        %v6995 = vpop.f32.mrf.mxu0
        %6996 = vmatprep.mubr.f32.mxu0 0.0
        %v6997 = vand.u32 %v6247, 4294901760
        %6998 = vmatmul.mubr.f32.gmra.mxu0 %v6997
        %v6999 = vpop.f32.mrf.mxu0
        %v7000 = vadd.f32 %v6885, %v6999
        %v7001 = vpop.f32.mrf.mxu0
        %7002 = vmatprep.mubr.f32.mxu0 0.0
        %v7003 = vand.u32 %v6250, 4294901760
        %7004 = vmatmul.mubr.f32.gmra.mxu0 %v7003
        %v7005 = vpop.f32.mrf.mxu0
        %v7006 = vadd.f32 %v6891, %v7005
        %v7007 = vpop.f32.mrf.mxu0
        %7008 = vmatprep.mubr.f32.mxu0 0.0
        %v7009 = vand.u32 %v6253, 4294901760
        %7010 = vmatmul.mubr.f32.gmra.mxu0 %v7009
        %v7011 = vpop.f32.mrf.mxu0
        %v7012 = vadd.f32 %v6897, %v7011
        %v7013 = vpop.f32.mrf.mxu0
        %7014 = vdwg.mxu0
        %v7015 = vsub.f32 %v4287, %v6970
        %v7016 = vsub.f32 %v4288, %v6976
        %v7017 = vsub.f32 %v4289, %v6982
        %v7018 = vsub.f32 %v4290, %v6988
        %v7019 = vsub.f32 %v4291, %v6994
        %v7020 = vsub.f32 %v4292, %v7000
        %v7021 = vsub.f32 %v4293, %v7006
        %v7022 = vsub.f32 %v4294, %v7012
        %v7024 = vsel %vm2490, %v6223, 0
        %v7027 = vsel %vm2490, %v6224, 0
        %v7030 = vsel %vm2490, %v6225, 0
        %v7033 = vsel %vm2490, %v6226, 0
        %v7036 = vsel %vm2490, %v6227, 0
        %v7039 = vsel %vm2490, %v6228, 0
        %v7042 = vsel %vm2490, %v6229, 0
        %v7045 = vsel %vm2490, %v6230, 0
        %7047 = vmatprep.subr.mxu0 0.0
        %7048 = vmatpush1.msra.mxu0 0.0
        %7049 = vmatprep.subr.mxu0 0.0
        %7050 = vmatpush1.msra.mxu0 0.0
        %7051 = vmatprep.subr.mxu0 0.0
        %7052 = vmatpush1.msra.mxu0 0.0
        %7053 = vmatprep.subr.mxu0 0.0
        %7054 = vmatpush1.msra.mxu0 0.0
        %7055 = vmatprep.subr.mxu0 0.0
        %7056 = vmatpush1.msra.mxu0 0.0
        %7057 = vmatprep.subr.mxu0 0.0
        %7058 = vmatpush1.msra.mxu0 0.0
        %7059 = vmatprep.subr.mxu0 0.0
        %7060 = vmatpush1.msra.mxu0 0.0
        %7061 = vmatprep.subr.mxu0 0.0
        %7062 = vmatpush1.msra.mxu0 0.0
        %7063 = vmatprep.subr.mxu0 0.0
        %7064 = vmatpush1.msra.mxu0 0.0
        %7065 = vmatprep.subr.mxu0 0.0
        %7066 = vmatpush1.msra.mxu0 0.0
        %7067 = vmatprep.subr.mxu0 0.0
        %7068 = vmatpush1.msra.mxu0 0.0
        %7069 = vmatprep.subr.mxu0 0.0
        %7070 = vmatpush1.msra.mxu0 0.0
        %7071 = vmatprep.subr.mxu0 0.0
        %7072 = vmatpush1.msra.mxu0 0.0
        %7073 = vmatprep.subr.mxu0 0.0
        %7074 = vmatpush1.msra.mxu0 0.0
        %7075 = vmatprep.subr.mxu0 0.0
        %v7076 = vand.u32 %v4314, 4294901760
        %7077 = vmatpush1.msra.mxu0 %v7076
        %7078 = vmatprep.subr.mxu0 0.0
        %v7079 = vand.u32 %v4313, 4294901760
        %7080 = vmatpush1.msra.mxu0 %v7079
        %7081 = vmatprep.subr.mxu0 0.0
        %7082 = vmatpush2.msra.mxu0 0.0
        %7083 = vmatprep.subr.mxu0 0.0
        %7084 = vmatpush2.msra.mxu0 0.0
        %7085 = vmatprep.subr.mxu0 0.0
        %7086 = vmatpush2.msra.mxu0 0.0
        %7087 = vmatprep.subr.mxu0 0.0
        %7088 = vmatpush2.msra.mxu0 0.0
        %7089 = vmatprep.subr.mxu0 0.0
        %7090 = vmatpush2.msra.mxu0 0.0
        %7091 = vmatprep.subr.mxu0 0.0
        %7092 = vmatpush2.msra.mxu0 0.0
        %7093 = vmatprep.subr.mxu0 0.0
        %7094 = vmatpush2.msra.mxu0 0.0
        %7095 = vmatprep.subr.mxu0 0.0
        %7096 = vmatpush2.msra.mxu0 0.0
        %7097 = vmatprep.subr.mxu0 0.0
        %7098 = vmatpush2.msra.mxu0 0.0
        %7099 = vmatprep.subr.mxu0 0.0
        %7100 = vmatpush2.msra.mxu0 0.0
        %7101 = vmatprep.subr.mxu0 0.0
        %7102 = vmatpush2.msra.mxu0 0.0
        %7103 = vmatprep.subr.mxu0 0.0
        %7104 = vmatpush2.msra.mxu0 0.0
        %7105 = vmatprep.subr.mxu0 0.0
        %7106 = vmatpush2.msra.mxu0 0.0
        %7107 = vmatprep.subr.mxu0 0.0
        %7108 = vmatpush2.msra.mxu0 0.0
        %7109 = vmatprep.subr.mxu0 0.0
        %7110 = vmatpush2.msra.mxu0 0.0
        %7111 = vmatprep.subr.mxu0 0.0
        %7112 = vmatpush2.msra.mxu0 0.0
        %7113 = vmatprep.mubr.f32.mxu0 0.0
        %v7114 = vand.u32 %v7024, 4294901760
        %v7115 = vsub.f32 %v7024, %v7114
        %v7116 = vand.u32 %v7115, 4294901760
        %v7117 = vsub.f32 %v7115, %v7116
        %v7118 = vand.u32 %v7117, 4294901760
        %7119 = vmatmul.mubr.f32.gmra.mxu0 %v7118
        %v7120 = vpop.f32.mrf.mxu0
        %v7121 = vadd.f32 1e-05, %v7120
        %v7122 = vpop.f32.mrf.mxu0
        %7123 = vmatprep.mubr.f32.mxu0 0.0
        %v7124 = vand.u32 %v7027, 4294901760
        %v7125 = vsub.f32 %v7027, %v7124
        %v7126 = vand.u32 %v7125, 4294901760
        %v7127 = vsub.f32 %v7125, %v7126
        %v7128 = vand.u32 %v7127, 4294901760
        %7129 = vmatmul.mubr.f32.gmra.mxu0 %v7128
        %v7130 = vpop.f32.mrf.mxu0
        %v7131 = vadd.f32 1e-05, %v7130
        %v7132 = vpop.f32.mrf.mxu0
        %7133 = vmatprep.mubr.f32.mxu0 0.0
        %v7134 = vand.u32 %v7030, 4294901760
        %v7135 = vsub.f32 %v7030, %v7134
        %v7136 = vand.u32 %v7135, 4294901760
        %v7137 = vsub.f32 %v7135, %v7136
        %v7138 = vand.u32 %v7137, 4294901760
        %7139 = vmatmul.mubr.f32.gmra.mxu0 %v7138
        %v7140 = vpop.f32.mrf.mxu0
        %v7141 = vadd.f32 1e-05, %v7140
        %v7142 = vpop.f32.mrf.mxu0
        %7143 = vmatprep.mubr.f32.mxu0 0.0
        %v7144 = vand.u32 %v7033, 4294901760
        %v7145 = vsub.f32 %v7033, %v7144
        %v7146 = vand.u32 %v7145, 4294901760
        %v7147 = vsub.f32 %v7145, %v7146
        %v7148 = vand.u32 %v7147, 4294901760
        %7149 = vmatmul.mubr.f32.gmra.mxu0 %v7148
        %v7150 = vpop.f32.mrf.mxu0
        %v7151 = vadd.f32 1e-05, %v7150
        %v7152 = vpop.f32.mrf.mxu0
        %7153 = vmatprep.mubr.f32.mxu0 0.0
        %v7154 = vand.u32 %v7036, 4294901760
        %v7155 = vsub.f32 %v7036, %v7154
        %v7156 = vand.u32 %v7155, 4294901760
        %v7157 = vsub.f32 %v7155, %v7156
        %v7158 = vand.u32 %v7157, 4294901760
        %7159 = vmatmul.mubr.f32.gmra.mxu0 %v7158
        %v7160 = vpop.f32.mrf.mxu0
        %v7161 = vadd.f32 1e-05, %v7160
        %v7162 = vpop.f32.mrf.mxu0
        %7163 = vmatprep.mubr.f32.mxu0 0.0
        %v7164 = vand.u32 %v7039, 4294901760
        %v7165 = vsub.f32 %v7039, %v7164
        %v7166 = vand.u32 %v7165, 4294901760
        %v7167 = vsub.f32 %v7165, %v7166
        %v7168 = vand.u32 %v7167, 4294901760
        %7169 = vmatmul.mubr.f32.gmra.mxu0 %v7168
        %v7170 = vpop.f32.mrf.mxu0
        %v7171 = vadd.f32 1e-05, %v7170
        %v7172 = vpop.f32.mrf.mxu0
        %7173 = vmatprep.mubr.f32.mxu0 0.0
        %v7174 = vand.u32 %v7042, 4294901760
        %v7175 = vsub.f32 %v7042, %v7174
        %v7176 = vand.u32 %v7175, 4294901760
        %v7177 = vsub.f32 %v7175, %v7176
        %v7178 = vand.u32 %v7177, 4294901760
        %7179 = vmatmul.mubr.f32.gmra.mxu0 %v7178
        %v7180 = vpop.f32.mrf.mxu0
        %v7181 = vadd.f32 1e-05, %v7180
        %v7182 = vpop.f32.mrf.mxu0
        %7183 = vmatprep.mubr.f32.mxu0 0.0
        %v7184 = vand.u32 %v7045, 4294901760
        %v7185 = vsub.f32 %v7045, %v7184
        %v7186 = vand.u32 %v7185, 4294901760
        %v7187 = vsub.f32 %v7185, %v7186
        %v7188 = vand.u32 %v7187, 4294901760
        %7189 = vmatmul.mubr.f32.gmra.mxu0 %v7188
        %v7190 = vpop.f32.mrf.mxu0
        %v7191 = vadd.f32 1e-05, %v7190
        %v7192 = vpop.f32.mrf.mxu0
        %7193 = vdwg.mxu0
        %7194 = vmatprep.subr.mxu0 0.0
        %7195 = vmatpush1.msra.mxu0 0.0
        %7196 = vmatprep.subr.mxu0 0.0
        %7197 = vmatpush1.msra.mxu0 0.0
        %7198 = vmatprep.subr.mxu0 0.0
        %7199 = vmatpush1.msra.mxu0 0.0
        %7200 = vmatprep.subr.mxu0 0.0
        %7201 = vmatpush1.msra.mxu0 0.0
        %7202 = vmatprep.subr.mxu0 0.0
        %7203 = vmatpush1.msra.mxu0 0.0
        %7204 = vmatprep.subr.mxu0 0.0
        %7205 = vmatpush1.msra.mxu0 0.0
        %7206 = vmatprep.subr.mxu0 0.0
        %7207 = vmatpush1.msra.mxu0 0.0
        %7208 = vmatprep.subr.mxu0 0.0
        %7209 = vmatpush1.msra.mxu0 0.0
        %7210 = vmatprep.subr.mxu0 0.0
        %7211 = vmatpush1.msra.mxu0 0.0
        %7212 = vmatprep.subr.mxu0 0.0
        %7213 = vmatpush1.msra.mxu0 0.0
        %7214 = vmatprep.subr.mxu0 0.0
        %7215 = vmatpush1.msra.mxu0 0.0
        %7216 = vmatprep.subr.mxu0 0.0
        %7217 = vmatpush1.msra.mxu0 0.0
        %7218 = vmatprep.subr.mxu0 0.0
        %7219 = vmatpush1.msra.mxu0 0.0
        %7220 = vmatprep.subr.mxu0 0.0
        %7221 = vmatpush1.msra.mxu0 0.0
        %7222 = vmatprep.subr.mxu0 0.0
        %v7223 = vand.u32 %v4314, 4294901760
        %v7224 = vsub.f32 %v4314, %v7223
        %v7225 = vand.u32 %v7224, 4294901760
        %v7226 = vsub.f32 %v7224, %v7225
        %v7227 = vand.u32 %v7226, 4294901760
        %7228 = vmatpush1.msra.mxu0 %v7227
        %7229 = vmatprep.subr.mxu0 0.0
        %v7230 = vand.u32 %v4313, 4294901760
        %v7231 = vsub.f32 %v4313, %v7230
        %v7232 = vand.u32 %v7231, 4294901760
        %v7233 = vsub.f32 %v7231, %v7232
        %v7234 = vand.u32 %v7233, 4294901760
        %7235 = vmatpush1.msra.mxu0 %v7234
        %7236 = vmatprep.subr.mxu0 0.0
        %7237 = vmatpush2.msra.mxu0 0.0
        %7238 = vmatprep.subr.mxu0 0.0
        %7239 = vmatpush2.msra.mxu0 0.0
        %7240 = vmatprep.subr.mxu0 0.0
        %7241 = vmatpush2.msra.mxu0 0.0
        %7242 = vmatprep.subr.mxu0 0.0
        %7243 = vmatpush2.msra.mxu0 0.0
        %7244 = vmatprep.subr.mxu0 0.0
        %7245 = vmatpush2.msra.mxu0 0.0
        %7246 = vmatprep.subr.mxu0 0.0
        %7247 = vmatpush2.msra.mxu0 0.0
        %7248 = vmatprep.subr.mxu0 0.0
        %7249 = vmatpush2.msra.mxu0 0.0
        %7250 = vmatprep.subr.mxu0 0.0
        %7251 = vmatpush2.msra.mxu0 0.0
        %7252 = vmatprep.subr.mxu0 0.0
        %7253 = vmatpush2.msra.mxu0 0.0
        %7254 = vmatprep.subr.mxu0 0.0
        %7255 = vmatpush2.msra.mxu0 0.0
        %7256 = vmatprep.subr.mxu0 0.0
        %7257 = vmatpush2.msra.mxu0 0.0
        %7258 = vmatprep.subr.mxu0 0.0
        %7259 = vmatpush2.msra.mxu0 0.0
        %7260 = vmatprep.subr.mxu0 0.0
        %7261 = vmatpush2.msra.mxu0 0.0
        %7262 = vmatprep.subr.mxu0 0.0
        %7263 = vmatpush2.msra.mxu0 0.0
        %7264 = vmatprep.subr.mxu0 0.0
        %7265 = vmatpush2.msra.mxu0 0.0
        %7266 = vmatprep.subr.mxu0 0.0
        %7267 = vmatpush2.msra.mxu0 0.0
        %7268 = vmatprep.mubr.f32.mxu0 0.0
        %v7269 = vand.u32 %v7024, 4294901760
        %7270 = vmatmul.mubr.f32.gmra.mxu0 %v7269
        %v7271 = vpop.f32.mrf.mxu0
        %v7272 = vadd.f32 %v7121, %v7271
        %v7273 = vpop.f32.mrf.mxu0
        %7274 = vmatprep.mubr.f32.mxu0 0.0
        %v7275 = vand.u32 %v7027, 4294901760
        %7276 = vmatmul.mubr.f32.gmra.mxu0 %v7275
        %v7277 = vpop.f32.mrf.mxu0
        %v7278 = vadd.f32 %v7131, %v7277
        %v7279 = vpop.f32.mrf.mxu0
        %7280 = vmatprep.mubr.f32.mxu0 0.0
        %v7281 = vand.u32 %v7030, 4294901760
        %7282 = vmatmul.mubr.f32.gmra.mxu0 %v7281
        %v7283 = vpop.f32.mrf.mxu0
        %v7284 = vadd.f32 %v7141, %v7283
        %v7285 = vpop.f32.mrf.mxu0
        %7286 = vmatprep.mubr.f32.mxu0 0.0
        %v7287 = vand.u32 %v7033, 4294901760
        %7288 = vmatmul.mubr.f32.gmra.mxu0 %v7287
        %v7289 = vpop.f32.mrf.mxu0
        %v7290 = vadd.f32 %v7151, %v7289
        %v7291 = vpop.f32.mrf.mxu0
        %7292 = vmatprep.mubr.f32.mxu0 0.0
        %v7293 = vand.u32 %v7036, 4294901760
        %7294 = vmatmul.mubr.f32.gmra.mxu0 %v7293
        %v7295 = vpop.f32.mrf.mxu0
        %v7296 = vadd.f32 %v7161, %v7295
        %v7297 = vpop.f32.mrf.mxu0
        %7298 = vmatprep.mubr.f32.mxu0 0.0
        %v7299 = vand.u32 %v7039, 4294901760
        %7300 = vmatmul.mubr.f32.gmra.mxu0 %v7299
        %v7301 = vpop.f32.mrf.mxu0
        %v7302 = vadd.f32 %v7171, %v7301
        %v7303 = vpop.f32.mrf.mxu0
        %7304 = vmatprep.mubr.f32.mxu0 0.0
        %v7305 = vand.u32 %v7042, 4294901760
        %7306 = vmatmul.mubr.f32.gmra.mxu0 %v7305
        %v7307 = vpop.f32.mrf.mxu0
        %v7308 = vadd.f32 %v7181, %v7307
        %v7309 = vpop.f32.mrf.mxu0
        %7310 = vmatprep.mubr.f32.mxu0 0.0
        %v7311 = vand.u32 %v7045, 4294901760
        %7312 = vmatmul.mubr.f32.gmra.mxu0 %v7311
        %v7313 = vpop.f32.mrf.mxu0
        %v7314 = vadd.f32 %v7191, %v7313
        %v7315 = vpop.f32.mrf.mxu0
        %7316 = vdwg.mxu0
        %7317 = vmatprep.subr.mxu0 0.0
        %7318 = vmatpush1.msra.mxu0 0.0
        %7319 = vmatprep.subr.mxu0 0.0
        %7320 = vmatpush1.msra.mxu0 0.0
        %7321 = vmatprep.subr.mxu0 0.0
        %7322 = vmatpush1.msra.mxu0 0.0
        %7323 = vmatprep.subr.mxu0 0.0
        %7324 = vmatpush1.msra.mxu0 0.0
        %7325 = vmatprep.subr.mxu0 0.0
        %7326 = vmatpush1.msra.mxu0 0.0
        %7327 = vmatprep.subr.mxu0 0.0
        %7328 = vmatpush1.msra.mxu0 0.0
        %7329 = vmatprep.subr.mxu0 0.0
        %7330 = vmatpush1.msra.mxu0 0.0
        %7331 = vmatprep.subr.mxu0 0.0
        %7332 = vmatpush1.msra.mxu0 0.0
        %7333 = vmatprep.subr.mxu0 0.0
        %7334 = vmatpush1.msra.mxu0 0.0
        %7335 = vmatprep.subr.mxu0 0.0
        %7336 = vmatpush1.msra.mxu0 0.0
        %7337 = vmatprep.subr.mxu0 0.0
        %7338 = vmatpush1.msra.mxu0 0.0
        %7339 = vmatprep.subr.mxu0 0.0
        %7340 = vmatpush1.msra.mxu0 0.0
        %7341 = vmatprep.subr.mxu0 0.0
        %7342 = vmatpush1.msra.mxu0 0.0
        %7343 = vmatprep.subr.mxu0 0.0
        %7344 = vmatpush1.msra.mxu0 0.0
        %7345 = vmatprep.subr.mxu0 0.0
        %v7346 = vand.u32 %v4314, 4294901760
        %v7347 = vsub.f32 %v4314, %v7346
        %7348 = vmatpush1.msra.mxu0 %v7347
        %7349 = vmatprep.subr.mxu0 0.0
        %v7350 = vand.u32 %v4313, 4294901760
        %v7351 = vsub.f32 %v4313, %v7350
        %7352 = vmatpush1.msra.mxu0 %v7351
        %7353 = vmatprep.subr.mxu0 0.0
        %7354 = vmatpush2.msra.mxu0 0.0
        %7355 = vmatprep.subr.mxu0 0.0
        %7356 = vmatpush2.msra.mxu0 0.0
        %7357 = vmatprep.subr.mxu0 0.0
        %7358 = vmatpush2.msra.mxu0 0.0
        %7359 = vmatprep.subr.mxu0 0.0
        %7360 = vmatpush2.msra.mxu0 0.0
        %7361 = vmatprep.subr.mxu0 0.0
        %7362 = vmatpush2.msra.mxu0 0.0
        %7363 = vmatprep.subr.mxu0 0.0
        %7364 = vmatpush2.msra.mxu0 0.0
        %7365 = vmatprep.subr.mxu0 0.0
        %7366 = vmatpush2.msra.mxu0 0.0
        %7367 = vmatprep.subr.mxu0 0.0
        %7368 = vmatpush2.msra.mxu0 0.0
        %7369 = vmatprep.subr.mxu0 0.0
        %7370 = vmatpush2.msra.mxu0 0.0
        %7371 = vmatprep.subr.mxu0 0.0
        %7372 = vmatpush2.msra.mxu0 0.0
        %7373 = vmatprep.subr.mxu0 0.0
        %7374 = vmatpush2.msra.mxu0 0.0
        %7375 = vmatprep.subr.mxu0 0.0
        %7376 = vmatpush2.msra.mxu0 0.0
        %7377 = vmatprep.subr.mxu0 0.0
        %7378 = vmatpush2.msra.mxu0 0.0
        %7379 = vmatprep.subr.mxu0 0.0
        %7380 = vmatpush2.msra.mxu0 0.0
        %7381 = vmatprep.subr.mxu0 0.0
        %7382 = vmatpush2.msra.mxu0 0.0
        %7383 = vmatprep.subr.mxu0 0.0
        %7384 = vmatpush2.msra.mxu0 0.0
        %7385 = vmatprep.mubr.f32.mxu0 0.0
        %v7386 = vand.u32 %v7024, 4294901760
        %v7387 = vsub.f32 %v7024, %v7386
        %7388 = vmatmul.mubr.f32.gmra.mxu0 %v7387
        %v7389 = vpop.f32.mrf.mxu0
        %v7390 = vadd.f32 %v7272, %v7389
        %v7391 = vpop.f32.mrf.mxu0
        %7392 = vmatprep.mubr.f32.mxu0 0.0
        %v7393 = vand.u32 %v7027, 4294901760
        %v7394 = vsub.f32 %v7027, %v7393
        %7395 = vmatmul.mubr.f32.gmra.mxu0 %v7394
        %v7396 = vpop.f32.mrf.mxu0
        %v7397 = vadd.f32 %v7278, %v7396
        %v7398 = vpop.f32.mrf.mxu0
        %7399 = vmatprep.mubr.f32.mxu0 0.0
        %v7400 = vand.u32 %v7030, 4294901760
        %v7401 = vsub.f32 %v7030, %v7400
        %7402 = vmatmul.mubr.f32.gmra.mxu0 %v7401
        %v7403 = vpop.f32.mrf.mxu0
        %v7404 = vadd.f32 %v7284, %v7403
        %v7405 = vpop.f32.mrf.mxu0
        %7406 = vmatprep.mubr.f32.mxu0 0.0
        %v7407 = vand.u32 %v7033, 4294901760
        %v7408 = vsub.f32 %v7033, %v7407
        %7409 = vmatmul.mubr.f32.gmra.mxu0 %v7408
        %v7410 = vpop.f32.mrf.mxu0
        %v7411 = vadd.f32 %v7290, %v7410
        %v7412 = vpop.f32.mrf.mxu0
        %7413 = vmatprep.mubr.f32.mxu0 0.0
        %v7414 = vand.u32 %v7036, 4294901760
        %v7415 = vsub.f32 %v7036, %v7414
        %7416 = vmatmul.mubr.f32.gmra.mxu0 %v7415
        %v7417 = vpop.f32.mrf.mxu0
        %v7418 = vadd.f32 %v7296, %v7417
        %v7419 = vpop.f32.mrf.mxu0
        %7420 = vmatprep.mubr.f32.mxu0 0.0
        %v7421 = vand.u32 %v7039, 4294901760
        %v7422 = vsub.f32 %v7039, %v7421
        %7423 = vmatmul.mubr.f32.gmra.mxu0 %v7422
        %v7424 = vpop.f32.mrf.mxu0
        %v7425 = vadd.f32 %v7302, %v7424
        %v7426 = vpop.f32.mrf.mxu0
        %7427 = vmatprep.mubr.f32.mxu0 0.0
        %v7428 = vand.u32 %v7042, 4294901760
        %v7429 = vsub.f32 %v7042, %v7428
        %7430 = vmatmul.mubr.f32.gmra.mxu0 %v7429
        %v7431 = vpop.f32.mrf.mxu0
        %v7432 = vadd.f32 %v7308, %v7431
        %v7433 = vpop.f32.mrf.mxu0
        %7434 = vmatprep.mubr.f32.mxu0 0.0
        %v7435 = vand.u32 %v7045, 4294901760
        %v7436 = vsub.f32 %v7045, %v7435
        %7437 = vmatmul.mubr.f32.gmra.mxu0 %v7436
        %v7438 = vpop.f32.mrf.mxu0
        %v7439 = vadd.f32 %v7314, %v7438
        %v7440 = vpop.f32.mrf.mxu0
        %7441 = vdwg.mxu0
        %7442 = vmatprep.subr.mxu0 0.0
        %7443 = vmatpush1.msra.mxu0 0.0
        %7444 = vmatprep.subr.mxu0 0.0
        %7445 = vmatpush1.msra.mxu0 0.0
        %7446 = vmatprep.subr.mxu0 0.0
        %7447 = vmatpush1.msra.mxu0 0.0
        %7448 = vmatprep.subr.mxu0 0.0
        %7449 = vmatpush1.msra.mxu0 0.0
        %7450 = vmatprep.subr.mxu0 0.0
        %7451 = vmatpush1.msra.mxu0 0.0
        %7452 = vmatprep.subr.mxu0 0.0
        %7453 = vmatpush1.msra.mxu0 0.0
        %7454 = vmatprep.subr.mxu0 0.0
        %7455 = vmatpush1.msra.mxu0 0.0
        %7456 = vmatprep.subr.mxu0 0.0
        %7457 = vmatpush1.msra.mxu0 0.0
        %7458 = vmatprep.subr.mxu0 0.0
        %7459 = vmatpush1.msra.mxu0 0.0
        %7460 = vmatprep.subr.mxu0 0.0
        %7461 = vmatpush1.msra.mxu0 0.0
        %7462 = vmatprep.subr.mxu0 0.0
        %7463 = vmatpush1.msra.mxu0 0.0
        %7464 = vmatprep.subr.mxu0 0.0
        %7465 = vmatpush1.msra.mxu0 0.0
        %7466 = vmatprep.subr.mxu0 0.0
        %7467 = vmatpush1.msra.mxu0 0.0
        %7468 = vmatprep.subr.mxu0 0.0
        %7469 = vmatpush1.msra.mxu0 0.0
        %7470 = vmatprep.subr.mxu0 0.0
        %v7471 = vand.u32 %v4314, 4294901760
        %7472 = vmatpush1.msra.mxu0 %v7471
        %7473 = vmatprep.subr.mxu0 0.0
        %v7474 = vand.u32 %v4313, 4294901760
        %7475 = vmatpush1.msra.mxu0 %v7474
        %7476 = vmatprep.subr.mxu0 0.0
        %7477 = vmatpush2.msra.mxu0 0.0
        %7478 = vmatprep.subr.mxu0 0.0
        %7479 = vmatpush2.msra.mxu0 0.0
        %7480 = vmatprep.subr.mxu0 0.0
        %7481 = vmatpush2.msra.mxu0 0.0
        %7482 = vmatprep.subr.mxu0 0.0
        %7483 = vmatpush2.msra.mxu0 0.0
        %7484 = vmatprep.subr.mxu0 0.0
        %7485 = vmatpush2.msra.mxu0 0.0
        %7486 = vmatprep.subr.mxu0 0.0
        %7487 = vmatpush2.msra.mxu0 0.0
        %7488 = vmatprep.subr.mxu0 0.0
        %7489 = vmatpush2.msra.mxu0 0.0
        %7490 = vmatprep.subr.mxu0 0.0
        %7491 = vmatpush2.msra.mxu0 0.0
        %7492 = vmatprep.subr.mxu0 0.0
        %7493 = vmatpush2.msra.mxu0 0.0
        %7494 = vmatprep.subr.mxu0 0.0
        %7495 = vmatpush2.msra.mxu0 0.0
        %7496 = vmatprep.subr.mxu0 0.0
        %7497 = vmatpush2.msra.mxu0 0.0
        %7498 = vmatprep.subr.mxu0 0.0
        %7499 = vmatpush2.msra.mxu0 0.0
        %7500 = vmatprep.subr.mxu0 0.0
        %7501 = vmatpush2.msra.mxu0 0.0
        %7502 = vmatprep.subr.mxu0 0.0
        %7503 = vmatpush2.msra.mxu0 0.0
        %7504 = vmatprep.subr.mxu0 0.0
        %7505 = vmatpush2.msra.mxu0 0.0
        %7506 = vmatprep.subr.mxu0 0.0
        %7507 = vmatpush2.msra.mxu0 0.0
        %7508 = vmatprep.mubr.f32.mxu0 0.0
        %v7509 = vand.u32 %v7024, 4294901760
        %v7510 = vsub.f32 %v7024, %v7509
        %v7511 = vand.u32 %v7510, 4294901760
        %7512 = vmatmul.mubr.f32.gmra.mxu0 %v7511
        %v7513 = vpop.f32.mrf.mxu0
        %v7514 = vadd.f32 %v7390, %v7513
        %v7515 = vpop.f32.mrf.mxu0
        %7516 = vmatprep.mubr.f32.mxu0 0.0
        %v7517 = vand.u32 %v7027, 4294901760
        %v7518 = vsub.f32 %v7027, %v7517
        %v7519 = vand.u32 %v7518, 4294901760
        %7520 = vmatmul.mubr.f32.gmra.mxu0 %v7519
        %v7521 = vpop.f32.mrf.mxu0
        %v7522 = vadd.f32 %v7397, %v7521
        %v7523 = vpop.f32.mrf.mxu0
        %7524 = vmatprep.mubr.f32.mxu0 0.0
        %v7525 = vand.u32 %v7030, 4294901760
        %v7526 = vsub.f32 %v7030, %v7525
        %v7527 = vand.u32 %v7526, 4294901760
        %7528 = vmatmul.mubr.f32.gmra.mxu0 %v7527
        %v7529 = vpop.f32.mrf.mxu0
        %v7530 = vadd.f32 %v7404, %v7529
        %v7531 = vpop.f32.mrf.mxu0
        %7532 = vmatprep.mubr.f32.mxu0 0.0
        %v7533 = vand.u32 %v7033, 4294901760
        %v7534 = vsub.f32 %v7033, %v7533
        %v7535 = vand.u32 %v7534, 4294901760
        %7536 = vmatmul.mubr.f32.gmra.mxu0 %v7535
        %v7537 = vpop.f32.mrf.mxu0
        %v7538 = vadd.f32 %v7411, %v7537
        %v7539 = vpop.f32.mrf.mxu0
        %7540 = vmatprep.mubr.f32.mxu0 0.0
        %v7541 = vand.u32 %v7036, 4294901760
        %v7542 = vsub.f32 %v7036, %v7541
        %v7543 = vand.u32 %v7542, 4294901760
        %7544 = vmatmul.mubr.f32.gmra.mxu0 %v7543
        %v7545 = vpop.f32.mrf.mxu0
        %v7546 = vadd.f32 %v7418, %v7545
        %v7547 = vpop.f32.mrf.mxu0
        %7548 = vmatprep.mubr.f32.mxu0 0.0
        %v7549 = vand.u32 %v7039, 4294901760
        %v7550 = vsub.f32 %v7039, %v7549
        %v7551 = vand.u32 %v7550, 4294901760
        %7552 = vmatmul.mubr.f32.gmra.mxu0 %v7551
        %v7553 = vpop.f32.mrf.mxu0
        %v7554 = vadd.f32 %v7425, %v7553
        %v7555 = vpop.f32.mrf.mxu0
        %7556 = vmatprep.mubr.f32.mxu0 0.0
        %v7557 = vand.u32 %v7042, 4294901760
        %v7558 = vsub.f32 %v7042, %v7557
        %v7559 = vand.u32 %v7558, 4294901760
        %7560 = vmatmul.mubr.f32.gmra.mxu0 %v7559
        %v7561 = vpop.f32.mrf.mxu0
        %v7562 = vadd.f32 %v7432, %v7561
        %v7563 = vpop.f32.mrf.mxu0
        %7564 = vmatprep.mubr.f32.mxu0 0.0
        %v7565 = vand.u32 %v7045, 4294901760
        %v7566 = vsub.f32 %v7045, %v7565
        %v7567 = vand.u32 %v7566, 4294901760
        %7568 = vmatmul.mubr.f32.gmra.mxu0 %v7567
        %v7569 = vpop.f32.mrf.mxu0
        %v7570 = vadd.f32 %v7439, %v7569
        %v7571 = vpop.f32.mrf.mxu0
        %7572 = vdwg.mxu0
        %7573 = vmatprep.subr.mxu0 0.0
        %7574 = vmatpush1.msra.mxu0 0.0
        %7575 = vmatprep.subr.mxu0 0.0
        %7576 = vmatpush1.msra.mxu0 0.0
        %7577 = vmatprep.subr.mxu0 0.0
        %7578 = vmatpush1.msra.mxu0 0.0
        %7579 = vmatprep.subr.mxu0 0.0
        %7580 = vmatpush1.msra.mxu0 0.0
        %7581 = vmatprep.subr.mxu0 0.0
        %7582 = vmatpush1.msra.mxu0 0.0
        %7583 = vmatprep.subr.mxu0 0.0
        %7584 = vmatpush1.msra.mxu0 0.0
        %7585 = vmatprep.subr.mxu0 0.0
        %7586 = vmatpush1.msra.mxu0 0.0
        %7587 = vmatprep.subr.mxu0 0.0
        %7588 = vmatpush1.msra.mxu0 0.0
        %7589 = vmatprep.subr.mxu0 0.0
        %7590 = vmatpush1.msra.mxu0 0.0
        %7591 = vmatprep.subr.mxu0 0.0
        %7592 = vmatpush1.msra.mxu0 0.0
        %7593 = vmatprep.subr.mxu0 0.0
        %7594 = vmatpush1.msra.mxu0 0.0
        %7595 = vmatprep.subr.mxu0 0.0
        %7596 = vmatpush1.msra.mxu0 0.0
        %7597 = vmatprep.subr.mxu0 0.0
        %7598 = vmatpush1.msra.mxu0 0.0
        %7599 = vmatprep.subr.mxu0 0.0
        %7600 = vmatpush1.msra.mxu0 0.0
        %7601 = vmatprep.subr.mxu0 0.0
        %v7602 = vand.u32 %v4314, 4294901760
        %v7603 = vsub.f32 %v4314, %v7602
        %v7604 = vand.u32 %v7603, 4294901760
        %7605 = vmatpush1.msra.mxu0 %v7604
        %7606 = vmatprep.subr.mxu0 0.0
        %v7607 = vand.u32 %v4313, 4294901760
        %v7608 = vsub.f32 %v4313, %v7607
        %v7609 = vand.u32 %v7608, 4294901760
        %7610 = vmatpush1.msra.mxu0 %v7609
        %7611 = vmatprep.subr.mxu0 0.0
        %7612 = vmatpush2.msra.mxu0 0.0
        %7613 = vmatprep.subr.mxu0 0.0
        %7614 = vmatpush2.msra.mxu0 0.0
        %7615 = vmatprep.subr.mxu0 0.0
        %7616 = vmatpush2.msra.mxu0 0.0
        %7617 = vmatprep.subr.mxu0 0.0
        %7618 = vmatpush2.msra.mxu0 0.0
        %7619 = vmatprep.subr.mxu0 0.0
        %7620 = vmatpush2.msra.mxu0 0.0
        %7621 = vmatprep.subr.mxu0 0.0
        %7622 = vmatpush2.msra.mxu0 0.0
        %7623 = vmatprep.subr.mxu0 0.0
        %7624 = vmatpush2.msra.mxu0 0.0
        %7625 = vmatprep.subr.mxu0 0.0
        %7626 = vmatpush2.msra.mxu0 0.0
        %7627 = vmatprep.subr.mxu0 0.0
        %7628 = vmatpush2.msra.mxu0 0.0
        %7629 = vmatprep.subr.mxu0 0.0
        %7630 = vmatpush2.msra.mxu0 0.0
        %7631 = vmatprep.subr.mxu0 0.0
        %7632 = vmatpush2.msra.mxu0 0.0
        %7633 = vmatprep.subr.mxu0 0.0
        %7634 = vmatpush2.msra.mxu0 0.0
        %7635 = vmatprep.subr.mxu0 0.0
        %7636 = vmatpush2.msra.mxu0 0.0
        %7637 = vmatprep.subr.mxu0 0.0
        %7638 = vmatpush2.msra.mxu0 0.0
        %7639 = vmatprep.subr.mxu0 0.0
        %7640 = vmatpush2.msra.mxu0 0.0
        %7641 = vmatprep.subr.mxu0 0.0
        %7642 = vmatpush2.msra.mxu0 0.0
        %7643 = vmatprep.mubr.f32.mxu0 0.0
        %v7644 = vand.u32 %v7024, 4294901760
        %7645 = vmatmul.mubr.f32.gmra.mxu0 %v7644
        %v7646 = vpop.f32.mrf.mxu0
        %v7647 = vadd.f32 %v7514, %v7646
        %v7648 = vpop.f32.mrf.mxu0
        %7649 = vmatprep.mubr.f32.mxu0 0.0
        %v7650 = vand.u32 %v7027, 4294901760
        %7651 = vmatmul.mubr.f32.gmra.mxu0 %v7650
        %v7652 = vpop.f32.mrf.mxu0
        %v7653 = vadd.f32 %v7522, %v7652
        %v7654 = vpop.f32.mrf.mxu0
        %7655 = vmatprep.mubr.f32.mxu0 0.0
        %v7656 = vand.u32 %v7030, 4294901760
        %7657 = vmatmul.mubr.f32.gmra.mxu0 %v7656
        %v7658 = vpop.f32.mrf.mxu0
        %v7659 = vadd.f32 %v7530, %v7658
        %v7660 = vpop.f32.mrf.mxu0
        %7661 = vmatprep.mubr.f32.mxu0 0.0
        %v7662 = vand.u32 %v7033, 4294901760
        %7663 = vmatmul.mubr.f32.gmra.mxu0 %v7662
        %v7664 = vpop.f32.mrf.mxu0
        %v7665 = vadd.f32 %v7538, %v7664
        %v7666 = vpop.f32.mrf.mxu0
        %7667 = vmatprep.mubr.f32.mxu0 0.0
        %v7668 = vand.u32 %v7036, 4294901760
        %7669 = vmatmul.mubr.f32.gmra.mxu0 %v7668
        %v7670 = vpop.f32.mrf.mxu0
        %v7671 = vadd.f32 %v7546, %v7670
        %v7672 = vpop.f32.mrf.mxu0
        %7673 = vmatprep.mubr.f32.mxu0 0.0
        %v7674 = vand.u32 %v7039, 4294901760
        %7675 = vmatmul.mubr.f32.gmra.mxu0 %v7674
        %v7676 = vpop.f32.mrf.mxu0
        %v7677 = vadd.f32 %v7554, %v7676
        %v7678 = vpop.f32.mrf.mxu0
        %7679 = vmatprep.mubr.f32.mxu0 0.0
        %v7680 = vand.u32 %v7042, 4294901760
        %7681 = vmatmul.mubr.f32.gmra.mxu0 %v7680
        %v7682 = vpop.f32.mrf.mxu0
        %v7683 = vadd.f32 %v7562, %v7682
        %v7684 = vpop.f32.mrf.mxu0
        %7685 = vmatprep.mubr.f32.mxu0 0.0
        %v7686 = vand.u32 %v7045, 4294901760
        %7687 = vmatmul.mubr.f32.gmra.mxu0 %v7686
        %v7688 = vpop.f32.mrf.mxu0
        %v7689 = vadd.f32 %v7570, %v7688
        %v7690 = vpop.f32.mrf.mxu0
        %7691 = vdwg.mxu0
        %7692 = vmatprep.subr.mxu0 0.0
        %7693 = vmatpush1.msra.mxu0 0.0
        %7694 = vmatprep.subr.mxu0 0.0
        %7695 = vmatpush1.msra.mxu0 0.0
        %7696 = vmatprep.subr.mxu0 0.0
        %7697 = vmatpush1.msra.mxu0 0.0
        %7698 = vmatprep.subr.mxu0 0.0
        %7699 = vmatpush1.msra.mxu0 0.0
        %7700 = vmatprep.subr.mxu0 0.0
        %7701 = vmatpush1.msra.mxu0 0.0
        %7702 = vmatprep.subr.mxu0 0.0
        %7703 = vmatpush1.msra.mxu0 0.0
        %7704 = vmatprep.subr.mxu0 0.0
        %7705 = vmatpush1.msra.mxu0 0.0
        %7706 = vmatprep.subr.mxu0 0.0
        %7707 = vmatpush1.msra.mxu0 0.0
        %7708 = vmatprep.subr.mxu0 0.0
        %7709 = vmatpush1.msra.mxu0 0.0
        %7710 = vmatprep.subr.mxu0 0.0
        %7711 = vmatpush1.msra.mxu0 0.0
        %7712 = vmatprep.subr.mxu0 0.0
        %7713 = vmatpush1.msra.mxu0 0.0
        %7714 = vmatprep.subr.mxu0 0.0
        %7715 = vmatpush1.msra.mxu0 0.0
        %7716 = vmatprep.subr.mxu0 0.0
        %7717 = vmatpush1.msra.mxu0 0.0
        %7718 = vmatprep.subr.mxu0 0.0
        %7719 = vmatpush1.msra.mxu0 0.0
        %7720 = vmatprep.subr.mxu0 0.0
        %v7721 = vand.u32 %v4314, 4294901760
        %7722 = vmatpush1.msra.mxu0 %v7721
        %7723 = vmatprep.subr.mxu0 0.0
        %v7724 = vand.u32 %v4313, 4294901760
        %7725 = vmatpush1.msra.mxu0 %v7724
        %7726 = vmatprep.subr.mxu0 0.0
        %7727 = vmatpush2.msra.mxu0 0.0
        %7728 = vmatprep.subr.mxu0 0.0
        %7729 = vmatpush2.msra.mxu0 0.0
        %7730 = vmatprep.subr.mxu0 0.0
        %7731 = vmatpush2.msra.mxu0 0.0
        %7732 = vmatprep.subr.mxu0 0.0
        %7733 = vmatpush2.msra.mxu0 0.0
        %7734 = vmatprep.subr.mxu0 0.0
        %7735 = vmatpush2.msra.mxu0 0.0
        %7736 = vmatprep.subr.mxu0 0.0
        %7737 = vmatpush2.msra.mxu0 0.0
        %7738 = vmatprep.subr.mxu0 0.0
        %7739 = vmatpush2.msra.mxu0 0.0
        %7740 = vmatprep.subr.mxu0 0.0
        %7741 = vmatpush2.msra.mxu0 0.0
        %7742 = vmatprep.subr.mxu0 0.0
        %7743 = vmatpush2.msra.mxu0 0.0
        %7744 = vmatprep.subr.mxu0 0.0
        %7745 = vmatpush2.msra.mxu0 0.0
        %7746 = vmatprep.subr.mxu0 0.0
        %7747 = vmatpush2.msra.mxu0 0.0
        %7748 = vmatprep.subr.mxu0 0.0
        %7749 = vmatpush2.msra.mxu0 0.0
        %7750 = vmatprep.subr.mxu0 0.0
        %7751 = vmatpush2.msra.mxu0 0.0
        %7752 = vmatprep.subr.mxu0 0.0
        %7753 = vmatpush2.msra.mxu0 0.0
        %7754 = vmatprep.subr.mxu0 0.0
        %7755 = vmatpush2.msra.mxu0 0.0
        %7756 = vmatprep.subr.mxu0 0.0
        %7757 = vmatpush2.msra.mxu0 0.0
        %7758 = vmatprep.mubr.f32.mxu0 0.0
        %v7759 = vand.u32 %v7024, 4294901760
        %7760 = vmatmul.mubr.f32.gmra.mxu0 %v7759
        %v7761 = vpop.f32.mrf.mxu0
        %v7762 = vadd.f32 %v7647, %v7761
        %v7763 = vpop.f32.mrf.mxu0
        %7764 = vmatprep.mubr.f32.mxu0 0.0
        %v7765 = vand.u32 %v7027, 4294901760
        %7766 = vmatmul.mubr.f32.gmra.mxu0 %v7765
        %v7767 = vpop.f32.mrf.mxu0
        %v7768 = vadd.f32 %v7653, %v7767
        %v7769 = vpop.f32.mrf.mxu0
        %7770 = vmatprep.mubr.f32.mxu0 0.0
        %v7771 = vand.u32 %v7030, 4294901760
        %7772 = vmatmul.mubr.f32.gmra.mxu0 %v7771
        %v7773 = vpop.f32.mrf.mxu0
        %v7774 = vadd.f32 %v7659, %v7773
        %v7775 = vpop.f32.mrf.mxu0
        %7776 = vmatprep.mubr.f32.mxu0 0.0
        %v7777 = vand.u32 %v7033, 4294901760
        %7778 = vmatmul.mubr.f32.gmra.mxu0 %v7777
        %v7779 = vpop.f32.mrf.mxu0
        %v7780 = vadd.f32 %v7665, %v7779
        %v7781 = vpop.f32.mrf.mxu0
        %7782 = vmatprep.mubr.f32.mxu0 0.0
        %v7783 = vand.u32 %v7036, 4294901760
        %7784 = vmatmul.mubr.f32.gmra.mxu0 %v7783
        %v7785 = vpop.f32.mrf.mxu0
        %v7786 = vadd.f32 %v7671, %v7785
        %v7787 = vpop.f32.mrf.mxu0
        %7788 = vmatprep.mubr.f32.mxu0 0.0
        %v7789 = vand.u32 %v7039, 4294901760
        %7790 = vmatmul.mubr.f32.gmra.mxu0 %v7789
        %v7791 = vpop.f32.mrf.mxu0
        %v7792 = vadd.f32 %v7677, %v7791
        %v7793 = vpop.f32.mrf.mxu0
        %7794 = vmatprep.mubr.f32.mxu0 0.0
        %v7795 = vand.u32 %v7042, 4294901760
        %7796 = vmatmul.mubr.f32.gmra.mxu0 %v7795
        %v7797 = vpop.f32.mrf.mxu0
        %v7798 = vadd.f32 %v7683, %v7797
        %v7799 = vpop.f32.mrf.mxu0
        %7800 = vmatprep.mubr.f32.mxu0 0.0
        %v7801 = vand.u32 %v7045, 4294901760
        %7802 = vmatmul.mubr.f32.gmra.mxu0 %v7801
        %v7803 = vpop.f32.mrf.mxu0
        %v7804 = vadd.f32 %v7689, %v7803
        %v7805 = vpop.f32.mrf.mxu0
        %7806 = vdwg.mxu0
        %v7807 = vrsqrt.pop %v7762
        %v7808 = vrsqrt.pop %v7768
        %v7809 = vrsqrt.pop %v7774
        %v7810 = vrsqrt.pop %v7780
        %v7811 = vrsqrt.pop %v7786
        %v7812 = vrsqrt.pop %v7792
        %v7813 = vrsqrt.pop %v7798
        %v7814 = vrsqrt.pop %v7804
        %v7815 = vmul.f32 %v7015, %v7807
        %v7816 = vmul.f32 %v7016, %v7808
        %v7817 = vmul.f32 %v7017, %v7809
        %v7818 = vmul.f32 %v7018, %v7810
        %v7819 = vmul.f32 %v7019, %v7811
        %v7820 = vmul.f32 %v7020, %v7812
        %v7821 = vmul.f32 %v7021, %v7813
        %v7822 = vmul.f32 %v7022, %v7814
        %v7824 = vlaneseq
        %v7825 = vshrl.u32 %v7824, 7
        %v7826 = vsub.s32 0, %v7825
        %v7827 = vrot.slane %v4295, %v7826
        %v7829 = vmul.f32 %v7815, %v7827
        %v7830 = vmul.f32 %v7816, %v7827
        %v7831 = vmul.f32 %v7817, %v7827
        %v7832 = vmul.f32 %v7818, %v7827
        %v7833 = vmul.f32 %v7819, %v7827
        %v7834 = vmul.f32 %v7820, %v7827
        %v7835 = vmul.f32 %v7821, %v7827
        %v7836 = vmul.f32 %v7822, %v7827
        %v7838 = vlaneseq
        %v7839 = vshrl.u32 %v7838, 7
        %v7840 = vsub.s32 0, %v7839
        %v7841 = vrot.slane %v4296, %v7840
        %v7843 = vadd.f32 %v7829, %v7841
        %v7844 = vadd.f32 %v7830, %v7841
        %v7845 = vadd.f32 %v7831, %v7841
        %v7846 = vadd.f32 %v7832, %v7841
        %v7847 = vadd.f32 %v7833, %v7841
        %v7848 = vadd.f32 %v7834, %v7841
        %v7849 = vadd.f32 %v7835, %v7841
        %v7850 = vadd.f32 %v7836, %v7841
        %v7851 = vxor.u32 %v7843, 2147483648
        %v7852 = vxor.u32 %v7844, 2147483648
        %v7853 = vxor.u32 %v7845, 2147483648
        %v7854 = vxor.u32 %v7846, 2147483648
        %v7855 = vxor.u32 %v7847, 2147483648
        %v7856 = vxor.u32 %v7848, 2147483648
        %v7857 = vxor.u32 %v7849, 2147483648
        %v7858 = vxor.u32 %v7850, 2147483648
        %v7859 = vmul.f32 %v7851, 1.442695
        %v7860 = vpow.pop %v7859
        %v7861 = vmul.f32 %v7852, 1.442695
        %v7862 = vpow.pop %v7861
        %v7863 = vmul.f32 %v7853, 1.442695
        %v7864 = vpow.pop %v7863
        %v7865 = vmul.f32 %v7854, 1.442695
        %v7866 = vpow.pop %v7865
        %v7867 = vmul.f32 %v7855, 1.442695
        %v7868 = vpow.pop %v7867
        %v7869 = vmul.f32 %v7856, 1.442695
        %v7870 = vpow.pop %v7869
        %v7871 = vmul.f32 %v7857, 1.442695
        %v7872 = vpow.pop %v7871
        %v7873 = vmul.f32 %v7858, 1.442695
        %v7874 = vpow.pop %v7873
        %v7875 = vadd.f32 %v7860, 1.0
        %v7876 = vadd.f32 %v7862, 1.0
        %v7877 = vadd.f32 %v7864, 1.0
        %v7878 = vadd.f32 %v7866, 1.0
        %v7879 = vadd.f32 %v7868, 1.0
        %v7880 = vadd.f32 %v7870, 1.0
        %v7881 = vadd.f32 %v7872, 1.0
        %v7882 = vadd.f32 %v7874, 1.0
        %v7883 = vrcp.pop %v7875
        %v7884 = vmul.f32 1.0, %v7883
        %v7885 = vrcp.pop %v7876
        %v7886 = vmul.f32 1.0, %v7885
        %v7887 = vrcp.pop %v7877
        %v7888 = vmul.f32 1.0, %v7887
        %v7889 = vrcp.pop %v7878
        %v7890 = vmul.f32 1.0, %v7889
        %v7891 = vrcp.pop %v7879
        %v7892 = vmul.f32 1.0, %v7891
        %v7893 = vrcp.pop %v7880
        %v7894 = vmul.f32 1.0, %v7893
        %v7895 = vrcp.pop %v7881
        %v7896 = vmul.f32 1.0, %v7895
        %v7897 = vrcp.pop %v7882
        %v7898 = vmul.f32 1.0, %v7897
        %v7899 = vmul.f32 %v7843, %v7884
        %v7900 = vmul.f32 %v7844, %v7886
        %v7901 = vmul.f32 %v7845, %v7888
        %v7902 = vmul.f32 %v7846, %v7890
        %v7903 = vmul.f32 %v7847, %v7892
        %v7904 = vmul.f32 %v7848, %v7894
        %v7905 = vmul.f32 %v7849, %v7896
        %v7906 = vmul.f32 %v7850, %v7898
        %v7907 = vpack.c.bf16 %v601, %v600
        %v7908 = vpack.c.bf16 %v603, %v602
        %v7909 = vpack.c.bf16 %v605, %v604
        %v7910 = vpack.c.bf16 %v607, %v606
        %v7911 = vld [vmem:[%s16] sm:$0xf]
        %v7912 = vld [vmem:[%s16 + $0x4] sm:$0xf]
        %v7913 = vld [vmem:[%s16 + $0x8] sm:$0xf]
        %v7914 = vld [vmem:[%s16 + $0xc] sm:$0xf]
        %v7915 = vld [vmem:[%s16 + $0x10] sm:$0xf]
        %v7916 = vld [vmem:[%s16 + $0x14] sm:$0xf]
        %v7917 = vld [vmem:[%s16 + $0x18] sm:$0xf]
        %v7918 = vld [vmem:[%s16 + $0x1c] sm:$0xf]
        %v7919 = vld [vmem:[%s17] sm:$0x1]
        %v7921 = vlaneseq
        %v7922 = vshrl.u32 %v7921, 7
        %v7923 = vsub.s32 0, %v7922
        %v7924 = vrot.slane %v7919, %v7923
        %v7934 = vunpack.c.l.b16 %v7911
        %v7935 = vunpack.c.l.b16 %v7912
        %v7936 = vunpack.c.l.b16 %v7913
        %v7937 = vunpack.c.l.b16 %v7914
        %v7938 = vunpack.c.l.b16 %v7915
        %v7939 = vunpack.c.l.b16 %v7916
        %v7940 = vunpack.c.l.b16 %v7917
        %v7941 = vunpack.c.l.b16 %v7918
        %v7942 = vpack.c.b16 %v7935, %v7934
        %v7943 = vpack.c.b16 %v7937, %v7936
        %v7944 = vpack.c.b16 %v7939, %v7938
        %v7945 = vpack.c.b16 %v7941, %v7940
        %v7951 = vsel %vm733, %v7907, 0
        %v7954 = vsel %vm733, %v7908, 0
        %v7957 = vsel %vm733, %v7909, 0
        %v7960 = vsel %vm733, %v7910, 0
        %7962 = vmatprep.subr.bf16.mxu0 0
        %7963 = vmatpush1.bf16.msra.mxu0 0
        %7964 = vmatprep.subr.bf16.mxu0 0
        %7965 = vmatpush1.bf16.msra.mxu0 0
        %7966 = vmatprep.subr.bf16.mxu0 0
        %7967 = vmatpush1.bf16.msra.mxu0 0
        %7968 = vmatprep.subr.bf16.mxu0 0
        %7969 = vmatpush1.bf16.msra.mxu0 0
        %7970 = vmatprep.subr.bf16.mxu0 0
        %7971 = vmatpush1.bf16.msra.mxu0 %v7945
        %7972 = vmatprep.subr.bf16.mxu0 0
        %7973 = vmatpush1.bf16.msra.mxu0 %v7944
        %7974 = vmatprep.subr.bf16.mxu0 0
        %7975 = vmatpush1.bf16.msra.mxu0 %v7943
        %7976 = vmatprep.subr.bf16.mxu0 0
        %7977 = vmatpush1.bf16.msra.mxu0 %v7942
        %7978 = vmatprep.subr.bf16.mxu0 0
        %7979 = vmatpush2.bf16.msra.mxu0 0
        %7980 = vmatprep.subr.bf16.mxu0 0
        %7981 = vmatpush2.bf16.msra.mxu0 0
        %7982 = vmatprep.subr.bf16.mxu0 0
        %7983 = vmatpush2.bf16.msra.mxu0 0
        %7984 = vmatprep.subr.bf16.mxu0 0
        %7985 = vmatpush2.bf16.msra.mxu0 0
        %7986 = vmatprep.subr.bf16.mxu0 0
        %7987 = vmatpush2.bf16.msra.mxu0 0
        %7988 = vmatprep.subr.bf16.mxu0 0
        %7989 = vmatpush2.bf16.msra.mxu0 0
        %7990 = vmatprep.subr.bf16.mxu0 0
        %7991 = vmatpush2.bf16.msra.mxu0 0
        %7992 = vmatprep.subr.bf16.mxu0 0
        %7993 = vmatpush2.bf16.msra.mxu0 0
        %7994 = vmatprep.mubr.bf16.mxu0 0
        %7995 = vmatmul.mubr.bf16.gmra.mxu0 %v7951
        %v7996 = vpop.f32.mrf.mxu0
        %v7997 = vadd.f32 %v7924, %v7996
        %v7998 = vpop.f32.mrf.mxu0
        %v7999 = vpop.f32.mrf.mxu0
        %v8000 = vadd.f32 %v7924, %v7999
        %v8001 = vpop.f32.mrf.mxu0
        %8002 = vmatprep.mubr.bf16.mxu0 0
        %8003 = vmatmul.mubr.bf16.gmra.mxu0 %v7954
        %v8004 = vpop.f32.mrf.mxu0
        %v8005 = vadd.f32 %v7924, %v8004
        %v8006 = vpop.f32.mrf.mxu0
        %v8007 = vpop.f32.mrf.mxu0
        %v8008 = vadd.f32 %v7924, %v8007
        %v8009 = vpop.f32.mrf.mxu0
        %8010 = vmatprep.mubr.bf16.mxu0 0
        %8011 = vmatmul.mubr.bf16.gmra.mxu0 %v7957
        %v8012 = vpop.f32.mrf.mxu0
        %v8013 = vadd.f32 %v7924, %v8012
        %v8014 = vpop.f32.mrf.mxu0
        %v8015 = vpop.f32.mrf.mxu0
        %v8016 = vadd.f32 %v7924, %v8015
        %v8017 = vpop.f32.mrf.mxu0
        %8018 = vmatprep.mubr.bf16.mxu0 0
        %8019 = vmatmul.mubr.bf16.gmra.mxu0 %v7960
        %v8020 = vpop.f32.mrf.mxu0
        %v8021 = vadd.f32 %v7924, %v8020
        %v8022 = vpop.f32.mrf.mxu0
        %v8023 = vpop.f32.mrf.mxu0
        %v8024 = vadd.f32 %v7924, %v8023
        %v8025 = vpop.f32.mrf.mxu0
        %8026 = vdwg.mxu0
        %v8027 = vpack.c.bf16 %v7900, %v7899
        %v8028 = vpack.c.bf16 %v7902, %v7901
        %v8029 = vpack.c.bf16 %v7904, %v7903
        %v8030 = vpack.c.bf16 %v7906, %v7905
        %v8031 = vld [vmem:[%s14] sm:$0xf]
        %v8032 = vld [vmem:[%s14 + $0x4] sm:$0xf]
        %v8033 = vld [vmem:[%s14 + $0x8] sm:$0xf]
        %v8034 = vld [vmem:[%s14 + $0xc] sm:$0xf]
        %v8035 = vld [vmem:[%s14 + $0x10] sm:$0xf]
        %v8036 = vld [vmem:[%s14 + $0x14] sm:$0xf]
        %v8037 = vld [vmem:[%s14 + $0x18] sm:$0xf]
        %v8038 = vld [vmem:[%s14 + $0x1c] sm:$0xf]
        %v8039 = vld [vmem:[%s14 + $0x20] sm:$0xf]
        %v8040 = vld [vmem:[%s14 + $0x24] sm:$0xf]
        %v8041 = vld [vmem:[%s14 + $0x28] sm:$0xf]
        %v8042 = vld [vmem:[%s14 + $0x2c] sm:$0xf]
        %v8043 = vld [vmem:[%s14 + $0x30] sm:$0xf]
        %v8044 = vld [vmem:[%s14 + $0x34] sm:$0xf]
        %v8045 = vld [vmem:[%s14 + $0x38] sm:$0xf]
        %v8046 = vld [vmem:[%s14 + $0x3c] sm:$0xf]
        %v8047 = vld [vmem:[%s15] sm:$0x1]
        %v8049 = vlaneseq
        %v8050 = vshrl.u32 %v8049, 7
        %v8051 = vsub.s32 0, %v8050
        %v8052 = vrot.slane %v8047, %v8051
        %v8070 = vunpack.c.l.b16 %v8031
        %v8071 = vunpack.c.l.b16 %v8032
        %v8072 = vunpack.c.l.b16 %v8033
        %v8073 = vunpack.c.l.b16 %v8034
        %v8074 = vunpack.c.l.b16 %v8035
        %v8075 = vunpack.c.l.b16 %v8036
        %v8076 = vunpack.c.l.b16 %v8037
        %v8077 = vunpack.c.l.b16 %v8038
        %v8078 = vunpack.c.l.b16 %v8039
        %v8079 = vunpack.c.l.b16 %v8040
        %v8080 = vunpack.c.l.b16 %v8041
        %v8081 = vunpack.c.l.b16 %v8042
        %v8082 = vunpack.c.l.b16 %v8043
        %v8083 = vunpack.c.l.b16 %v8044
        %v8084 = vunpack.c.l.b16 %v8045
        %v8085 = vunpack.c.l.b16 %v8046
        %v8086 = vpack.c.b16 %v8071, %v8070
        %v8087 = vpack.c.b16 %v8073, %v8072
        %v8088 = vpack.c.b16 %v8075, %v8074
        %v8089 = vpack.c.b16 %v8077, %v8076
        %v8090 = vpack.c.b16 %v8079, %v8078
        %v8091 = vpack.c.b16 %v8081, %v8080
        %v8092 = vpack.c.b16 %v8083, %v8082
        %v8093 = vpack.c.b16 %v8085, %v8084
        %8102 = vmatprep.subr.bf16.mxu0 0
        %8103 = vmatpush1.bf16.msra.mxu0 %v8093
        %8104 = vmatprep.subr.bf16.mxu0 0
        %8105 = vmatpush1.bf16.msra.mxu0 %v8092
        %8106 = vmatprep.subr.bf16.mxu0 0
        %8107 = vmatpush1.bf16.msra.mxu0 %v8091
        %8108 = vmatprep.subr.bf16.mxu0 0
        %8109 = vmatpush1.bf16.msra.mxu0 %v8090
        %8110 = vmatprep.subr.bf16.mxu0 0
        %8111 = vmatpush1.bf16.msra.mxu0 %v8089
        %8112 = vmatprep.subr.bf16.mxu0 0
        %8113 = vmatpush1.bf16.msra.mxu0 %v8088
        %8114 = vmatprep.subr.bf16.mxu0 0
        %8115 = vmatpush1.bf16.msra.mxu0 %v8087
        %8116 = vmatprep.subr.bf16.mxu0 0
        %8117 = vmatpush1.bf16.msra.mxu0 %v8086
        %8118 = vmatprep.subr.bf16.mxu0 0
        %8119 = vmatpush2.bf16.msra.mxu0 0
        %8120 = vmatprep.subr.bf16.mxu0 0
        %8121 = vmatpush2.bf16.msra.mxu0 0
        %8122 = vmatprep.subr.bf16.mxu0 0
        %8123 = vmatpush2.bf16.msra.mxu0 0
        %8124 = vmatprep.subr.bf16.mxu0 0
        %8125 = vmatpush2.bf16.msra.mxu0 0
        %8126 = vmatprep.subr.bf16.mxu0 0
        %8127 = vmatpush2.bf16.msra.mxu0 0
        %8128 = vmatprep.subr.bf16.mxu0 0
        %8129 = vmatpush2.bf16.msra.mxu0 0
        %8130 = vmatprep.subr.bf16.mxu0 0
        %8131 = vmatpush2.bf16.msra.mxu0 0
        %8132 = vmatprep.subr.bf16.mxu0 0
        %8133 = vmatpush2.bf16.msra.mxu0 0
        %8134 = vmatprep.mubr.bf16.mxu0 0
        %8135 = vmatmul.mubr.bf16.gmra.mxu0 %v8027
        %v8136 = vpop.f32.mrf.mxu0
        %v8137 = vadd.f32 %v8052, %v8136
        %v8138 = vpop.f32.mrf.mxu0
        %v8139 = vpop.f32.mrf.mxu0
        %v8140 = vadd.f32 %v8052, %v8139
        %v8141 = vpop.f32.mrf.mxu0
        %8142 = vmatprep.mubr.bf16.mxu0 0
        %8143 = vmatmul.mubr.bf16.gmra.mxu0 %v8028
        %v8144 = vpop.f32.mrf.mxu0
        %v8145 = vadd.f32 %v8052, %v8144
        %v8146 = vpop.f32.mrf.mxu0
        %v8147 = vpop.f32.mrf.mxu0
        %v8148 = vadd.f32 %v8052, %v8147
        %v8149 = vpop.f32.mrf.mxu0
        %8150 = vmatprep.mubr.bf16.mxu0 0
        %8151 = vmatmul.mubr.bf16.gmra.mxu0 %v8029
        %v8152 = vpop.f32.mrf.mxu0
        %v8153 = vadd.f32 %v8052, %v8152
        %v8154 = vpop.f32.mrf.mxu0
        %v8155 = vpop.f32.mrf.mxu0
        %v8156 = vadd.f32 %v8052, %v8155
        %v8157 = vpop.f32.mrf.mxu0
        %8158 = vmatprep.mubr.bf16.mxu0 0
        %8159 = vmatmul.mubr.bf16.gmra.mxu0 %v8030
        %v8160 = vpop.f32.mrf.mxu0
        %v8161 = vadd.f32 %v8052, %v8160
        %v8162 = vpop.f32.mrf.mxu0
        %v8163 = vpop.f32.mrf.mxu0
        %v8164 = vadd.f32 %v8052, %v8163
        %v8165 = vpop.f32.mrf.mxu0
        %8166 = vdwg.mxu0
        %v8167 = vadd.f32 %v8137, %v7997
        %v8168 = vadd.f32 %v8140, %v8000
        %v8169 = vadd.f32 %v8145, %v8005
        %v8170 = vadd.f32 %v8148, %v8008
        %v8171 = vadd.f32 %v8153, %v8013
        %v8172 = vadd.f32 %v8156, %v8016
        %v8173 = vadd.f32 %v8161, %v8021
        %v8174 = vadd.f32 %v8164, %v8024
        %v8175 = vmul.f32 %v8167, 0.70710677
        %v8176 = vmul.f32 %v8168, 0.70710677
        %v8177 = vmul.f32 %v8169, 0.70710677
        %v8178 = vmul.f32 %v8170, 0.70710677
        %v8179 = vmul.f32 %v8171, 0.70710677
        %v8180 = vmul.f32 %v8172, 0.70710677
        %v8181 = vmul.f32 %v8173, 0.70710677
        %v8182 = vmul.f32 %v8174, 0.70710677
        %8183 = vst [vmem:[%s585] sm:$0xff] %v8175
        %8184 = vst [vmem:[%s585 + $0x8] sm:$0xff] %v8176
        %8185 = vst [vmem:[%s585 + $0x10] sm:$0xff] %v8177
        %8186 = vst [vmem:[%s585 + $0x18] sm:$0xff] %v8178
        %8187 = vst [vmem:[%s585 + $0x20] sm:$0xff] %v8179
        %8188 = vst [vmem:[%s585 + $0x28] sm:$0xff] %v8180
        %8189 = vst [vmem:[%s585 + $0x30] sm:$0xff] %v8181
        %8190 = vst [vmem:[%s585 + $0x38] sm:$0xff] %v8182
        %s8191 = sand.u32 %s428, 1
        %s8192 = scalar_lea.sflag [#allocation3], %s8191
        %s8193 = sand.u32 %s428, 1
        %s8194 = smul.addr %s8193, 64
        %s8195 = scalar_lea.vmem [#allocation2], %s8194
        // Predicated region
        $region93: #{tpu_custom_call.1} parent=91 // pred_check
          %p8196 = pneg %p438
        $region94: #{tpu_custom_call.1} parent=91 // pred_check_branch
          %8198 = sbr.rel (%p8196) target = $region96
        $region95: #{tpu_custom_call.1} parent=91 // pred_region
          %s8199 = smul.u32 8, %s32
          %s8201 = ssub.s32 1024, 1024
          %8202 = vsyncadd %s8192, %s8201
          %s8203 = smul.addr %s8199, 128
          %s8204 = scalar_lea.hbm %s18, %s8203
          %s8205 = sshll.u32 %s8195, 4
          %s8206 = int_to_ptr.vmem [resolvable:$true] %s8205
          %8211 = dma.vmem_to_hbm [thread:$0]  %s8206, 1024, %s8204, %s8192, 128, 128, 8
        $region96: #{tpu_custom_call.1} parent=91 // pred_fallthru
          _
      $region92: #{tpu_custom_call.1} parent=5 // pred_fallthru
        _
      %p8212 = scmp.le.s32.totalorder 2, %s27
      // Predicated region
      $region97: #{tpu_custom_call.1} parent=5 // pred_check
        %p8213 = pneg %p8212
      $region98: #{tpu_custom_call.1} parent=5 // pred_check_branch
        %8215 = sbr.rel (%p8213) target = $region100
      $region99: #{tpu_custom_call.1} parent=5 // pred_region
        %s8216 = ssub.s32 %s27, 2
        // Predicated region
        $region101: #{tpu_custom_call.1} parent=99 // pred_check
          %p8217 = pneg %p444
        $region102: #{tpu_custom_call.1} parent=99 // pred_check_branch
          %8219 = sbr.rel (%p8217) target = $region104
        $region103: #{tpu_custom_call.1} parent=99 // pred_region
          %s8220 = sand.u32 %s429, 1
          %s8221 = scalar_lea.sflag [#allocation3], %s8220
          %s8222 = sand.u32 %s429, 1
          %s8223 = smul.addr %s8222, 64
          %s8224 = scalar_lea.vmem [#allocation2], %s8223
          %8225 = dma.done %s8221, 1024
        $region104: #{tpu_custom_call.1} parent=99 // pred_fallthru
          _
      $region100: #{tpu_custom_call.1} parent=5 // pred_fallthru
        _
    $region6: #{tpu_custom_call.1} parent=1 // loop_footer
      %s31 = sadd.s32 1, %s27
    $region7: #{tpu_custom_call.1} parent=1 // loop_footer_branch
      %26 = sbr.rel target = $region3
    $region8: #{tpu_custom_call.1} parent=1 // loop_exit
      _
    %8226 = vsyncpa [#allocation3], 1
    %s8227 = scalar_lea.sflag [#allocation3], 1
    %8228 = vsyncpa %s8227, 1

</llo_original>
